<compile_context>
chip_gen: v5e
topology: v5e:2x2
jax: 0.10.0
libtpu: 0.0.40
codegen_flags: <defaults>
</compile_context>

<pallas_src>
import functools

import jax
import jax.numpy as jnp
from jax import lax
from jax.experimental import pallas as pl
from jax.experimental.pallas import tpu as pltpu


def _round_up(x, m):
    return (x + m - 1) // m * m


# ----------------------- Pallas matmul kernel --------------------------------
# Single K block, fused bias (+ optional residual add) (+ optional ReLU).
# K <= 16 uses an unrolled VPU broadcast-MAC path instead of the MXU.

def _mm_kernel(a_ref, b_ref, bias_ref, *rest, relu, has_add, unroll_k):
    if has_add:
        add_ref, o_ref = rest
    else:
        (o_ref,) = rest
    if unroll_k:
        a = a_ref[...].astype(jnp.float32)
        b = b_ref[...].astype(jnp.float32)
        acc = a[:, 0:1] * b[0:1, :]
        for t in range(1, a.shape[1]):
            acc = acc + a[:, t:t + 1] * b[t:t + 1, :]
    else:
        acc = jnp.dot(a_ref[...], b_ref[...],
                      preferred_element_type=jnp.float32)
    acc = acc + bias_ref[...]
    if has_add:
        acc = acc + add_ref[...].astype(jnp.float32)
    if relu:
        acc = jnp.maximum(acc, 0.0)
    o_ref[...] = acc.astype(o_ref.dtype)


def matmul_bias_act(a, b, bias, add=None, relu=False, out_dtype=jnp.float32):
    """(C,K)bf16 @ (K,M)bf16 + bias[C,1] (+add) (+relu) -> (C,M) out_dtype.

    C and K are single full-extent blocks (no host-side padding); only the
    lane dim M (always a multiple of 128 here) is tiled by the grid.
    """
    C, K = a.shape
    K2, M = b.shape
    assert K == K2 and M % 128 == 0
    tn = next(t for t in (1024, 512, 256, 128) if M % t == 0)
    grid = (M // tn,)

    in_specs = [
        pl.BlockSpec((C, K), lambda i: (0, 0)),
        pl.BlockSpec((K, tn), lambda i: (0, i)),
        pl.BlockSpec((C, 1), lambda i: (0, 0)),
    ]
    args = [a, b, bias]
    has_add = add is not None
    if has_add:
        in_specs.append(pl.BlockSpec((C, tn), lambda i: (0, i)))
        args.append(add)
    unroll_k = K <= 16

    flops = 2 * C * K * M
    bytes_accessed = int(a.size * a.dtype.itemsize + b.size * b.dtype.itemsize
                         + bias.size * 4
                         + C * M * jnp.dtype(out_dtype).itemsize
                         + (add.size * add.dtype.itemsize if has_add else 0))

    return pl.pallas_call(
        functools.partial(_mm_kernel, relu=relu, has_add=has_add,
                          unroll_k=unroll_k),
        out_shape=jax.ShapeDtypeStruct((C, M), out_dtype),
        grid_spec=pltpu.PrefetchScalarGridSpec(
            num_scalar_prefetch=0,
            grid=grid,
            in_specs=in_specs,
            out_specs=pl.BlockSpec((C, tn), lambda i: (0, i)),
        ),
        compiler_params=pltpu.CompilerParams(
            dimension_semantics=("parallel",)),
        cost_estimate=pl.CostEstimate(flops=flops, transcendentals=0,
                                      bytes_accessed=bytes_accessed),
    )(*args)


# ------------------------ conv lowering (glue) --------------------------------

def prep_conv(w, b):
    """Pack a conv weight/bias into the MXU-ready bf16 A matrix (no padding)."""
    w = jnp.asarray(w, jnp.float32)
    cout, cin, kh, kw = w.shape
    # K ordering is tap-major then channel, matching _im2col_cf.
    A = w.transpose(0, 2, 3, 1).reshape(cout, cin * kh * kw).astype(jnp.bfloat16)
    bias = jnp.asarray(b, jnp.float32).reshape(cout, 1)
    return {"A": A, "bias": bias, "cout": cout, "cin": cin, "kh": kh, "kw": kw}


def _im2col_cf(x, kh, kw, stride, padding):
    # x: (C, N, H, W) channels-first; no transposes needed in this layout.
    C, N, H, W = x.shape
    if padding:
        x = jnp.pad(x, ((0, 0), (0, 0), (padding, padding), (padding, padding)))
    Hp, Wp = H + 2 * padding, W + 2 * padding
    Ho = (Hp - kh) // stride + 1
    Wo = (Wp - kw) // stride + 1
    if kh == 1 and kw == 1 and stride == 1:
        col = x.reshape(C, N * Ho * Wo)
    else:
        taps = [x[:, :, i:i + stride * Ho:stride, j:j + stride * Wo:stride]
                for i in range(kh) for j in range(kw)]
        col = jnp.stack(taps, axis=0).reshape(kh * kw * C, N * Ho * Wo)
    return col, Ho, Wo


def conv2d_cf(x, p, stride=1, padding=0, relu=False, add=None,
              out_dtype=jnp.float32):
    """Conv2d on channels-first (C, N, H, W) activations -> one Pallas matmul."""
    C, N, H, W = x.shape
    assert C == p["cin"]
    col, Ho, Wo = _im2col_cf(x, p["kh"], p["kw"], stride, padding)
    K, M = col.shape
    Mp = _round_up(M, 128)                      # no-op for batch 2 (M lane-aligned)
    col = col.astype(jnp.bfloat16)
    if Mp != M:
        col = jnp.pad(col, ((0, 0), (0, Mp - M)))
    if add is not None:
        add = add.reshape(p["cout"], M)
        if Mp != M:
            add = jnp.pad(add, ((0, 0), (0, Mp - M)))
    out = matmul_bias_act(p["A"], col, p["bias"], add=add, relu=relu,
                          out_dtype=out_dtype)
    if Mp != M:
        out = out[:, :M]
    return out.reshape(p["cout"], N, Ho, Wo)


def fold_bn(w, b, gamma, beta, mean, var, eps=1e-5):
    """Fold eval-mode BatchNorm2d into the preceding conv (exact)."""
    scale = gamma / jnp.sqrt(var + eps)
    return w * scale[:, None, None, None], (b - mean) * scale + beta


def _valid_maps(Hin, Win, kh, kw, stride, pad):
    Ho = (Hin + 2 * pad - kh) // stride + 1
    Wo = (Win + 2 * pad - kw) // stride + 1
    iy = stride * jnp.arange(Ho)[:, None] + jnp.arange(kh)[None, :] - pad
    ix = stride * jnp.arange(Wo)[:, None] + jnp.arange(kw)[None, :] - pad
    vy = ((iy >= 0) & (iy < Hin)).astype(jnp.float32)       # (Ho, kh)
    vx = ((ix >= 0) & (ix < Win)).astype(jnp.float32)       # (Wo, kw)
    return vy, vx


def fold_1x1_into_conv(w0, b0, w1, b1, Hin, Win, stride, pad):
    """Fold a 1x1 conv (w0:(Cmid,Cin), b0:(Cmid,)) into the following KxK conv
    (w1:(Cout,Cmid,kh,kw), b1:(Cout,)) EXACTLY.

    Returns packed conv params for the folded conv (bias = 0) plus a
    position-dependent bias map (Cout, Ho, Wo): b0 contributes through every
    kernel tap that reads a real pixel, but NOT through the KxK conv's zero
    padding, so the bias is smaller on the image border.
    """
    Cout, Cmid, kh, kw = w1.shape
    w_fold = jnp.einsum('omij,mc->ocij', w1, w0)             # (Cout, Cin, kh, kw)
    wb = jnp.einsum('omij,m->oij', w1, b0)                   # (Cout, kh, kw)
    vy, vx = _valid_maps(Hin, Win, kh, kw, stride, pad)
    posbias = jnp.einsum('oij,yi,xj->oyx', wb, vy, vx) + b1[:, None, None]
    Cin = w_fold.shape[1]
    return prep_conv(w_fold, jnp.zeros((Cout,), jnp.float32)), posbias


# ---- combined Deception stack: sum of 3 ConvTranspose2d -> 4 phase 3x3 convs --

def combine_deconv_stack(stack_params):
    """Combine ConvTranspose2d(32,32,2,2,0)+(4,2,1)+(6,2,2), which the forward
    sums, into one 6x6 kernel, then sub-pixel decompose into 4 3x3 phase convs
    packed along the output-channel dim (phase order (r,q)=(0,0),(0,1),(1,0),(1,1))."""
    cin, cout = stack_params[0][0].shape[0], stack_params[0][0].shape[1]
    W6 = jnp.zeros((cin, cout, 6, 6), jnp.float32)
    bsum = jnp.zeros((cout,), jnp.float32)
    for (w, b), pad in zip(stack_params, (0, 1, 2)):
        k = w.shape[2]
        lo = 2 - pad
        W6 = W6.at[:, :, lo:lo + k, lo:lo + k].add(w)
        bsum = bsum + b
    phase_ws = []
    for r in (0, 1):
        for q in (0, 1):
            wp = W6[:, :, 4 + r::-2, 4 + q::-2]              # (cin, cout, 3, 3)
            phase_ws.append(wp.transpose(1, 0, 2, 3))        # (cout, cin, 3, 3)
    w_all = jnp.concatenate(phase_ws, axis=0)                # (4*cout, cin, 3, 3)
    b_all = jnp.tile(bsum, 4)
    return w_all, b_all


def upsample_reassemble(out4):
    # out4: (4*co, N, H, W) phase-packed -> (co, N, 2H, 2W)
    # TODO(synk): this interleave could be absorbed into the next conv's tap
    # indexing / an interleaving out_spec; left as a cheap XLA transpose here.
    P, N, H, W = out4.shape
    co = P // 4
    out = out4.reshape(2, 2, co, N, H, W)
    out = out.transpose(2, 3, 4, 0, 5, 1).reshape(co, N, 2 * H, 2 * W)
    return out


# --------------------------- parameters --------------------------------------

class ParamGen:
    def __init__(self, seed):
        self.key = jax.random.PRNGKey(seed)

    def _next(self):
        self.key, k = jax.random.split(self.key)
        return k

    def conv(self, cout, cin, kh, kw):
        fan_in = cin * kh * kw
        w = jax.random.normal(self._next(), (cout, cin, kh, kw),
                              jnp.float32) / jnp.sqrt(fan_in)
        b = 0.01 * jax.random.normal(self._next(), (cout,), jnp.float32)
        return w, b

    def convT(self, cin, cout, kh, kw):
        fan_in = cout * kh * kw
        w = jax.random.normal(self._next(), (cin, cout, kh, kw),
                              jnp.float32) / jnp.sqrt(fan_in)
        b = 0.01 * jax.random.normal(self._next(), (cout,), jnp.float32)
        return w, b

    def bn(self, c):
        gamma = 1.0 + 0.1 * jax.random.normal(self._next(), (c,), jnp.float32)
        beta = 0.1 * jax.random.normal(self._next(), (c,), jnp.float32)
        mean = 0.1 * jax.random.normal(self._next(), (c,), jnp.float32)
        var = 1.0 + 0.1 * jnp.abs(
            jax.random.normal(self._next(), (c,), jnp.float32))
        return gamma, beta, mean, var


def sample_raw_params(n_joints, hh_k, oh_k, hidden_chans=64, seed=42):
    g = ParamGen(seed)
    raw = {"init_hidden": g.conv(hidden_chans, 512, 1, 1)}
    dec = []
    for _ in range(n_joints):
        dec.append({
            "start": g.conv(32, hidden_chans, 1, 1),
            # The BatchNorm2d appended to stack1/stack2 in Deception is never
            # used in its forward(), so it is not sampled/materialized.
            "stack1": [g.convT(32, 32, k, k) for k in (2, 4, 6)],
            "stack2": [g.convT(32, 32, k, k) for k in (2, 4, 6)],
            "end": g.conv(1, 32, 3, 3),
        })
    raw["deception"] = dec
    h2h, o2h = [], []
    for i in range(n_joints):
        h2h.append({"conv": g.conv(hidden_chans, hidden_chans, hh_k, hh_k),
                    "bn": g.bn(hidden_chans)})
        row = []
        for _ in range(i + 1):
            row.append({"c0": g.conv(hidden_chans, 1, 1, 1),
                        "c1": g.conv(hidden_chans, hidden_chans, oh_k, oh_k),
                        "bn1": g.bn(hidden_chans),
                        "c2": g.conv(hidden_chans, hidden_chans, oh_k, oh_k),
                        "bn2": g.bn(hidden_chans)})
        o2h.append(row)
    raw["h2h"] = h2h
    raw["o2h"] = o2h
    return raw


def pack_params(raw, hh_k, oh_k, feat_hw=8):
    p = {"init_hidden": prep_conv(*raw["init_hidden"])}

    dec = []
    for d in raw["deception"]:
        up1_w, up1_b = combine_deconv_stack(d["stack1"])
        up2_w, up2_b = combine_deconv_stack(d["stack2"])
        ws, bs = d["start"]
        # fold the 1x1 `start` into the first phase-conv (exact, incl. border bias)
        su_conv, su_pos = fold_1x1_into_conv(ws[:, :, 0, 0], bs, up1_w, up1_b,
                                             feat_hw, feat_hw, 1, 1)
        dec.append({"start_up1": su_conv, "start_up1_pos": su_pos,
                    "up2": prep_conv(up2_w, up2_b),
                    "end": prep_conv(*d["end"])})
    p["deception"] = dec

    h2h, o2h = [], []
    for h in raw["h2h"]:
        h2h.append(prep_conv(*fold_bn(*h["conv"], *h["bn"])))
    for row in raw["o2h"]:
        prow = []
        for t in row:
            w0, b0 = t["c0"]                                  # (64, 1, 1, 1)
            w1, b1 = fold_bn(*t["c1"], *t["bn1"])
            w2, b2 = fold_bn(*t["c2"], *t["bn2"])
            # fold c0 (1x1, 1->64) into c1: K drops 9*64 -> 9, zero-B matmul gone
            c1_conv, c1_pos = fold_1x1_into_conv(
                w0[:, :, 0, 0], b0, w1, b1,
                4 * feat_hw, 4 * feat_hw, 2, oh_k // 2)
            prow.append({"c1": c1_conv, "c1_pos": c1_pos,
                         "c2": prep_conv(w2, b2)})
        o2h.append(prow)
    p["h2h"] = h2h
    p["o2h"] = o2h
    return p


def _tile_posbias(pb, n):
    # (C, Ho, Wo) -> (C, N, Ho, Wo), matching the (n, y, x)-major col ordering.
    C, Ho, Wo = pb.shape
    return jnp.broadcast_to(pb[:, None], (C, n, Ho, Wo))


# ------------------------------ forward ---------------------------------------

def deception_forward(x, p):
    # x: (64, N, 8, 8)
    N = x.shape[1]
    pos = _tile_posbias(p["start_up1_pos"], N)
    x4 = conv2d_cf(x, p["start_up1"], padding=1, add=pos,
                   out_dtype=jnp.bfloat16)                     # (128, N, 8, 8)
    x = upsample_reassemble(x4)                                # (32, N, 16, 16)
    x4 = conv2d_cf(x, p["up2"], padding=1, out_dtype=jnp.bfloat16)
    x = upsample_reassemble(x4)                                # (32, N, 32, 32)
    x = conv2d_cf(x, p["end"], padding=1)                      # (1, N, 32, 32) f32
    return x


def chained_forward(feat, params, n_joints, hh_k, oh_k):
    # feat plays the role of resnet(x).reshape(-1, 512, 8, 8)  (NCHW)
    x = jnp.transpose(feat, (1, 0, 2, 3))                      # NCHW -> CNHW, once
    N = feat.shape[0]
    hidden = [None] * n_joints
    output = [None] * n_joints
    hidden[0] = conv2d_cf(x, params["init_hidden"])            # 512 -> 64, f32
    output[0] = deception_forward(hidden[0], params["deception"][0])
    for i in range(n_joints - 1):
        acc = conv2d_cf(hidden[i], params["h2h"][i], padding=hh_k // 2)
        for j in range(i + 1):
            t = params["o2h"][i][j]
            # c0 folded into c1 (K=9, VPU path) with its border-aware pos-bias
            u = conv2d_cf(output[j], t["c1"], stride=2, padding=oh_k // 2,
                          add=_tile_posbias(t["c1_pos"], N),
                          out_dtype=jnp.bfloat16)
            # final term fuses the running f32 sum and torch.relu in the epilogue
            acc = conv2d_cf(u, t["c2"], stride=2, padding=oh_k // 2,
                            add=acc, relu=(j == i))
        hidden[i + 1] = acc
        output[i + 1] = deception_forward(hidden[i + 1],
                                          params["deception"][i + 1])
    outs = [jnp.transpose(o, (1, 0, 2, 3)) for o in output]     # -> NCHW
    return jnp.concatenate(outs, axis=1)                        # (N, nJ, 32, 32)


# --------------------- pure-JAX f32 reference (validation) --------------------

def _conv_ref(x, w, b, stride=1, pad=0):
    out = lax.conv_general_dilated(
        x, w, window_strides=(stride, stride),
        padding=[(pad, pad), (pad, pad)],
        dimension_numbers=('NCHW', 'OIHW', 'NCHW'))
    return out + b[None, :, None, None]


def _convT_ref(x, w, b, stride, pad):
    # PyTorch ConvTranspose2d(cin, cout, k, stride, pad); w: (cin, cout, k, k)
    k = w.shape[2]
    wt = jnp.flip(w, (2, 3)).transpose(1, 0, 2, 3)
    out = lax.conv_general_dilated(
        x, wt, window_strides=(1, 1),
        padding=[(k - 1 - pad, k - 1 - pad)] * 2,
        lhs_dilation=(stride, stride),
        dimension_numbers=('NCHW', 'OIHW', 'NCHW'))
    return out + b[None, :, None, None]


def _bn_ref(x, gamma, beta, mean, var, eps=1e-5):
    inv = gamma / jnp.sqrt(var + eps)
    return (x - mean[None, :, None, None]) * inv[None, :, None, None] \
        + beta[None, :, None, None]


def deception_ref(x, d):
    x = _conv_ref(x, *d["start"])
    x = sum(_convT_ref(x, w, b, 2, p) for (w, b), p in zip(d["stack1"], (0, 1, 2)))
    x = sum(_convT_ref(x, w, b, 2, p) for (w, b), p in zip(d["stack2"], (0, 1, 2)))
    x = _conv_ref(x, *d["end"], pad=1)
    return x


def chained_ref(feat, raw, n_joints, hh_k, oh_k):
    hidden = [None] * n_joints
    output = [None] * n_joints
    hidden[0] = _conv_ref(feat, *raw["init_hidden"])
    output[0] = deception_ref(hidden[0], raw["deception"][0])
    for i in range(n_joints - 1):
        h = _bn_ref(_conv_ref(hidden[i], *raw["h2h"][i]["conv"], pad=hh_k // 2),
                    *raw["h2h"][i]["bn"])
        for j in range(i + 1):
            t = raw["o2h"][i][j]
            u = _conv_ref(output[j], *t["c0"])
            u = _bn_ref(_conv_ref(u, *t["c1"], stride=2, pad=oh_k // 2), *t["bn1"])
            u = _bn_ref(_conv_ref(u, *t["c2"], stride=2, pad=oh_k // 2), *t["bn2"])
            h = h + u
        hidden[i + 1] = jnp.maximum(h, 0.0)
        output[i + 1] = deception_ref(hidden[i + 1], raw["deception"][i + 1])
    return jnp.concatenate(output, axis=1)


# -------------------------------- main -----------------------------------------

if __name__ == "__main__":
    N_JOINTS = 3
    HH_KERNEL = 3
    OH_KERNEL = 3
    BATCH = 2

    raw = sample_raw_params(N_JOINTS, HH_KERNEL, OH_KERNEL)
    params = pack_params(raw, HH_KERNEL, OH_KERNEL, feat_hw=8)

    # Input = ResNet feature map, i.e. resnet(x).reshape(-1, 512, 8, 8)
    feat = jax.random.normal(jax.random.PRNGKey(0),
                             (BATCH, 512, 8, 8), jnp.float32)

    forward = jax.jit(functools.partial(
        chained_forward, params=params,
        n_joints=N_JOINTS, hh_k=HH_KERNEL, oh_k=OH_KERNEL))
    out = jax.block_until_ready(forward(feat))

    assert out.shape == (BATCH, N_JOINTS, 32, 32), out.shape
    assert bool(jnp.all(jnp.isfinite(out)))

    # Numerical validation against the pure-JAX f32 reference (checks the
    # summed-ConvTranspose phase decomposition and the exact 1x1 folds;
    # tolerance accounts for bf16 MXU operands).
    ref = jax.block_until_ready(jax.jit(functools.partial(
        chained_ref, raw=raw,
        n_joints=N_JOINTS, hh_k=HH_KERNEL, oh_k=OH_KERNEL))(feat))
    err = float(jnp.max(jnp.abs(out - ref)))
    scale = float(jnp.max(jnp.abs(ref))) + 1e-6
    assert err <= 0.05 * scale + 0.02, (err, scale)

    print("KERNEL_OK")
</pallas_src>

<mosaic_0001>
module attributes {stable_mosaic.version = 11 : i64} {
  func.func @_mm_kernel(%arg0: i32, %arg1: memref<64x512xbf16, #tpu.memory_space<vmem>>, %arg2: memref<512x128xbf16, #tpu.memory_space<vmem>>, %arg3: memref<64x1xf32, #tpu.memory_space<vmem>>, %arg4: memref<64x128xf32, #tpu.memory_space<vmem>>) attributes {dimension_semantics = [#tpu.dimension_semantics<parallel>], iteration_bounds = array<i64: 1>, scalar_prefetch = 0 : i64, scratch_operands = 0 : i64, tpu.core_type = #tpu.core_type<tc>, window_params = [{pipeline_mode = #tpu.pipeline_mode<synchronous>, transform_indices = @transform_0, window_bounds = array<i64: 64, 512>}, {transform_indices = @transform_1, window_bounds = array<i64: 512, 128>}, {pipeline_mode = #tpu.pipeline_mode<synchronous>, transform_indices = @transform_2, window_bounds = array<i64: 64, 1>}, {transform_indices = @transform_3, window_bounds = array<i64: 64, 128>}]} {
    %c0 = arith.constant 0 : index
    %c0_0 = arith.constant 0 : index
    %0 = vector.load %arg1[%c0, %c0_0] : memref<64x512xbf16, #tpu.memory_space<vmem>>, vector<64x512xbf16>
    %c0_1 = arith.constant 0 : index
    %c0_2 = arith.constant 0 : index
    %1 = vector.load %arg2[%c0_1, %c0_2] : memref<512x128xbf16, #tpu.memory_space<vmem>>, vector<512x128xbf16>
    %cst = arith.constant dense<0.000000e+00> : vector<64x128xf32>
    %2 = tpu.matmul %0, %1, %cst {dimension_numbers = #tpu.dot_dimension_numbers<[1], [0], [0], [1], [0, 0, 1, 1], [], []>} : vector<64x512xbf16>, vector<512x128xbf16>, vector<64x128xf32> -> vector<64x128xf32>
    %c0_3 = arith.constant 0 : index
    %c0_4 = arith.constant 0 : index
    %3 = vector.load %arg3[%c0_3, %c0_4] : memref<64x1xf32, #tpu.memory_space<vmem>>, vector<64x1xf32>
    %4 = vector.broadcast %3 : vector<64x1xf32> to vector<64x128xf32>
    %5 = arith.addf %2, %4 : vector<64x128xf32>
    %c0_5 = arith.constant 0 : index
    %c0_6 = arith.constant 0 : index
    %6 = vector.load %arg4[%c0_5, %c0_6] : memref<64x128xf32, #tpu.memory_space<vmem>>, vector<64x128xf32>
    tpu.vector_store %arg4[%c0_5, %c0_6], %5 {strides = array<i32>} : memref<64x128xf32, #tpu.memory_space<vmem>>, vector<64x128xf32>,
    return
  }
  func.func @transform_0(%arg0: i32) -> (i32, i32) {
    %c0_i32 = arith.constant 0 : i32
    %c0_i32_0 = arith.constant 0 : i32
    %c0_i32_1 = arith.constant 0 : i32
    return %c0_i32, %c0_i32_0 : i32, i32
  }
  func.func @transform_1(%arg0: i32) -> (i32, i32) {
    %c0_i32 = arith.constant 0 : i32
    %c0_i32_0 = arith.constant 0 : i32
    return %c0_i32, %arg0 : i32, i32
  }
  func.func @transform_2(%arg0: i32) -> (i32, i32) {
    %c0_i32 = arith.constant 0 : i32
    %c0_i32_0 = arith.constant 0 : i32
    %c0_i32_1 = arith.constant 0 : i32
    return %c0_i32, %c0_i32_0 : i32, i32
  }
  func.func @transform_3(%arg0: i32) -> (i32, i32) {
    %c0_i32 = arith.constant 0 : i32
    %c0_i32_0 = arith.constant 0 : i32
    return %c0_i32, %arg0 : i32, i32
  }
}

module attributes {stable_mosaic.version = 11 : i64} {
  func.func @_mm_kernel(%arg0: i32, %arg1: memref<128x576xbf16, #tpu.memory_space<vmem>>, %arg2: memref<576x128xbf16, #tpu.memory_space<vmem>>, %arg3: memref<128x1xf32, #tpu.memory_space<vmem>>, %arg4: memref<128x128xf32, #tpu.memory_space<vmem>>, %arg5: memref<128x128xbf16, #tpu.memory_space<vmem>>) attributes {dimension_semantics = [#tpu.dimension_semantics<parallel>], iteration_bounds = array<i64: 1>, scalar_prefetch = 0 : i64, scratch_operands = 0 : i64, tpu.core_type = #tpu.core_type<tc>, window_params = [{pipeline_mode = #tpu.pipeline_mode<synchronous>, transform_indices = @transform_0, window_bounds = array<i64: 128, 576>}, {transform_indices = @transform_1, window_bounds = array<i64: 576, 128>}, {pipeline_mode = #tpu.pipeline_mode<synchronous>, transform_indices = @transform_2, window_bounds = array<i64: 128, 1>}, {transform_indices = @transform_3, window_bounds = array<i64: 128, 128>}, {transform_indices = @transform_4, window_bounds = array<i64: 128, 128>}]} {
    %c0 = arith.constant 0 : index
    %c0_0 = arith.constant 0 : index
    %0 = vector.load %arg1[%c0, %c0_0] : memref<128x576xbf16, #tpu.memory_space<vmem>>, vector<128x576xbf16>
    %c0_1 = arith.constant 0 : index
    %c0_2 = arith.constant 0 : index
    %1 = vector.load %arg2[%c0_1, %c0_2] : memref<576x128xbf16, #tpu.memory_space<vmem>>, vector<576x128xbf16>
    %cst = arith.constant dense<0.000000e+00> : vector<128x128xf32>
    %2 = tpu.matmul %0, %1, %cst {dimension_numbers = #tpu.dot_dimension_numbers<[1], [0], [0], [1], [0, 0, 1, 1], [], []>} : vector<128x576xbf16>, vector<576x128xbf16>, vector<128x128xf32> -> vector<128x128xf32>
    %c0_3 = arith.constant 0 : index
    %c0_4 = arith.constant 0 : index
    %3 = vector.load %arg3[%c0_3, %c0_4] : memref<128x1xf32, #tpu.memory_space<vmem>>, vector<128x1xf32>
    %4 = vector.broadcast %3 : vector<128x1xf32> to vector<128x128xf32>
    %5 = arith.addf %2, %4 : vector<128x128xf32>
    %c0_5 = arith.constant 0 : index
    %c0_6 = arith.constant 0 : index
    %6 = vector.load %arg4[%c0_5, %c0_6] : memref<128x128xf32, #tpu.memory_space<vmem>>, vector<128x128xf32>
    %7 = arith.addf %5, %6 : vector<128x128xf32>
    %8 = arith.truncf %7 : vector<128x128xf32> to vector<128x128xbf16>
    %c0_7 = arith.constant 0 : index
    %c0_8 = arith.constant 0 : index
    %9 = vector.load %arg5[%c0_7, %c0_8] : memref<128x128xbf16, #tpu.memory_space<vmem>>, vector<128x128xbf16>
    tpu.vector_store %arg5[%c0_7, %c0_8], %8 {strides = array<i32>} : memref<128x128xbf16, #tpu.memory_space<vmem>>, vector<128x128xbf16>,
    return
  }
  func.func @transform_0(%arg0: i32) -> (i32, i32) {
    %c0_i32 = arith.constant 0 : i32
    %c0_i32_0 = arith.constant 0 : i32
    %c0_i32_1 = arith.constant 0 : i32
    return %c0_i32, %c0_i32_0 : i32, i32
  }
  func.func @transform_1(%arg0: i32) -> (i32, i32) {
    %c0_i32 = arith.constant 0 : i32
    %c0_i32_0 = arith.constant 0 : i32
    return %c0_i32, %arg0 : i32, i32
  }
  func.func @transform_2(%arg0: i32) -> (i32, i32) {
    %c0_i32 = arith.constant 0 : i32
    %c0_i32_0 = arith.constant 0 : i32
    %c0_i32_1 = arith.constant 0 : i32
    return %c0_i32, %c0_i32_0 : i32, i32
  }
  func.func @transform_3(%arg0: i32) -> (i32, i32) {
    %c0_i32 = arith.constant 0 : i32
    %c0_i32_0 = arith.constant 0 : i32
    return %c0_i32, %arg0 : i32, i32
  }
  func.func @transform_4(%arg0: i32) -> (i32, i32) {
    %c0_i32 = arith.constant 0 : i32
    %c0_i32_0 = arith.constant 0 : i32
    return %c0_i32, %arg0 : i32, i32
  }
}

module attributes {stable_mosaic.version = 11 : i64} {
  func.func @_mm_kernel(%arg0: i32, %arg1: memref<128x288xbf16, #tpu.memory_space<vmem>>, %arg2: memref<288x512xbf16, #tpu.memory_space<vmem>>, %arg3: memref<128x1xf32, #tpu.memory_space<vmem>>, %arg4: memref<128x512xbf16, #tpu.memory_space<vmem>>) attributes {dimension_semantics = [#tpu.dimension_semantics<parallel>], iteration_bounds = array<i64: 1>, scalar_prefetch = 0 : i64, scratch_operands = 0 : i64, tpu.core_type = #tpu.core_type<tc>, window_params = [{pipeline_mode = #tpu.pipeline_mode<synchronous>, transform_indices = @transform_0, window_bounds = array<i64: 128, 288>}, {transform_indices = @transform_1, window_bounds = array<i64: 288, 512>}, {pipeline_mode = #tpu.pipeline_mode<synchronous>, transform_indices = @transform_2, window_bounds = array<i64: 128, 1>}, {transform_indices = @transform_3, window_bounds = array<i64: 128, 512>}]} {
    %c0 = arith.constant 0 : index
    %c0_0 = arith.constant 0 : index
    %0 = vector.load %arg1[%c0, %c0_0] : memref<128x288xbf16, #tpu.memory_space<vmem>>, vector<128x288xbf16>
    %c0_1 = arith.constant 0 : index
    %c0_2 = arith.constant 0 : index
    %1 = vector.load %arg2[%c0_1, %c0_2] : memref<288x512xbf16, #tpu.memory_space<vmem>>, vector<288x512xbf16>
    %cst = arith.constant dense<0.000000e+00> : vector<128x512xf32>
    %2 = tpu.matmul %0, %1, %cst {dimension_numbers = #tpu.dot_dimension_numbers<[1], [0], [0], [1], [0, 0, 1, 1], [], []>} : vector<128x288xbf16>, vector<288x512xbf16>, vector<128x512xf32> -> vector<128x512xf32>
    %c0_3 = arith.constant 0 : index
    %c0_4 = arith.constant 0 : index
    %3 = vector.load %arg3[%c0_3, %c0_4] : memref<128x1xf32, #tpu.memory_space<vmem>>, vector<128x1xf32>
    %4 = vector.broadcast %3 : vector<128x1xf32> to vector<128x512xf32>
    %5 = arith.addf %2, %4 : vector<128x512xf32>
    %6 = arith.truncf %5 : vector<128x512xf32> to vector<128x512xbf16>
    %c0_5 = arith.constant 0 : index
    %c0_6 = arith.constant 0 : index
    %7 = vector.load %arg4[%c0_5, %c0_6] : memref<128x512xbf16, #tpu.memory_space<vmem>>, vector<128x512xbf16>
    tpu.vector_store %arg4[%c0_5, %c0_6], %6 {strides = array<i32>} : memref<128x512xbf16, #tpu.memory_space<vmem>>, vector<128x512xbf16>,
    return
  }
  func.func @transform_0(%arg0: i32) -> (i32, i32) {
    %c0_i32 = arith.constant 0 : i32
    %c0_i32_0 = arith.constant 0 : i32
    %c0_i32_1 = arith.constant 0 : i32
    return %c0_i32, %c0_i32_0 : i32, i32
  }
  func.func @transform_1(%arg0: i32) -> (i32, i32) {
    %c0_i32 = arith.constant 0 : i32
    %c0_i32_0 = arith.constant 0 : i32
    return %c0_i32, %arg0 : i32, i32
  }
  func.func @transform_2(%arg0: i32) -> (i32, i32) {
    %c0_i32 = arith.constant 0 : i32
    %c0_i32_0 = arith.constant 0 : i32
    %c0_i32_1 = arith.constant 0 : i32
    return %c0_i32, %c0_i32_0 : i32, i32
  }
  func.func @transform_3(%arg0: i32) -> (i32, i32) {
    %c0_i32 = arith.constant 0 : i32
    %c0_i32_0 = arith.constant 0 : i32
    return %c0_i32, %arg0 : i32, i32
  }
}

module attributes {stable_mosaic.version = 11 : i64} {
  func.func @_mm_kernel(%arg0: i32, %arg1: memref<1x288xbf16, #tpu.memory_space<vmem>>, %arg2: memref<288x1024xbf16, #tpu.memory_space<vmem>>, %arg3: memref<1x1xf32, #tpu.memory_space<vmem>>, %arg4: memref<1x1024xf32, #tpu.memory_space<vmem>>) attributes {dimension_semantics = [#tpu.dimension_semantics<parallel>], iteration_bounds = array<i64: 2>, scalar_prefetch = 0 : i64, scratch_operands = 0 : i64, tpu.core_type = #tpu.core_type<tc>, window_params = [{pipeline_mode = #tpu.pipeline_mode<synchronous>, transform_indices = @transform_0, window_bounds = array<i64: 1, 288>}, {transform_indices = @transform_1, window_bounds = array<i64: 288, 1024>}, {pipeline_mode = #tpu.pipeline_mode<synchronous>, transform_indices = @transform_2, window_bounds = array<i64: 1, 1>}, {transform_indices = @transform_3, window_bounds = array<i64: 1, 1024>}]} {
    %c0 = arith.constant 0 : index
    %c0_0 = arith.constant 0 : index
    %0 = vector.load %arg1[%c0, %c0_0] : memref<1x288xbf16, #tpu.memory_space<vmem>>, vector<1x288xbf16>
    %c0_1 = arith.constant 0 : index
    %c0_2 = arith.constant 0 : index
    %1 = vector.load %arg2[%c0_1, %c0_2] : memref<288x1024xbf16, #tpu.memory_space<vmem>>, vector<288x1024xbf16>
    %cst = arith.constant dense<0.000000e+00> : vector<1x1024xf32>
    %2 = tpu.matmul %0, %1, %cst {dimension_numbers = #tpu.dot_dimension_numbers<[1], [0], [0], [1], [0, 0, 1, 1], [], []>} : vector<1x288xbf16>, vector<288x1024xbf16>, vector<1x1024xf32> -> vector<1x1024xf32>
    %c0_3 = arith.constant 0 : index
    %c0_4 = arith.constant 0 : index
    %3 = vector.load %arg3[%c0_3, %c0_4] : memref<1x1xf32, #tpu.memory_space<vmem>>, vector<1x1xf32>
    %4 = vector.broadcast %3 : vector<1x1xf32> to vector<1x1024xf32>
    %5 = arith.addf %2, %4 : vector<1x1024xf32>
    %c0_5 = arith.constant 0 : index
    %c0_6 = arith.constant 0 : index
    %6 = vector.load %arg4[%c0_5, %c0_6] : memref<1x1024xf32, #tpu.memory_space<vmem>>, vector<1x1024xf32>
    tpu.vector_store %arg4[%c0_5, %c0_6], %5 {strides = array<i32>} : memref<1x1024xf32, #tpu.memory_space<vmem>>, vector<1x1024xf32>,
    return
  }
  func.func @transform_0(%arg0: i32) -> (i32, i32) {
    %c0_i32 = arith.constant 0 : i32
    %c0_i32_0 = arith.constant 0 : i32
    %c0_i32_1 = arith.constant 0 : i32
    return %c0_i32, %c0_i32_0 : i32, i32
  }
  func.func @transform_1(%arg0: i32) -> (i32, i32) {
    %c0_i32 = arith.constant 0 : i32
    %c0_i32_0 = arith.constant 0 : i32
    return %c0_i32, %arg0 : i32, i32
  }
  func.func @transform_2(%arg0: i32) -> (i32, i32) {
    %c0_i32 = arith.constant 0 : i32
    %c0_i32_0 = arith.constant 0 : i32
    %c0_i32_1 = arith.constant 0 : i32
    return %c0_i32, %c0_i32_0 : i32, i32
  }
  func.func @transform_3(%arg0: i32) -> (i32, i32) {
    %c0_i32 = arith.constant 0 : i32
    %c0_i32_0 = arith.constant 0 : i32
    return %c0_i32, %arg0 : i32, i32
  }
}

module attributes {stable_mosaic.version = 11 : i64} {
  func.func @_mm_kernel(%arg0: i32, %arg1: memref<64x9xbf16, #tpu.memory_space<vmem>>, %arg2: memref<9x512xbf16, #tpu.memory_space<vmem>>, %arg3: memref<64x1xf32, #tpu.memory_space<vmem>>, %arg4: memref<64x512xf32, #tpu.memory_space<vmem>>, %arg5: memref<64x512xbf16, #tpu.memory_space<vmem>>) attributes {dimension_semantics = [#tpu.dimension_semantics<parallel>], iteration_bounds = array<i64: 1>, scalar_prefetch = 0 : i64, scratch_operands = 0 : i64, tpu.core_type = #tpu.core_type<tc>, window_params = [{pipeline_mode = #tpu.pipeline_mode<synchronous>, transform_indices = @transform_0, window_bounds = array<i64: 64, 9>}, {transform_indices = @transform_1, window_bounds = array<i64: 9, 512>}, {pipeline_mode = #tpu.pipeline_mode<synchronous>, transform_indices = @transform_2, window_bounds = array<i64: 64, 1>}, {transform_indices = @transform_3, window_bounds = array<i64: 64, 512>}, {transform_indices = @transform_4, window_bounds = array<i64: 64, 512>}]} {
    %c0 = arith.constant 0 : index
    %c0_0 = arith.constant 0 : index
    %0 = vector.load %arg1[%c0, %c0_0] : memref<64x9xbf16, #tpu.memory_space<vmem>>, vector<64x9xbf16>
    %1 = arith.extf %0 : vector<64x9xbf16> to vector<64x9xf32>
    %c0_1 = arith.constant 0 : index
    %c0_2 = arith.constant 0 : index
    %2 = vector.load %arg2[%c0_1, %c0_2] : memref<9x512xbf16, #tpu.memory_space<vmem>>, vector<9x512xbf16>
    %3 = arith.extf %2 : vector<9x512xbf16> to vector<9x512xf32>
    %4 = vector.extract_strided_slice %1 {offsets = [0, 0], sizes = [64, 1], strides = [1, 1]} : vector<64x9xf32> to vector<64x1xf32>
    %5 = vector.extract_strided_slice %3 {offsets = [0, 0], sizes = [1, 512], strides = [1, 1]} : vector<9x512xf32> to vector<1x512xf32>
    %6 = vector.broadcast %4 : vector<64x1xf32> to vector<64x512xf32>
    %7 = vector.broadcast %5 : vector<1x512xf32> to vector<64x512xf32>
    %8 = arith.mulf %6, %7 : vector<64x512xf32>
    %9 = vector.extract_strided_slice %1 {offsets = [0, 1], sizes = [64, 1], strides = [1, 1]} : vector<64x9xf32> to vector<64x1xf32>
    %10 = vector.extract_strided_slice %3 {offsets = [1, 0], sizes = [1, 512], strides = [1, 1]} : vector<9x512xf32> to vector<1x512xf32>
    %11 = vector.broadcast %9 : vector<64x1xf32> to vector<64x512xf32>
    %12 = vector.broadcast %10 : vector<1x512xf32> to vector<64x512xf32>
    %13 = arith.mulf %11, %12 : vector<64x512xf32>
    %14 = arith.addf %8, %13 : vector<64x512xf32>
    %15 = vector.extract_strided_slice %1 {offsets = [0, 2], sizes = [64, 1], strides = [1, 1]} : vector<64x9xf32> to vector<64x1xf32>
    %16 = vector.extract_strided_slice %3 {offsets = [2, 0], sizes = [1, 512], strides = [1, 1]} : vector<9x512xf32> to vector<1x512xf32>
    %17 = vector.broadcast %15 : vector<64x1xf32> to vector<64x512xf32>
    %18 = vector.broadcast %16 : vector<1x512xf32> to vector<64x512xf32>
    %19 = arith.mulf %17, %18 : vector<64x512xf32>
    %20 = arith.addf %14, %19 : vector<64x512xf32>
    %21 = vector.extract_strided_slice %1 {offsets = [0, 3], sizes = [64, 1], strides = [1, 1]} : vector<64x9xf32> to vector<64x1xf32>
    %22 = vector.extract_strided_slice %3 {offsets = [3, 0], sizes = [1, 512], strides = [1, 1]} : vector<9x512xf32> to vector<1x512xf32>
    %23 = vector.broadcast %21 : vector<64x1xf32> to vector<64x512xf32>
    %24 = vector.broadcast %22 : vector<1x512xf32> to vector<64x512xf32>
    %25 = arith.mulf %23, %24 : vector<64x512xf32>
    %26 = arith.addf %20, %25 : vector<64x512xf32>
    %27 = vector.extract_strided_slice %1 {offsets = [0, 4], sizes = [64, 1], strides = [1, 1]} : vector<64x9xf32> to vector<64x1xf32>
    %28 = vector.extract_strided_slice %3 {offsets = [4, 0], sizes = [1, 512], strides = [1, 1]} : vector<9x512xf32> to vector<1x512xf32>
    %29 = vector.broadcast %27 : vector<64x1xf32> to vector<64x512xf32>
    %30 = vector.broadcast %28 : vector<1x512xf32> to vector<64x512xf32>
    %31 = arith.mulf %29, %30 : vector<64x512xf32>
    %32 = arith.addf %26, %31 : vector<64x512xf32>
    %33 = vector.extract_strided_slice %1 {offsets = [0, 5], sizes = [64, 1], strides = [1, 1]} : vector<64x9xf32> to vector<64x1xf32>
    %34 = vector.extract_strided_slice %3 {offsets = [5, 0], sizes = [1, 512], strides = [1, 1]} : vector<9x512xf32> to vector<1x512xf32>
    %35 = vector.broadcast %33 : vector<64x1xf32> to vector<64x512xf32>
    %36 = vector.broadcast %34 : vector<1x512xf32> to vector<64x512xf32>
    %37 = arith.mulf %35, %36 : vector<64x512xf32>
    %38 = arith.addf %32, %37 : vector<64x512xf32>
    %39 = vector.extract_strided_slice %1 {offsets = [0, 6], sizes = [64, 1], strides = [1, 1]} : vector<64x9xf32> to vector<64x1xf32>
    %40 = vector.extract_strided_slice %3 {offsets = [6, 0], sizes = [1, 512], strides = [1, 1]} : vector<9x512xf32> to vector<1x512xf32>
    %41 = vector.broadcast %39 : vector<64x1xf32> to vector<64x512xf32>
    %42 = vector.broadcast %40 : vector<1x512xf32> to vector<64x512xf32>
    %43 = arith.mulf %41, %42 : vector<64x512xf32>
    %44 = arith.addf %38, %43 : vector<64x512xf32>
    %45 = vector.extract_strided_slice %1 {offsets = [0, 7], sizes = [64, 1], strides = [1, 1]} : vector<64x9xf32> to vector<64x1xf32>
    %46 = vector.extract_strided_slice %3 {offsets = [7, 0], sizes = [1, 512], strides = [1, 1]} : vector<9x512xf32> to vector<1x512xf32>
    %47 = vector.broadcast %45 : vector<64x1xf32> to vector<64x512xf32>
    %48 = vector.broadcast %46 : vector<1x512xf32> to vector<64x512xf32>
    %49 = arith.mulf %47, %48 : vector<64x512xf32>
    %50 = arith.addf %44, %49 : vector<64x512xf32>
    %51 = vector.extract_strided_slice %1 {offsets = [0, 8], sizes = [64, 1], strides = [1, 1]} : vector<64x9xf32> to vector<64x1xf32>
    %52 = vector.extract_strided_slice %3 {offsets = [8, 0], sizes = [1, 512], strides = [1, 1]} : vector<9x512xf32> to vector<1x512xf32>
    %53 = vector.broadcast %51 : vector<64x1xf32> to vector<64x512xf32>
    %54 = vector.broadcast %52 : vector<1x512xf32> to vector<64x512xf32>
    %55 = arith.mulf %53, %54 : vector<64x512xf32>
    %56 = arith.addf %50, %55 : vector<64x512xf32>
    %c0_3 = arith.constant 0 : index
    %c0_4 = arith.constant 0 : index
    %57 = vector.load %arg3[%c0_3, %c0_4] : memref<64x1xf32, #tpu.memory_space<vmem>>, vector<64x1xf32>
    %58 = vector.broadcast %57 : vector<64x1xf32> to vector<64x512xf32>
    %59 = arith.addf %56, %58 : vector<64x512xf32>
    %c0_5 = arith.constant 0 : index
    %c0_6 = arith.constant 0 : index
    %60 = vector.load %arg4[%c0_5, %c0_6] : memref<64x512xf32, #tpu.memory_space<vmem>>, vector<64x512xf32>
    %61 = arith.addf %59, %60 : vector<64x512xf32>
    %62 = arith.truncf %61 : vector<64x512xf32> to vector<64x512xbf16>
    %c0_7 = arith.constant 0 : index
    %c0_8 = arith.constant 0 : index
    %63 = vector.load %arg5[%c0_7, %c0_8] : memref<64x512xbf16, #tpu.memory_space<vmem>>, vector<64x512xbf16>
    tpu.vector_store %arg5[%c0_7, %c0_8], %62 {strides = array<i32>} : memref<64x512xbf16, #tpu.memory_space<vmem>>, vector<64x512xbf16>,
    return
  }
  func.func @transform_0(%arg0: i32) -> (i32, i32) {
    %c0_i32 = arith.constant 0 : i32
    %c0_i32_0 = arith.constant 0 : i32
    %c0_i32_1 = arith.constant 0 : i32
    return %c0_i32, %c0_i32_0 : i32, i32
  }
  func.func @transform_1(%arg0: i32) -> (i32, i32) {
    %c0_i32 = arith.constant 0 : i32
    %c0_i32_0 = arith.constant 0 : i32
    return %c0_i32, %arg0 : i32, i32
  }
  func.func @transform_2(%arg0: i32) -> (i32, i32) {
    %c0_i32 = arith.constant 0 : i32
    %c0_i32_0 = arith.constant 0 : i32
    %c0_i32_1 = arith.constant 0 : i32
    return %c0_i32, %c0_i32_0 : i32, i32
  }
  func.func @transform_3(%arg0: i32) -> (i32, i32) {
    %c0_i32 = arith.constant 0 : i32
    %c0_i32_0 = arith.constant 0 : i32
    return %c0_i32, %arg0 : i32, i32
  }
  func.func @transform_4(%arg0: i32) -> (i32, i32) {
    %c0_i32 = arith.constant 0 : i32
    %c0_i32_0 = arith.constant 0 : i32
    return %c0_i32, %arg0 : i32, i32
  }
}

module attributes {stable_mosaic.version = 11 : i64} {
  func.func @_mm_kernel(%arg0: i32, %arg1: memref<64x576xbf16, #tpu.memory_space<vmem>>, %arg2: memref<576x128xbf16, #tpu.memory_space<vmem>>, %arg3: memref<64x1xf32, #tpu.memory_space<vmem>>, %arg4: memref<64x128xf32, #tpu.memory_space<vmem>>) attributes {dimension_semantics = [#tpu.dimension_semantics<parallel>], iteration_bounds = array<i64: 1>, scalar_prefetch = 0 : i64, scratch_operands = 0 : i64, tpu.core_type = #tpu.core_type<tc>, window_params = [{pipeline_mode = #tpu.pipeline_mode<synchronous>, transform_indices = @transform_0, window_bounds = array<i64: 64, 576>}, {transform_indices = @transform_1, window_bounds = array<i64: 576, 128>}, {pipeline_mode = #tpu.pipeline_mode<synchronous>, transform_indices = @transform_2, window_bounds = array<i64: 64, 1>}, {transform_indices = @transform_3, window_bounds = array<i64: 64, 128>}]} {
    %c0 = arith.constant 0 : index
    %c0_0 = arith.constant 0 : index
    %0 = vector.load %arg1[%c0, %c0_0] : memref<64x576xbf16, #tpu.memory_space<vmem>>, vector<64x576xbf16>
    %c0_1 = arith.constant 0 : index
    %c0_2 = arith.constant 0 : index
    %1 = vector.load %arg2[%c0_1, %c0_2] : memref<576x128xbf16, #tpu.memory_space<vmem>>, vector<576x128xbf16>
    %cst = arith.constant dense<0.000000e+00> : vector<64x128xf32>
    %2 = tpu.matmul %0, %1, %cst {dimension_numbers = #tpu.dot_dimension_numbers<[1], [0], [0], [1], [0, 0, 1, 1], [], []>} : vector<64x576xbf16>, vector<576x128xbf16>, vector<64x128xf32> -> vector<64x128xf32>
    %c0_3 = arith.constant 0 : index
    %c0_4 = arith.constant 0 : index
    %3 = vector.load %arg3[%c0_3, %c0_4] : memref<64x1xf32, #tpu.memory_space<vmem>>, vector<64x1xf32>
    %4 = vector.broadcast %3 : vector<64x1xf32> to vector<64x128xf32>
    %5 = arith.addf %2, %4 : vector<64x128xf32>
    %c0_5 = arith.constant 0 : index
    %c0_6 = arith.constant 0 : index
    %6 = vector.load %arg4[%c0_5, %c0_6] : memref<64x128xf32, #tpu.memory_space<vmem>>, vector<64x128xf32>
    tpu.vector_store %arg4[%c0_5, %c0_6], %5 {strides = array<i32>} : memref<64x128xf32, #tpu.memory_space<vmem>>, vector<64x128xf32>,
    return
  }
  func.func @transform_0(%arg0: i32) -> (i32, i32) {
    %c0_i32 = arith.constant 0 : i32
    %c0_i32_0 = arith.constant 0 : i32
    %c0_i32_1 = arith.constant 0 : i32
    return %c0_i32, %c0_i32_0 : i32, i32
  }
  func.func @transform_1(%arg0: i32) -> (i32, i32) {
    %c0_i32 = arith.constant 0 : i32
    %c0_i32_0 = arith.constant 0 : i32
    return %c0_i32, %arg0 : i32, i32
  }
  func.func @transform_2(%arg0: i32) -> (i32, i32) {
    %c0_i32 = arith.constant 0 : i32
    %c0_i32_0 = arith.constant 0 : i32
    %c0_i32_1 = arith.constant 0 : i32
    return %c0_i32, %c0_i32_0 : i32, i32
  }
  func.func @transform_3(%arg0: i32) -> (i32, i32) {
    %c0_i32 = arith.constant 0 : i32
    %c0_i32_0 = arith.constant 0 : i32
    return %c0_i32, %arg0 : i32, i32
  }
}

module attributes {stable_mosaic.version = 11 : i64} {
  func.func @_mm_kernel(%arg0: i32, %arg1: memref<64x576xbf16, #tpu.memory_space<vmem>>, %arg2: memref<576x128xbf16, #tpu.memory_space<vmem>>, %arg3: memref<64x1xf32, #tpu.memory_space<vmem>>, %arg4: memref<64x128xf32, #tpu.memory_space<vmem>>, %arg5: memref<64x128xf32, #tpu.memory_space<vmem>>) attributes {dimension_semantics = [#tpu.dimension_semantics<parallel>], iteration_bounds = array<i64: 1>, scalar_prefetch = 0 : i64, scratch_operands = 0 : i64, tpu.core_type = #tpu.core_type<tc>, window_params = [{pipeline_mode = #tpu.pipeline_mode<synchronous>, transform_indices = @transform_0, window_bounds = array<i64: 64, 576>}, {transform_indices = @transform_1, window_bounds = array<i64: 576, 128>}, {pipeline_mode = #tpu.pipeline_mode<synchronous>, transform_indices = @transform_2, window_bounds = array<i64: 64, 1>}, {transform_indices = @transform_3, window_bounds = array<i64: 64, 128>}, {transform_indices = @transform_4, window_bounds = array<i64: 64, 128>}]} {
    %c0 = arith.constant 0 : index
    %c0_0 = arith.constant 0 : index
    %0 = vector.load %arg1[%c0, %c0_0] : memref<64x576xbf16, #tpu.memory_space<vmem>>, vector<64x576xbf16>
    %c0_1 = arith.constant 0 : index
    %c0_2 = arith.constant 0 : index
    %1 = vector.load %arg2[%c0_1, %c0_2] : memref<576x128xbf16, #tpu.memory_space<vmem>>, vector<576x128xbf16>
    %cst = arith.constant dense<0.000000e+00> : vector<64x128xf32>
    %2 = tpu.matmul %0, %1, %cst {dimension_numbers = #tpu.dot_dimension_numbers<[1], [0], [0], [1], [0, 0, 1, 1], [], []>} : vector<64x576xbf16>, vector<576x128xbf16>, vector<64x128xf32> -> vector<64x128xf32>
    %c0_3 = arith.constant 0 : index
    %c0_4 = arith.constant 0 : index
    %3 = vector.load %arg3[%c0_3, %c0_4] : memref<64x1xf32, #tpu.memory_space<vmem>>, vector<64x1xf32>
    %4 = vector.broadcast %3 : vector<64x1xf32> to vector<64x128xf32>
    %5 = arith.addf %2, %4 : vector<64x128xf32>
    %c0_5 = arith.constant 0 : index
    %c0_6 = arith.constant 0 : index
    %6 = vector.load %arg4[%c0_5, %c0_6] : memref<64x128xf32, #tpu.memory_space<vmem>>, vector<64x128xf32>
    %7 = arith.addf %5, %6 : vector<64x128xf32>
    %cst_7 = arith.constant 0.000000e+00 : f32
    %8 = vector.broadcast %cst_7 : f32 to vector<64x128xf32>
    %9 = arith.maximumf %7, %8 : vector<64x128xf32>
    %c0_8 = arith.constant 0 : index
    %c0_9 = arith.constant 0 : index
    %10 = vector.load %arg5[%c0_8, %c0_9] : memref<64x128xf32, #tpu.memory_space<vmem>>, vector<64x128xf32>
    tpu.vector_store %arg5[%c0_8, %c0_9], %9 {strides = array<i32>} : memref<64x128xf32, #tpu.memory_space<vmem>>, vector<64x128xf32>,
    return
  }
  func.func @transform_0(%arg0: i32) -> (i32, i32) {
    %c0_i32 = arith.constant 0 : i32
    %c0_i32_0 = arith.constant 0 : i32
    %c0_i32_1 = arith.constant 0 : i32
    return %c0_i32, %c0_i32_0 : i32, i32
  }
  func.func @transform_1(%arg0: i32) -> (i32, i32) {
    %c0_i32 = arith.constant 0 : i32
    %c0_i32_0 = arith.constant 0 : i32
    return %c0_i32, %arg0 : i32, i32
  }
  func.func @transform_2(%arg0: i32) -> (i32, i32) {
    %c0_i32 = arith.constant 0 : i32
    %c0_i32_0 = arith.constant 0 : i32
    %c0_i32_1 = arith.constant 0 : i32
    return %c0_i32, %c0_i32_0 : i32, i32
  }
  func.func @transform_3(%arg0: i32) -> (i32, i32) {
    %c0_i32 = arith.constant 0 : i32
    %c0_i32_0 = arith.constant 0 : i32
    return %c0_i32, %arg0 : i32, i32
  }
  func.func @transform_4(%arg0: i32) -> (i32, i32) {
    %c0_i32 = arith.constant 0 : i32
    %c0_i32_0 = arith.constant 0 : i32
    return %c0_i32, %arg0 : i32, i32
  }
}

module attributes {stable_mosaic.version = 11 : i64} {
  func.func @_mm_kernel(%arg0: i32, %arg1: memref<64x576xbf16, #tpu.memory_space<vmem>>, %arg2: memref<576x128xbf16, #tpu.memory_space<vmem>>, %arg3: memref<64x1xf32, #tpu.memory_space<vmem>>, %arg4: memref<64x128xf32, #tpu.memory_space<vmem>>, %arg5: memref<64x128xf32, #tpu.memory_space<vmem>>) attributes {dimension_semantics = [#tpu.dimension_semantics<parallel>], iteration_bounds = array<i64: 1>, scalar_prefetch = 0 : i64, scratch_operands = 0 : i64, tpu.core_type = #tpu.core_type<tc>, window_params = [{pipeline_mode = #tpu.pipeline_mode<synchronous>, transform_indices = @transform_0, window_bounds = array<i64: 64, 576>}, {transform_indices = @transform_1, window_bounds = array<i64: 576, 128>}, {pipeline_mode = #tpu.pipeline_mode<synchronous>, transform_indices = @transform_2, window_bounds = array<i64: 64, 1>}, {transform_indices = @transform_3, window_bounds = array<i64: 64, 128>}, {transform_indices = @transform_4, window_bounds = array<i64: 64, 128>}]} {
    %c0 = arith.constant 0 : index
    %c0_0 = arith.constant 0 : index
    %0 = vector.load %arg1[%c0, %c0_0] : memref<64x576xbf16, #tpu.memory_space<vmem>>, vector<64x576xbf16>
    %c0_1 = arith.constant 0 : index
    %c0_2 = arith.constant 0 : index
    %1 = vector.load %arg2[%c0_1, %c0_2] : memref<576x128xbf16, #tpu.memory_space<vmem>>, vector<576x128xbf16>
    %cst = arith.constant dense<0.000000e+00> : vector<64x128xf32>
    %2 = tpu.matmul %0, %1, %cst {dimension_numbers = #tpu.dot_dimension_numbers<[1], [0], [0], [1], [0, 0, 1, 1], [], []>} : vector<64x576xbf16>, vector<576x128xbf16>, vector<64x128xf32> -> vector<64x128xf32>
    %c0_3 = arith.constant 0 : index
    %c0_4 = arith.constant 0 : index
    %3 = vector.load %arg3[%c0_3, %c0_4] : memref<64x1xf32, #tpu.memory_space<vmem>>, vector<64x1xf32>
    %4 = vector.broadcast %3 : vector<64x1xf32> to vector<64x128xf32>
    %5 = arith.addf %2, %4 : vector<64x128xf32>
    %c0_5 = arith.constant 0 : index
    %c0_6 = arith.constant 0 : index
    %6 = vector.load %arg4[%c0_5, %c0_6] : memref<64x128xf32, #tpu.memory_space<vmem>>, vector<64x128xf32>
    %7 = arith.addf %5, %6 : vector<64x128xf32>
    %c0_7 = arith.constant 0 : index
    %c0_8 = arith.constant 0 : index
    %8 = vector.load %arg5[%c0_7, %c0_8] : memref<64x128xf32, #tpu.memory_space<vmem>>, vector<64x128xf32>
    tpu.vector_store %arg5[%c0_7, %c0_8], %7 {strides = array<i32>} : memref<64x128xf32, #tpu.memory_space<vmem>>, vector<64x128xf32>,
    return
  }
  func.func @transform_0(%arg0: i32) -> (i32, i32) {
    %c0_i32 = arith.constant 0 : i32
    %c0_i32_0 = arith.constant 0 : i32
    %c0_i32_1 = arith.constant 0 : i32
    return %c0_i32, %c0_i32_0 : i32, i32
  }
  func.func @transform_1(%arg0: i32) -> (i32, i32) {
    %c0_i32 = arith.constant 0 : i32
    %c0_i32_0 = arith.constant 0 : i32
    return %c0_i32, %arg0 : i32, i32
  }
  func.func @transform_2(%arg0: i32) -> (i32, i32) {
    %c0_i32 = arith.constant 0 : i32
    %c0_i32_0 = arith.constant 0 : i32
    %c0_i32_1 = arith.constant 0 : i32
    return %c0_i32, %c0_i32_0 : i32, i32
  }
  func.func @transform_3(%arg0: i32) -> (i32, i32) {
    %c0_i32 = arith.constant 0 : i32
    %c0_i32_0 = arith.constant 0 : i32
    return %c0_i32, %arg0 : i32, i32
  }
  func.func @transform_4(%arg0: i32) -> (i32, i32) {
    %c0_i32 = arith.constant 0 : i32
    %c0_i32_0 = arith.constant 0 : i32
    return %c0_i32, %arg0 : i32, i32
  }
}

</mosaic_0001>

<llo_original>
// kernel: chained_forward.18
$region0: #{chained_forward.18}
  #allocation0 [shape = 'u32[]', space=smem, size = 0x4, offset = 0x4, fixed_abs, tag = 'smem constant byte address 0x4 - core index']
  #allocation1 [shape = 'u32[72,128]{1,0:T(1,128)}', space=vmem, size = 0x9000, scoped, tag = 'internal scratch']
  %s0 = inlined_call_operand.hbm [shape: bf16[64,512], index: 0, kind: input, shape index: {}]
  %s1 = inlined_call_operand.vmem [shape: bf16[512,128], index: 1, kind: input, shape index: {}]
  %s2 = inlined_call_operand.hbm [shape: f32[64,1], index: 2, kind: input, shape index: {}]
  %s3 = inlined_call_operand.vmem [shape: f32[64,128], index: 3, kind: output, shape index: {}]
  %s4 = sld [smem:[#allocation0]]
  $region30: #{chained_forward.18} parent=0
    _
  %s6 = ssub.s32 1, %s4
  %s7 = scalar_select 0, %s6, %s4
  $region1: #{chained_forward.18} parent=0
    #allocation2 [shape = 'u8[65536]{0}', space=vmem, size = 0x10000, scoped, tag = 'input window, operand 0, single buffered']
    #allocation3 [shape = 's32[1]{0}', space=sflag, size = 0x4, scoped, tag = 'scoped memory for chained_forward.18']
    #allocation4 [shape = 'u8[32768]{0}', space=vmem, size = 0x8000, scoped, tag = 'input window, operand 2, single buffered']
    #allocation5 [shape = 's32[1]{0}', space=sflag, size = 0x4, scoped, tag = 'scoped memory for chained_forward.18']
    %8 = vsyncpa [#allocation3], 0
    %9 = vsyncpa [#allocation5], 0
    // Predicated region
    $region2: #{chained_forward.18} parent=1 // pred_check
      _
    $region3: #{chained_forward.18} parent=1 // pred_check_branch
      %11 = sbr.rel (0) target = $region5
    $region4: #{chained_forward.18} parent=1 // pred_region
      %13 = vsyncadd [#allocation3], 0
      %s14 = sshll.u32 %s0, 4
      %s15 = int_to_ptr.hbm [resolvable:$true] %s14
      %s16 = sshll.u32 [#allocation2], 4
      %s17 = int_to_ptr.vmem [resolvable:$true] %s16
      %22 = dma.hbm_to_vmem [thread:$0]  %s15, 2048, %s17, [#allocation3], 256, 256, 16
    $region5: #{chained_forward.18} parent=1 // pred_fallthru
      _
    // Predicated region
    $region6: #{chained_forward.18} parent=1 // pred_check
      _
    $region7: #{chained_forward.18} parent=1 // pred_check_branch
      %24 = sbr.rel (0) target = $region9
    $region8: #{chained_forward.18} parent=1 // pred_region
      _
    $region9: #{chained_forward.18} parent=1 // pred_fallthru
      _
    // Predicated region
    $region10: #{chained_forward.18} parent=1 // pred_check
      _
    $region11: #{chained_forward.18} parent=1 // pred_check_branch
      %26 = sbr.rel (0) target = $region13
    $region12: #{chained_forward.18} parent=1 // pred_region
      %28 = vsyncadd [#allocation5], 0
      %s29 = sshll.u32 %s2, 4
      %s30 = int_to_ptr.hbm [resolvable:$true] %s29
      %s31 = sshll.u32 [#allocation4], 4
      %s32 = int_to_ptr.vmem [resolvable:$true] %s31
      %37 = dma.hbm_to_vmem [thread:$0]  %s30, 1024, %s32, [#allocation5], 128, 128, 8
    $region13: #{chained_forward.18} parent=1 // pred_fallthru
      _
    // Predicated region
    $region14: #{chained_forward.18} parent=1 // pred_check
      _
    $region15: #{chained_forward.18} parent=1 // pred_check_branch
      %39 = sbr.rel (0) target = $region17
    $region16: #{chained_forward.18} parent=1 // pred_region
      %41 = dma.done [#allocation3], 2048
    $region17: #{chained_forward.18} parent=1 // pred_fallthru
      _
    // Predicated region
    $region18: #{chained_forward.18} parent=1 // pred_check
      _
    $region19: #{chained_forward.18} parent=1 // pred_check_branch
      %43 = sbr.rel (0) target = $region21
    $region20: #{chained_forward.18} parent=1 // pred_region
      %45 = dma.done [#allocation5], 1024
    $region21: #{chained_forward.18} parent=1 // pred_fallthru
      _
    %v46 = vld [vmem:[#allocation2] sm:$0xff]
    %v47 = vld [vmem:[#allocation2 + $0x8] sm:$0xff]
    %v48 = vld [vmem:[#allocation2 + $0x10] sm:$0xff]
    %v49 = vld [vmem:[#allocation2 + $0x18] sm:$0xff]
    %v50 = vld [vmem:[#allocation2 + $0x20] sm:$0xff]
    %v51 = vld [vmem:[#allocation2 + $0x28] sm:$0xff]
    %v52 = vld [vmem:[#allocation2 + $0x30] sm:$0xff]
    %v53 = vld [vmem:[#allocation2 + $0x38] sm:$0xff]
    %v54 = vld [vmem:[#allocation2 + $0x40] sm:$0xff]
    %v55 = vld [vmem:[#allocation2 + $0x48] sm:$0xff]
    %v56 = vld [vmem:[#allocation2 + $0x50] sm:$0xff]
    %v57 = vld [vmem:[#allocation2 + $0x58] sm:$0xff]
    %v58 = vld [vmem:[#allocation2 + $0x60] sm:$0xff]
    %v59 = vld [vmem:[#allocation2 + $0x68] sm:$0xff]
    %v60 = vld [vmem:[#allocation2 + $0x70] sm:$0xff]
    %v61 = vld [vmem:[#allocation2 + $0x78] sm:$0xff]
    %v62 = vld [vmem:[%s1] sm:$0xf]
    %v63 = vld [vmem:[%s1 + $0x4] sm:$0xf]
    %v64 = vld [vmem:[%s1 + $0x8] sm:$0xf]
    %v65 = vld [vmem:[%s1 + $0xc] sm:$0xf]
    %v66 = vld [vmem:[%s1 + $0x10] sm:$0xf]
    %v67 = vld [vmem:[%s1 + $0x14] sm:$0xf]
    %v68 = vld [vmem:[%s1 + $0x18] sm:$0xf]
    %v69 = vld [vmem:[%s1 + $0x1c] sm:$0xf]
    %v70 = vld [vmem:[%s1 + $0x20] sm:$0xf]
    %v71 = vld [vmem:[%s1 + $0x24] sm:$0xf]
    %v72 = vld [vmem:[%s1 + $0x28] sm:$0xf]
    %v73 = vld [vmem:[%s1 + $0x2c] sm:$0xf]
    %v74 = vld [vmem:[%s1 + $0x30] sm:$0xf]
    %v75 = vld [vmem:[%s1 + $0x34] sm:$0xf]
    %v76 = vld [vmem:[%s1 + $0x38] sm:$0xf]
    %v77 = vld [vmem:[%s1 + $0x3c] sm:$0xf]
    %v78 = vld [vmem:[%s1 + $0x40] sm:$0xf]
    %v79 = vld [vmem:[%s1 + $0x44] sm:$0xf]
    %v80 = vld [vmem:[%s1 + $0x48] sm:$0xf]
    %v81 = vld [vmem:[%s1 + $0x4c] sm:$0xf]
    %v82 = vld [vmem:[%s1 + $0x50] sm:$0xf]
    %v83 = vld [vmem:[%s1 + $0x54] sm:$0xf]
    %v84 = vld [vmem:[%s1 + $0x58] sm:$0xf]
    %v85 = vld [vmem:[%s1 + $0x5c] sm:$0xf]
    %v86 = vld [vmem:[%s1 + $0x60] sm:$0xf]
    %v87 = vld [vmem:[%s1 + $0x64] sm:$0xf]
    %v88 = vld [vmem:[%s1 + $0x68] sm:$0xf]
    %v89 = vld [vmem:[%s1 + $0x6c] sm:$0xf]
    %v90 = vld [vmem:[%s1 + $0x70] sm:$0xf]
    %v91 = vld [vmem:[%s1 + $0x74] sm:$0xf]
    %v92 = vld [vmem:[%s1 + $0x78] sm:$0xf]
    %v93 = vld [vmem:[%s1 + $0x7c] sm:$0xf]
    %v94 = vld [vmem:[%s1 + $0x80] sm:$0xf]
    %v95 = vld [vmem:[%s1 + $0x84] sm:$0xf]
    %v96 = vld [vmem:[%s1 + $0x88] sm:$0xf]
    %v97 = vld [vmem:[%s1 + $0x8c] sm:$0xf]
    %v98 = vld [vmem:[%s1 + $0x90] sm:$0xf]
    %v99 = vld [vmem:[%s1 + $0x94] sm:$0xf]
    %v100 = vld [vmem:[%s1 + $0x98] sm:$0xf]
    %v101 = vld [vmem:[%s1 + $0x9c] sm:$0xf]
    %v102 = vld [vmem:[%s1 + $0xa0] sm:$0xf]
    %v103 = vld [vmem:[%s1 + $0xa4] sm:$0xf]
    %v104 = vld [vmem:[%s1 + $0xa8] sm:$0xf]
    %v105 = vld [vmem:[%s1 + $0xac] sm:$0xf]
    %v106 = vld [vmem:[%s1 + $0xb0] sm:$0xf]
    %v107 = vld [vmem:[%s1 + $0xb4] sm:$0xf]
    %v108 = vld [vmem:[%s1 + $0xb8] sm:$0xf]
    %v109 = vld [vmem:[%s1 + $0xbc] sm:$0xf]
    %v110 = vld [vmem:[%s1 + $0xc0] sm:$0xf]
    %v111 = vld [vmem:[%s1 + $0xc4] sm:$0xf]
    %v112 = vld [vmem:[%s1 + $0xc8] sm:$0xf]
    %v113 = vld [vmem:[%s1 + $0xcc] sm:$0xf]
    %v114 = vld [vmem:[%s1 + $0xd0] sm:$0xf]
    %v115 = vld [vmem:[%s1 + $0xd4] sm:$0xf]
    %v116 = vld [vmem:[%s1 + $0xd8] sm:$0xf]
    %v117 = vld [vmem:[%s1 + $0xdc] sm:$0xf]
    %v118 = vld [vmem:[%s1 + $0xe0] sm:$0xf]
    %v119 = vld [vmem:[%s1 + $0xe4] sm:$0xf]
    %v120 = vld [vmem:[%s1 + $0xe8] sm:$0xf]
    %v121 = vld [vmem:[%s1 + $0xec] sm:$0xf]
    %v122 = vld [vmem:[%s1 + $0xf0] sm:$0xf]
    %v123 = vld [vmem:[%s1 + $0xf4] sm:$0xf]
    %v124 = vld [vmem:[%s1 + $0xf8] sm:$0xf]
    %v125 = vld [vmem:[%s1 + $0xfc] sm:$0xf]
    %v126 = vld [vmem:[#allocation4] sm:$0xff]
    %v127 = vld [vmem:[#allocation4 + $0x8] sm:$0xff]
    %v128 = vld [vmem:[#allocation4 + $0x10] sm:$0xff]
    %v129 = vld [vmem:[#allocation4 + $0x18] sm:$0xff]
    %v130 = vld [vmem:[#allocation4 + $0x20] sm:$0xff]
    %v131 = vld [vmem:[#allocation4 + $0x28] sm:$0xff]
    %v132 = vld [vmem:[#allocation4 + $0x30] sm:$0xff]
    %v133 = vld [vmem:[#allocation4 + $0x38] sm:$0xff]
    %135 = vset.pattern.permute.xlu0 0
    %136 = vperm.xlu0 %135, %v126
    %v137 = vpop.permute.xlu0 %136
    %140 = vset.pattern.permute.xlu0 0
    %141 = vperm.xlu0 %140, %v127
    %v142 = vpop.permute.xlu0 %141
    %145 = vset.pattern.permute.xlu0 0
    %146 = vperm.xlu0 %145, %v128
    %v147 = vpop.permute.xlu0 %146
    %150 = vset.pattern.permute.xlu0 0
    %151 = vperm.xlu0 %150, %v129
    %v152 = vpop.permute.xlu0 %151
    %155 = vset.pattern.permute.xlu0 0
    %156 = vperm.xlu0 %155, %v130
    %v157 = vpop.permute.xlu0 %156
    %160 = vset.pattern.permute.xlu0 0
    %161 = vperm.xlu0 %160, %v131
    %v162 = vpop.permute.xlu0 %161
    %165 = vset.pattern.permute.xlu0 0
    %166 = vperm.xlu0 %165, %v132
    %v167 = vpop.permute.xlu0 %166
    %170 = vset.pattern.permute.xlu0 0
    %171 = vperm.xlu0 %170, %v133
    %v172 = vpop.permute.xlu0 %171
    %v190 = vunpack.c.l.b16 %v46
    %v191 = vunpack.c.h.b16 %v46
    %v192 = vunpack.c.l.b16 %v47
    %v193 = vunpack.c.h.b16 %v47
    %v194 = vunpack.c.l.b16 %v48
    %v195 = vunpack.c.h.b16 %v48
    %v196 = vunpack.c.l.b16 %v49
    %v197 = vunpack.c.h.b16 %v49
    %v198 = vunpack.c.l.b16 %v50
    %v199 = vunpack.c.h.b16 %v50
    %v200 = vunpack.c.l.b16 %v51
    %v201 = vunpack.c.h.b16 %v51
    %v202 = vunpack.c.l.b16 %v52
    %v203 = vunpack.c.h.b16 %v52
    %v204 = vunpack.c.l.b16 %v53
    %v205 = vunpack.c.h.b16 %v53
    %v206 = vunpack.c.l.b16 %v54
    %v207 = vunpack.c.h.b16 %v54
    %v208 = vunpack.c.l.b16 %v55
    %v209 = vunpack.c.h.b16 %v55
    %v210 = vunpack.c.l.b16 %v56
    %v211 = vunpack.c.h.b16 %v56
    %v212 = vunpack.c.l.b16 %v57
    %v213 = vunpack.c.h.b16 %v57
    %v214 = vunpack.c.l.b16 %v58
    %v215 = vunpack.c.h.b16 %v58
    %v216 = vunpack.c.l.b16 %v59
    %v217 = vunpack.c.h.b16 %v59
    %v218 = vunpack.c.l.b16 %v60
    %v219 = vunpack.c.h.b16 %v60
    %v220 = vunpack.c.l.b16 %v61
    %v221 = vunpack.c.h.b16 %v61
    %v222 = vpack.c.b16 %v194, %v190
    %v223 = vpack.c.b16 %v195, %v191
    %v224 = vpack.c.b16 %v196, %v192
    %v225 = vpack.c.b16 %v197, %v193
    %v226 = vpack.c.b16 %v202, %v198
    %v227 = vpack.c.b16 %v203, %v199
    %v228 = vpack.c.b16 %v204, %v200
    %v229 = vpack.c.b16 %v205, %v201
    %v230 = vpack.c.b16 %v210, %v206
    %v231 = vpack.c.b16 %v211, %v207
    %v232 = vpack.c.b16 %v212, %v208
    %v233 = vpack.c.b16 %v213, %v209
    %v234 = vpack.c.b16 %v218, %v214
    %v235 = vpack.c.b16 %v219, %v215
    %v236 = vpack.c.b16 %v220, %v216
    %v237 = vpack.c.b16 %v221, %v217
    %v318 = vunpack.c.l.b16 %v62
    %v319 = vunpack.c.l.b16 %v63
    %v320 = vunpack.c.l.b16 %v64
    %v321 = vunpack.c.l.b16 %v65
    %v322 = vunpack.c.l.b16 %v66
    %v323 = vunpack.c.l.b16 %v67
    %v324 = vunpack.c.l.b16 %v68
    %v325 = vunpack.c.l.b16 %v69
    %v326 = vunpack.c.l.b16 %v70
    %v327 = vunpack.c.l.b16 %v71
    %v328 = vunpack.c.l.b16 %v72
    %v329 = vunpack.c.l.b16 %v73
    %v330 = vunpack.c.l.b16 %v74
    %v331 = vunpack.c.l.b16 %v75
    %v332 = vunpack.c.l.b16 %v76
    %v333 = vunpack.c.l.b16 %v77
    %v334 = vunpack.c.l.b16 %v78
    %v335 = vunpack.c.l.b16 %v79
    %v336 = vunpack.c.l.b16 %v80
    %v337 = vunpack.c.l.b16 %v81
    %v338 = vunpack.c.l.b16 %v82
    %v339 = vunpack.c.l.b16 %v83
    %v340 = vunpack.c.l.b16 %v84
    %v341 = vunpack.c.l.b16 %v85
    %v342 = vunpack.c.l.b16 %v86
    %v343 = vunpack.c.l.b16 %v87
    %v344 = vunpack.c.l.b16 %v88
    %v345 = vunpack.c.l.b16 %v89
    %v346 = vunpack.c.l.b16 %v90
    %v347 = vunpack.c.l.b16 %v91
    %v348 = vunpack.c.l.b16 %v92
    %v349 = vunpack.c.l.b16 %v93
    %v350 = vunpack.c.l.b16 %v94
    %v351 = vunpack.c.l.b16 %v95
    %v352 = vunpack.c.l.b16 %v96
    %v353 = vunpack.c.l.b16 %v97
    %v354 = vunpack.c.l.b16 %v98
    %v355 = vunpack.c.l.b16 %v99
    %v356 = vunpack.c.l.b16 %v100
    %v357 = vunpack.c.l.b16 %v101
    %v358 = vunpack.c.l.b16 %v102
    %v359 = vunpack.c.l.b16 %v103
    %v360 = vunpack.c.l.b16 %v104
    %v361 = vunpack.c.l.b16 %v105
    %v362 = vunpack.c.l.b16 %v106
    %v363 = vunpack.c.l.b16 %v107
    %v364 = vunpack.c.l.b16 %v108
    %v365 = vunpack.c.l.b16 %v109
    %v366 = vunpack.c.l.b16 %v110
    %v367 = vunpack.c.l.b16 %v111
    %v368 = vunpack.c.l.b16 %v112
    %v369 = vunpack.c.l.b16 %v113
    %v370 = vunpack.c.l.b16 %v114
    %v371 = vunpack.c.l.b16 %v115
    %v372 = vunpack.c.l.b16 %v116
    %v373 = vunpack.c.l.b16 %v117
    %v374 = vunpack.c.l.b16 %v118
    %v375 = vunpack.c.l.b16 %v119
    %v376 = vunpack.c.l.b16 %v120
    %v377 = vunpack.c.l.b16 %v121
    %v378 = vunpack.c.l.b16 %v122
    %v379 = vunpack.c.l.b16 %v123
    %v380 = vunpack.c.l.b16 %v124
    %v381 = vunpack.c.l.b16 %v125
    %v382 = vpack.c.b16 %v319, %v318
    %v383 = vpack.c.b16 %v321, %v320
    %v384 = vpack.c.b16 %v323, %v322
    %v385 = vpack.c.b16 %v325, %v324
    %v386 = vpack.c.b16 %v327, %v326
    %v387 = vpack.c.b16 %v329, %v328
    %v388 = vpack.c.b16 %v331, %v330
    %v389 = vpack.c.b16 %v333, %v332
    %v390 = vpack.c.b16 %v335, %v334
    %v391 = vpack.c.b16 %v337, %v336
    %v392 = vpack.c.b16 %v339, %v338
    %v393 = vpack.c.b16 %v341, %v340
    %v394 = vpack.c.b16 %v343, %v342
    %v395 = vpack.c.b16 %v345, %v344
    %v396 = vpack.c.b16 %v347, %v346
    %v397 = vpack.c.b16 %v349, %v348
    %v398 = vpack.c.b16 %v351, %v350
    %v399 = vpack.c.b16 %v353, %v352
    %v400 = vpack.c.b16 %v355, %v354
    %v401 = vpack.c.b16 %v357, %v356
    %v402 = vpack.c.b16 %v359, %v358
    %v403 = vpack.c.b16 %v361, %v360
    %v404 = vpack.c.b16 %v363, %v362
    %v405 = vpack.c.b16 %v365, %v364
    %v406 = vpack.c.b16 %v367, %v366
    %v407 = vpack.c.b16 %v369, %v368
    %v408 = vpack.c.b16 %v371, %v370
    %v409 = vpack.c.b16 %v373, %v372
    %v410 = vpack.c.b16 %v375, %v374
    %v411 = vpack.c.b16 %v377, %v376
    %v412 = vpack.c.b16 %v379, %v378
    %v413 = vpack.c.b16 %v381, %v380
    %446 = vmatpush.bf16.msra.mxu0 %v389
    %447 = vmatpush.bf16.msra.mxu0 %v388
    %448 = vmatpush.bf16.msra.mxu0 %v387
    %449 = vmatpush.bf16.msra.mxu0 %v386
    %450 = vmatpush.bf16.msra.mxu0 %v385
    %451 = vmatpush.bf16.msra.mxu0 %v384
    %452 = vmatpush.bf16.msra.mxu0 %v383
    %453 = vmatpush.bf16.msra.mxu0 %v382
    %454 = vmatmul.bf16.gmra.mxu0 %v222
    %v455 = vpop.f32.mrf.mxu0
    %v456 = vadd.f32 %v137, %v455
    %v457 = vpop.f32.mrf.mxu0
    %v458 = vadd.f32 %v142, %v457
    %459 = vmatmul.bf16.gmra.mxu0 %v226
    %v460 = vpop.f32.mrf.mxu0
    %v461 = vadd.f32 %v147, %v460
    %v462 = vpop.f32.mrf.mxu0
    %v463 = vadd.f32 %v152, %v462
    %464 = vmatmul.bf16.gmra.mxu0 %v230
    %v465 = vpop.f32.mrf.mxu0
    %v466 = vadd.f32 %v157, %v465
    %v467 = vpop.f32.mrf.mxu0
    %v468 = vadd.f32 %v162, %v467
    %469 = vmatmul.bf16.gmra.mxu0 %v234
    %v470 = vpop.f32.mrf.mxu0
    %v471 = vadd.f32 %v167, %v470
    %v472 = vpop.f32.mrf.mxu0
    %v473 = vadd.f32 %v172, %v472
    %474 = vdwg.mxu0
    %475 = vmatpush.bf16.msra.mxu0 %v397
    %476 = vmatpush.bf16.msra.mxu0 %v396
    %477 = vmatpush.bf16.msra.mxu0 %v395
    %478 = vmatpush.bf16.msra.mxu0 %v394
    %479 = vmatpush.bf16.msra.mxu0 %v393
    %480 = vmatpush.bf16.msra.mxu0 %v392
    %481 = vmatpush.bf16.msra.mxu0 %v391
    %482 = vmatpush.bf16.msra.mxu0 %v390
    %483 = vmatmul.bf16.gmra.mxu0 %v223
    %v484 = vpop.f32.mrf.mxu0
    %v485 = vadd.f32 %v456, %v484
    %v486 = vpop.f32.mrf.mxu0
    %v487 = vadd.f32 %v458, %v486
    %488 = vmatmul.bf16.gmra.mxu0 %v227
    %v489 = vpop.f32.mrf.mxu0
    %v490 = vadd.f32 %v461, %v489
    %v491 = vpop.f32.mrf.mxu0
    %v492 = vadd.f32 %v463, %v491
    %493 = vmatmul.bf16.gmra.mxu0 %v231
    %v494 = vpop.f32.mrf.mxu0
    %v495 = vadd.f32 %v466, %v494
    %v496 = vpop.f32.mrf.mxu0
    %v497 = vadd.f32 %v468, %v496
    %498 = vmatmul.bf16.gmra.mxu0 %v235
    %v499 = vpop.f32.mrf.mxu0
    %v500 = vadd.f32 %v471, %v499
    %v501 = vpop.f32.mrf.mxu0
    %v502 = vadd.f32 %v473, %v501
    %503 = vdwg.mxu0
    %504 = vmatpush.bf16.msra.mxu0 %v405
    %505 = vmatpush.bf16.msra.mxu0 %v404
    %506 = vmatpush.bf16.msra.mxu0 %v403
    %507 = vmatpush.bf16.msra.mxu0 %v402
    %508 = vmatpush.bf16.msra.mxu0 %v401
    %509 = vmatpush.bf16.msra.mxu0 %v400
    %510 = vmatpush.bf16.msra.mxu0 %v399
    %511 = vmatpush.bf16.msra.mxu0 %v398
    %512 = vmatmul.bf16.gmra.mxu0 %v224
    %v513 = vpop.f32.mrf.mxu0
    %v514 = vadd.f32 %v485, %v513
    %v515 = vpop.f32.mrf.mxu0
    %v516 = vadd.f32 %v487, %v515
    %517 = vmatmul.bf16.gmra.mxu0 %v228
    %v518 = vpop.f32.mrf.mxu0
    %v519 = vadd.f32 %v490, %v518
    %v520 = vpop.f32.mrf.mxu0
    %v521 = vadd.f32 %v492, %v520
    %522 = vmatmul.bf16.gmra.mxu0 %v232
    %v523 = vpop.f32.mrf.mxu0
    %v524 = vadd.f32 %v495, %v523
    %v525 = vpop.f32.mrf.mxu0
    %v526 = vadd.f32 %v497, %v525
    %527 = vmatmul.bf16.gmra.mxu0 %v236
    %v528 = vpop.f32.mrf.mxu0
    %v529 = vadd.f32 %v500, %v528
    %v530 = vpop.f32.mrf.mxu0
    %v531 = vadd.f32 %v502, %v530
    %532 = vdwg.mxu0
    %533 = vmatpush.bf16.msra.mxu0 %v413
    %534 = vmatpush.bf16.msra.mxu0 %v412
    %535 = vmatpush.bf16.msra.mxu0 %v411
    %536 = vmatpush.bf16.msra.mxu0 %v410
    %537 = vmatpush.bf16.msra.mxu0 %v409
    %538 = vmatpush.bf16.msra.mxu0 %v408
    %539 = vmatpush.bf16.msra.mxu0 %v407
    %540 = vmatpush.bf16.msra.mxu0 %v406
    %541 = vmatmul.bf16.gmra.mxu0 %v225
    %v542 = vpop.f32.mrf.mxu0
    %v543 = vadd.f32 %v514, %v542
    %v544 = vpop.f32.mrf.mxu0
    %v545 = vadd.f32 %v516, %v544
    %546 = vmatmul.bf16.gmra.mxu0 %v229
    %v547 = vpop.f32.mrf.mxu0
    %v548 = vadd.f32 %v519, %v547
    %v549 = vpop.f32.mrf.mxu0
    %v550 = vadd.f32 %v521, %v549
    %551 = vmatmul.bf16.gmra.mxu0 %v233
    %v552 = vpop.f32.mrf.mxu0
    %v553 = vadd.f32 %v524, %v552
    %v554 = vpop.f32.mrf.mxu0
    %v555 = vadd.f32 %v526, %v554
    %556 = vmatmul.bf16.gmra.mxu0 %v237
    %v557 = vpop.f32.mrf.mxu0
    %v558 = vadd.f32 %v529, %v557
    %v559 = vpop.f32.mrf.mxu0
    %v560 = vadd.f32 %v531, %v559
    %561 = vdwg.mxu0
    %562 = vst [vmem:[%s3] sm:$0xff] %v543
    %563 = vst [vmem:[%s3 + $0x8] sm:$0xff] %v545
    %564 = vst [vmem:[%s3 + $0x10] sm:$0xff] %v548
    %565 = vst [vmem:[%s3 + $0x18] sm:$0xff] %v550
    %566 = vst [vmem:[%s3 + $0x20] sm:$0xff] %v553
    %567 = vst [vmem:[%s3 + $0x28] sm:$0xff] %v555
    %568 = vst [vmem:[%s3 + $0x30] sm:$0xff] %v558
    %569 = vst [vmem:[%s3 + $0x38] sm:$0xff] %v560
    // Predicated region
    $region22: #{chained_forward.18} parent=1 // pred_check
      _
    $region23: #{chained_forward.18} parent=1 // pred_check_branch
      %571 = sbr.rel (0) target = $region25
    $region24: #{chained_forward.18} parent=1 // pred_region
      _
    $region25: #{chained_forward.18} parent=1 // pred_fallthru
      _
    // Predicated region
    $region26: #{chained_forward.18} parent=1 // pred_check
      _
    $region27: #{chained_forward.18} parent=1 // pred_check_branch
      %573 = sbr.rel (0) target = $region29
    $region28: #{chained_forward.18} parent=1 // pred_region
      _
    $region29: #{chained_forward.18} parent=1 // pred_fallthru
      _
    %574 = vsyncpa [#allocation3], 1
    %575 = vsyncpa [#allocation5], 1

// kernel: chained_forward.19
$region0: #{chained_forward.19}
  #allocation0 [shape = 'u32[]', space=smem, size = 0x4, offset = 0x4, fixed_abs, tag = 'smem constant byte address 0x4 - core index']
  #allocation1 [shape = 'u32[72,128]{1,0:T(1,128)}', space=vmem, size = 0x9000, scoped, tag = 'internal scratch']
  %s0 = inlined_call_operand.vmem [shape: bf16[128,576], index: 0, kind: input, shape index: {}]
  %s1 = inlined_call_operand.vmem [shape: bf16[576,128], index: 1, kind: input, shape index: {}]
  %s2 = inlined_call_operand.vmem [shape: f32[128,1], index: 2, kind: input, shape index: {}]
  %s3 = inlined_call_operand.vmem [shape: f32[128,128], index: 3, kind: input, shape index: {}]
  %s4 = inlined_call_operand.vmem [shape: bf16[128,128], index: 4, kind: output, shape index: {}]
  %s5 = sld [smem:[#allocation0]]
  $region26: #{chained_forward.19} parent=0
    _
  %s7 = ssub.s32 1, %s5
  %s8 = scalar_select 0, %s7, %s5
  // Predicated region
  $region2: #{chained_forward.19} parent=0 // pred_check
    _
  $region3: #{chained_forward.19} parent=0 // pred_check_branch
    %10 = sbr.rel (0) target = $region5
  $region4: #{chained_forward.19} parent=0 // pred_region
    _
  $region5: #{chained_forward.19} parent=0 // pred_fallthru
    _
  // Predicated region
  $region6: #{chained_forward.19} parent=0 // pred_check
    _
  $region7: #{chained_forward.19} parent=0 // pred_check_branch
    %12 = sbr.rel (0) target = $region9
  $region8: #{chained_forward.19} parent=0 // pred_region
    _
  $region9: #{chained_forward.19} parent=0 // pred_fallthru
    _
  // Predicated region
  $region10: #{chained_forward.19} parent=0 // pred_check
    _
  $region11: #{chained_forward.19} parent=0 // pred_check_branch
    %14 = sbr.rel (0) target = $region13
  $region12: #{chained_forward.19} parent=0 // pred_region
    _
  $region13: #{chained_forward.19} parent=0 // pred_fallthru
    _
  // Predicated region
  $region14: #{chained_forward.19} parent=0 // pred_check
    _
  $region15: #{chained_forward.19} parent=0 // pred_check_branch
    %16 = sbr.rel (0) target = $region17
  $region16: #{chained_forward.19} parent=0 // pred_region
    _
  $region17: #{chained_forward.19} parent=0 // pred_fallthru
    _
  %v18 = vld [vmem:[%s0] sm:$0xff]
  %v19 = vld [vmem:[%s0 + $0x8] sm:$0xff]
  %v20 = vld [vmem:[%s0 + $0x10] sm:$0xf]
  %v21 = vld [vmem:[%s0 + $0x14] sm:$0xff]
  %v22 = vld [vmem:[%s0 + $0x1c] sm:$0xff]
  %v23 = vld [vmem:[%s0 + $0x24] sm:$0xf]
  %v24 = vld [vmem:[%s0 + $0x28] sm:$0xff]
  %v25 = vld [vmem:[%s0 + $0x30] sm:$0xff]
  %v26 = vld [vmem:[%s0 + $0x38] sm:$0xf]
  %v27 = vld [vmem:[%s0 + $0x3c] sm:$0xff]
  %v28 = vld [vmem:[%s0 + $0x44] sm:$0xff]
  %v29 = vld [vmem:[%s0 + $0x4c] sm:$0xf]
  %v30 = vld [vmem:[%s0 + $0x50] sm:$0xff]
  %v31 = vld [vmem:[%s0 + $0x58] sm:$0xff]
  %v32 = vld [vmem:[%s0 + $0x60] sm:$0xf]
  %v33 = vld [vmem:[%s0 + $0x64] sm:$0xff]
  %v34 = vld [vmem:[%s0 + $0x6c] sm:$0xff]
  %v35 = vld [vmem:[%s0 + $0x74] sm:$0xf]
  %v36 = vld [vmem:[%s0 + $0x78] sm:$0xff]
  %v37 = vld [vmem:[%s0 + $0x80] sm:$0xff]
  %v38 = vld [vmem:[%s0 + $0x88] sm:$0xf]
  %v39 = vld [vmem:[%s0 + $0x8c] sm:$0xff]
  %v40 = vld [vmem:[%s0 + $0x94] sm:$0xff]
  %v41 = vld [vmem:[%s0 + $0x9c] sm:$0xf]
  %v42 = vld [vmem:[%s0 + $0xa0] sm:$0xff]
  %v43 = vld [vmem:[%s0 + $0xa8] sm:$0xff]
  %v44 = vld [vmem:[%s0 + $0xb0] sm:$0xf]
  %v45 = vld [vmem:[%s0 + $0xb4] sm:$0xff]
  %v46 = vld [vmem:[%s0 + $0xbc] sm:$0xff]
  %v47 = vld [vmem:[%s0 + $0xc4] sm:$0xf]
  %v48 = vld [vmem:[%s0 + $0xc8] sm:$0xff]
  %v49 = vld [vmem:[%s0 + $0xd0] sm:$0xff]
  %v50 = vld [vmem:[%s0 + $0xd8] sm:$0xf]
  %v51 = vld [vmem:[%s0 + $0xdc] sm:$0xff]
  %v52 = vld [vmem:[%s0 + $0xe4] sm:$0xff]
  %v53 = vld [vmem:[%s0 + $0xec] sm:$0xf]
  %v54 = vld [vmem:[%s0 + $0xf0] sm:$0xff]
  %v55 = vld [vmem:[%s0 + $0xf8] sm:$0xff]
  %v56 = vld [vmem:[%s0 + $0x100] sm:$0xf]
  %v57 = vld [vmem:[%s0 + $0x104] sm:$0xff]
  %v58 = vld [vmem:[%s0 + $0x10c] sm:$0xff]
  %v59 = vld [vmem:[%s0 + $0x114] sm:$0xf]
  %v60 = vld [vmem:[%s0 + $0x118] sm:$0xff]
  %v61 = vld [vmem:[%s0 + $0x120] sm:$0xff]
  %v62 = vld [vmem:[%s0 + $0x128] sm:$0xf]
  %v63 = vld [vmem:[%s0 + $0x12c] sm:$0xff]
  %v64 = vld [vmem:[%s0 + $0x134] sm:$0xff]
  %v65 = vld [vmem:[%s0 + $0x13c] sm:$0xf]
  %v66 = vld [vmem:[%s1] sm:$0xf]
  %v67 = vld [vmem:[%s1 + $0x4] sm:$0xf]
  %v68 = vld [vmem:[%s1 + $0x8] sm:$0xf]
  %v69 = vld [vmem:[%s1 + $0xc] sm:$0xf]
  %v70 = vld [vmem:[%s1 + $0x10] sm:$0xf]
  %v71 = vld [vmem:[%s1 + $0x14] sm:$0xf]
  %v72 = vld [vmem:[%s1 + $0x18] sm:$0xf]
  %v73 = vld [vmem:[%s1 + $0x1c] sm:$0xf]
  %v74 = vld [vmem:[%s1 + $0x20] sm:$0xf]
  %v75 = vld [vmem:[%s1 + $0x24] sm:$0xf]
  %v76 = vld [vmem:[%s1 + $0x28] sm:$0xf]
  %v77 = vld [vmem:[%s1 + $0x2c] sm:$0xf]
  %v78 = vld [vmem:[%s1 + $0x30] sm:$0xf]
  %v79 = vld [vmem:[%s1 + $0x34] sm:$0xf]
  %v80 = vld [vmem:[%s1 + $0x38] sm:$0xf]
  %v81 = vld [vmem:[%s1 + $0x3c] sm:$0xf]
  %v82 = vld [vmem:[%s1 + $0x40] sm:$0xf]
  %v83 = vld [vmem:[%s1 + $0x44] sm:$0xf]
  %v84 = vld [vmem:[%s1 + $0x48] sm:$0xf]
  %v85 = vld [vmem:[%s1 + $0x4c] sm:$0xf]
  %v86 = vld [vmem:[%s1 + $0x50] sm:$0xf]
  %v87 = vld [vmem:[%s1 + $0x54] sm:$0xf]
  %v88 = vld [vmem:[%s1 + $0x58] sm:$0xf]
  %v89 = vld [vmem:[%s1 + $0x5c] sm:$0xf]
  %v90 = vld [vmem:[%s1 + $0x60] sm:$0xf]
  %v91 = vld [vmem:[%s1 + $0x64] sm:$0xf]
  %v92 = vld [vmem:[%s1 + $0x68] sm:$0xf]
  %v93 = vld [vmem:[%s1 + $0x6c] sm:$0xf]
  %v94 = vld [vmem:[%s1 + $0x70] sm:$0xf]
  %v95 = vld [vmem:[%s1 + $0x74] sm:$0xf]
  %v96 = vld [vmem:[%s1 + $0x78] sm:$0xf]
  %v97 = vld [vmem:[%s1 + $0x7c] sm:$0xf]
  %v98 = vld [vmem:[%s1 + $0x80] sm:$0xf]
  %v99 = vld [vmem:[%s1 + $0x84] sm:$0xf]
  %v100 = vld [vmem:[%s1 + $0x88] sm:$0xf]
  %v101 = vld [vmem:[%s1 + $0x8c] sm:$0xf]
  %v102 = vld [vmem:[%s1 + $0x90] sm:$0xf]
  %v103 = vld [vmem:[%s1 + $0x94] sm:$0xf]
  %v104 = vld [vmem:[%s1 + $0x98] sm:$0xf]
  %v105 = vld [vmem:[%s1 + $0x9c] sm:$0xf]
  %v106 = vld [vmem:[%s1 + $0xa0] sm:$0xf]
  %v107 = vld [vmem:[%s1 + $0xa4] sm:$0xf]
  %v108 = vld [vmem:[%s1 + $0xa8] sm:$0xf]
  %v109 = vld [vmem:[%s1 + $0xac] sm:$0xf]
  %v110 = vld [vmem:[%s1 + $0xb0] sm:$0xf]
  %v111 = vld [vmem:[%s1 + $0xb4] sm:$0xf]
  %v112 = vld [vmem:[%s1 + $0xb8] sm:$0xf]
  %v113 = vld [vmem:[%s1 + $0xbc] sm:$0xf]
  %v114 = vld [vmem:[%s1 + $0xc0] sm:$0xf]
  %v115 = vld [vmem:[%s1 + $0xc4] sm:$0xf]
  %v116 = vld [vmem:[%s1 + $0xc8] sm:$0xf]
  %v117 = vld [vmem:[%s1 + $0xcc] sm:$0xf]
  %v118 = vld [vmem:[%s1 + $0xd0] sm:$0xf]
  %v119 = vld [vmem:[%s1 + $0xd4] sm:$0xf]
  %v120 = vld [vmem:[%s1 + $0xd8] sm:$0xf]
  %v121 = vld [vmem:[%s1 + $0xdc] sm:$0xf]
  %v122 = vld [vmem:[%s1 + $0xe0] sm:$0xf]
  %v123 = vld [vmem:[%s1 + $0xe4] sm:$0xf]
  %v124 = vld [vmem:[%s1 + $0xe8] sm:$0xf]
  %v125 = vld [vmem:[%s1 + $0xec] sm:$0xf]
  %v126 = vld [vmem:[%s1 + $0xf0] sm:$0xf]
  %v127 = vld [vmem:[%s1 + $0xf4] sm:$0xf]
  %v128 = vld [vmem:[%s1 + $0xf8] sm:$0xf]
  %v129 = vld [vmem:[%s1 + $0xfc] sm:$0xf]
  %v130 = vld [vmem:[%s1 + $0x100] sm:$0xf]
  %v131 = vld [vmem:[%s1 + $0x104] sm:$0xf]
  %v132 = vld [vmem:[%s1 + $0x108] sm:$0xf]
  %v133 = vld [vmem:[%s1 + $0x10c] sm:$0xf]
  %v134 = vld [vmem:[%s1 + $0x110] sm:$0xf]
  %v135 = vld [vmem:[%s1 + $0x114] sm:$0xf]
  %v136 = vld [vmem:[%s1 + $0x118] sm:$0xf]
  %v137 = vld [vmem:[%s1 + $0x11c] sm:$0xf]
  %v138 = vld [vmem:[%s2] sm:$0xff]
  %v139 = vld [vmem:[%s2 + $0x8] sm:$0xff]
  %v140 = vld [vmem:[%s2 + $0x10] sm:$0xff]
  %v141 = vld [vmem:[%s2 + $0x18] sm:$0xff]
  %v142 = vld [vmem:[%s2 + $0x20] sm:$0xff]
  %v143 = vld [vmem:[%s2 + $0x28] sm:$0xff]
  %v144 = vld [vmem:[%s2 + $0x30] sm:$0xff]
  %v145 = vld [vmem:[%s2 + $0x38] sm:$0xff]
  %v146 = vld [vmem:[%s2 + $0x40] sm:$0xff]
  %v147 = vld [vmem:[%s2 + $0x48] sm:$0xff]
  %v148 = vld [vmem:[%s2 + $0x50] sm:$0xff]
  %v149 = vld [vmem:[%s2 + $0x58] sm:$0xff]
  %v150 = vld [vmem:[%s2 + $0x60] sm:$0xff]
  %v151 = vld [vmem:[%s2 + $0x68] sm:$0xff]
  %v152 = vld [vmem:[%s2 + $0x70] sm:$0xff]
  %v153 = vld [vmem:[%s2 + $0x78] sm:$0xff]
  %155 = vset.pattern.permute.xlu0 0
  %156 = vperm.xlu0 %155, %v138
  %v157 = vpop.permute.xlu0 %156
  %160 = vset.pattern.permute.xlu0 0
  %161 = vperm.xlu0 %160, %v139
  %v162 = vpop.permute.xlu0 %161
  %165 = vset.pattern.permute.xlu0 0
  %166 = vperm.xlu0 %165, %v140
  %v167 = vpop.permute.xlu0 %166
  %170 = vset.pattern.permute.xlu0 0
  %171 = vperm.xlu0 %170, %v141
  %v172 = vpop.permute.xlu0 %171
  %175 = vset.pattern.permute.xlu0 0
  %176 = vperm.xlu0 %175, %v142
  %v177 = vpop.permute.xlu0 %176
  %180 = vset.pattern.permute.xlu0 0
  %181 = vperm.xlu0 %180, %v143
  %v182 = vpop.permute.xlu0 %181
  %185 = vset.pattern.permute.xlu0 0
  %186 = vperm.xlu0 %185, %v144
  %v187 = vpop.permute.xlu0 %186
  %190 = vset.pattern.permute.xlu0 0
  %191 = vperm.xlu0 %190, %v145
  %v192 = vpop.permute.xlu0 %191
  %195 = vset.pattern.permute.xlu0 0
  %196 = vperm.xlu0 %195, %v146
  %v197 = vpop.permute.xlu0 %196
  %200 = vset.pattern.permute.xlu0 0
  %201 = vperm.xlu0 %200, %v147
  %v202 = vpop.permute.xlu0 %201
  %205 = vset.pattern.permute.xlu0 0
  %206 = vperm.xlu0 %205, %v148
  %v207 = vpop.permute.xlu0 %206
  %210 = vset.pattern.permute.xlu0 0
  %211 = vperm.xlu0 %210, %v149
  %v212 = vpop.permute.xlu0 %211
  %215 = vset.pattern.permute.xlu0 0
  %216 = vperm.xlu0 %215, %v150
  %v217 = vpop.permute.xlu0 %216
  %220 = vset.pattern.permute.xlu0 0
  %221 = vperm.xlu0 %220, %v151
  %v222 = vpop.permute.xlu0 %221
  %225 = vset.pattern.permute.xlu0 0
  %226 = vperm.xlu0 %225, %v152
  %v227 = vpop.permute.xlu0 %226
  %230 = vset.pattern.permute.xlu0 0
  %231 = vperm.xlu0 %230, %v153
  %v232 = vpop.permute.xlu0 %231
  %v282 = vunpack.c.l.b16 %v18
  %v283 = vunpack.c.h.b16 %v18
  %v284 = vunpack.c.l.b16 %v19
  %v285 = vunpack.c.h.b16 %v19
  %v286 = vunpack.c.l.b16 %v20
  %v287 = vunpack.c.l.b16 %v21
  %v288 = vunpack.c.h.b16 %v21
  %v289 = vunpack.c.l.b16 %v22
  %v290 = vunpack.c.h.b16 %v22
  %v291 = vunpack.c.l.b16 %v23
  %v292 = vunpack.c.l.b16 %v24
  %v293 = vunpack.c.h.b16 %v24
  %v294 = vunpack.c.l.b16 %v25
  %v295 = vunpack.c.h.b16 %v25
  %v296 = vunpack.c.l.b16 %v26
  %v297 = vunpack.c.l.b16 %v27
  %v298 = vunpack.c.h.b16 %v27
  %v299 = vunpack.c.l.b16 %v28
  %v300 = vunpack.c.h.b16 %v28
  %v301 = vunpack.c.l.b16 %v29
  %v302 = vunpack.c.l.b16 %v30
  %v303 = vunpack.c.h.b16 %v30
  %v304 = vunpack.c.l.b16 %v31
  %v305 = vunpack.c.h.b16 %v31
  %v306 = vunpack.c.l.b16 %v32
  %v307 = vunpack.c.l.b16 %v33
  %v308 = vunpack.c.h.b16 %v33
  %v309 = vunpack.c.l.b16 %v34
  %v310 = vunpack.c.h.b16 %v34
  %v311 = vunpack.c.l.b16 %v35
  %v312 = vunpack.c.l.b16 %v36
  %v313 = vunpack.c.h.b16 %v36
  %v314 = vunpack.c.l.b16 %v37
  %v315 = vunpack.c.h.b16 %v37
  %v316 = vunpack.c.l.b16 %v38
  %v317 = vunpack.c.l.b16 %v39
  %v318 = vunpack.c.h.b16 %v39
  %v319 = vunpack.c.l.b16 %v40
  %v320 = vunpack.c.h.b16 %v40
  %v321 = vunpack.c.l.b16 %v41
  %v322 = vunpack.c.l.b16 %v42
  %v323 = vunpack.c.h.b16 %v42
  %v324 = vunpack.c.l.b16 %v43
  %v325 = vunpack.c.h.b16 %v43
  %v326 = vunpack.c.l.b16 %v44
  %v327 = vunpack.c.l.b16 %v45
  %v328 = vunpack.c.h.b16 %v45
  %v329 = vunpack.c.l.b16 %v46
  %v330 = vunpack.c.h.b16 %v46
  %v331 = vunpack.c.l.b16 %v47
  %v332 = vunpack.c.l.b16 %v48
  %v333 = vunpack.c.h.b16 %v48
  %v334 = vunpack.c.l.b16 %v49
  %v335 = vunpack.c.h.b16 %v49
  %v336 = vunpack.c.l.b16 %v50
  %v337 = vunpack.c.l.b16 %v51
  %v338 = vunpack.c.h.b16 %v51
  %v339 = vunpack.c.l.b16 %v52
  %v340 = vunpack.c.h.b16 %v52
  %v341 = vunpack.c.l.b16 %v53
  %v342 = vunpack.c.l.b16 %v54
  %v343 = vunpack.c.h.b16 %v54
  %v344 = vunpack.c.l.b16 %v55
  %v345 = vunpack.c.h.b16 %v55
  %v346 = vunpack.c.l.b16 %v56
  %v347 = vunpack.c.l.b16 %v57
  %v348 = vunpack.c.h.b16 %v57
  %v349 = vunpack.c.l.b16 %v58
  %v350 = vunpack.c.h.b16 %v58
  %v351 = vunpack.c.l.b16 %v59
  %v352 = vunpack.c.l.b16 %v60
  %v353 = vunpack.c.h.b16 %v60
  %v354 = vunpack.c.l.b16 %v61
  %v355 = vunpack.c.h.b16 %v61
  %v356 = vunpack.c.l.b16 %v62
  %v357 = vunpack.c.l.b16 %v63
  %v358 = vunpack.c.h.b16 %v63
  %v359 = vunpack.c.l.b16 %v64
  %v360 = vunpack.c.h.b16 %v64
  %v361 = vunpack.c.l.b16 %v65
  %v362 = vpack.c.b16 %v287, %v282
  %v363 = vpack.c.b16 %v288, %v283
  %v364 = vpack.c.b16 %v289, %v284
  %v365 = vpack.c.b16 %v290, %v285
  %v366 = vpack.c.b16 %v291, %v286
  %v367 = vpack.c.b16 %v297, %v292
  %v368 = vpack.c.b16 %v298, %v293
  %v369 = vpack.c.b16 %v299, %v294
  %v370 = vpack.c.b16 %v300, %v295
  %v371 = vpack.c.b16 %v301, %v296
  %v372 = vpack.c.b16 %v307, %v302
  %v373 = vpack.c.b16 %v308, %v303
  %v374 = vpack.c.b16 %v309, %v304
  %v375 = vpack.c.b16 %v310, %v305
  %v376 = vpack.c.b16 %v311, %v306
  %v377 = vpack.c.b16 %v317, %v312
  %v378 = vpack.c.b16 %v318, %v313
  %v379 = vpack.c.b16 %v319, %v314
  %v380 = vpack.c.b16 %v320, %v315
  %v381 = vpack.c.b16 %v321, %v316
  %v382 = vpack.c.b16 %v327, %v322
  %v383 = vpack.c.b16 %v328, %v323
  %v384 = vpack.c.b16 %v329, %v324
  %v385 = vpack.c.b16 %v330, %v325
  %v386 = vpack.c.b16 %v331, %v326
  %v387 = vpack.c.b16 %v337, %v332
  %v388 = vpack.c.b16 %v338, %v333
  %v389 = vpack.c.b16 %v339, %v334
  %v390 = vpack.c.b16 %v340, %v335
  %v391 = vpack.c.b16 %v341, %v336
  %v392 = vpack.c.b16 %v347, %v342
  %v393 = vpack.c.b16 %v348, %v343
  %v394 = vpack.c.b16 %v349, %v344
  %v395 = vpack.c.b16 %v350, %v345
  %v396 = vpack.c.b16 %v351, %v346
  %v397 = vpack.c.b16 %v357, %v352
  %v398 = vpack.c.b16 %v358, %v353
  %v399 = vpack.c.b16 %v359, %v354
  %v400 = vpack.c.b16 %v360, %v355
  %v401 = vpack.c.b16 %v361, %v356
  %v506 = vunpack.c.l.b16 %v66
  %v507 = vunpack.c.l.b16 %v67
  %v508 = vunpack.c.l.b16 %v68
  %v509 = vunpack.c.l.b16 %v69
  %v510 = vunpack.c.l.b16 %v70
  %v511 = vunpack.c.l.b16 %v71
  %v512 = vunpack.c.l.b16 %v72
  %v513 = vunpack.c.l.b16 %v73
  %v514 = vunpack.c.l.b16 %v74
  %v515 = vunpack.c.l.b16 %v75
  %v516 = vunpack.c.l.b16 %v76
  %v517 = vunpack.c.l.b16 %v77
  %v518 = vunpack.c.l.b16 %v78
  %v519 = vunpack.c.l.b16 %v79
  %v520 = vunpack.c.l.b16 %v80
  %v521 = vunpack.c.l.b16 %v81
  %v522 = vunpack.c.l.b16 %v82
  %v523 = vunpack.c.l.b16 %v83
  %v524 = vunpack.c.l.b16 %v84
  %v525 = vunpack.c.l.b16 %v85
  %v526 = vunpack.c.l.b16 %v86
  %v527 = vunpack.c.l.b16 %v87
  %v528 = vunpack.c.l.b16 %v88
  %v529 = vunpack.c.l.b16 %v89
  %v530 = vunpack.c.l.b16 %v90
  %v531 = vunpack.c.l.b16 %v91
  %v532 = vunpack.c.l.b16 %v92
  %v533 = vunpack.c.l.b16 %v93
  %v534 = vunpack.c.l.b16 %v94
  %v535 = vunpack.c.l.b16 %v95
  %v536 = vunpack.c.l.b16 %v96
  %v537 = vunpack.c.l.b16 %v97
  %v538 = vunpack.c.l.b16 %v98
  %v539 = vunpack.c.l.b16 %v99
  %v540 = vunpack.c.l.b16 %v100
  %v541 = vunpack.c.l.b16 %v101
  %v542 = vunpack.c.l.b16 %v102
  %v543 = vunpack.c.l.b16 %v103
  %v544 = vunpack.c.l.b16 %v104
  %v545 = vunpack.c.l.b16 %v105
  %v546 = vunpack.c.l.b16 %v106
  %v547 = vunpack.c.l.b16 %v107
  %v548 = vunpack.c.l.b16 %v108
  %v549 = vunpack.c.l.b16 %v109
  %v550 = vunpack.c.l.b16 %v110
  %v551 = vunpack.c.l.b16 %v111
  %v552 = vunpack.c.l.b16 %v112
  %v553 = vunpack.c.l.b16 %v113
  %v554 = vunpack.c.l.b16 %v114
  %v555 = vunpack.c.l.b16 %v115
  %v556 = vunpack.c.l.b16 %v116
  %v557 = vunpack.c.l.b16 %v117
  %v558 = vunpack.c.l.b16 %v118
  %v559 = vunpack.c.l.b16 %v119
  %v560 = vunpack.c.l.b16 %v120
  %v561 = vunpack.c.l.b16 %v121
  %v562 = vunpack.c.l.b16 %v122
  %v563 = vunpack.c.l.b16 %v123
  %v564 = vunpack.c.l.b16 %v124
  %v565 = vunpack.c.l.b16 %v125
  %v566 = vunpack.c.l.b16 %v126
  %v567 = vunpack.c.l.b16 %v127
  %v568 = vunpack.c.l.b16 %v128
  %v569 = vunpack.c.l.b16 %v129
  %v570 = vunpack.c.l.b16 %v130
  %v571 = vunpack.c.l.b16 %v131
  %v572 = vunpack.c.l.b16 %v132
  %v573 = vunpack.c.l.b16 %v133
  %v574 = vunpack.c.l.b16 %v134
  %v575 = vunpack.c.l.b16 %v135
  %v576 = vunpack.c.l.b16 %v136
  %v577 = vunpack.c.l.b16 %v137
  %v578 = vpack.c.b16 %v507, %v506
  %v579 = vpack.c.b16 %v509, %v508
  %v580 = vpack.c.b16 %v511, %v510
  %v581 = vpack.c.b16 %v513, %v512
  %v582 = vpack.c.b16 %v515, %v514
  %v583 = vpack.c.b16 %v517, %v516
  %v584 = vpack.c.b16 %v519, %v518
  %v585 = vpack.c.b16 %v521, %v520
  %v586 = vpack.c.b16 %v523, %v522
  %v587 = vpack.c.b16 %v525, %v524
  %v588 = vpack.c.b16 %v527, %v526
  %v589 = vpack.c.b16 %v529, %v528
  %v590 = vpack.c.b16 %v531, %v530
  %v591 = vpack.c.b16 %v533, %v532
  %v592 = vpack.c.b16 %v535, %v534
  %v593 = vpack.c.b16 %v537, %v536
  %v594 = vpack.c.b16 %v539, %v538
  %v595 = vpack.c.b16 %v541, %v540
  %v596 = vpack.c.b16 %v543, %v542
  %v597 = vpack.c.b16 %v545, %v544
  %v598 = vpack.c.b16 %v547, %v546
  %v599 = vpack.c.b16 %v549, %v548
  %v600 = vpack.c.b16 %v551, %v550
  %v601 = vpack.c.b16 %v553, %v552
  %v602 = vpack.c.b16 %v555, %v554
  %v603 = vpack.c.b16 %v557, %v556
  %v604 = vpack.c.b16 %v559, %v558
  %v605 = vpack.c.b16 %v561, %v560
  %v606 = vpack.c.b16 %v563, %v562
  %v607 = vpack.c.b16 %v565, %v564
  %v608 = vpack.c.b16 %v567, %v566
  %v609 = vpack.c.b16 %v569, %v568
  %v610 = vpack.c.b16 %v571, %v570
  %v611 = vpack.c.b16 %v573, %v572
  %v612 = vpack.c.b16 %v575, %v574
  %v613 = vpack.c.b16 %v577, %v576
  %vm650 = vcmask 523264
  %v652 = vsel %vm650, %v366, 0
  %v655 = vsel %vm650, %v371, 0
  %v658 = vsel %vm650, %v376, 0
  %v661 = vsel %vm650, %v381, 0
  %v664 = vsel %vm650, %v386, 0
  %v667 = vsel %vm650, %v391, 0
  %v670 = vsel %vm650, %v396, 0
  %v673 = vsel %vm650, %v401, 0
  %675 = vmatpush.bf16.msra.mxu0 %v585
  %676 = vmatpush.bf16.msra.mxu0 %v584
  %677 = vmatpush.bf16.msra.mxu0 %v583
  %678 = vmatpush.bf16.msra.mxu0 %v582
  %679 = vmatpush.bf16.msra.mxu0 %v581
  %680 = vmatpush.bf16.msra.mxu0 %v580
  %681 = vmatpush.bf16.msra.mxu0 %v579
  %682 = vmatpush.bf16.msra.mxu0 %v578
  %683 = vmatmul.bf16.gmra.mxu0 %v362
  %v684 = vpop.f32.mrf.mxu0
  %v685 = vadd.f32 %v157, %v684
  %v686 = vpop.f32.mrf.mxu0
  %v687 = vadd.f32 %v162, %v686
  %688 = vmatmul.bf16.gmra.mxu0 %v367
  %v689 = vpop.f32.mrf.mxu0
  %v690 = vadd.f32 %v167, %v689
  %v691 = vpop.f32.mrf.mxu0
  %v692 = vadd.f32 %v172, %v691
  %693 = vmatmul.bf16.gmra.mxu0 %v372
  %v694 = vpop.f32.mrf.mxu0
  %v695 = vadd.f32 %v177, %v694
  %v696 = vpop.f32.mrf.mxu0
  %v697 = vadd.f32 %v182, %v696
  %698 = vmatmul.bf16.gmra.mxu0 %v377
  %v699 = vpop.f32.mrf.mxu0
  %v700 = vadd.f32 %v187, %v699
  %v701 = vpop.f32.mrf.mxu0
  %v702 = vadd.f32 %v192, %v701
  %703 = vmatmul.bf16.gmra.mxu0 %v382
  %v704 = vpop.f32.mrf.mxu0
  %v705 = vadd.f32 %v197, %v704
  %v706 = vpop.f32.mrf.mxu0
  %v707 = vadd.f32 %v202, %v706
  %708 = vmatmul.bf16.gmra.mxu0 %v387
  %v709 = vpop.f32.mrf.mxu0
  %v710 = vadd.f32 %v207, %v709
  %v711 = vpop.f32.mrf.mxu0
  %v712 = vadd.f32 %v212, %v711
  %713 = vmatmul.bf16.gmra.mxu0 %v392
  %v714 = vpop.f32.mrf.mxu0
  %v715 = vadd.f32 %v217, %v714
  %v716 = vpop.f32.mrf.mxu0
  %v717 = vadd.f32 %v222, %v716
  %718 = vmatmul.bf16.gmra.mxu0 %v397
  %v719 = vpop.f32.mrf.mxu0
  %v720 = vadd.f32 %v227, %v719
  %v721 = vpop.f32.mrf.mxu0
  %v722 = vadd.f32 %v232, %v721
  %723 = vdwg.mxu0
  %724 = vmatpush.bf16.msra.mxu0 %v593
  %725 = vmatpush.bf16.msra.mxu0 %v592
  %726 = vmatpush.bf16.msra.mxu0 %v591
  %727 = vmatpush.bf16.msra.mxu0 %v590
  %728 = vmatpush.bf16.msra.mxu0 %v589
  %729 = vmatpush.bf16.msra.mxu0 %v588
  %730 = vmatpush.bf16.msra.mxu0 %v587
  %731 = vmatpush.bf16.msra.mxu0 %v586
  %732 = vmatmul.bf16.gmra.mxu0 %v363
  %v733 = vpop.f32.mrf.mxu0
  %v734 = vadd.f32 %v685, %v733
  %v735 = vpop.f32.mrf.mxu0
  %v736 = vadd.f32 %v687, %v735
  %737 = vmatmul.bf16.gmra.mxu0 %v368
  %v738 = vpop.f32.mrf.mxu0
  %v739 = vadd.f32 %v690, %v738
  %v740 = vpop.f32.mrf.mxu0
  %v741 = vadd.f32 %v692, %v740
  %742 = vmatmul.bf16.gmra.mxu0 %v373
  %v743 = vpop.f32.mrf.mxu0
  %v744 = vadd.f32 %v695, %v743
  %v745 = vpop.f32.mrf.mxu0
  %v746 = vadd.f32 %v697, %v745
  %747 = vmatmul.bf16.gmra.mxu0 %v378
  %v748 = vpop.f32.mrf.mxu0
  %v749 = vadd.f32 %v700, %v748
  %v750 = vpop.f32.mrf.mxu0
  %v751 = vadd.f32 %v702, %v750
  %752 = vmatmul.bf16.gmra.mxu0 %v383
  %v753 = vpop.f32.mrf.mxu0
  %v754 = vadd.f32 %v705, %v753
  %v755 = vpop.f32.mrf.mxu0
  %v756 = vadd.f32 %v707, %v755
  %757 = vmatmul.bf16.gmra.mxu0 %v388
  %v758 = vpop.f32.mrf.mxu0
  %v759 = vadd.f32 %v710, %v758
  %v760 = vpop.f32.mrf.mxu0
  %v761 = vadd.f32 %v712, %v760
  %762 = vmatmul.bf16.gmra.mxu0 %v393
  %v763 = vpop.f32.mrf.mxu0
  %v764 = vadd.f32 %v715, %v763
  %v765 = vpop.f32.mrf.mxu0
  %v766 = vadd.f32 %v717, %v765
  %767 = vmatmul.bf16.gmra.mxu0 %v398
  %v768 = vpop.f32.mrf.mxu0
  %v769 = vadd.f32 %v720, %v768
  %v770 = vpop.f32.mrf.mxu0
  %v771 = vadd.f32 %v722, %v770
  %772 = vdwg.mxu0
  %773 = vmatpush.bf16.msra.mxu0 %v601
  %774 = vmatpush.bf16.msra.mxu0 %v600
  %775 = vmatpush.bf16.msra.mxu0 %v599
  %776 = vmatpush.bf16.msra.mxu0 %v598
  %777 = vmatpush.bf16.msra.mxu0 %v597
  %778 = vmatpush.bf16.msra.mxu0 %v596
  %779 = vmatpush.bf16.msra.mxu0 %v595
  %780 = vmatpush.bf16.msra.mxu0 %v594
  %781 = vmatmul.bf16.gmra.mxu0 %v364
  %v782 = vpop.f32.mrf.mxu0
  %v783 = vadd.f32 %v734, %v782
  %v784 = vpop.f32.mrf.mxu0
  %v785 = vadd.f32 %v736, %v784
  %786 = vmatmul.bf16.gmra.mxu0 %v369
  %v787 = vpop.f32.mrf.mxu0
  %v788 = vadd.f32 %v739, %v787
  %v789 = vpop.f32.mrf.mxu0
  %v790 = vadd.f32 %v741, %v789
  %791 = vmatmul.bf16.gmra.mxu0 %v374
  %v792 = vpop.f32.mrf.mxu0
  %v793 = vadd.f32 %v744, %v792
  %v794 = vpop.f32.mrf.mxu0
  %v795 = vadd.f32 %v746, %v794
  %796 = vmatmul.bf16.gmra.mxu0 %v379
  %v797 = vpop.f32.mrf.mxu0
  %v798 = vadd.f32 %v749, %v797
  %v799 = vpop.f32.mrf.mxu0
  %v800 = vadd.f32 %v751, %v799
  %801 = vmatmul.bf16.gmra.mxu0 %v384
  %v802 = vpop.f32.mrf.mxu0
  %v803 = vadd.f32 %v754, %v802
  %v804 = vpop.f32.mrf.mxu0
  %v805 = vadd.f32 %v756, %v804
  %806 = vmatmul.bf16.gmra.mxu0 %v389
  %v807 = vpop.f32.mrf.mxu0
  %v808 = vadd.f32 %v759, %v807
  %v809 = vpop.f32.mrf.mxu0
  %v810 = vadd.f32 %v761, %v809
  %811 = vmatmul.bf16.gmra.mxu0 %v394
  %v812 = vpop.f32.mrf.mxu0
  %v813 = vadd.f32 %v764, %v812
  %v814 = vpop.f32.mrf.mxu0
  %v815 = vadd.f32 %v766, %v814
  %816 = vmatmul.bf16.gmra.mxu0 %v399
  %v817 = vpop.f32.mrf.mxu0
  %v818 = vadd.f32 %v769, %v817
  %v819 = vpop.f32.mrf.mxu0
  %v820 = vadd.f32 %v771, %v819
  %821 = vdwg.mxu0
  %822 = vmatpush.bf16.msra.mxu0 %v609
  %823 = vmatpush.bf16.msra.mxu0 %v608
  %824 = vmatpush.bf16.msra.mxu0 %v607
  %825 = vmatpush.bf16.msra.mxu0 %v606
  %826 = vmatpush.bf16.msra.mxu0 %v605
  %827 = vmatpush.bf16.msra.mxu0 %v604
  %828 = vmatpush.bf16.msra.mxu0 %v603
  %829 = vmatpush.bf16.msra.mxu0 %v602
  %830 = vmatmul.bf16.gmra.mxu0 %v365
  %v831 = vpop.f32.mrf.mxu0
  %v832 = vadd.f32 %v783, %v831
  %v833 = vpop.f32.mrf.mxu0
  %v834 = vadd.f32 %v785, %v833
  %835 = vmatmul.bf16.gmra.mxu0 %v370
  %v836 = vpop.f32.mrf.mxu0
  %v837 = vadd.f32 %v788, %v836
  %v838 = vpop.f32.mrf.mxu0
  %v839 = vadd.f32 %v790, %v838
  %840 = vmatmul.bf16.gmra.mxu0 %v375
  %v841 = vpop.f32.mrf.mxu0
  %v842 = vadd.f32 %v793, %v841
  %v843 = vpop.f32.mrf.mxu0
  %v844 = vadd.f32 %v795, %v843
  %845 = vmatmul.bf16.gmra.mxu0 %v380
  %v846 = vpop.f32.mrf.mxu0
  %v847 = vadd.f32 %v798, %v846
  %v848 = vpop.f32.mrf.mxu0
  %v849 = vadd.f32 %v800, %v848
  %850 = vmatmul.bf16.gmra.mxu0 %v385
  %v851 = vpop.f32.mrf.mxu0
  %v852 = vadd.f32 %v803, %v851
  %v853 = vpop.f32.mrf.mxu0
  %v854 = vadd.f32 %v805, %v853
  %855 = vmatmul.bf16.gmra.mxu0 %v390
  %v856 = vpop.f32.mrf.mxu0
  %v857 = vadd.f32 %v808, %v856
  %v858 = vpop.f32.mrf.mxu0
  %v859 = vadd.f32 %v810, %v858
  %860 = vmatmul.bf16.gmra.mxu0 %v395
  %v861 = vpop.f32.mrf.mxu0
  %v862 = vadd.f32 %v813, %v861
  %v863 = vpop.f32.mrf.mxu0
  %v864 = vadd.f32 %v815, %v863
  %865 = vmatmul.bf16.gmra.mxu0 %v400
  %v866 = vpop.f32.mrf.mxu0
  %v867 = vadd.f32 %v818, %v866
  %v868 = vpop.f32.mrf.mxu0
  %v869 = vadd.f32 %v820, %v868
  %870 = vdwg.mxu0
  %871 = vmatpush.bf16.msra.mxu0 0
  %872 = vmatpush.bf16.msra.mxu0 0
  %873 = vmatpush.bf16.msra.mxu0 0
  %874 = vmatpush.bf16.msra.mxu0 0
  %875 = vmatpush.bf16.msra.mxu0 %v613
  %876 = vmatpush.bf16.msra.mxu0 %v612
  %877 = vmatpush.bf16.msra.mxu0 %v611
  %878 = vmatpush.bf16.msra.mxu0 %v610
  %879 = vmatmul.bf16.gmra.mxu0 %v652
  %v880 = vpop.f32.mrf.mxu0
  %v881 = vadd.f32 %v832, %v880
  %v882 = vpop.f32.mrf.mxu0
  %v883 = vadd.f32 %v834, %v882
  %884 = vmatmul.bf16.gmra.mxu0 %v655
  %v885 = vpop.f32.mrf.mxu0
  %v886 = vadd.f32 %v837, %v885
  %v887 = vpop.f32.mrf.mxu0
  %v888 = vadd.f32 %v839, %v887
  %889 = vmatmul.bf16.gmra.mxu0 %v658
  %v890 = vpop.f32.mrf.mxu0
  %v891 = vadd.f32 %v842, %v890
  %v892 = vpop.f32.mrf.mxu0
  %v893 = vadd.f32 %v844, %v892
  %894 = vmatmul.bf16.gmra.mxu0 %v661
  %v895 = vpop.f32.mrf.mxu0
  %v896 = vadd.f32 %v847, %v895
  %v897 = vpop.f32.mrf.mxu0
  %v898 = vadd.f32 %v849, %v897
  %899 = vmatmul.bf16.gmra.mxu0 %v664
  %v900 = vpop.f32.mrf.mxu0
  %v901 = vadd.f32 %v852, %v900
  %v902 = vpop.f32.mrf.mxu0
  %v903 = vadd.f32 %v854, %v902
  %904 = vmatmul.bf16.gmra.mxu0 %v667
  %v905 = vpop.f32.mrf.mxu0
  %v906 = vadd.f32 %v857, %v905
  %v907 = vpop.f32.mrf.mxu0
  %v908 = vadd.f32 %v859, %v907
  %909 = vmatmul.bf16.gmra.mxu0 %v670
  %v910 = vpop.f32.mrf.mxu0
  %v911 = vadd.f32 %v862, %v910
  %v912 = vpop.f32.mrf.mxu0
  %v913 = vadd.f32 %v864, %v912
  %914 = vmatmul.bf16.gmra.mxu0 %v673
  %v915 = vpop.f32.mrf.mxu0
  %v916 = vadd.f32 %v867, %v915
  %v917 = vpop.f32.mrf.mxu0
  %v918 = vadd.f32 %v869, %v917
  %919 = vdwg.mxu0
  %v920 = vld [vmem:[%s3] sm:$0xff]
  %v921 = vld [vmem:[%s3 + $0x8] sm:$0xff]
  %v922 = vld [vmem:[%s3 + $0x10] sm:$0xff]
  %v923 = vld [vmem:[%s3 + $0x18] sm:$0xff]
  %v924 = vld [vmem:[%s3 + $0x20] sm:$0xff]
  %v925 = vld [vmem:[%s3 + $0x28] sm:$0xff]
  %v926 = vld [vmem:[%s3 + $0x30] sm:$0xff]
  %v927 = vld [vmem:[%s3 + $0x38] sm:$0xff]
  %v928 = vld [vmem:[%s3 + $0x40] sm:$0xff]
  %v929 = vld [vmem:[%s3 + $0x48] sm:$0xff]
  %v930 = vld [vmem:[%s3 + $0x50] sm:$0xff]
  %v931 = vld [vmem:[%s3 + $0x58] sm:$0xff]
  %v932 = vld [vmem:[%s3 + $0x60] sm:$0xff]
  %v933 = vld [vmem:[%s3 + $0x68] sm:$0xff]
  %v934 = vld [vmem:[%s3 + $0x70] sm:$0xff]
  %v935 = vld [vmem:[%s3 + $0x78] sm:$0xff]
  %v936 = vadd.f32 %v881, %v920
  %v937 = vadd.f32 %v883, %v921
  %v938 = vadd.f32 %v886, %v922
  %v939 = vadd.f32 %v888, %v923
  %v940 = vadd.f32 %v891, %v924
  %v941 = vadd.f32 %v893, %v925
  %v942 = vadd.f32 %v896, %v926
  %v943 = vadd.f32 %v898, %v927
  %v944 = vadd.f32 %v901, %v928
  %v945 = vadd.f32 %v903, %v929
  %v946 = vadd.f32 %v906, %v930
  %v947 = vadd.f32 %v908, %v931
  %v948 = vadd.f32 %v911, %v932
  %v949 = vadd.f32 %v913, %v933
  %v950 = vadd.f32 %v916, %v934
  %v951 = vadd.f32 %v918, %v935
  %v952 = vpack.c.bf16 %v936, %v936
  %v953 = vpack.c.bf16 %v937, %v937
  %v954 = vpack.c.bf16 %v938, %v938
  %v955 = vpack.c.bf16 %v939, %v939
  %v956 = vpack.c.bf16 %v940, %v940
  %v957 = vpack.c.bf16 %v941, %v941
  %v958 = vpack.c.bf16 %v942, %v942
  %v959 = vpack.c.bf16 %v943, %v943
  %v960 = vpack.c.bf16 %v944, %v944
  %v961 = vpack.c.bf16 %v945, %v945
  %v962 = vpack.c.bf16 %v946, %v946
  %v963 = vpack.c.bf16 %v947, %v947
  %v964 = vpack.c.bf16 %v948, %v948
  %v965 = vpack.c.bf16 %v949, %v949
  %v966 = vpack.c.bf16 %v950, %v950
  %v967 = vpack.c.bf16 %v951, %v951
  %968 = vst [vmem:[%s4] sm:$0xf] %v952
  %969 = vst [vmem:[%s4 + $0x4] sm:$0xf] %v953
  %970 = vst [vmem:[%s4 + $0x8] sm:$0xf] %v954
  %971 = vst [vmem:[%s4 + $0xc] sm:$0xf] %v955
  %972 = vst [vmem:[%s4 + $0x10] sm:$0xf] %v956
  %973 = vst [vmem:[%s4 + $0x14] sm:$0xf] %v957
  %974 = vst [vmem:[%s4 + $0x18] sm:$0xf] %v958
  %975 = vst [vmem:[%s4 + $0x1c] sm:$0xf] %v959
  %976 = vst [vmem:[%s4 + $0x20] sm:$0xf] %v960
  %977 = vst [vmem:[%s4 + $0x24] sm:$0xf] %v961
  %978 = vst [vmem:[%s4 + $0x28] sm:$0xf] %v962
  %979 = vst [vmem:[%s4 + $0x2c] sm:$0xf] %v963
  %980 = vst [vmem:[%s4 + $0x30] sm:$0xf] %v964
  %981 = vst [vmem:[%s4 + $0x34] sm:$0xf] %v965
  %982 = vst [vmem:[%s4 + $0x38] sm:$0xf] %v966
  %983 = vst [vmem:[%s4 + $0x3c] sm:$0xf] %v967
  // Predicated region
  $region18: #{chained_forward.19} parent=0 // pred_check
    _
  $region19: #{chained_forward.19} parent=0 // pred_check_branch
    %985 = sbr.rel (0) target = $region21
  $region20: #{chained_forward.19} parent=0 // pred_region
    _
  $region21: #{chained_forward.19} parent=0 // pred_fallthru
    _
  // Predicated region
  $region22: #{chained_forward.19} parent=0 // pred_check
    _
  $region23: #{chained_forward.19} parent=0 // pred_check_branch
    %987 = sbr.rel (0) target = $region25
  $region24: #{chained_forward.19} parent=0 // pred_region
    _
  $region25: #{chained_forward.19} parent=0 // pred_fallthru
    _

// kernel: chained_forward.20
$region0: #{chained_forward.20}
  #allocation0 [shape = 'u32[]', space=smem, size = 0x4, offset = 0x4, fixed_abs, tag = 'smem constant byte address 0x4 - core index']
  #allocation1 [shape = 'u32[72,128]{1,0:T(1,128)}', space=vmem, size = 0x9000, scoped, tag = 'internal scratch']
  %s0 = inlined_call_operand.vmem [shape: bf16[128,288], index: 0, kind: input, shape index: {}]
  %s1 = inlined_call_operand.vmem [shape: bf16[288,512], index: 1, kind: input, shape index: {}]
  %s2 = inlined_call_operand.vmem [shape: f32[128,1], index: 2, kind: input, shape index: {}]
  %s3 = inlined_call_operand.vmem [shape: bf16[128,512], index: 3, kind: output, shape index: {}]
  %s4 = sld [smem:[#allocation0]]
  $region22: #{chained_forward.20} parent=0
    _
  %s6 = ssub.s32 1, %s4
  %s7 = scalar_select 0, %s6, %s4
  // Predicated region
  $region2: #{chained_forward.20} parent=0 // pred_check
    _
  $region3: #{chained_forward.20} parent=0 // pred_check_branch
    %9 = sbr.rel (0) target = $region5
  $region4: #{chained_forward.20} parent=0 // pred_region
    _
  $region5: #{chained_forward.20} parent=0 // pred_fallthru
    _
  // Predicated region
  $region6: #{chained_forward.20} parent=0 // pred_check
    _
  $region7: #{chained_forward.20} parent=0 // pred_check_branch
    %11 = sbr.rel (0) target = $region9
  $region8: #{chained_forward.20} parent=0 // pred_region
    _
  $region9: #{chained_forward.20} parent=0 // pred_fallthru
    _
  // Predicated region
  $region10: #{chained_forward.20} parent=0 // pred_check
    _
  $region11: #{chained_forward.20} parent=0 // pred_check_branch
    %13 = sbr.rel (0) target = $region13
  $region12: #{chained_forward.20} parent=0 // pred_region
    _
  $region13: #{chained_forward.20} parent=0 // pred_fallthru
    _
  %v15 = vld [vmem:[%s0] sm:$0xff]
  %v16 = vld [vmem:[%s0 + $0x8] sm:$0xf]
  %v17 = vld [vmem:[%s0 + $0xc] sm:$0xff]
  %v18 = vld [vmem:[%s0 + $0x14] sm:$0xf]
  %v19 = vld [vmem:[%s0 + $0x18] sm:$0xff]
  %v20 = vld [vmem:[%s0 + $0x20] sm:$0xf]
  %v21 = vld [vmem:[%s0 + $0x24] sm:$0xff]
  %v22 = vld [vmem:[%s0 + $0x2c] sm:$0xf]
  %v23 = vld [vmem:[%s0 + $0x30] sm:$0xff]
  %v24 = vld [vmem:[%s0 + $0x38] sm:$0xf]
  %v25 = vld [vmem:[%s0 + $0x3c] sm:$0xff]
  %v26 = vld [vmem:[%s0 + $0x44] sm:$0xf]
  %v27 = vld [vmem:[%s0 + $0x48] sm:$0xff]
  %v28 = vld [vmem:[%s0 + $0x50] sm:$0xf]
  %v29 = vld [vmem:[%s0 + $0x54] sm:$0xff]
  %v30 = vld [vmem:[%s0 + $0x5c] sm:$0xf]
  %v31 = vld [vmem:[%s0 + $0x60] sm:$0xff]
  %v32 = vld [vmem:[%s0 + $0x68] sm:$0xf]
  %v33 = vld [vmem:[%s0 + $0x6c] sm:$0xff]
  %v34 = vld [vmem:[%s0 + $0x74] sm:$0xf]
  %v35 = vld [vmem:[%s0 + $0x78] sm:$0xff]
  %v36 = vld [vmem:[%s0 + $0x80] sm:$0xf]
  %v37 = vld [vmem:[%s0 + $0x84] sm:$0xff]
  %v38 = vld [vmem:[%s0 + $0x8c] sm:$0xf]
  %v39 = vld [vmem:[%s0 + $0x90] sm:$0xff]
  %v40 = vld [vmem:[%s0 + $0x98] sm:$0xf]
  %v41 = vld [vmem:[%s0 + $0x9c] sm:$0xff]
  %v42 = vld [vmem:[%s0 + $0xa4] sm:$0xf]
  %v43 = vld [vmem:[%s0 + $0xa8] sm:$0xff]
  %v44 = vld [vmem:[%s0 + $0xb0] sm:$0xf]
  %v45 = vld [vmem:[%s0 + $0xb4] sm:$0xff]
  %v46 = vld [vmem:[%s0 + $0xbc] sm:$0xf]
  %v47 = vld [vmem:[%s1] sm:$0xff]
  %v48 = vld [vmem:[%s1 + $0x8] sm:$0xff]
  %v49 = vld [vmem:[%s1 + $0x10] sm:$0xff]
  %v50 = vld [vmem:[%s1 + $0x18] sm:$0xff]
  %v51 = vld [vmem:[%s1 + $0x20] sm:$0xff]
  %v52 = vld [vmem:[%s1 + $0x28] sm:$0xff]
  %v53 = vld [vmem:[%s1 + $0x30] sm:$0xff]
  %v54 = vld [vmem:[%s1 + $0x38] sm:$0xff]
  %v55 = vld [vmem:[%s1 + $0x40] sm:$0xff]
  %v56 = vld [vmem:[%s1 + $0x48] sm:$0xff]
  %v57 = vld [vmem:[%s1 + $0x50] sm:$0xff]
  %v58 = vld [vmem:[%s1 + $0x58] sm:$0xff]
  %v59 = vld [vmem:[%s1 + $0x60] sm:$0xff]
  %v60 = vld [vmem:[%s1 + $0x68] sm:$0xff]
  %v61 = vld [vmem:[%s1 + $0x70] sm:$0xff]
  %v62 = vld [vmem:[%s1 + $0x78] sm:$0xff]
  %v63 = vld [vmem:[%s1 + $0x80] sm:$0xff]
  %v64 = vld [vmem:[%s1 + $0x88] sm:$0xff]
  %v65 = vld [vmem:[%s1 + $0x90] sm:$0xff]
  %v66 = vld [vmem:[%s1 + $0x98] sm:$0xff]
  %v67 = vld [vmem:[%s1 + $0xa0] sm:$0xff]
  %v68 = vld [vmem:[%s1 + $0xa8] sm:$0xff]
  %v69 = vld [vmem:[%s1 + $0xb0] sm:$0xff]
  %v70 = vld [vmem:[%s1 + $0xb8] sm:$0xff]
  %v71 = vld [vmem:[%s1 + $0xc0] sm:$0xff]
  %v72 = vld [vmem:[%s1 + $0xc8] sm:$0xff]
  %v73 = vld [vmem:[%s1 + $0xd0] sm:$0xff]
  %v74 = vld [vmem:[%s1 + $0xd8] sm:$0xff]
  %v75 = vld [vmem:[%s1 + $0xe0] sm:$0xff]
  %v76 = vld [vmem:[%s1 + $0xe8] sm:$0xff]
  %v77 = vld [vmem:[%s1 + $0xf0] sm:$0xff]
  %v78 = vld [vmem:[%s1 + $0xf8] sm:$0xff]
  %v79 = vld [vmem:[%s1 + $0x100] sm:$0xff]
  %v80 = vld [vmem:[%s1 + $0x108] sm:$0xff]
  %v81 = vld [vmem:[%s1 + $0x110] sm:$0xff]
  %v82 = vld [vmem:[%s1 + $0x118] sm:$0xff]
  %v83 = vld [vmem:[%s1 + $0x120] sm:$0xff]
  %v84 = vld [vmem:[%s1 + $0x128] sm:$0xff]
  %v85 = vld [vmem:[%s1 + $0x130] sm:$0xff]
  %v86 = vld [vmem:[%s1 + $0x138] sm:$0xff]
  %v87 = vld [vmem:[%s1 + $0x140] sm:$0xff]
  %v88 = vld [vmem:[%s1 + $0x148] sm:$0xff]
  %v89 = vld [vmem:[%s1 + $0x150] sm:$0xff]
  %v90 = vld [vmem:[%s1 + $0x158] sm:$0xff]
  %v91 = vld [vmem:[%s1 + $0x160] sm:$0xff]
  %v92 = vld [vmem:[%s1 + $0x168] sm:$0xff]
  %v93 = vld [vmem:[%s1 + $0x170] sm:$0xff]
  %v94 = vld [vmem:[%s1 + $0x178] sm:$0xff]
  %v95 = vld [vmem:[%s1 + $0x180] sm:$0xff]
  %v96 = vld [vmem:[%s1 + $0x188] sm:$0xff]
  %v97 = vld [vmem:[%s1 + $0x190] sm:$0xff]
  %v98 = vld [vmem:[%s1 + $0x198] sm:$0xff]
  %v99 = vld [vmem:[%s1 + $0x1a0] sm:$0xff]
  %v100 = vld [vmem:[%s1 + $0x1a8] sm:$0xff]
  %v101 = vld [vmem:[%s1 + $0x1b0] sm:$0xff]
  %v102 = vld [vmem:[%s1 + $0x1b8] sm:$0xff]
  %v103 = vld [vmem:[%s1 + $0x1c0] sm:$0xff]
  %v104 = vld [vmem:[%s1 + $0x1c8] sm:$0xff]
  %v105 = vld [vmem:[%s1 + $0x1d0] sm:$0xff]
  %v106 = vld [vmem:[%s1 + $0x1d8] sm:$0xff]
  %v107 = vld [vmem:[%s1 + $0x1e0] sm:$0xff]
  %v108 = vld [vmem:[%s1 + $0x1e8] sm:$0xff]
  %v109 = vld [vmem:[%s1 + $0x1f0] sm:$0xff]
  %v110 = vld [vmem:[%s1 + $0x1f8] sm:$0xff]
  %v111 = vld [vmem:[%s1 + $0x200] sm:$0xff]
  %v112 = vld [vmem:[%s1 + $0x208] sm:$0xff]
  %v113 = vld [vmem:[%s1 + $0x210] sm:$0xff]
  %v114 = vld [vmem:[%s1 + $0x218] sm:$0xff]
  %v115 = vld [vmem:[%s1 + $0x220] sm:$0xff]
  %v116 = vld [vmem:[%s1 + $0x228] sm:$0xff]
  %v117 = vld [vmem:[%s1 + $0x230] sm:$0xff]
  %v118 = vld [vmem:[%s1 + $0x238] sm:$0xff]
  %v119 = vld [vmem:[%s2] sm:$0xff]
  %v120 = vld [vmem:[%s2 + $0x8] sm:$0xff]
  %v121 = vld [vmem:[%s2 + $0x10] sm:$0xff]
  %v122 = vld [vmem:[%s2 + $0x18] sm:$0xff]
  %v123 = vld [vmem:[%s2 + $0x20] sm:$0xff]
  %v124 = vld [vmem:[%s2 + $0x28] sm:$0xff]
  %v125 = vld [vmem:[%s2 + $0x30] sm:$0xff]
  %v126 = vld [vmem:[%s2 + $0x38] sm:$0xff]
  %v127 = vld [vmem:[%s2 + $0x40] sm:$0xff]
  %v128 = vld [vmem:[%s2 + $0x48] sm:$0xff]
  %v129 = vld [vmem:[%s2 + $0x50] sm:$0xff]
  %v130 = vld [vmem:[%s2 + $0x58] sm:$0xff]
  %v131 = vld [vmem:[%s2 + $0x60] sm:$0xff]
  %v132 = vld [vmem:[%s2 + $0x68] sm:$0xff]
  %v133 = vld [vmem:[%s2 + $0x70] sm:$0xff]
  %v134 = vld [vmem:[%s2 + $0x78] sm:$0xff]
  %136 = vset.pattern.permute.xlu0 0
  %137 = vperm.xlu0 %136, %v119
  %v138 = vpop.permute.xlu0 %137
  %141 = vset.pattern.permute.xlu0 0
  %142 = vperm.xlu0 %141, %v120
  %v143 = vpop.permute.xlu0 %142
  %146 = vset.pattern.permute.xlu0 0
  %147 = vperm.xlu0 %146, %v121
  %v148 = vpop.permute.xlu0 %147
  %151 = vset.pattern.permute.xlu0 0
  %152 = vperm.xlu0 %151, %v122
  %v153 = vpop.permute.xlu0 %152
  %156 = vset.pattern.permute.xlu0 0
  %157 = vperm.xlu0 %156, %v123
  %v158 = vpop.permute.xlu0 %157
  %161 = vset.pattern.permute.xlu0 0
  %162 = vperm.xlu0 %161, %v124
  %v163 = vpop.permute.xlu0 %162
  %166 = vset.pattern.permute.xlu0 0
  %167 = vperm.xlu0 %166, %v125
  %v168 = vpop.permute.xlu0 %167
  %171 = vset.pattern.permute.xlu0 0
  %172 = vperm.xlu0 %171, %v126
  %v173 = vpop.permute.xlu0 %172
  %176 = vset.pattern.permute.xlu0 0
  %177 = vperm.xlu0 %176, %v127
  %v178 = vpop.permute.xlu0 %177
  %181 = vset.pattern.permute.xlu0 0
  %182 = vperm.xlu0 %181, %v128
  %v183 = vpop.permute.xlu0 %182
  %186 = vset.pattern.permute.xlu0 0
  %187 = vperm.xlu0 %186, %v129
  %v188 = vpop.permute.xlu0 %187
  %191 = vset.pattern.permute.xlu0 0
  %192 = vperm.xlu0 %191, %v130
  %v193 = vpop.permute.xlu0 %192
  %196 = vset.pattern.permute.xlu0 0
  %197 = vperm.xlu0 %196, %v131
  %v198 = vpop.permute.xlu0 %197
  %201 = vset.pattern.permute.xlu0 0
  %202 = vperm.xlu0 %201, %v132
  %v203 = vpop.permute.xlu0 %202
  %206 = vset.pattern.permute.xlu0 0
  %207 = vperm.xlu0 %206, %v133
  %v208 = vpop.permute.xlu0 %207
  %211 = vset.pattern.permute.xlu0 0
  %212 = vperm.xlu0 %211, %v134
  %v213 = vpop.permute.xlu0 %212
  %v247 = vunpack.c.l.b16 %v15
  %v248 = vunpack.c.h.b16 %v15
  %v249 = vunpack.c.l.b16 %v16
  %v250 = vunpack.c.l.b16 %v17
  %v251 = vunpack.c.h.b16 %v17
  %v252 = vunpack.c.l.b16 %v18
  %v253 = vunpack.c.l.b16 %v19
  %v254 = vunpack.c.h.b16 %v19
  %v255 = vunpack.c.l.b16 %v20
  %v256 = vunpack.c.l.b16 %v21
  %v257 = vunpack.c.h.b16 %v21
  %v258 = vunpack.c.l.b16 %v22
  %v259 = vunpack.c.l.b16 %v23
  %v260 = vunpack.c.h.b16 %v23
  %v261 = vunpack.c.l.b16 %v24
  %v262 = vunpack.c.l.b16 %v25
  %v263 = vunpack.c.h.b16 %v25
  %v264 = vunpack.c.l.b16 %v26
  %v265 = vunpack.c.l.b16 %v27
  %v266 = vunpack.c.h.b16 %v27
  %v267 = vunpack.c.l.b16 %v28
  %v268 = vunpack.c.l.b16 %v29
  %v269 = vunpack.c.h.b16 %v29
  %v270 = vunpack.c.l.b16 %v30
  %v271 = vunpack.c.l.b16 %v31
  %v272 = vunpack.c.h.b16 %v31
  %v273 = vunpack.c.l.b16 %v32
  %v274 = vunpack.c.l.b16 %v33
  %v275 = vunpack.c.h.b16 %v33
  %v276 = vunpack.c.l.b16 %v34
  %v277 = vunpack.c.l.b16 %v35
  %v278 = vunpack.c.h.b16 %v35
  %v279 = vunpack.c.l.b16 %v36
  %v280 = vunpack.c.l.b16 %v37
  %v281 = vunpack.c.h.b16 %v37
  %v282 = vunpack.c.l.b16 %v38
  %v283 = vunpack.c.l.b16 %v39
  %v284 = vunpack.c.h.b16 %v39
  %v285 = vunpack.c.l.b16 %v40
  %v286 = vunpack.c.l.b16 %v41
  %v287 = vunpack.c.h.b16 %v41
  %v288 = vunpack.c.l.b16 %v42
  %v289 = vunpack.c.l.b16 %v43
  %v290 = vunpack.c.h.b16 %v43
  %v291 = vunpack.c.l.b16 %v44
  %v292 = vunpack.c.l.b16 %v45
  %v293 = vunpack.c.h.b16 %v45
  %v294 = vunpack.c.l.b16 %v46
  %v295 = vpack.c.b16 %v250, %v247
  %v296 = vpack.c.b16 %v251, %v248
  %v297 = vpack.c.b16 %v252, %v249
  %v298 = vpack.c.b16 %v256, %v253
  %v299 = vpack.c.b16 %v257, %v254
  %v300 = vpack.c.b16 %v258, %v255
  %v301 = vpack.c.b16 %v262, %v259
  %v302 = vpack.c.b16 %v263, %v260
  %v303 = vpack.c.b16 %v264, %v261
  %v304 = vpack.c.b16 %v268, %v265
  %v305 = vpack.c.b16 %v269, %v266
  %v306 = vpack.c.b16 %v270, %v267
  %v307 = vpack.c.b16 %v274, %v271
  %v308 = vpack.c.b16 %v275, %v272
  %v309 = vpack.c.b16 %v276, %v273
  %v310 = vpack.c.b16 %v280, %v277
  %v311 = vpack.c.b16 %v281, %v278
  %v312 = vpack.c.b16 %v282, %v279
  %v313 = vpack.c.b16 %v286, %v283
  %v314 = vpack.c.b16 %v287, %v284
  %v315 = vpack.c.b16 %v288, %v285
  %v316 = vpack.c.b16 %v292, %v289
  %v317 = vpack.c.b16 %v293, %v290
  %v318 = vpack.c.b16 %v294, %v291
  %v407 = vunpack.c.l.b16 %v47
  %v408 = vunpack.c.h.b16 %v47
  %v409 = vunpack.c.l.b16 %v48
  %v410 = vunpack.c.h.b16 %v48
  %v411 = vunpack.c.l.b16 %v49
  %v412 = vunpack.c.h.b16 %v49
  %v413 = vunpack.c.l.b16 %v50
  %v414 = vunpack.c.h.b16 %v50
  %v415 = vunpack.c.l.b16 %v51
  %v416 = vunpack.c.h.b16 %v51
  %v417 = vunpack.c.l.b16 %v52
  %v418 = vunpack.c.h.b16 %v52
  %v419 = vunpack.c.l.b16 %v53
  %v420 = vunpack.c.h.b16 %v53
  %v421 = vunpack.c.l.b16 %v54
  %v422 = vunpack.c.h.b16 %v54
  %v423 = vunpack.c.l.b16 %v55
  %v424 = vunpack.c.h.b16 %v55
  %v425 = vunpack.c.l.b16 %v56
  %v426 = vunpack.c.h.b16 %v56
  %v427 = vunpack.c.l.b16 %v57
  %v428 = vunpack.c.h.b16 %v57
  %v429 = vunpack.c.l.b16 %v58
  %v430 = vunpack.c.h.b16 %v58
  %v431 = vunpack.c.l.b16 %v59
  %v432 = vunpack.c.h.b16 %v59
  %v433 = vunpack.c.l.b16 %v60
  %v434 = vunpack.c.h.b16 %v60
  %v435 = vunpack.c.l.b16 %v61
  %v436 = vunpack.c.h.b16 %v61
  %v437 = vunpack.c.l.b16 %v62
  %v438 = vunpack.c.h.b16 %v62
  %v439 = vunpack.c.l.b16 %v63
  %v440 = vunpack.c.h.b16 %v63
  %v441 = vunpack.c.l.b16 %v64
  %v442 = vunpack.c.h.b16 %v64
  %v443 = vunpack.c.l.b16 %v65
  %v444 = vunpack.c.h.b16 %v65
  %v445 = vunpack.c.l.b16 %v66
  %v446 = vunpack.c.h.b16 %v66
  %v447 = vunpack.c.l.b16 %v67
  %v448 = vunpack.c.h.b16 %v67
  %v449 = vunpack.c.l.b16 %v68
  %v450 = vunpack.c.h.b16 %v68
  %v451 = vunpack.c.l.b16 %v69
  %v452 = vunpack.c.h.b16 %v69
  %v453 = vunpack.c.l.b16 %v70
  %v454 = vunpack.c.h.b16 %v70
  %v455 = vunpack.c.l.b16 %v71
  %v456 = vunpack.c.h.b16 %v71
  %v457 = vunpack.c.l.b16 %v72
  %v458 = vunpack.c.h.b16 %v72
  %v459 = vunpack.c.l.b16 %v73
  %v460 = vunpack.c.h.b16 %v73
  %v461 = vunpack.c.l.b16 %v74
  %v462 = vunpack.c.h.b16 %v74
  %v463 = vunpack.c.l.b16 %v75
  %v464 = vunpack.c.h.b16 %v75
  %v465 = vunpack.c.l.b16 %v76
  %v466 = vunpack.c.h.b16 %v76
  %v467 = vunpack.c.l.b16 %v77
  %v468 = vunpack.c.h.b16 %v77
  %v469 = vunpack.c.l.b16 %v78
  %v470 = vunpack.c.h.b16 %v78
  %v471 = vunpack.c.l.b16 %v79
  %v472 = vunpack.c.h.b16 %v79
  %v473 = vunpack.c.l.b16 %v80
  %v474 = vunpack.c.h.b16 %v80
  %v475 = vunpack.c.l.b16 %v81
  %v476 = vunpack.c.h.b16 %v81
  %v477 = vunpack.c.l.b16 %v82
  %v478 = vunpack.c.h.b16 %v82
  %v479 = vunpack.c.l.b16 %v83
  %v480 = vunpack.c.h.b16 %v83
  %v481 = vunpack.c.l.b16 %v84
  %v482 = vunpack.c.h.b16 %v84
  %v483 = vunpack.c.l.b16 %v85
  %v484 = vunpack.c.h.b16 %v85
  %v485 = vunpack.c.l.b16 %v86
  %v486 = vunpack.c.h.b16 %v86
  %v487 = vunpack.c.l.b16 %v87
  %v488 = vunpack.c.h.b16 %v87
  %v489 = vunpack.c.l.b16 %v88
  %v490 = vunpack.c.h.b16 %v88
  %v491 = vunpack.c.l.b16 %v89
  %v492 = vunpack.c.h.b16 %v89
  %v493 = vunpack.c.l.b16 %v90
  %v494 = vunpack.c.h.b16 %v90
  %v495 = vunpack.c.l.b16 %v91
  %v496 = vunpack.c.h.b16 %v91
  %v497 = vunpack.c.l.b16 %v92
  %v498 = vunpack.c.h.b16 %v92
  %v499 = vunpack.c.l.b16 %v93
  %v500 = vunpack.c.h.b16 %v93
  %v501 = vunpack.c.l.b16 %v94
  %v502 = vunpack.c.h.b16 %v94
  %v503 = vunpack.c.l.b16 %v95
  %v504 = vunpack.c.h.b16 %v95
  %v505 = vunpack.c.l.b16 %v96
  %v506 = vunpack.c.h.b16 %v96
  %v507 = vunpack.c.l.b16 %v97
  %v508 = vunpack.c.h.b16 %v97
  %v509 = vunpack.c.l.b16 %v98
  %v510 = vunpack.c.h.b16 %v98
  %v511 = vunpack.c.l.b16 %v99
  %v512 = vunpack.c.h.b16 %v99
  %v513 = vunpack.c.l.b16 %v100
  %v514 = vunpack.c.h.b16 %v100
  %v515 = vunpack.c.l.b16 %v101
  %v516 = vunpack.c.h.b16 %v101
  %v517 = vunpack.c.l.b16 %v102
  %v518 = vunpack.c.h.b16 %v102
  %v519 = vunpack.c.l.b16 %v103
  %v520 = vunpack.c.h.b16 %v103
  %v521 = vunpack.c.l.b16 %v104
  %v522 = vunpack.c.h.b16 %v104
  %v523 = vunpack.c.l.b16 %v105
  %v524 = vunpack.c.h.b16 %v105
  %v525 = vunpack.c.l.b16 %v106
  %v526 = vunpack.c.h.b16 %v106
  %v527 = vunpack.c.l.b16 %v107
  %v528 = vunpack.c.h.b16 %v107
  %v529 = vunpack.c.l.b16 %v108
  %v530 = vunpack.c.h.b16 %v108
  %v531 = vunpack.c.l.b16 %v109
  %v532 = vunpack.c.h.b16 %v109
  %v533 = vunpack.c.l.b16 %v110
  %v534 = vunpack.c.h.b16 %v110
  %v535 = vunpack.c.l.b16 %v111
  %v536 = vunpack.c.h.b16 %v111
  %v537 = vunpack.c.l.b16 %v112
  %v538 = vunpack.c.h.b16 %v112
  %v539 = vunpack.c.l.b16 %v113
  %v540 = vunpack.c.h.b16 %v113
  %v541 = vunpack.c.l.b16 %v114
  %v542 = vunpack.c.h.b16 %v114
  %v543 = vunpack.c.l.b16 %v115
  %v544 = vunpack.c.h.b16 %v115
  %v545 = vunpack.c.l.b16 %v116
  %v546 = vunpack.c.h.b16 %v116
  %v547 = vunpack.c.l.b16 %v117
  %v548 = vunpack.c.h.b16 %v117
  %v549 = vunpack.c.l.b16 %v118
  %v550 = vunpack.c.h.b16 %v118
  %v551 = vpack.c.b16 %v411, %v407
  %v552 = vpack.c.b16 %v412, %v408
  %v553 = vpack.c.b16 %v413, %v409
  %v554 = vpack.c.b16 %v414, %v410
  %v555 = vpack.c.b16 %v419, %v415
  %v556 = vpack.c.b16 %v420, %v416
  %v557 = vpack.c.b16 %v421, %v417
  %v558 = vpack.c.b16 %v422, %v418
  %v559 = vpack.c.b16 %v427, %v423
  %v560 = vpack.c.b16 %v428, %v424
  %v561 = vpack.c.b16 %v429, %v425
  %v562 = vpack.c.b16 %v430, %v426
  %v563 = vpack.c.b16 %v435, %v431
  %v564 = vpack.c.b16 %v436, %v432
  %v565 = vpack.c.b16 %v437, %v433
  %v566 = vpack.c.b16 %v438, %v434
  %v567 = vpack.c.b16 %v443, %v439
  %v568 = vpack.c.b16 %v444, %v440
  %v569 = vpack.c.b16 %v445, %v441
  %v570 = vpack.c.b16 %v446, %v442
  %v571 = vpack.c.b16 %v451, %v447
  %v572 = vpack.c.b16 %v452, %v448
  %v573 = vpack.c.b16 %v453, %v449
  %v574 = vpack.c.b16 %v454, %v450
  %v575 = vpack.c.b16 %v459, %v455
  %v576 = vpack.c.b16 %v460, %v456
  %v577 = vpack.c.b16 %v461, %v457
  %v578 = vpack.c.b16 %v462, %v458
  %v579 = vpack.c.b16 %v467, %v463
  %v580 = vpack.c.b16 %v468, %v464
  %v581 = vpack.c.b16 %v469, %v465
  %v582 = vpack.c.b16 %v470, %v466
  %v583 = vpack.c.b16 %v475, %v471
  %v584 = vpack.c.b16 %v476, %v472
  %v585 = vpack.c.b16 %v477, %v473
  %v586 = vpack.c.b16 %v478, %v474
  %v587 = vpack.c.b16 %v483, %v479
  %v588 = vpack.c.b16 %v484, %v480
  %v589 = vpack.c.b16 %v485, %v481
  %v590 = vpack.c.b16 %v486, %v482
  %v591 = vpack.c.b16 %v491, %v487
  %v592 = vpack.c.b16 %v492, %v488
  %v593 = vpack.c.b16 %v493, %v489
  %v594 = vpack.c.b16 %v494, %v490
  %v595 = vpack.c.b16 %v499, %v495
  %v596 = vpack.c.b16 %v500, %v496
  %v597 = vpack.c.b16 %v501, %v497
  %v598 = vpack.c.b16 %v502, %v498
  %v599 = vpack.c.b16 %v507, %v503
  %v600 = vpack.c.b16 %v508, %v504
  %v601 = vpack.c.b16 %v509, %v505
  %v602 = vpack.c.b16 %v510, %v506
  %v603 = vpack.c.b16 %v515, %v511
  %v604 = vpack.c.b16 %v516, %v512
  %v605 = vpack.c.b16 %v517, %v513
  %v606 = vpack.c.b16 %v518, %v514
  %v607 = vpack.c.b16 %v523, %v519
  %v608 = vpack.c.b16 %v524, %v520
  %v609 = vpack.c.b16 %v525, %v521
  %v610 = vpack.c.b16 %v526, %v522
  %v611 = vpack.c.b16 %v531, %v527
  %v612 = vpack.c.b16 %v532, %v528
  %v613 = vpack.c.b16 %v533, %v529
  %v614 = vpack.c.b16 %v534, %v530
  %v615 = vpack.c.b16 %v539, %v535
  %v616 = vpack.c.b16 %v540, %v536
  %v617 = vpack.c.b16 %v541, %v537
  %v618 = vpack.c.b16 %v542, %v538
  %v619 = vpack.c.b16 %v547, %v543
  %v620 = vpack.c.b16 %v548, %v544
  %v621 = vpack.c.b16 %v549, %v545
  %v622 = vpack.c.b16 %v550, %v546
  %vm695 = vcmask 261120
  %v697 = vsel %vm695, %v297, 0
  %v700 = vsel %vm695, %v300, 0
  %v703 = vsel %vm695, %v303, 0
  %v706 = vsel %vm695, %v306, 0
  %v709 = vsel %vm695, %v309, 0
  %v712 = vsel %vm695, %v312, 0
  %v715 = vsel %vm695, %v315, 0
  %v718 = vsel %vm695, %v318, 0
  %720 = vmatpush.bf16.msra.mxu0 %v579
  %721 = vmatpush.bf16.msra.mxu0 %v575
  %722 = vmatpush.bf16.msra.mxu0 %v571
  %723 = vmatpush.bf16.msra.mxu0 %v567
  %724 = vmatpush.bf16.msra.mxu0 %v563
  %725 = vmatpush.bf16.msra.mxu0 %v559
  %726 = vmatpush.bf16.msra.mxu0 %v555
  %727 = vmatpush.bf16.msra.mxu0 %v551
  %728 = vmatmul.bf16.gmra.mxu0 %v295
  %v729 = vpop.f32.mrf.mxu0
  %v730 = vadd.f32 %v138, %v729
  %v731 = vpop.f32.mrf.mxu0
  %v732 = vadd.f32 %v143, %v731
  %733 = vmatmul.bf16.gmra.mxu0 %v298
  %v734 = vpop.f32.mrf.mxu0
  %v735 = vadd.f32 %v148, %v734
  %v736 = vpop.f32.mrf.mxu0
  %v737 = vadd.f32 %v153, %v736
  %738 = vmatmul.bf16.gmra.mxu0 %v301
  %v739 = vpop.f32.mrf.mxu0
  %v740 = vadd.f32 %v158, %v739
  %v741 = vpop.f32.mrf.mxu0
  %v742 = vadd.f32 %v163, %v741
  %743 = vmatmul.bf16.gmra.mxu0 %v304
  %v744 = vpop.f32.mrf.mxu0
  %v745 = vadd.f32 %v168, %v744
  %v746 = vpop.f32.mrf.mxu0
  %v747 = vadd.f32 %v173, %v746
  %748 = vmatmul.bf16.gmra.mxu0 %v307
  %v749 = vpop.f32.mrf.mxu0
  %v750 = vadd.f32 %v178, %v749
  %v751 = vpop.f32.mrf.mxu0
  %v752 = vadd.f32 %v183, %v751
  %753 = vmatmul.bf16.gmra.mxu0 %v310
  %v754 = vpop.f32.mrf.mxu0
  %v755 = vadd.f32 %v188, %v754
  %v756 = vpop.f32.mrf.mxu0
  %v757 = vadd.f32 %v193, %v756
  %758 = vmatmul.bf16.gmra.mxu0 %v313
  %v759 = vpop.f32.mrf.mxu0
  %v760 = vadd.f32 %v198, %v759
  %v761 = vpop.f32.mrf.mxu0
  %v762 = vadd.f32 %v203, %v761
  %763 = vmatmul.bf16.gmra.mxu0 %v316
  %v764 = vpop.f32.mrf.mxu0
  %v765 = vadd.f32 %v208, %v764
  %v766 = vpop.f32.mrf.mxu0
  %v767 = vadd.f32 %v213, %v766
  %768 = vdwg.mxu0
  %769 = vmatpush.bf16.msra.mxu0 %v611
  %770 = vmatpush.bf16.msra.mxu0 %v607
  %771 = vmatpush.bf16.msra.mxu0 %v603
  %772 = vmatpush.bf16.msra.mxu0 %v599
  %773 = vmatpush.bf16.msra.mxu0 %v595
  %774 = vmatpush.bf16.msra.mxu0 %v591
  %775 = vmatpush.bf16.msra.mxu0 %v587
  %776 = vmatpush.bf16.msra.mxu0 %v583
  %777 = vmatmul.bf16.gmra.mxu0 %v296
  %v778 = vpop.f32.mrf.mxu0
  %v779 = vadd.f32 %v730, %v778
  %v780 = vpop.f32.mrf.mxu0
  %v781 = vadd.f32 %v732, %v780
  %782 = vmatmul.bf16.gmra.mxu0 %v299
  %v783 = vpop.f32.mrf.mxu0
  %v784 = vadd.f32 %v735, %v783
  %v785 = vpop.f32.mrf.mxu0
  %v786 = vadd.f32 %v737, %v785
  %787 = vmatmul.bf16.gmra.mxu0 %v302
  %v788 = vpop.f32.mrf.mxu0
  %v789 = vadd.f32 %v740, %v788
  %v790 = vpop.f32.mrf.mxu0
  %v791 = vadd.f32 %v742, %v790
  %792 = vmatmul.bf16.gmra.mxu0 %v305
  %v793 = vpop.f32.mrf.mxu0
  %v794 = vadd.f32 %v745, %v793
  %v795 = vpop.f32.mrf.mxu0
  %v796 = vadd.f32 %v747, %v795
  %797 = vmatmul.bf16.gmra.mxu0 %v308
  %v798 = vpop.f32.mrf.mxu0
  %v799 = vadd.f32 %v750, %v798
  %v800 = vpop.f32.mrf.mxu0
  %v801 = vadd.f32 %v752, %v800
  %802 = vmatmul.bf16.gmra.mxu0 %v311
  %v803 = vpop.f32.mrf.mxu0
  %v804 = vadd.f32 %v755, %v803
  %v805 = vpop.f32.mrf.mxu0
  %v806 = vadd.f32 %v757, %v805
  %807 = vmatmul.bf16.gmra.mxu0 %v314
  %v808 = vpop.f32.mrf.mxu0
  %v809 = vadd.f32 %v760, %v808
  %v810 = vpop.f32.mrf.mxu0
  %v811 = vadd.f32 %v762, %v810
  %812 = vmatmul.bf16.gmra.mxu0 %v317
  %v813 = vpop.f32.mrf.mxu0
  %v814 = vadd.f32 %v765, %v813
  %v815 = vpop.f32.mrf.mxu0
  %v816 = vadd.f32 %v767, %v815
  %817 = vdwg.mxu0
  %818 = vmatpush.bf16.msra.mxu0 0
  %819 = vmatpush.bf16.msra.mxu0 0
  %820 = vmatpush.bf16.msra.mxu0 0
  %821 = vmatpush.bf16.msra.mxu0 0
  %822 = vmatpush.bf16.msra.mxu0 0
  %823 = vmatpush.bf16.msra.mxu0 0
  %824 = vmatpush.bf16.msra.mxu0 %v619
  %825 = vmatpush.bf16.msra.mxu0 %v615
  %826 = vmatmul.bf16.gmra.mxu0 %v697
  %v827 = vpop.f32.mrf.mxu0
  %v828 = vadd.f32 %v779, %v827
  %v829 = vpop.f32.mrf.mxu0
  %v830 = vadd.f32 %v781, %v829
  %831 = vmatmul.bf16.gmra.mxu0 %v700
  %v832 = vpop.f32.mrf.mxu0
  %v833 = vadd.f32 %v784, %v832
  %v834 = vpop.f32.mrf.mxu0
  %v835 = vadd.f32 %v786, %v834
  %836 = vmatmul.bf16.gmra.mxu0 %v703
  %v837 = vpop.f32.mrf.mxu0
  %v838 = vadd.f32 %v789, %v837
  %v839 = vpop.f32.mrf.mxu0
  %v840 = vadd.f32 %v791, %v839
  %841 = vmatmul.bf16.gmra.mxu0 %v706
  %v842 = vpop.f32.mrf.mxu0
  %v843 = vadd.f32 %v794, %v842
  %v844 = vpop.f32.mrf.mxu0
  %v845 = vadd.f32 %v796, %v844
  %846 = vmatmul.bf16.gmra.mxu0 %v709
  %v847 = vpop.f32.mrf.mxu0
  %v848 = vadd.f32 %v799, %v847
  %v849 = vpop.f32.mrf.mxu0
  %v850 = vadd.f32 %v801, %v849
  %851 = vmatmul.bf16.gmra.mxu0 %v712
  %v852 = vpop.f32.mrf.mxu0
  %v853 = vadd.f32 %v804, %v852
  %v854 = vpop.f32.mrf.mxu0
  %v855 = vadd.f32 %v806, %v854
  %856 = vmatmul.bf16.gmra.mxu0 %v715
  %v857 = vpop.f32.mrf.mxu0
  %v858 = vadd.f32 %v809, %v857
  %v859 = vpop.f32.mrf.mxu0
  %v860 = vadd.f32 %v811, %v859
  %861 = vmatmul.bf16.gmra.mxu0 %v718
  %v862 = vpop.f32.mrf.mxu0
  %v863 = vadd.f32 %v814, %v862
  %v864 = vpop.f32.mrf.mxu0
  %v865 = vadd.f32 %v816, %v864
  %866 = vdwg.mxu0
  %867 = vmatpush.bf16.msra.mxu0 %v580
  %868 = vmatpush.bf16.msra.mxu0 %v576
  %869 = vmatpush.bf16.msra.mxu0 %v572
  %870 = vmatpush.bf16.msra.mxu0 %v568
  %871 = vmatpush.bf16.msra.mxu0 %v564
  %872 = vmatpush.bf16.msra.mxu0 %v560
  %873 = vmatpush.bf16.msra.mxu0 %v556
  %874 = vmatpush.bf16.msra.mxu0 %v552
  %875 = vmatmul.bf16.gmra.mxu0 %v295
  %v876 = vpop.f32.mrf.mxu0
  %v877 = vadd.f32 %v138, %v876
  %v878 = vpop.f32.mrf.mxu0
  %v879 = vadd.f32 %v143, %v878
  %880 = vmatmul.bf16.gmra.mxu0 %v298
  %v881 = vpop.f32.mrf.mxu0
  %v882 = vadd.f32 %v148, %v881
  %v883 = vpop.f32.mrf.mxu0
  %v884 = vadd.f32 %v153, %v883
  %885 = vmatmul.bf16.gmra.mxu0 %v301
  %v886 = vpop.f32.mrf.mxu0
  %v887 = vadd.f32 %v158, %v886
  %v888 = vpop.f32.mrf.mxu0
  %v889 = vadd.f32 %v163, %v888
  %890 = vmatmul.bf16.gmra.mxu0 %v304
  %v891 = vpop.f32.mrf.mxu0
  %v892 = vadd.f32 %v168, %v891
  %v893 = vpop.f32.mrf.mxu0
  %v894 = vadd.f32 %v173, %v893
  %895 = vmatmul.bf16.gmra.mxu0 %v307
  %v896 = vpop.f32.mrf.mxu0
  %v897 = vadd.f32 %v178, %v896
  %v898 = vpop.f32.mrf.mxu0
  %v899 = vadd.f32 %v183, %v898
  %900 = vmatmul.bf16.gmra.mxu0 %v310
  %v901 = vpop.f32.mrf.mxu0
  %v902 = vadd.f32 %v188, %v901
  %v903 = vpop.f32.mrf.mxu0
  %v904 = vadd.f32 %v193, %v903
  %905 = vmatmul.bf16.gmra.mxu0 %v313
  %v906 = vpop.f32.mrf.mxu0
  %v907 = vadd.f32 %v198, %v906
  %v908 = vpop.f32.mrf.mxu0
  %v909 = vadd.f32 %v203, %v908
  %910 = vmatmul.bf16.gmra.mxu0 %v316
  %v911 = vpop.f32.mrf.mxu0
  %v912 = vadd.f32 %v208, %v911
  %v913 = vpop.f32.mrf.mxu0
  %v914 = vadd.f32 %v213, %v913
  %915 = vdwg.mxu0
  %916 = vmatpush.bf16.msra.mxu0 %v612
  %917 = vmatpush.bf16.msra.mxu0 %v608
  %918 = vmatpush.bf16.msra.mxu0 %v604
  %919 = vmatpush.bf16.msra.mxu0 %v600
  %920 = vmatpush.bf16.msra.mxu0 %v596
  %921 = vmatpush.bf16.msra.mxu0 %v592
  %922 = vmatpush.bf16.msra.mxu0 %v588
  %923 = vmatpush.bf16.msra.mxu0 %v584
  %924 = vmatmul.bf16.gmra.mxu0 %v296
  %v925 = vpop.f32.mrf.mxu0
  %v926 = vadd.f32 %v877, %v925
  %v927 = vpop.f32.mrf.mxu0
  %v928 = vadd.f32 %v879, %v927
  %929 = vmatmul.bf16.gmra.mxu0 %v299
  %v930 = vpop.f32.mrf.mxu0
  %v931 = vadd.f32 %v882, %v930
  %v932 = vpop.f32.mrf.mxu0
  %v933 = vadd.f32 %v884, %v932
  %934 = vmatmul.bf16.gmra.mxu0 %v302
  %v935 = vpop.f32.mrf.mxu0
  %v936 = vadd.f32 %v887, %v935
  %v937 = vpop.f32.mrf.mxu0
  %v938 = vadd.f32 %v889, %v937
  %939 = vmatmul.bf16.gmra.mxu0 %v305
  %v940 = vpop.f32.mrf.mxu0
  %v941 = vadd.f32 %v892, %v940
  %v942 = vpop.f32.mrf.mxu0
  %v943 = vadd.f32 %v894, %v942
  %944 = vmatmul.bf16.gmra.mxu0 %v308
  %v945 = vpop.f32.mrf.mxu0
  %v946 = vadd.f32 %v897, %v945
  %v947 = vpop.f32.mrf.mxu0
  %v948 = vadd.f32 %v899, %v947
  %949 = vmatmul.bf16.gmra.mxu0 %v311
  %v950 = vpop.f32.mrf.mxu0
  %v951 = vadd.f32 %v902, %v950
  %v952 = vpop.f32.mrf.mxu0
  %v953 = vadd.f32 %v904, %v952
  %954 = vmatmul.bf16.gmra.mxu0 %v314
  %v955 = vpop.f32.mrf.mxu0
  %v956 = vadd.f32 %v907, %v955
  %v957 = vpop.f32.mrf.mxu0
  %v958 = vadd.f32 %v909, %v957
  %959 = vmatmul.bf16.gmra.mxu0 %v317
  %v960 = vpop.f32.mrf.mxu0
  %v961 = vadd.f32 %v912, %v960
  %v962 = vpop.f32.mrf.mxu0
  %v963 = vadd.f32 %v914, %v962
  %964 = vdwg.mxu0
  %965 = vmatpush.bf16.msra.mxu0 0
  %966 = vmatpush.bf16.msra.mxu0 0
  %967 = vmatpush.bf16.msra.mxu0 0
  %968 = vmatpush.bf16.msra.mxu0 0
  %969 = vmatpush.bf16.msra.mxu0 0
  %970 = vmatpush.bf16.msra.mxu0 0
  %971 = vmatpush.bf16.msra.mxu0 %v620
  %972 = vmatpush.bf16.msra.mxu0 %v616
  %973 = vmatmul.bf16.gmra.mxu0 %v697
  %v974 = vpop.f32.mrf.mxu0
  %v975 = vadd.f32 %v926, %v974
  %v976 = vpop.f32.mrf.mxu0
  %v977 = vadd.f32 %v928, %v976
  %978 = vmatmul.bf16.gmra.mxu0 %v700
  %v979 = vpop.f32.mrf.mxu0
  %v980 = vadd.f32 %v931, %v979
  %v981 = vpop.f32.mrf.mxu0
  %v982 = vadd.f32 %v933, %v981
  %983 = vmatmul.bf16.gmra.mxu0 %v703
  %v984 = vpop.f32.mrf.mxu0
  %v985 = vadd.f32 %v936, %v984
  %v986 = vpop.f32.mrf.mxu0
  %v987 = vadd.f32 %v938, %v986
  %988 = vmatmul.bf16.gmra.mxu0 %v706
  %v989 = vpop.f32.mrf.mxu0
  %v990 = vadd.f32 %v941, %v989
  %v991 = vpop.f32.mrf.mxu0
  %v992 = vadd.f32 %v943, %v991
  %993 = vmatmul.bf16.gmra.mxu0 %v709
  %v994 = vpop.f32.mrf.mxu0
  %v995 = vadd.f32 %v946, %v994
  %v996 = vpop.f32.mrf.mxu0
  %v997 = vadd.f32 %v948, %v996
  %998 = vmatmul.bf16.gmra.mxu0 %v712
  %v999 = vpop.f32.mrf.mxu0
  %v1000 = vadd.f32 %v951, %v999
  %v1001 = vpop.f32.mrf.mxu0
  %v1002 = vadd.f32 %v953, %v1001
  %1003 = vmatmul.bf16.gmra.mxu0 %v715
  %v1004 = vpop.f32.mrf.mxu0
  %v1005 = vadd.f32 %v956, %v1004
  %v1006 = vpop.f32.mrf.mxu0
  %v1007 = vadd.f32 %v958, %v1006
  %1008 = vmatmul.bf16.gmra.mxu0 %v718
  %v1009 = vpop.f32.mrf.mxu0
  %v1010 = vadd.f32 %v961, %v1009
  %v1011 = vpop.f32.mrf.mxu0
  %v1012 = vadd.f32 %v963, %v1011
  %1013 = vdwg.mxu0
  %1014 = vmatpush.bf16.msra.mxu0 %v581
  %1015 = vmatpush.bf16.msra.mxu0 %v577
  %1016 = vmatpush.bf16.msra.mxu0 %v573
  %1017 = vmatpush.bf16.msra.mxu0 %v569
  %1018 = vmatpush.bf16.msra.mxu0 %v565
  %1019 = vmatpush.bf16.msra.mxu0 %v561
  %1020 = vmatpush.bf16.msra.mxu0 %v557
  %1021 = vmatpush.bf16.msra.mxu0 %v553
  %1022 = vmatmul.bf16.gmra.mxu0 %v295
  %v1023 = vpop.f32.mrf.mxu0
  %v1024 = vadd.f32 %v138, %v1023
  %v1025 = vpop.f32.mrf.mxu0
  %v1026 = vadd.f32 %v143, %v1025
  %1027 = vmatmul.bf16.gmra.mxu0 %v298
  %v1028 = vpop.f32.mrf.mxu0
  %v1029 = vadd.f32 %v148, %v1028
  %v1030 = vpop.f32.mrf.mxu0
  %v1031 = vadd.f32 %v153, %v1030
  %1032 = vmatmul.bf16.gmra.mxu0 %v301
  %v1033 = vpop.f32.mrf.mxu0
  %v1034 = vadd.f32 %v158, %v1033
  %v1035 = vpop.f32.mrf.mxu0
  %v1036 = vadd.f32 %v163, %v1035
  %1037 = vmatmul.bf16.gmra.mxu0 %v304
  %v1038 = vpop.f32.mrf.mxu0
  %v1039 = vadd.f32 %v168, %v1038
  %v1040 = vpop.f32.mrf.mxu0
  %v1041 = vadd.f32 %v173, %v1040
  %1042 = vmatmul.bf16.gmra.mxu0 %v307
  %v1043 = vpop.f32.mrf.mxu0
  %v1044 = vadd.f32 %v178, %v1043
  %v1045 = vpop.f32.mrf.mxu0
  %v1046 = vadd.f32 %v183, %v1045
  %1047 = vmatmul.bf16.gmra.mxu0 %v310
  %v1048 = vpop.f32.mrf.mxu0
  %v1049 = vadd.f32 %v188, %v1048
  %v1050 = vpop.f32.mrf.mxu0
  %v1051 = vadd.f32 %v193, %v1050
  %1052 = vmatmul.bf16.gmra.mxu0 %v313
  %v1053 = vpop.f32.mrf.mxu0
  %v1054 = vadd.f32 %v198, %v1053
  %v1055 = vpop.f32.mrf.mxu0
  %v1056 = vadd.f32 %v203, %v1055
  %1057 = vmatmul.bf16.gmra.mxu0 %v316
  %v1058 = vpop.f32.mrf.mxu0
  %v1059 = vadd.f32 %v208, %v1058
  %v1060 = vpop.f32.mrf.mxu0
  %v1061 = vadd.f32 %v213, %v1060
  %1062 = vdwg.mxu0
  %1063 = vmatpush.bf16.msra.mxu0 %v613
  %1064 = vmatpush.bf16.msra.mxu0 %v609
  %1065 = vmatpush.bf16.msra.mxu0 %v605
  %1066 = vmatpush.bf16.msra.mxu0 %v601
  %1067 = vmatpush.bf16.msra.mxu0 %v597
  %1068 = vmatpush.bf16.msra.mxu0 %v593
  %1069 = vmatpush.bf16.msra.mxu0 %v589
  %1070 = vmatpush.bf16.msra.mxu0 %v585
  %1071 = vmatmul.bf16.gmra.mxu0 %v296
  %v1072 = vpop.f32.mrf.mxu0
  %v1073 = vadd.f32 %v1024, %v1072
  %v1074 = vpop.f32.mrf.mxu0
  %v1075 = vadd.f32 %v1026, %v1074
  %1076 = vmatmul.bf16.gmra.mxu0 %v299
  %v1077 = vpop.f32.mrf.mxu0
  %v1078 = vadd.f32 %v1029, %v1077
  %v1079 = vpop.f32.mrf.mxu0
  %v1080 = vadd.f32 %v1031, %v1079
  %1081 = vmatmul.bf16.gmra.mxu0 %v302
  %v1082 = vpop.f32.mrf.mxu0
  %v1083 = vadd.f32 %v1034, %v1082
  %v1084 = vpop.f32.mrf.mxu0
  %v1085 = vadd.f32 %v1036, %v1084
  %1086 = vmatmul.bf16.gmra.mxu0 %v305
  %v1087 = vpop.f32.mrf.mxu0
  %v1088 = vadd.f32 %v1039, %v1087
  %v1089 = vpop.f32.mrf.mxu0
  %v1090 = vadd.f32 %v1041, %v1089
  %1091 = vmatmul.bf16.gmra.mxu0 %v308
  %v1092 = vpop.f32.mrf.mxu0
  %v1093 = vadd.f32 %v1044, %v1092
  %v1094 = vpop.f32.mrf.mxu0
  %v1095 = vadd.f32 %v1046, %v1094
  %1096 = vmatmul.bf16.gmra.mxu0 %v311
  %v1097 = vpop.f32.mrf.mxu0
  %v1098 = vadd.f32 %v1049, %v1097
  %v1099 = vpop.f32.mrf.mxu0
  %v1100 = vadd.f32 %v1051, %v1099
  %1101 = vmatmul.bf16.gmra.mxu0 %v314
  %v1102 = vpop.f32.mrf.mxu0
  %v1103 = vadd.f32 %v1054, %v1102
  %v1104 = vpop.f32.mrf.mxu0
  %v1105 = vadd.f32 %v1056, %v1104
  %1106 = vmatmul.bf16.gmra.mxu0 %v317
  %v1107 = vpop.f32.mrf.mxu0
  %v1108 = vadd.f32 %v1059, %v1107
  %v1109 = vpop.f32.mrf.mxu0
  %v1110 = vadd.f32 %v1061, %v1109
  %1111 = vdwg.mxu0
  %1112 = vmatpush.bf16.msra.mxu0 0
  %1113 = vmatpush.bf16.msra.mxu0 0
  %1114 = vmatpush.bf16.msra.mxu0 0
  %1115 = vmatpush.bf16.msra.mxu0 0
  %1116 = vmatpush.bf16.msra.mxu0 0
  %1117 = vmatpush.bf16.msra.mxu0 0
  %1118 = vmatpush.bf16.msra.mxu0 %v621
  %1119 = vmatpush.bf16.msra.mxu0 %v617
  %1120 = vmatmul.bf16.gmra.mxu0 %v697
  %v1121 = vpop.f32.mrf.mxu0
  %v1122 = vadd.f32 %v1073, %v1121
  %v1123 = vpop.f32.mrf.mxu0
  %v1124 = vadd.f32 %v1075, %v1123
  %1125 = vmatmul.bf16.gmra.mxu0 %v700
  %v1126 = vpop.f32.mrf.mxu0
  %v1127 = vadd.f32 %v1078, %v1126
  %v1128 = vpop.f32.mrf.mxu0
  %v1129 = vadd.f32 %v1080, %v1128
  %1130 = vmatmul.bf16.gmra.mxu0 %v703
  %v1131 = vpop.f32.mrf.mxu0
  %v1132 = vadd.f32 %v1083, %v1131
  %v1133 = vpop.f32.mrf.mxu0
  %v1134 = vadd.f32 %v1085, %v1133
  %1135 = vmatmul.bf16.gmra.mxu0 %v706
  %v1136 = vpop.f32.mrf.mxu0
  %v1137 = vadd.f32 %v1088, %v1136
  %v1138 = vpop.f32.mrf.mxu0
  %v1139 = vadd.f32 %v1090, %v1138
  %1140 = vmatmul.bf16.gmra.mxu0 %v709
  %v1141 = vpop.f32.mrf.mxu0
  %v1142 = vadd.f32 %v1093, %v1141
  %v1143 = vpop.f32.mrf.mxu0
  %v1144 = vadd.f32 %v1095, %v1143
  %1145 = vmatmul.bf16.gmra.mxu0 %v712
  %v1146 = vpop.f32.mrf.mxu0
  %v1147 = vadd.f32 %v1098, %v1146
  %v1148 = vpop.f32.mrf.mxu0
  %v1149 = vadd.f32 %v1100, %v1148
  %1150 = vmatmul.bf16.gmra.mxu0 %v715
  %v1151 = vpop.f32.mrf.mxu0
  %v1152 = vadd.f32 %v1103, %v1151
  %v1153 = vpop.f32.mrf.mxu0
  %v1154 = vadd.f32 %v1105, %v1153
  %1155 = vmatmul.bf16.gmra.mxu0 %v718
  %v1156 = vpop.f32.mrf.mxu0
  %v1157 = vadd.f32 %v1108, %v1156
  %v1158 = vpop.f32.mrf.mxu0
  %v1159 = vadd.f32 %v1110, %v1158
  %1160 = vdwg.mxu0
  %1161 = vmatpush.bf16.msra.mxu0 %v582
  %1162 = vmatpush.bf16.msra.mxu0 %v578
  %1163 = vmatpush.bf16.msra.mxu0 %v574
  %1164 = vmatpush.bf16.msra.mxu0 %v570
  %1165 = vmatpush.bf16.msra.mxu0 %v566
  %1166 = vmatpush.bf16.msra.mxu0 %v562
  %1167 = vmatpush.bf16.msra.mxu0 %v558
  %1168 = vmatpush.bf16.msra.mxu0 %v554
  %1169 = vmatmul.bf16.gmra.mxu0 %v295
  %v1170 = vpop.f32.mrf.mxu0
  %v1171 = vadd.f32 %v138, %v1170
  %v1172 = vpop.f32.mrf.mxu0
  %v1173 = vadd.f32 %v143, %v1172
  %1174 = vmatmul.bf16.gmra.mxu0 %v298
  %v1175 = vpop.f32.mrf.mxu0
  %v1176 = vadd.f32 %v148, %v1175
  %v1177 = vpop.f32.mrf.mxu0
  %v1178 = vadd.f32 %v153, %v1177
  %1179 = vmatmul.bf16.gmra.mxu0 %v301
  %v1180 = vpop.f32.mrf.mxu0
  %v1181 = vadd.f32 %v158, %v1180
  %v1182 = vpop.f32.mrf.mxu0
  %v1183 = vadd.f32 %v163, %v1182
  %1184 = vmatmul.bf16.gmra.mxu0 %v304
  %v1185 = vpop.f32.mrf.mxu0
  %v1186 = vadd.f32 %v168, %v1185
  %v1187 = vpop.f32.mrf.mxu0
  %v1188 = vadd.f32 %v173, %v1187
  %1189 = vmatmul.bf16.gmra.mxu0 %v307
  %v1190 = vpop.f32.mrf.mxu0
  %v1191 = vadd.f32 %v178, %v1190
  %v1192 = vpop.f32.mrf.mxu0
  %v1193 = vadd.f32 %v183, %v1192
  %1194 = vmatmul.bf16.gmra.mxu0 %v310
  %v1195 = vpop.f32.mrf.mxu0
  %v1196 = vadd.f32 %v188, %v1195
  %v1197 = vpop.f32.mrf.mxu0
  %v1198 = vadd.f32 %v193, %v1197
  %1199 = vmatmul.bf16.gmra.mxu0 %v313
  %v1200 = vpop.f32.mrf.mxu0
  %v1201 = vadd.f32 %v198, %v1200
  %v1202 = vpop.f32.mrf.mxu0
  %v1203 = vadd.f32 %v203, %v1202
  %1204 = vmatmul.bf16.gmra.mxu0 %v316
  %v1205 = vpop.f32.mrf.mxu0
  %v1206 = vadd.f32 %v208, %v1205
  %v1207 = vpop.f32.mrf.mxu0
  %v1208 = vadd.f32 %v213, %v1207
  %1209 = vdwg.mxu0
  %1210 = vmatpush.bf16.msra.mxu0 %v614
  %1211 = vmatpush.bf16.msra.mxu0 %v610
  %1212 = vmatpush.bf16.msra.mxu0 %v606
  %1213 = vmatpush.bf16.msra.mxu0 %v602
  %1214 = vmatpush.bf16.msra.mxu0 %v598
  %1215 = vmatpush.bf16.msra.mxu0 %v594
  %1216 = vmatpush.bf16.msra.mxu0 %v590
  %1217 = vmatpush.bf16.msra.mxu0 %v586
  %1218 = vmatmul.bf16.gmra.mxu0 %v296
  %v1219 = vpop.f32.mrf.mxu0
  %v1220 = vadd.f32 %v1171, %v1219
  %v1221 = vpop.f32.mrf.mxu0
  %v1222 = vadd.f32 %v1173, %v1221
  %1223 = vmatmul.bf16.gmra.mxu0 %v299
  %v1224 = vpop.f32.mrf.mxu0
  %v1225 = vadd.f32 %v1176, %v1224
  %v1226 = vpop.f32.mrf.mxu0
  %v1227 = vadd.f32 %v1178, %v1226
  %1228 = vmatmul.bf16.gmra.mxu0 %v302
  %v1229 = vpop.f32.mrf.mxu0
  %v1230 = vadd.f32 %v1181, %v1229
  %v1231 = vpop.f32.mrf.mxu0
  %v1232 = vadd.f32 %v1183, %v1231
  %1233 = vmatmul.bf16.gmra.mxu0 %v305
  %v1234 = vpop.f32.mrf.mxu0
  %v1235 = vadd.f32 %v1186, %v1234
  %v1236 = vpop.f32.mrf.mxu0
  %v1237 = vadd.f32 %v1188, %v1236
  %1238 = vmatmul.bf16.gmra.mxu0 %v308
  %v1239 = vpop.f32.mrf.mxu0
  %v1240 = vadd.f32 %v1191, %v1239
  %v1241 = vpop.f32.mrf.mxu0
  %v1242 = vadd.f32 %v1193, %v1241
  %1243 = vmatmul.bf16.gmra.mxu0 %v311
  %v1244 = vpop.f32.mrf.mxu0
  %v1245 = vadd.f32 %v1196, %v1244
  %v1246 = vpop.f32.mrf.mxu0
  %v1247 = vadd.f32 %v1198, %v1246
  %1248 = vmatmul.bf16.gmra.mxu0 %v314
  %v1249 = vpop.f32.mrf.mxu0
  %v1250 = vadd.f32 %v1201, %v1249
  %v1251 = vpop.f32.mrf.mxu0
  %v1252 = vadd.f32 %v1203, %v1251
  %1253 = vmatmul.bf16.gmra.mxu0 %v317
  %v1254 = vpop.f32.mrf.mxu0
  %v1255 = vadd.f32 %v1206, %v1254
  %v1256 = vpop.f32.mrf.mxu0
  %v1257 = vadd.f32 %v1208, %v1256
  %1258 = vdwg.mxu0
  %1259 = vmatpush.bf16.msra.mxu0 0
  %1260 = vmatpush.bf16.msra.mxu0 0
  %1261 = vmatpush.bf16.msra.mxu0 0
  %1262 = vmatpush.bf16.msra.mxu0 0
  %1263 = vmatpush.bf16.msra.mxu0 0
  %1264 = vmatpush.bf16.msra.mxu0 0
  %1265 = vmatpush.bf16.msra.mxu0 %v622
  %1266 = vmatpush.bf16.msra.mxu0 %v618
  %1267 = vmatmul.bf16.gmra.mxu0 %v697
  %v1268 = vpop.f32.mrf.mxu0
  %v1269 = vadd.f32 %v1220, %v1268
  %v1270 = vpop.f32.mrf.mxu0
  %v1271 = vadd.f32 %v1222, %v1270
  %1272 = vmatmul.bf16.gmra.mxu0 %v700
  %v1273 = vpop.f32.mrf.mxu0
  %v1274 = vadd.f32 %v1225, %v1273
  %v1275 = vpop.f32.mrf.mxu0
  %v1276 = vadd.f32 %v1227, %v1275
  %1277 = vmatmul.bf16.gmra.mxu0 %v703
  %v1278 = vpop.f32.mrf.mxu0
  %v1279 = vadd.f32 %v1230, %v1278
  %v1280 = vpop.f32.mrf.mxu0
  %v1281 = vadd.f32 %v1232, %v1280
  %1282 = vmatmul.bf16.gmra.mxu0 %v706
  %v1283 = vpop.f32.mrf.mxu0
  %v1284 = vadd.f32 %v1235, %v1283
  %v1285 = vpop.f32.mrf.mxu0
  %v1286 = vadd.f32 %v1237, %v1285
  %1287 = vmatmul.bf16.gmra.mxu0 %v709
  %v1288 = vpop.f32.mrf.mxu0
  %v1289 = vadd.f32 %v1240, %v1288
  %v1290 = vpop.f32.mrf.mxu0
  %v1291 = vadd.f32 %v1242, %v1290
  %1292 = vmatmul.bf16.gmra.mxu0 %v712
  %v1293 = vpop.f32.mrf.mxu0
  %v1294 = vadd.f32 %v1245, %v1293
  %v1295 = vpop.f32.mrf.mxu0
  %v1296 = vadd.f32 %v1247, %v1295
  %1297 = vmatmul.bf16.gmra.mxu0 %v715
  %v1298 = vpop.f32.mrf.mxu0
  %v1299 = vadd.f32 %v1250, %v1298
  %v1300 = vpop.f32.mrf.mxu0
  %v1301 = vadd.f32 %v1252, %v1300
  %1302 = vmatmul.bf16.gmra.mxu0 %v718
  %v1303 = vpop.f32.mrf.mxu0
  %v1304 = vadd.f32 %v1255, %v1303
  %v1305 = vpop.f32.mrf.mxu0
  %v1306 = vadd.f32 %v1257, %v1305
  %1307 = vdwg.mxu0
  %v1308 = vpack.c.bf16 %v975, %v828
  %v1309 = vpack.c.bf16 %v1269, %v1122
  %v1310 = vpack.c.bf16 %v977, %v830
  %v1311 = vpack.c.bf16 %v1271, %v1124
  %v1312 = vpack.c.bf16 %v980, %v833
  %v1313 = vpack.c.bf16 %v1274, %v1127
  %v1314 = vpack.c.bf16 %v982, %v835
  %v1315 = vpack.c.bf16 %v1276, %v1129
  %v1316 = vpack.c.bf16 %v985, %v838
  %v1317 = vpack.c.bf16 %v1279, %v1132
  %v1318 = vpack.c.bf16 %v987, %v840
  %v1319 = vpack.c.bf16 %v1281, %v1134
  %v1320 = vpack.c.bf16 %v990, %v843
  %v1321 = vpack.c.bf16 %v1284, %v1137
  %v1322 = vpack.c.bf16 %v992, %v845
  %v1323 = vpack.c.bf16 %v1286, %v1139
  %v1324 = vpack.c.bf16 %v995, %v848
  %v1325 = vpack.c.bf16 %v1289, %v1142
  %v1326 = vpack.c.bf16 %v997, %v850
  %v1327 = vpack.c.bf16 %v1291, %v1144
  %v1328 = vpack.c.bf16 %v1000, %v853
  %v1329 = vpack.c.bf16 %v1294, %v1147
  %v1330 = vpack.c.bf16 %v1002, %v855
  %v1331 = vpack.c.bf16 %v1296, %v1149
  %v1332 = vpack.c.bf16 %v1005, %v858
  %v1333 = vpack.c.bf16 %v1299, %v1152
  %v1334 = vpack.c.bf16 %v1007, %v860
  %v1335 = vpack.c.bf16 %v1301, %v1154
  %v1336 = vpack.c.bf16 %v1010, %v863
  %v1337 = vpack.c.bf16 %v1304, %v1157
  %v1338 = vpack.c.bf16 %v1012, %v865
  %v1339 = vpack.c.bf16 %v1306, %v1159
  %1340 = vst [vmem:[%s3] sm:$0xff] %v1308
  %1341 = vst [vmem:[%s3 + $0x8] sm:$0xff] %v1309
  %1342 = vst [vmem:[%s3 + $0x10] sm:$0xff] %v1310
  %1343 = vst [vmem:[%s3 + $0x18] sm:$0xff] %v1311
  %1344 = vst [vmem:[%s3 + $0x20] sm:$0xff] %v1312
  %1345 = vst [vmem:[%s3 + $0x28] sm:$0xff] %v1313
  %1346 = vst [vmem:[%s3 + $0x30] sm:$0xff] %v1314
  %1347 = vst [vmem:[%s3 + $0x38] sm:$0xff] %v1315
  %1348 = vst [vmem:[%s3 + $0x40] sm:$0xff] %v1316
  %1349 = vst [vmem:[%s3 + $0x48] sm:$0xff] %v1317
  %1350 = vst [vmem:[%s3 + $0x50] sm:$0xff] %v1318
  %1351 = vst [vmem:[%s3 + $0x58] sm:$0xff] %v1319
  %1352 = vst [vmem:[%s3 + $0x60] sm:$0xff] %v1320
  %1353 = vst [vmem:[%s3 + $0x68] sm:$0xff] %v1321
  %1354 = vst [vmem:[%s3 + $0x70] sm:$0xff] %v1322
  %1355 = vst [vmem:[%s3 + $0x78] sm:$0xff] %v1323
  %1356 = vst [vmem:[%s3 + $0x80] sm:$0xff] %v1324
  %1357 = vst [vmem:[%s3 + $0x88] sm:$0xff] %v1325
  %1358 = vst [vmem:[%s3 + $0x90] sm:$0xff] %v1326
  %1359 = vst [vmem:[%s3 + $0x98] sm:$0xff] %v1327
  %1360 = vst [vmem:[%s3 + $0xa0] sm:$0xff] %v1328
  %1361 = vst [vmem:[%s3 + $0xa8] sm:$0xff] %v1329
  %1362 = vst [vmem:[%s3 + $0xb0] sm:$0xff] %v1330
  %1363 = vst [vmem:[%s3 + $0xb8] sm:$0xff] %v1331
  %1364 = vst [vmem:[%s3 + $0xc0] sm:$0xff] %v1332
  %1365 = vst [vmem:[%s3 + $0xc8] sm:$0xff] %v1333
  %1366 = vst [vmem:[%s3 + $0xd0] sm:$0xff] %v1334
  %1367 = vst [vmem:[%s3 + $0xd8] sm:$0xff] %v1335
  %1368 = vst [vmem:[%s3 + $0xe0] sm:$0xff] %v1336
  %1369 = vst [vmem:[%s3 + $0xe8] sm:$0xff] %v1337
  %1370 = vst [vmem:[%s3 + $0xf0] sm:$0xff] %v1338
  %1371 = vst [vmem:[%s3 + $0xf8] sm:$0xff] %v1339
  // Predicated region
  $region14: #{chained_forward.20} parent=0 // pred_check
    _
  $region15: #{chained_forward.20} parent=0 // pred_check_branch
    %1373 = sbr.rel (0) target = $region17
  $region16: #{chained_forward.20} parent=0 // pred_region
    _
  $region17: #{chained_forward.20} parent=0 // pred_fallthru
    _
  // Predicated region
  $region18: #{chained_forward.20} parent=0 // pred_check
    _
  $region19: #{chained_forward.20} parent=0 // pred_check_branch
    %1375 = sbr.rel (0) target = $region21
  $region20: #{chained_forward.20} parent=0 // pred_region
    _
  $region21: #{chained_forward.20} parent=0 // pred_fallthru
    _

// kernel: chained_forward.21
$region0: #{chained_forward.21}
  #allocation0 [shape = 'u32[]', space=smem, size = 0x4, offset = 0x4, fixed_abs, tag = 'smem constant byte address 0x4 - core index']
  #allocation1 [shape = 'u32[72,128]{1,0:T(1,128)}', space=vmem, size = 0x9000, scoped, tag = 'internal scratch']
  #allocation2 [shape = 'f32[1,1]{1,0:T(1,128)S(1)}', space=vmem, size = 0x200, scoped, tag = 'scoped memory for chained_forward.21']
  %s0 = inlined_call_operand.vmem [shape: bf16[1,288], index: 0, kind: input, shape index: {}]
  %s1 = inlined_call_operand.vmem [shape: bf16[288,2048], index: 1, kind: input, shape index: {}]
  %s2 = inlined_call_operand.<no memory space> [shape: f32[1,1], index: 2, kind: input, shape index: {}]
  %s3 = inlined_call_operand.vmem [shape: f32[1,2048], index: 3, kind: output, shape index: {}]
  %s4 = sld [smem:[#allocation0]]
  $region68: #{chained_forward.21} parent=0
    _
  %s6 = ssub.s32 1, %s4
  %s7 = scalar_select 0, %s6, %s4
  %v8 = vstv %s2
  %9 = vst [vmem:[#allocation2] sm:$0x1] %v8
  $region1: #{chained_forward.21} parent=0
    #allocation3 [shape = 'u8[1179648]{0}', space=vmem, size = 0x120000, scoped, tag = 'input window, operand 1']
    loop: start=0, step=1, limit=4
    $region2: #{chained_forward.21} parent=1 // loop_pre_header
      _
    $region3: #{chained_forward.21} parent=1 // loop_header
      %s11 = sphi 0, %s15
      %p12 = scmp.ge.s32.totalorder %s11, 4
      %s19 = sphi 0, %s19
      %s21 = sphi 0, %s19
      %s22 = sphi 0, %s21
      %s36 = sphi 0, %s22
      %s42 = sphi 0, %s44
      %s45 = sphi 0, %s42
      %s46 = sphi 0, %s45
      %s62 = sphi 0, %s46
      %s66 = sphi 0, %s66
      %s68 = sphi 0, %s66
      %s69 = sphi 0, %s68
      %s83 = sphi 0, %s69
      %s89 = sphi 0, %s91
      %s92 = sphi 0, %s89
      %s93 = sphi 0, %s92
      %s109 = sphi 0, %s93
    $region4: #{chained_forward.21} parent=1 // loop_header_branch
      %14 = sbr.rel (%p12) target = $region8
    $region5: #{chained_forward.21} parent=1 // loop_body
      %s16 = ssub.s32 %s11, 1
      %s17 = ssub.s32 %s11, 2
      %s18 = sadd.s32 %s11, 1
      %s20 = sadd.s32 %s19, 1
      %p23 = scmp.eq.s32.totalorder %s11, 1
      %p24 = scmp.ne.s32.totalorder %s19, %s21
      %p25 = scmp.eq.s32.totalorder %s11, 0
      %p26 = por %p24, %p25
      %p27 = scmp.ne.s32.totalorder %s19, %s21
      %p28 = scmp.eq.s32.totalorder %s16, 1
      %p29 = por %p27, %p28
      %p30 = scmp.ne.s32.totalorder %s21, %s22
      %p31 = scmp.eq.s32.totalorder %s16, 0
      %p32 = por %p30, %p31
      %p33 = scmp.ne.s32.totalorder %s21, %s22
      %p34 = scmp.eq.s32.totalorder %s17, 1
      %p35 = por %p33, %p34
      %p37 = scmp.ne.s32.totalorder %s22, %s36
      %p38 = scmp.eq.s32.totalorder %s17, 0
      %p39 = por %p37, %p38
      %s40 = ssub.s32 %s11, %s18
      %p41 = scmp.eq.s32.totalorder %s40, 0
      %s43 = sadd.s32 %s42, 1
      %s44 = scalar_select %p41, %s42, %s43
      %p47 = pneg %p41
      %p48 = scmp.eq.s32.totalorder %s11, 1
      %p49 = por %p47, %p48
      %p50 = scmp.ne.s32.totalorder %s42, %s45
      %p51 = scmp.eq.s32.totalorder %s11, 0
      %p52 = por %p50, %p51
      %p53 = scmp.ne.s32.totalorder %s42, %s45
      %p54 = scmp.eq.s32.totalorder %s16, 1
      %p55 = por %p53, %p54
      %p56 = scmp.ne.s32.totalorder %s45, %s46
      %p57 = scmp.eq.s32.totalorder %s16, 0
      %p58 = por %p56, %p57
      %p59 = scmp.ne.s32.totalorder %s45, %s46
      %p60 = scmp.eq.s32.totalorder %s17, 1
      %p61 = por %p59, %p60
      %p63 = scmp.ne.s32.totalorder %s46, %s62
      %p64 = scmp.eq.s32.totalorder %s17, 0
      %p65 = por %p63, %p64
      %s67 = sadd.s32 %s66, 1
      %p70 = scmp.eq.s32.totalorder %s11, 1
      %p71 = scmp.ne.s32.totalorder %s66, %s68
      %p72 = scmp.eq.s32.totalorder %s11, 0
      %p73 = por %p71, %p72
      %p74 = scmp.ne.s32.totalorder %s66, %s68
      %p75 = scmp.eq.s32.totalorder %s16, 1
      %p76 = por %p74, %p75
      %p77 = scmp.ne.s32.totalorder %s68, %s69
      %p78 = scmp.eq.s32.totalorder %s16, 0
      %p79 = por %p77, %p78
      %p80 = scmp.ne.s32.totalorder %s68, %s69
      %p81 = scmp.eq.s32.totalorder %s17, 1
      %p82 = por %p80, %p81
      %p84 = scmp.ne.s32.totalorder %s69, %s83
      %p85 = scmp.eq.s32.totalorder %s17, 0
      %p86 = por %p84, %p85
      %s87 = ssub.s32 %s11, %s18
      %p88 = scmp.eq.s32.totalorder %s87, 0
      %s90 = sadd.s32 %s89, 1
      %s91 = scalar_select %p88, %s89, %s90
      %p94 = pneg %p88
      %p95 = scmp.eq.s32.totalorder %s11, 1
      %p96 = por %p94, %p95
      %p97 = scmp.ne.s32.totalorder %s89, %s92
      %p98 = scmp.eq.s32.totalorder %s11, 0
      %p99 = por %p97, %p98
      %p100 = scmp.ne.s32.totalorder %s89, %s92
      %p101 = scmp.eq.s32.totalorder %s16, 1
      %p102 = por %p100, %p101
      %p103 = scmp.ne.s32.totalorder %s92, %s93
      %p104 = scmp.eq.s32.totalorder %s16, 0
      %p105 = por %p103, %p104
      %p106 = scmp.ne.s32.totalorder %s92, %s93
      %p107 = scmp.eq.s32.totalorder %s17, 1
      %p108 = por %p106, %p107
      %p110 = scmp.ne.s32.totalorder %s93, %s109
      %p111 = scmp.eq.s32.totalorder %s17, 0
      %p112 = por %p110, %p111
      %p113 = scmp.le.s32.totalorder 1, %s11
      %p114 = scmp.lt.s32.totalorder %s11, 3
      %p115 = pnand %p113, %p114
      %p116 = pneg %p115
      // Predicated region
      $region9: #{chained_forward.21} parent=5 // pred_check
        _
      $region10: #{chained_forward.21} parent=5 // pred_check_branch
        %118 = sbr.rel (%p115) target = $region12
      $region11: #{chained_forward.21} parent=5 // pred_region
        %s119 = ssub.s32 %s11, 1
        // Predicated region
        $region13: #{chained_forward.21} parent=11 // pred_check
          %p120 = pneg %p32
        $region14: #{chained_forward.21} parent=11 // pred_check_branch
          %122 = sbr.rel (%p120) target = $region16
        $region15: #{chained_forward.21} parent=11 // pred_region
          _
        $region16: #{chained_forward.21} parent=11 // pred_fallthru
          _
        // Predicated region
        $region17: #{chained_forward.21} parent=11 // pred_check
          %p123 = pneg %p79
        $region18: #{chained_forward.21} parent=11 // pred_check_branch
          %125 = sbr.rel (%p123) target = $region20
        $region19: #{chained_forward.21} parent=11 // pred_region
          _
        $region20: #{chained_forward.21} parent=11 // pred_fallthru
          _
      $region12: #{chained_forward.21} parent=5 // pred_fallthru
        _
      %p126 = scmp.lt.s32.totalorder %s11, 2
      // Predicated region
      $region21: #{chained_forward.21} parent=5 // pred_check
        %p127 = pneg %p126
      $region22: #{chained_forward.21} parent=5 // pred_check_branch
        %129 = sbr.rel (%p127) target = $region24
      $region23: #{chained_forward.21} parent=5 // pred_region
        // Predicated region
        $region25: #{chained_forward.21} parent=23 // pred_check
          %p130 = pneg %p52
        $region26: #{chained_forward.21} parent=23 // pred_check_branch
          %132 = sbr.rel (%p130) target = $region28
        $region27: #{chained_forward.21} parent=23 // pred_region
          %s133 = sand.u32 %s42, 1
          %s134 = sand.u32 %s42, 1
          %s135 = smul.addr %s134, 1152
          %s136 = scalar_lea.vmem [#allocation3], %s135
          %s137 = smul.u32 8, %s11
          %s138 = smul.addr %s137, 4
          %s139 = scalar_lea.vmem %s1, %s138
          // Predicated region
          $region29: #{chained_forward.21} parent=27 // pred_check
            _
          $region30: #{chained_forward.21} parent=27 // pred_check_branch
            %141 = sbr.rel (0) target = $region32
          $region31: #{chained_forward.21} parent=27 // pred_region
            // Predicated region
            $region33: #{chained_forward.21} parent=31 // pred_check
              _
            $region34: #{chained_forward.21} parent=31 // pred_check_branch
              %143 = sbr.rel (0) target = $region36
            $region35: #{chained_forward.21} parent=31 // pred_region
              loop: start=0, step=1, limit=1
              $region37: #{chained_forward.21} parent=35 // loop_pre_header
                _
              $region38: #{chained_forward.21} parent=35 // loop_header
                %s145 = sphi 0, %s149
                %p146 = scmp.ge.s32.totalorder %s145, 1
                %s150 = sphi %s139, %s139
                %s151 = sphi %s136, %s136
              $region39: #{chained_forward.21} parent=35 // loop_header_branch
                %148 = sbr.rel (%p146) target = $region43
              $region40: #{chained_forward.21} parent=35 // loop_body
                %v152 = vld [vmem:[%s150] sm:$0xff]
                %153 = vst [vmem:[%s151] sm:$0xff] %v152
                %v154 = vld [vmem:[%s150 + $0x8] sm:$0xff]
                %155 = vst [vmem:[%s151 + $0x8] sm:$0xff] %v154
                %v156 = vld [vmem:[%s150 + $0x10] sm:$0xff]
                %157 = vst [vmem:[%s151 + $0x10] sm:$0xff] %v156
                %v158 = vld [vmem:[%s150 + $0x18] sm:$0xff]
                %159 = vst [vmem:[%s151 + $0x18] sm:$0xff] %v158
                %v160 = vld [vmem:[%s150 + $0x40] sm:$0xff]
                %161 = vst [vmem:[%s151 + $0x20] sm:$0xff] %v160
                %v162 = vld [vmem:[%s150 + $0x48] sm:$0xff]
                %163 = vst [vmem:[%s151 + $0x28] sm:$0xff] %v162
                %v164 = vld [vmem:[%s150 + $0x50] sm:$0xff]
                %165 = vst [vmem:[%s151 + $0x30] sm:$0xff] %v164
                %v166 = vld [vmem:[%s150 + $0x58] sm:$0xff]
                %167 = vst [vmem:[%s151 + $0x38] sm:$0xff] %v166
                %v168 = vld [vmem:[%s150 + $0x80] sm:$0xff]
                %169 = vst [vmem:[%s151 + $0x40] sm:$0xff] %v168
                %v170 = vld [vmem:[%s150 + $0x88] sm:$0xff]
                %171 = vst [vmem:[%s151 + $0x48] sm:$0xff] %v170
                %v172 = vld [vmem:[%s150 + $0x90] sm:$0xff]
                %173 = vst [vmem:[%s151 + $0x50] sm:$0xff] %v172
                %v174 = vld [vmem:[%s150 + $0x98] sm:$0xff]
                %175 = vst [vmem:[%s151 + $0x58] sm:$0xff] %v174
                %v176 = vld [vmem:[%s150 + $0xc0] sm:$0xff]
                %177 = vst [vmem:[%s151 + $0x60] sm:$0xff] %v176
                %v178 = vld [vmem:[%s150 + $0xc8] sm:$0xff]
                %179 = vst [vmem:[%s151 + $0x68] sm:$0xff] %v178
                %v180 = vld [vmem:[%s150 + $0xd0] sm:$0xff]
                %181 = vst [vmem:[%s151 + $0x70] sm:$0xff] %v180
                %v182 = vld [vmem:[%s150 + $0xd8] sm:$0xff]
                %183 = vst [vmem:[%s151 + $0x78] sm:$0xff] %v182
                %v184 = vld [vmem:[%s150 + $0x100] sm:$0xff]
                %185 = vst [vmem:[%s151 + $0x80] sm:$0xff] %v184
                %v186 = vld [vmem:[%s150 + $0x108] sm:$0xff]
                %187 = vst [vmem:[%s151 + $0x88] sm:$0xff] %v186
                %v188 = vld [vmem:[%s150 + $0x110] sm:$0xff]
                %189 = vst [vmem:[%s151 + $0x90] sm:$0xff] %v188
                %v190 = vld [vmem:[%s150 + $0x118] sm:$0xff]
                %191 = vst [vmem:[%s151 + $0x98] sm:$0xff] %v190
                %v192 = vld [vmem:[%s150 + $0x140] sm:$0xff]
                %193 = vst [vmem:[%s151 + $0xa0] sm:$0xff] %v192
                %v194 = vld [vmem:[%s150 + $0x148] sm:$0xff]
                %195 = vst [vmem:[%s151 + $0xa8] sm:$0xff] %v194
                %v196 = vld [vmem:[%s150 + $0x150] sm:$0xff]
                %197 = vst [vmem:[%s151 + $0xb0] sm:$0xff] %v196
                %v198 = vld [vmem:[%s150 + $0x158] sm:$0xff]
                %199 = vst [vmem:[%s151 + $0xb8] sm:$0xff] %v198
                %v200 = vld [vmem:[%s150 + $0x180] sm:$0xff]
                %201 = vst [vmem:[%s151 + $0xc0] sm:$0xff] %v200
                %v202 = vld [vmem:[%s150 + $0x188] sm:$0xff]
                %203 = vst [vmem:[%s151 + $0xc8] sm:$0xff] %v202
                %v204 = vld [vmem:[%s150 + $0x190] sm:$0xff]
                %205 = vst [vmem:[%s151 + $0xd0] sm:$0xff] %v204
                %v206 = vld [vmem:[%s150 + $0x198] sm:$0xff]
                %207 = vst [vmem:[%s151 + $0xd8] sm:$0xff] %v206
                %v208 = vld [vmem:[%s150 + $0x1c0] sm:$0xff]
                %209 = vst [vmem:[%s151 + $0xe0] sm:$0xff] %v208
                %v210 = vld [vmem:[%s150 + $0x1c8] sm:$0xff]
                %211 = vst [vmem:[%s151 + $0xe8] sm:$0xff] %v210
                %v212 = vld [vmem:[%s150 + $0x1d0] sm:$0xff]
                %213 = vst [vmem:[%s151 + $0xf0] sm:$0xff] %v212
                %v214 = vld [vmem:[%s150 + $0x1d8] sm:$0xff]
                %215 = vst [vmem:[%s151 + $0xf8] sm:$0xff] %v214
                %v216 = vld [vmem:[%s150 + $0x200] sm:$0xff]
                %217 = vst [vmem:[%s151 + $0x100] sm:$0xff] %v216
                %v218 = vld [vmem:[%s150 + $0x208] sm:$0xff]
                %219 = vst [vmem:[%s151 + $0x108] sm:$0xff] %v218
                %v220 = vld [vmem:[%s150 + $0x210] sm:$0xff]
                %221 = vst [vmem:[%s151 + $0x110] sm:$0xff] %v220
                %v222 = vld [vmem:[%s150 + $0x218] sm:$0xff]
                %223 = vst [vmem:[%s151 + $0x118] sm:$0xff] %v222
                %v224 = vld [vmem:[%s150 + $0x240] sm:$0xff]
                %225 = vst [vmem:[%s151 + $0x120] sm:$0xff] %v224
                %v226 = vld [vmem:[%s150 + $0x248] sm:$0xff]
                %227 = vst [vmem:[%s151 + $0x128] sm:$0xff] %v226
                %v228 = vld [vmem:[%s150 + $0x250] sm:$0xff]
                %229 = vst [vmem:[%s151 + $0x130] sm:$0xff] %v228
                %v230 = vld [vmem:[%s150 + $0x258] sm:$0xff]
                %231 = vst [vmem:[%s151 + $0x138] sm:$0xff] %v230
                %v232 = vld [vmem:[%s150 + $0x280] sm:$0xff]
                %233 = vst [vmem:[%s151 + $0x140] sm:$0xff] %v232
                %v234 = vld [vmem:[%s150 + $0x288] sm:$0xff]
                %235 = vst [vmem:[%s151 + $0x148] sm:$0xff] %v234
                %v236 = vld [vmem:[%s150 + $0x290] sm:$0xff]
                %237 = vst [vmem:[%s151 + $0x150] sm:$0xff] %v236
                %v238 = vld [vmem:[%s150 + $0x298] sm:$0xff]
                %239 = vst [vmem:[%s151 + $0x158] sm:$0xff] %v238
                %v240 = vld [vmem:[%s150 + $0x2c0] sm:$0xff]
                %241 = vst [vmem:[%s151 + $0x160] sm:$0xff] %v240
                %v242 = vld [vmem:[%s150 + $0x2c8] sm:$0xff]
                %243 = vst [vmem:[%s151 + $0x168] sm:$0xff] %v242
                %v244 = vld [vmem:[%s150 + $0x2d0] sm:$0xff]
                %245 = vst [vmem:[%s151 + $0x170] sm:$0xff] %v244
                %v246 = vld [vmem:[%s150 + $0x2d8] sm:$0xff]
                %247 = vst [vmem:[%s151 + $0x178] sm:$0xff] %v246
                %v248 = vld [vmem:[%s150 + $0x300] sm:$0xff]
                %249 = vst [vmem:[%s151 + $0x180] sm:$0xff] %v248
                %v250 = vld [vmem:[%s150 + $0x308] sm:$0xff]
                %251 = vst [vmem:[%s151 + $0x188] sm:$0xff] %v250
                %v252 = vld [vmem:[%s150 + $0x310] sm:$0xff]
                %253 = vst [vmem:[%s151 + $0x190] sm:$0xff] %v252
                %v254 = vld [vmem:[%s150 + $0x318] sm:$0xff]
                %255 = vst [vmem:[%s151 + $0x198] sm:$0xff] %v254
                %v256 = vld [vmem:[%s150 + $0x340] sm:$0xff]
                %257 = vst [vmem:[%s151 + $0x1a0] sm:$0xff] %v256
                %v258 = vld [vmem:[%s150 + $0x348] sm:$0xff]
                %259 = vst [vmem:[%s151 + $0x1a8] sm:$0xff] %v258
                %v260 = vld [vmem:[%s150 + $0x350] sm:$0xff]
                %261 = vst [vmem:[%s151 + $0x1b0] sm:$0xff] %v260
                %v262 = vld [vmem:[%s150 + $0x358] sm:$0xff]
                %263 = vst [vmem:[%s151 + $0x1b8] sm:$0xff] %v262
                %v264 = vld [vmem:[%s150 + $0x380] sm:$0xff]
                %265 = vst [vmem:[%s151 + $0x1c0] sm:$0xff] %v264
                %v266 = vld [vmem:[%s150 + $0x388] sm:$0xff]
                %267 = vst [vmem:[%s151 + $0x1c8] sm:$0xff] %v266
                %v268 = vld [vmem:[%s150 + $0x390] sm:$0xff]
                %269 = vst [vmem:[%s151 + $0x1d0] sm:$0xff] %v268
                %v270 = vld [vmem:[%s150 + $0x398] sm:$0xff]
                %271 = vst [vmem:[%s151 + $0x1d8] sm:$0xff] %v270
                %v272 = vld [vmem:[%s150 + $0x3c0] sm:$0xff]
                %273 = vst [vmem:[%s151 + $0x1e0] sm:$0xff] %v272
                %v274 = vld [vmem:[%s150 + $0x3c8] sm:$0xff]
                %275 = vst [vmem:[%s151 + $0x1e8] sm:$0xff] %v274
                %v276 = vld [vmem:[%s150 + $0x3d0] sm:$0xff]
                %277 = vst [vmem:[%s151 + $0x1f0] sm:$0xff] %v276
                %v278 = vld [vmem:[%s150 + $0x3d8] sm:$0xff]
                %279 = vst [vmem:[%s151 + $0x1f8] sm:$0xff] %v278
                %v280 = vld [vmem:[%s150 + $0x400] sm:$0xff]
                %281 = vst [vmem:[%s151 + $0x200] sm:$0xff] %v280
                %v282 = vld [vmem:[%s150 + $0x408] sm:$0xff]
                %283 = vst [vmem:[%s151 + $0x208] sm:$0xff] %v282
                %v284 = vld [vmem:[%s150 + $0x410] sm:$0xff]
                %285 = vst [vmem:[%s151 + $0x210] sm:$0xff] %v284
                %v286 = vld [vmem:[%s150 + $0x418] sm:$0xff]
                %287 = vst [vmem:[%s151 + $0x218] sm:$0xff] %v286
                %v288 = vld [vmem:[%s150 + $0x440] sm:$0xff]
                %289 = vst [vmem:[%s151 + $0x220] sm:$0xff] %v288
                %v290 = vld [vmem:[%s150 + $0x448] sm:$0xff]
                %291 = vst [vmem:[%s151 + $0x228] sm:$0xff] %v290
                %v292 = vld [vmem:[%s150 + $0x450] sm:$0xff]
                %293 = vst [vmem:[%s151 + $0x230] sm:$0xff] %v292
                %v294 = vld [vmem:[%s150 + $0x458] sm:$0xff]
                %295 = vst [vmem:[%s151 + $0x238] sm:$0xff] %v294
                %v296 = vld [vmem:[%s150 + $0x480] sm:$0xff]
                %297 = vst [vmem:[%s151 + $0x240] sm:$0xff] %v296
                %v298 = vld [vmem:[%s150 + $0x488] sm:$0xff]
                %299 = vst [vmem:[%s151 + $0x248] sm:$0xff] %v298
                %v300 = vld [vmem:[%s150 + $0x490] sm:$0xff]
                %301 = vst [vmem:[%s151 + $0x250] sm:$0xff] %v300
                %v302 = vld [vmem:[%s150 + $0x498] sm:$0xff]
                %303 = vst [vmem:[%s151 + $0x258] sm:$0xff] %v302
                %v304 = vld [vmem:[%s150 + $0x4c0] sm:$0xff]
                %305 = vst [vmem:[%s151 + $0x260] sm:$0xff] %v304
                %v306 = vld [vmem:[%s150 + $0x4c8] sm:$0xff]
                %307 = vst [vmem:[%s151 + $0x268] sm:$0xff] %v306
                %v308 = vld [vmem:[%s150 + $0x4d0] sm:$0xff]
                %309 = vst [vmem:[%s151 + $0x270] sm:$0xff] %v308
                %v310 = vld [vmem:[%s150 + $0x4d8] sm:$0xff]
                %311 = vst [vmem:[%s151 + $0x278] sm:$0xff] %v310
                %v312 = vld [vmem:[%s150 + $0x500] sm:$0xff]
                %313 = vst [vmem:[%s151 + $0x280] sm:$0xff] %v312
                %v314 = vld [vmem:[%s150 + $0x508] sm:$0xff]
                %315 = vst [vmem:[%s151 + $0x288] sm:$0xff] %v314
                %v316 = vld [vmem:[%s150 + $0x510] sm:$0xff]
                %317 = vst [vmem:[%s151 + $0x290] sm:$0xff] %v316
                %v318 = vld [vmem:[%s150 + $0x518] sm:$0xff]
                %319 = vst [vmem:[%s151 + $0x298] sm:$0xff] %v318
                %v320 = vld [vmem:[%s150 + $0x540] sm:$0xff]
                %321 = vst [vmem:[%s151 + $0x2a0] sm:$0xff] %v320
                %v322 = vld [vmem:[%s150 + $0x548] sm:$0xff]
                %323 = vst [vmem:[%s151 + $0x2a8] sm:$0xff] %v322
                %v324 = vld [vmem:[%s150 + $0x550] sm:$0xff]
                %325 = vst [vmem:[%s151 + $0x2b0] sm:$0xff] %v324
                %v326 = vld [vmem:[%s150 + $0x558] sm:$0xff]
                %327 = vst [vmem:[%s151 + $0x2b8] sm:$0xff] %v326
                %v328 = vld [vmem:[%s150 + $0x580] sm:$0xff]
                %329 = vst [vmem:[%s151 + $0x2c0] sm:$0xff] %v328
                %v330 = vld [vmem:[%s150 + $0x588] sm:$0xff]
                %331 = vst [vmem:[%s151 + $0x2c8] sm:$0xff] %v330
                %v332 = vld [vmem:[%s150 + $0x590] sm:$0xff]
                %333 = vst [vmem:[%s151 + $0x2d0] sm:$0xff] %v332
                %v334 = vld [vmem:[%s150 + $0x598] sm:$0xff]
                %335 = vst [vmem:[%s151 + $0x2d8] sm:$0xff] %v334
                %v336 = vld [vmem:[%s150 + $0x5c0] sm:$0xff]
                %337 = vst [vmem:[%s151 + $0x2e0] sm:$0xff] %v336
                %v338 = vld [vmem:[%s150 + $0x5c8] sm:$0xff]
                %339 = vst [vmem:[%s151 + $0x2e8] sm:$0xff] %v338
                %v340 = vld [vmem:[%s150 + $0x5d0] sm:$0xff]
                %341 = vst [vmem:[%s151 + $0x2f0] sm:$0xff] %v340
                %v342 = vld [vmem:[%s150 + $0x5d8] sm:$0xff]
                %343 = vst [vmem:[%s151 + $0x2f8] sm:$0xff] %v342
                %v344 = vld [vmem:[%s150 + $0x600] sm:$0xff]
                %345 = vst [vmem:[%s151 + $0x300] sm:$0xff] %v344
                %v346 = vld [vmem:[%s150 + $0x608] sm:$0xff]
                %347 = vst [vmem:[%s151 + $0x308] sm:$0xff] %v346
                %v348 = vld [vmem:[%s150 + $0x610] sm:$0xff]
                %349 = vst [vmem:[%s151 + $0x310] sm:$0xff] %v348
                %v350 = vld [vmem:[%s150 + $0x618] sm:$0xff]
                %351 = vst [vmem:[%s151 + $0x318] sm:$0xff] %v350
                %v352 = vld [vmem:[%s150 + $0x640] sm:$0xff]
                %353 = vst [vmem:[%s151 + $0x320] sm:$0xff] %v352
                %v354 = vld [vmem:[%s150 + $0x648] sm:$0xff]
                %355 = vst [vmem:[%s151 + $0x328] sm:$0xff] %v354
                %v356 = vld [vmem:[%s150 + $0x650] sm:$0xff]
                %357 = vst [vmem:[%s151 + $0x330] sm:$0xff] %v356
                %v358 = vld [vmem:[%s150 + $0x658] sm:$0xff]
                %359 = vst [vmem:[%s151 + $0x338] sm:$0xff] %v358
                %v360 = vld [vmem:[%s150 + $0x680] sm:$0xff]
                %361 = vst [vmem:[%s151 + $0x340] sm:$0xff] %v360
                %v362 = vld [vmem:[%s150 + $0x688] sm:$0xff]
                %363 = vst [vmem:[%s151 + $0x348] sm:$0xff] %v362
                %v364 = vld [vmem:[%s150 + $0x690] sm:$0xff]
                %365 = vst [vmem:[%s151 + $0x350] sm:$0xff] %v364
                %v366 = vld [vmem:[%s150 + $0x698] sm:$0xff]
                %367 = vst [vmem:[%s151 + $0x358] sm:$0xff] %v366
                %v368 = vld [vmem:[%s150 + $0x6c0] sm:$0xff]
                %369 = vst [vmem:[%s151 + $0x360] sm:$0xff] %v368
                %v370 = vld [vmem:[%s150 + $0x6c8] sm:$0xff]
                %371 = vst [vmem:[%s151 + $0x368] sm:$0xff] %v370
                %v372 = vld [vmem:[%s150 + $0x6d0] sm:$0xff]
                %373 = vst [vmem:[%s151 + $0x370] sm:$0xff] %v372
                %v374 = vld [vmem:[%s150 + $0x6d8] sm:$0xff]
                %375 = vst [vmem:[%s151 + $0x378] sm:$0xff] %v374
                %v376 = vld [vmem:[%s150 + $0x700] sm:$0xff]
                %377 = vst [vmem:[%s151 + $0x380] sm:$0xff] %v376
                %v378 = vld [vmem:[%s150 + $0x708] sm:$0xff]
                %379 = vst [vmem:[%s151 + $0x388] sm:$0xff] %v378
                %v380 = vld [vmem:[%s150 + $0x710] sm:$0xff]
                %381 = vst [vmem:[%s151 + $0x390] sm:$0xff] %v380
                %v382 = vld [vmem:[%s150 + $0x718] sm:$0xff]
                %383 = vst [vmem:[%s151 + $0x398] sm:$0xff] %v382
                %v384 = vld [vmem:[%s150 + $0x740] sm:$0xff]
                %385 = vst [vmem:[%s151 + $0x3a0] sm:$0xff] %v384
                %v386 = vld [vmem:[%s150 + $0x748] sm:$0xff]
                %387 = vst [vmem:[%s151 + $0x3a8] sm:$0xff] %v386
                %v388 = vld [vmem:[%s150 + $0x750] sm:$0xff]
                %389 = vst [vmem:[%s151 + $0x3b0] sm:$0xff] %v388
                %v390 = vld [vmem:[%s150 + $0x758] sm:$0xff]
                %391 = vst [vmem:[%s151 + $0x3b8] sm:$0xff] %v390
                %v392 = vld [vmem:[%s150 + $0x780] sm:$0xff]
                %393 = vst [vmem:[%s151 + $0x3c0] sm:$0xff] %v392
                %v394 = vld [vmem:[%s150 + $0x788] sm:$0xff]
                %395 = vst [vmem:[%s151 + $0x3c8] sm:$0xff] %v394
                %v396 = vld [vmem:[%s150 + $0x790] sm:$0xff]
                %397 = vst [vmem:[%s151 + $0x3d0] sm:$0xff] %v396
                %v398 = vld [vmem:[%s150 + $0x798] sm:$0xff]
                %399 = vst [vmem:[%s151 + $0x3d8] sm:$0xff] %v398
                %v400 = vld [vmem:[%s150 + $0x7c0] sm:$0xff]
                %401 = vst [vmem:[%s151 + $0x3e0] sm:$0xff] %v400
                %v402 = vld [vmem:[%s150 + $0x7c8] sm:$0xff]
                %403 = vst [vmem:[%s151 + $0x3e8] sm:$0xff] %v402
                %v404 = vld [vmem:[%s150 + $0x7d0] sm:$0xff]
                %405 = vst [vmem:[%s151 + $0x3f0] sm:$0xff] %v404
                %v406 = vld [vmem:[%s150 + $0x7d8] sm:$0xff]
                %407 = vst [vmem:[%s151 + $0x3f8] sm:$0xff] %v406
                %v408 = vld [vmem:[%s150 + $0x800] sm:$0xff]
                %409 = vst [vmem:[%s151 + $0x400] sm:$0xff] %v408
                %v410 = vld [vmem:[%s150 + $0x808] sm:$0xff]
                %411 = vst [vmem:[%s151 + $0x408] sm:$0xff] %v410
                %v412 = vld [vmem:[%s150 + $0x810] sm:$0xff]
                %413 = vst [vmem:[%s151 + $0x410] sm:$0xff] %v412
                %v414 = vld [vmem:[%s150 + $0x818] sm:$0xff]
                %415 = vst [vmem:[%s151 + $0x418] sm:$0xff] %v414
                %v416 = vld [vmem:[%s150 + $0x840] sm:$0xff]
                %417 = vst [vmem:[%s151 + $0x420] sm:$0xff] %v416
                %v418 = vld [vmem:[%s150 + $0x848] sm:$0xff]
                %419 = vst [vmem:[%s151 + $0x428] sm:$0xff] %v418
                %v420 = vld [vmem:[%s150 + $0x850] sm:$0xff]
                %421 = vst [vmem:[%s151 + $0x430] sm:$0xff] %v420
                %v422 = vld [vmem:[%s150 + $0x858] sm:$0xff]
                %423 = vst [vmem:[%s151 + $0x438] sm:$0xff] %v422
                %v424 = vld [vmem:[%s150 + $0x880] sm:$0xff]
                %425 = vst [vmem:[%s151 + $0x440] sm:$0xff] %v424
                %v426 = vld [vmem:[%s150 + $0x888] sm:$0xff]
                %427 = vst [vmem:[%s151 + $0x448] sm:$0xff] %v426
                %v428 = vld [vmem:[%s150 + $0x890] sm:$0xff]
                %429 = vst [vmem:[%s151 + $0x450] sm:$0xff] %v428
                %v430 = vld [vmem:[%s150 + $0x898] sm:$0xff]
                %431 = vst [vmem:[%s151 + $0x458] sm:$0xff] %v430
                %v432 = vld [vmem:[%s150 + $0x8c0] sm:$0xff]
                %433 = vst [vmem:[%s151 + $0x460] sm:$0xff] %v432
                %v434 = vld [vmem:[%s150 + $0x8c8] sm:$0xff]
                %435 = vst [vmem:[%s151 + $0x468] sm:$0xff] %v434
                %v436 = vld [vmem:[%s150 + $0x8d0] sm:$0xff]
                %437 = vst [vmem:[%s151 + $0x470] sm:$0xff] %v436
                %v438 = vld [vmem:[%s150 + $0x8d8] sm:$0xff]
                %439 = vst [vmem:[%s151 + $0x478] sm:$0xff] %v438
              $region41: #{chained_forward.21} parent=35 // loop_footer
                %s149 = sadd.s32 1, %s145
              $region42: #{chained_forward.21} parent=35 // loop_footer_branch
                %144 = sbr.rel target = $region38
              $region43: #{chained_forward.21} parent=35 // loop_exit
                _
            $region36: #{chained_forward.21} parent=31 // pred_fallthru
              _
            // Predicated region
            $region44: #{chained_forward.21} parent=31 // pred_check
              _
            $region45: #{chained_forward.21} parent=31 // pred_check_branch
              %441 = sbr.rel target = $region47
            $region46: #{chained_forward.21} parent=31 // pred_region
              _
            $region47: #{chained_forward.21} parent=31 // pred_fallthru
              _
          $region32: #{chained_forward.21} parent=27 // pred_fallthru
            _
          %442 = vnop
        $region28: #{chained_forward.21} parent=23 // pred_fallthru
          _
      $region24: #{chained_forward.21} parent=5 // pred_fallthru
        _
      %p443 = scmp.le.s32.totalorder 1, %s11
      %p444 = scmp.lt.s32.totalorder %s11, 3
      %p445 = pnand %p443, %p444
      %p446 = pneg %p445
      // Predicated region
      $region48: #{chained_forward.21} parent=5 // pred_check
        _
      $region49: #{chained_forward.21} parent=5 // pred_check_branch
        %448 = sbr.rel (%p445) target = $region51
      $region50: #{chained_forward.21} parent=5 // pred_region
        %s449 = ssub.s32 %s11, 1
        %s450 = sand.u32 %s45, 1
        %s451 = sand.u32 %s45, 1
        %s452 = smul.addr %s451, 1152
        %s453 = scalar_lea.vmem [#allocation3], %s452
        // Predicated region
        $region52: #{chained_forward.21} parent=50 // pred_check
          %p454 = pneg %p58
        $region53: #{chained_forward.21} parent=50 // pred_check_branch
          %456 = sbr.rel (%p454) target = $region55
        $region54: #{chained_forward.21} parent=50 // pred_region
          _
        $region55: #{chained_forward.21} parent=50 // pred_fallthru
          _
        %p457 = pneg %p32
        %p458 = pneg %p29
        %s459 = sand.u32 %s45, 1
        %s460 = sand.u32 %s45, 1
        %s461 = smul.addr %s460, 1152
        %s462 = scalar_lea.vmem [#allocation3], %s461
        %p463 = pneg %p58
        %p464 = pneg %p55
        %p465 = pneg %p79
        %p466 = pneg %p76
        %p467 = pneg %p105
        %p468 = pneg %p102
        %s469 = smul.u32 8, %s16
        %p470 = scmp.lt.s32.totalorder %s469, 15
        %s471 = scalar_select %p470, %s469, 15
        %s472 = scalar_lea.vmem %s3, %s471
        %s473 = smul.u32 8, %s16
        %s474 = smul.u32 8, %s16
        %p475 = scmp.lt.s32.totalorder %s474, 15
        %s476 = scalar_select %p475, %s474, 15
        %s477 = scalar_lea.vmem %s3, %s476
        %s478 = smul.u32 8, %s16
        %v480 = vld [vmem:[%s0] sm:$0x7]
        %v481 = vld [vmem:[%s453] sm:$0xff]
        %v482 = vld [vmem:[%s453 + $0x8] sm:$0xff]
        %v483 = vld [vmem:[%s453 + $0x10] sm:$0xff]
        %v484 = vld [vmem:[%s453 + $0x18] sm:$0xff]
        %v485 = vld [vmem:[%s453 + $0x20] sm:$0xff]
        %v486 = vld [vmem:[%s453 + $0x28] sm:$0xff]
        %v487 = vld [vmem:[%s453 + $0x30] sm:$0xff]
        %v488 = vld [vmem:[%s453 + $0x38] sm:$0xff]
        %v489 = vld [vmem:[%s453 + $0x40] sm:$0xff]
        %v490 = vld [vmem:[%s453 + $0x48] sm:$0xff]
        %v491 = vld [vmem:[%s453 + $0x50] sm:$0xff]
        %v492 = vld [vmem:[%s453 + $0x58] sm:$0xff]
        %v493 = vld [vmem:[%s453 + $0x60] sm:$0xff]
        %v494 = vld [vmem:[%s453 + $0x68] sm:$0xff]
        %v495 = vld [vmem:[%s453 + $0x70] sm:$0xff]
        %v496 = vld [vmem:[%s453 + $0x78] sm:$0xff]
        %v497 = vld [vmem:[%s453 + $0x80] sm:$0xff]
        %v498 = vld [vmem:[%s453 + $0x88] sm:$0xff]
        %v499 = vld [vmem:[%s453 + $0x90] sm:$0xff]
        %v500 = vld [vmem:[%s453 + $0x98] sm:$0xff]
        %v501 = vld [vmem:[%s453 + $0xa0] sm:$0xff]
        %v502 = vld [vmem:[%s453 + $0xa8] sm:$0xff]
        %v503 = vld [vmem:[%s453 + $0xb0] sm:$0xff]
        %v504 = vld [vmem:[%s453 + $0xb8] sm:$0xff]
        %v505 = vld [vmem:[%s453 + $0xc0] sm:$0xff]
        %v506 = vld [vmem:[%s453 + $0xc8] sm:$0xff]
        %v507 = vld [vmem:[%s453 + $0xd0] sm:$0xff]
        %v508 = vld [vmem:[%s453 + $0xd8] sm:$0xff]
        %v509 = vld [vmem:[%s453 + $0xe0] sm:$0xff]
        %v510 = vld [vmem:[%s453 + $0xe8] sm:$0xff]
        %v511 = vld [vmem:[%s453 + $0xf0] sm:$0xff]
        %v512 = vld [vmem:[%s453 + $0xf8] sm:$0xff]
        %v513 = vld [vmem:[%s453 + $0x100] sm:$0xff]
        %v514 = vld [vmem:[%s453 + $0x108] sm:$0xff]
        %v515 = vld [vmem:[%s453 + $0x110] sm:$0xff]
        %v516 = vld [vmem:[%s453 + $0x118] sm:$0xff]
        %v517 = vld [vmem:[%s453 + $0x120] sm:$0xff]
        %v518 = vld [vmem:[%s453 + $0x128] sm:$0xff]
        %v519 = vld [vmem:[%s453 + $0x130] sm:$0xff]
        %v520 = vld [vmem:[%s453 + $0x138] sm:$0xff]
        %v521 = vld [vmem:[%s453 + $0x140] sm:$0xff]
        %v522 = vld [vmem:[%s453 + $0x148] sm:$0xff]
        %v523 = vld [vmem:[%s453 + $0x150] sm:$0xff]
        %v524 = vld [vmem:[%s453 + $0x158] sm:$0xff]
        %v525 = vld [vmem:[%s453 + $0x160] sm:$0xff]
        %v526 = vld [vmem:[%s453 + $0x168] sm:$0xff]
        %v527 = vld [vmem:[%s453 + $0x170] sm:$0xff]
        %v528 = vld [vmem:[%s453 + $0x178] sm:$0xff]
        %v529 = vld [vmem:[%s453 + $0x180] sm:$0xff]
        %v530 = vld [vmem:[%s453 + $0x188] sm:$0xff]
        %v531 = vld [vmem:[%s453 + $0x190] sm:$0xff]
        %v532 = vld [vmem:[%s453 + $0x198] sm:$0xff]
        %v533 = vld [vmem:[%s453 + $0x1a0] sm:$0xff]
        %v534 = vld [vmem:[%s453 + $0x1a8] sm:$0xff]
        %v535 = vld [vmem:[%s453 + $0x1b0] sm:$0xff]
        %v536 = vld [vmem:[%s453 + $0x1b8] sm:$0xff]
        %v537 = vld [vmem:[%s453 + $0x1c0] sm:$0xff]
        %v538 = vld [vmem:[%s453 + $0x1c8] sm:$0xff]
        %v539 = vld [vmem:[%s453 + $0x1d0] sm:$0xff]
        %v540 = vld [vmem:[%s453 + $0x1d8] sm:$0xff]
        %v541 = vld [vmem:[%s453 + $0x1e0] sm:$0xff]
        %v542 = vld [vmem:[%s453 + $0x1e8] sm:$0xff]
        %v543 = vld [vmem:[%s453 + $0x1f0] sm:$0xff]
        %v544 = vld [vmem:[%s453 + $0x1f8] sm:$0xff]
        %v545 = vld [vmem:[%s453 + $0x200] sm:$0xff]
        %v546 = vld [vmem:[%s453 + $0x208] sm:$0xff]
        %v547 = vld [vmem:[%s453 + $0x210] sm:$0xff]
        %v548 = vld [vmem:[%s453 + $0x218] sm:$0xff]
        %v549 = vld [vmem:[%s453 + $0x220] sm:$0xff]
        %v550 = vld [vmem:[%s453 + $0x228] sm:$0xff]
        %v551 = vld [vmem:[%s453 + $0x230] sm:$0xff]
        %v552 = vld [vmem:[%s453 + $0x238] sm:$0xff]
        %v553 = vld [vmem:[%s453 + $0x240] sm:$0xff]
        %v554 = vld [vmem:[%s453 + $0x248] sm:$0xff]
        %v555 = vld [vmem:[%s453 + $0x250] sm:$0xff]
        %v556 = vld [vmem:[%s453 + $0x258] sm:$0xff]
        %v557 = vld [vmem:[%s453 + $0x260] sm:$0xff]
        %v558 = vld [vmem:[%s453 + $0x268] sm:$0xff]
        %v559 = vld [vmem:[%s453 + $0x270] sm:$0xff]
        %v560 = vld [vmem:[%s453 + $0x278] sm:$0xff]
        %v561 = vld [vmem:[%s453 + $0x280] sm:$0xff]
        %v562 = vld [vmem:[%s453 + $0x288] sm:$0xff]
        %v563 = vld [vmem:[%s453 + $0x290] sm:$0xff]
        %v564 = vld [vmem:[%s453 + $0x298] sm:$0xff]
        %v565 = vld [vmem:[%s453 + $0x2a0] sm:$0xff]
        %v566 = vld [vmem:[%s453 + $0x2a8] sm:$0xff]
        %v567 = vld [vmem:[%s453 + $0x2b0] sm:$0xff]
        %v568 = vld [vmem:[%s453 + $0x2b8] sm:$0xff]
        %v569 = vld [vmem:[%s453 + $0x2c0] sm:$0xff]
        %v570 = vld [vmem:[%s453 + $0x2c8] sm:$0xff]
        %v571 = vld [vmem:[%s453 + $0x2d0] sm:$0xff]
        %v572 = vld [vmem:[%s453 + $0x2d8] sm:$0xff]
        %v573 = vld [vmem:[%s453 + $0x2e0] sm:$0xff]
        %v574 = vld [vmem:[%s453 + $0x2e8] sm:$0xff]
        %v575 = vld [vmem:[%s453 + $0x2f0] sm:$0xff]
        %v576 = vld [vmem:[%s453 + $0x2f8] sm:$0xff]
        %v577 = vld [vmem:[%s453 + $0x300] sm:$0xff]
        %v578 = vld [vmem:[%s453 + $0x308] sm:$0xff]
        %v579 = vld [vmem:[%s453 + $0x310] sm:$0xff]
        %v580 = vld [vmem:[%s453 + $0x318] sm:$0xff]
        %v581 = vld [vmem:[%s453 + $0x320] sm:$0xff]
        %v582 = vld [vmem:[%s453 + $0x328] sm:$0xff]
        %v583 = vld [vmem:[%s453 + $0x330] sm:$0xff]
        %v584 = vld [vmem:[%s453 + $0x338] sm:$0xff]
        %v585 = vld [vmem:[%s453 + $0x340] sm:$0xff]
        %v586 = vld [vmem:[%s453 + $0x348] sm:$0xff]
        %v587 = vld [vmem:[%s453 + $0x350] sm:$0xff]
        %v588 = vld [vmem:[%s453 + $0x358] sm:$0xff]
        %v589 = vld [vmem:[%s453 + $0x360] sm:$0xff]
        %v590 = vld [vmem:[%s453 + $0x368] sm:$0xff]
        %v591 = vld [vmem:[%s453 + $0x370] sm:$0xff]
        %v592 = vld [vmem:[%s453 + $0x378] sm:$0xff]
        %v593 = vld [vmem:[%s453 + $0x380] sm:$0xff]
        %v594 = vld [vmem:[%s453 + $0x388] sm:$0xff]
        %v595 = vld [vmem:[%s453 + $0x390] sm:$0xff]
        %v596 = vld [vmem:[%s453 + $0x398] sm:$0xff]
        %v597 = vld [vmem:[%s453 + $0x3a0] sm:$0xff]
        %v598 = vld [vmem:[%s453 + $0x3a8] sm:$0xff]
        %v599 = vld [vmem:[%s453 + $0x3b0] sm:$0xff]
        %v600 = vld [vmem:[%s453 + $0x3b8] sm:$0xff]
        %v601 = vld [vmem:[%s453 + $0x3c0] sm:$0xff]
        %v602 = vld [vmem:[%s453 + $0x3c8] sm:$0xff]
        %v603 = vld [vmem:[%s453 + $0x3d0] sm:$0xff]
        %v604 = vld [vmem:[%s453 + $0x3d8] sm:$0xff]
        %v605 = vld [vmem:[%s453 + $0x3e0] sm:$0xff]
        %v606 = vld [vmem:[%s453 + $0x3e8] sm:$0xff]
        %v607 = vld [vmem:[%s453 + $0x3f0] sm:$0xff]
        %v608 = vld [vmem:[%s453 + $0x3f8] sm:$0xff]
        %v609 = vld [vmem:[%s453 + $0x400] sm:$0xff]
        %v610 = vld [vmem:[%s453 + $0x408] sm:$0xff]
        %v611 = vld [vmem:[%s453 + $0x410] sm:$0xff]
        %v612 = vld [vmem:[%s453 + $0x418] sm:$0xff]
        %v613 = vld [vmem:[%s453 + $0x420] sm:$0xff]
        %v614 = vld [vmem:[%s453 + $0x428] sm:$0xff]
        %v615 = vld [vmem:[%s453 + $0x430] sm:$0xff]
        %v616 = vld [vmem:[%s453 + $0x438] sm:$0xff]
        %v617 = vld [vmem:[%s453 + $0x440] sm:$0xff]
        %v618 = vld [vmem:[%s453 + $0x448] sm:$0xff]
        %v619 = vld [vmem:[%s453 + $0x450] sm:$0xff]
        %v620 = vld [vmem:[%s453 + $0x458] sm:$0xff]
        %v621 = vld [vmem:[%s453 + $0x460] sm:$0xff]
        %v622 = vld [vmem:[%s453 + $0x468] sm:$0xff]
        %v623 = vld [vmem:[%s453 + $0x470] sm:$0xff]
        %v624 = vld [vmem:[%s453 + $0x478] sm:$0xff]
        %v625 = vld [vmem:[#allocation2] sm:$0x1]
        %627 = vset.pattern.permute.xlu0 0
        %628 = vperm.xlu0 %627, %v625
        %v629 = vpop.permute.xlu0 %628
        %v631 = vperm.slane %v629, 0
        %633 = vst [vmem:[#allocation1] ss:$9 sm:$0xff] %v480
        %v634 = vld [vmem:[#allocation1] sm:$0xff]
        %v635 = vld [vmem:[#allocation1 + $0x9] sm:$0xff]
        %v636 = vld [vmem:[#allocation1 + $0x12] sm:$0xff]
        %v783 = vunpack.c.l.b16 %v481
        %v784 = vunpack.c.h.b16 %v481
        %v785 = vunpack.c.l.b16 %v482
        %v786 = vunpack.c.h.b16 %v482
        %v787 = vunpack.c.l.b16 %v483
        %v788 = vunpack.c.h.b16 %v483
        %v789 = vunpack.c.l.b16 %v484
        %v790 = vunpack.c.h.b16 %v484
        %v791 = vunpack.c.l.b16 %v485
        %v792 = vunpack.c.h.b16 %v485
        %v793 = vunpack.c.l.b16 %v486
        %v794 = vunpack.c.h.b16 %v486
        %v795 = vunpack.c.l.b16 %v487
        %v796 = vunpack.c.h.b16 %v487
        %v797 = vunpack.c.l.b16 %v488
        %v798 = vunpack.c.h.b16 %v488
        %v799 = vunpack.c.l.b16 %v489
        %v800 = vunpack.c.h.b16 %v489
        %v801 = vunpack.c.l.b16 %v490
        %v802 = vunpack.c.h.b16 %v490
        %v803 = vunpack.c.l.b16 %v491
        %v804 = vunpack.c.h.b16 %v491
        %v805 = vunpack.c.l.b16 %v492
        %v806 = vunpack.c.h.b16 %v492
        %v807 = vunpack.c.l.b16 %v493
        %v808 = vunpack.c.h.b16 %v493
        %v809 = vunpack.c.l.b16 %v494
        %v810 = vunpack.c.h.b16 %v494
        %v811 = vunpack.c.l.b16 %v495
        %v812 = vunpack.c.h.b16 %v495
        %v813 = vunpack.c.l.b16 %v496
        %v814 = vunpack.c.h.b16 %v496
        %v815 = vunpack.c.l.b16 %v497
        %v816 = vunpack.c.h.b16 %v497
        %v817 = vunpack.c.l.b16 %v498
        %v818 = vunpack.c.h.b16 %v498
        %v819 = vunpack.c.l.b16 %v499
        %v820 = vunpack.c.h.b16 %v499
        %v821 = vunpack.c.l.b16 %v500
        %v822 = vunpack.c.h.b16 %v500
        %v823 = vunpack.c.l.b16 %v501
        %v824 = vunpack.c.h.b16 %v501
        %v825 = vunpack.c.l.b16 %v502
        %v826 = vunpack.c.h.b16 %v502
        %v827 = vunpack.c.l.b16 %v503
        %v828 = vunpack.c.h.b16 %v503
        %v829 = vunpack.c.l.b16 %v504
        %v830 = vunpack.c.h.b16 %v504
        %v831 = vunpack.c.l.b16 %v505
        %v832 = vunpack.c.h.b16 %v505
        %v833 = vunpack.c.l.b16 %v506
        %v834 = vunpack.c.h.b16 %v506
        %v835 = vunpack.c.l.b16 %v507
        %v836 = vunpack.c.h.b16 %v507
        %v837 = vunpack.c.l.b16 %v508
        %v838 = vunpack.c.h.b16 %v508
        %v839 = vunpack.c.l.b16 %v509
        %v840 = vunpack.c.h.b16 %v509
        %v841 = vunpack.c.l.b16 %v510
        %v842 = vunpack.c.h.b16 %v510
        %v843 = vunpack.c.l.b16 %v511
        %v844 = vunpack.c.h.b16 %v511
        %v845 = vunpack.c.l.b16 %v512
        %v846 = vunpack.c.h.b16 %v512
        %v847 = vunpack.c.l.b16 %v513
        %v848 = vunpack.c.h.b16 %v513
        %v849 = vunpack.c.l.b16 %v514
        %v850 = vunpack.c.h.b16 %v514
        %v851 = vunpack.c.l.b16 %v515
        %v852 = vunpack.c.h.b16 %v515
        %v853 = vunpack.c.l.b16 %v516
        %v854 = vunpack.c.h.b16 %v516
        %v855 = vunpack.c.l.b16 %v517
        %v856 = vunpack.c.h.b16 %v517
        %v857 = vunpack.c.l.b16 %v518
        %v858 = vunpack.c.h.b16 %v518
        %v859 = vunpack.c.l.b16 %v519
        %v860 = vunpack.c.h.b16 %v519
        %v861 = vunpack.c.l.b16 %v520
        %v862 = vunpack.c.h.b16 %v520
        %v863 = vunpack.c.l.b16 %v521
        %v864 = vunpack.c.h.b16 %v521
        %v865 = vunpack.c.l.b16 %v522
        %v866 = vunpack.c.h.b16 %v522
        %v867 = vunpack.c.l.b16 %v523
        %v868 = vunpack.c.h.b16 %v523
        %v869 = vunpack.c.l.b16 %v524
        %v870 = vunpack.c.h.b16 %v524
        %v871 = vunpack.c.l.b16 %v525
        %v872 = vunpack.c.h.b16 %v525
        %v873 = vunpack.c.l.b16 %v526
        %v874 = vunpack.c.h.b16 %v526
        %v875 = vunpack.c.l.b16 %v527
        %v876 = vunpack.c.h.b16 %v527
        %v877 = vunpack.c.l.b16 %v528
        %v878 = vunpack.c.h.b16 %v528
        %v879 = vunpack.c.l.b16 %v529
        %v880 = vunpack.c.h.b16 %v529
        %v881 = vunpack.c.l.b16 %v530
        %v882 = vunpack.c.h.b16 %v530
        %v883 = vunpack.c.l.b16 %v531
        %v884 = vunpack.c.h.b16 %v531
        %v885 = vunpack.c.l.b16 %v532
        %v886 = vunpack.c.h.b16 %v532
        %v887 = vunpack.c.l.b16 %v533
        %v888 = vunpack.c.h.b16 %v533
        %v889 = vunpack.c.l.b16 %v534
        %v890 = vunpack.c.h.b16 %v534
        %v891 = vunpack.c.l.b16 %v535
        %v892 = vunpack.c.h.b16 %v535
        %v893 = vunpack.c.l.b16 %v536
        %v894 = vunpack.c.h.b16 %v536
        %v895 = vunpack.c.l.b16 %v537
        %v896 = vunpack.c.h.b16 %v537
        %v897 = vunpack.c.l.b16 %v538
        %v898 = vunpack.c.h.b16 %v538
        %v899 = vunpack.c.l.b16 %v539
        %v900 = vunpack.c.h.b16 %v539
        %v901 = vunpack.c.l.b16 %v540
        %v902 = vunpack.c.h.b16 %v540
        %v903 = vunpack.c.l.b16 %v541
        %v904 = vunpack.c.h.b16 %v541
        %v905 = vunpack.c.l.b16 %v542
        %v906 = vunpack.c.h.b16 %v542
        %v907 = vunpack.c.l.b16 %v543
        %v908 = vunpack.c.h.b16 %v543
        %v909 = vunpack.c.l.b16 %v544
        %v910 = vunpack.c.h.b16 %v544
        %v911 = vunpack.c.l.b16 %v545
        %v912 = vunpack.c.h.b16 %v545
        %v913 = vunpack.c.l.b16 %v546
        %v914 = vunpack.c.h.b16 %v546
        %v915 = vunpack.c.l.b16 %v547
        %v916 = vunpack.c.h.b16 %v547
        %v917 = vunpack.c.l.b16 %v548
        %v918 = vunpack.c.h.b16 %v548
        %v919 = vunpack.c.l.b16 %v549
        %v920 = vunpack.c.h.b16 %v549
        %v921 = vunpack.c.l.b16 %v550
        %v922 = vunpack.c.h.b16 %v550
        %v923 = vunpack.c.l.b16 %v551
        %v924 = vunpack.c.h.b16 %v551
        %v925 = vunpack.c.l.b16 %v552
        %v926 = vunpack.c.h.b16 %v552
        %v927 = vunpack.c.l.b16 %v553
        %v928 = vunpack.c.h.b16 %v553
        %v929 = vunpack.c.l.b16 %v554
        %v930 = vunpack.c.h.b16 %v554
        %v931 = vunpack.c.l.b16 %v555
        %v932 = vunpack.c.h.b16 %v555
        %v933 = vunpack.c.l.b16 %v556
        %v934 = vunpack.c.h.b16 %v556
        %v935 = vunpack.c.l.b16 %v557
        %v936 = vunpack.c.h.b16 %v557
        %v937 = vunpack.c.l.b16 %v558
        %v938 = vunpack.c.h.b16 %v558
        %v939 = vunpack.c.l.b16 %v559
        %v940 = vunpack.c.h.b16 %v559
        %v941 = vunpack.c.l.b16 %v560
        %v942 = vunpack.c.h.b16 %v560
        %v943 = vunpack.c.l.b16 %v561
        %v944 = vunpack.c.h.b16 %v561
        %v945 = vunpack.c.l.b16 %v562
        %v946 = vunpack.c.h.b16 %v562
        %v947 = vunpack.c.l.b16 %v563
        %v948 = vunpack.c.h.b16 %v563
        %v949 = vunpack.c.l.b16 %v564
        %v950 = vunpack.c.h.b16 %v564
        %v951 = vunpack.c.l.b16 %v565
        %v952 = vunpack.c.h.b16 %v565
        %v953 = vunpack.c.l.b16 %v566
        %v954 = vunpack.c.h.b16 %v566
        %v955 = vunpack.c.l.b16 %v567
        %v956 = vunpack.c.h.b16 %v567
        %v957 = vunpack.c.l.b16 %v568
        %v958 = vunpack.c.h.b16 %v568
        %v959 = vunpack.c.l.b16 %v569
        %v960 = vunpack.c.h.b16 %v569
        %v961 = vunpack.c.l.b16 %v570
        %v962 = vunpack.c.h.b16 %v570
        %v963 = vunpack.c.l.b16 %v571
        %v964 = vunpack.c.h.b16 %v571
        %v965 = vunpack.c.l.b16 %v572
        %v966 = vunpack.c.h.b16 %v572
        %v967 = vunpack.c.l.b16 %v573
        %v968 = vunpack.c.h.b16 %v573
        %v969 = vunpack.c.l.b16 %v574
        %v970 = vunpack.c.h.b16 %v574
        %v971 = vunpack.c.l.b16 %v575
        %v972 = vunpack.c.h.b16 %v575
        %v973 = vunpack.c.l.b16 %v576
        %v974 = vunpack.c.h.b16 %v576
        %v975 = vunpack.c.l.b16 %v577
        %v976 = vunpack.c.h.b16 %v577
        %v977 = vunpack.c.l.b16 %v578
        %v978 = vunpack.c.h.b16 %v578
        %v979 = vunpack.c.l.b16 %v579
        %v980 = vunpack.c.h.b16 %v579
        %v981 = vunpack.c.l.b16 %v580
        %v982 = vunpack.c.h.b16 %v580
        %v983 = vunpack.c.l.b16 %v581
        %v984 = vunpack.c.h.b16 %v581
        %v985 = vunpack.c.l.b16 %v582
        %v986 = vunpack.c.h.b16 %v582
        %v987 = vunpack.c.l.b16 %v583
        %v988 = vunpack.c.h.b16 %v583
        %v989 = vunpack.c.l.b16 %v584
        %v990 = vunpack.c.h.b16 %v584
        %v991 = vunpack.c.l.b16 %v585
        %v992 = vunpack.c.h.b16 %v585
        %v993 = vunpack.c.l.b16 %v586
        %v994 = vunpack.c.h.b16 %v586
        %v995 = vunpack.c.l.b16 %v587
        %v996 = vunpack.c.h.b16 %v587
        %v997 = vunpack.c.l.b16 %v588
        %v998 = vunpack.c.h.b16 %v588
        %v999 = vunpack.c.l.b16 %v589
        %v1000 = vunpack.c.h.b16 %v589
        %v1001 = vunpack.c.l.b16 %v590
        %v1002 = vunpack.c.h.b16 %v590
        %v1003 = vunpack.c.l.b16 %v591
        %v1004 = vunpack.c.h.b16 %v591
        %v1005 = vunpack.c.l.b16 %v592
        %v1006 = vunpack.c.h.b16 %v592
        %v1007 = vunpack.c.l.b16 %v593
        %v1008 = vunpack.c.h.b16 %v593
        %v1009 = vunpack.c.l.b16 %v594
        %v1010 = vunpack.c.h.b16 %v594
        %v1011 = vunpack.c.l.b16 %v595
        %v1012 = vunpack.c.h.b16 %v595
        %v1013 = vunpack.c.l.b16 %v596
        %v1014 = vunpack.c.h.b16 %v596
        %v1015 = vunpack.c.l.b16 %v597
        %v1016 = vunpack.c.h.b16 %v597
        %v1017 = vunpack.c.l.b16 %v598
        %v1018 = vunpack.c.h.b16 %v598
        %v1019 = vunpack.c.l.b16 %v599
        %v1020 = vunpack.c.h.b16 %v599
        %v1021 = vunpack.c.l.b16 %v600
        %v1022 = vunpack.c.h.b16 %v600
        %v1023 = vunpack.c.l.b16 %v601
        %v1024 = vunpack.c.h.b16 %v601
        %v1025 = vunpack.c.l.b16 %v602
        %v1026 = vunpack.c.h.b16 %v602
        %v1027 = vunpack.c.l.b16 %v603
        %v1028 = vunpack.c.h.b16 %v603
        %v1029 = vunpack.c.l.b16 %v604
        %v1030 = vunpack.c.h.b16 %v604
        %v1031 = vunpack.c.l.b16 %v605
        %v1032 = vunpack.c.h.b16 %v605
        %v1033 = vunpack.c.l.b16 %v606
        %v1034 = vunpack.c.h.b16 %v606
        %v1035 = vunpack.c.l.b16 %v607
        %v1036 = vunpack.c.h.b16 %v607
        %v1037 = vunpack.c.l.b16 %v608
        %v1038 = vunpack.c.h.b16 %v608
        %v1039 = vunpack.c.l.b16 %v609
        %v1040 = vunpack.c.h.b16 %v609
        %v1041 = vunpack.c.l.b16 %v610
        %v1042 = vunpack.c.h.b16 %v610
        %v1043 = vunpack.c.l.b16 %v611
        %v1044 = vunpack.c.h.b16 %v611
        %v1045 = vunpack.c.l.b16 %v612
        %v1046 = vunpack.c.h.b16 %v612
        %v1047 = vunpack.c.l.b16 %v613
        %v1048 = vunpack.c.h.b16 %v613
        %v1049 = vunpack.c.l.b16 %v614
        %v1050 = vunpack.c.h.b16 %v614
        %v1051 = vunpack.c.l.b16 %v615
        %v1052 = vunpack.c.h.b16 %v615
        %v1053 = vunpack.c.l.b16 %v616
        %v1054 = vunpack.c.h.b16 %v616
        %v1055 = vunpack.c.l.b16 %v617
        %v1056 = vunpack.c.h.b16 %v617
        %v1057 = vunpack.c.l.b16 %v618
        %v1058 = vunpack.c.h.b16 %v618
        %v1059 = vunpack.c.l.b16 %v619
        %v1060 = vunpack.c.h.b16 %v619
        %v1061 = vunpack.c.l.b16 %v620
        %v1062 = vunpack.c.h.b16 %v620
        %v1063 = vunpack.c.l.b16 %v621
        %v1064 = vunpack.c.h.b16 %v621
        %v1065 = vunpack.c.l.b16 %v622
        %v1066 = vunpack.c.h.b16 %v622
        %v1067 = vunpack.c.l.b16 %v623
        %v1068 = vunpack.c.h.b16 %v623
        %v1069 = vunpack.c.l.b16 %v624
        %v1070 = vunpack.c.h.b16 %v624
        %v1071 = vpack.c.b16 %v791, %v783
        %v1072 = vpack.c.b16 %v792, %v784
        %v1073 = vpack.c.b16 %v793, %v785
        %v1074 = vpack.c.b16 %v794, %v786
        %v1075 = vpack.c.b16 %v795, %v787
        %v1076 = vpack.c.b16 %v796, %v788
        %v1077 = vpack.c.b16 %v797, %v789
        %v1078 = vpack.c.b16 %v798, %v790
        %v1079 = vpack.c.b16 %v807, %v799
        %v1080 = vpack.c.b16 %v808, %v800
        %v1081 = vpack.c.b16 %v809, %v801
        %v1082 = vpack.c.b16 %v810, %v802
        %v1083 = vpack.c.b16 %v811, %v803
        %v1084 = vpack.c.b16 %v812, %v804
        %v1085 = vpack.c.b16 %v813, %v805
        %v1086 = vpack.c.b16 %v814, %v806
        %v1087 = vpack.c.b16 %v823, %v815
        %v1088 = vpack.c.b16 %v824, %v816
        %v1089 = vpack.c.b16 %v825, %v817
        %v1090 = vpack.c.b16 %v826, %v818
        %v1091 = vpack.c.b16 %v827, %v819
        %v1092 = vpack.c.b16 %v828, %v820
        %v1093 = vpack.c.b16 %v829, %v821
        %v1094 = vpack.c.b16 %v830, %v822
        %v1095 = vpack.c.b16 %v839, %v831
        %v1096 = vpack.c.b16 %v840, %v832
        %v1097 = vpack.c.b16 %v841, %v833
        %v1098 = vpack.c.b16 %v842, %v834
        %v1099 = vpack.c.b16 %v843, %v835
        %v1100 = vpack.c.b16 %v844, %v836
        %v1101 = vpack.c.b16 %v845, %v837
        %v1102 = vpack.c.b16 %v846, %v838
        %v1103 = vpack.c.b16 %v855, %v847
        %v1104 = vpack.c.b16 %v856, %v848
        %v1105 = vpack.c.b16 %v857, %v849
        %v1106 = vpack.c.b16 %v858, %v850
        %v1107 = vpack.c.b16 %v859, %v851
        %v1108 = vpack.c.b16 %v860, %v852
        %v1109 = vpack.c.b16 %v861, %v853
        %v1110 = vpack.c.b16 %v862, %v854
        %v1111 = vpack.c.b16 %v871, %v863
        %v1112 = vpack.c.b16 %v872, %v864
        %v1113 = vpack.c.b16 %v873, %v865
        %v1114 = vpack.c.b16 %v874, %v866
        %v1115 = vpack.c.b16 %v875, %v867
        %v1116 = vpack.c.b16 %v876, %v868
        %v1117 = vpack.c.b16 %v877, %v869
        %v1118 = vpack.c.b16 %v878, %v870
        %v1119 = vpack.c.b16 %v887, %v879
        %v1120 = vpack.c.b16 %v888, %v880
        %v1121 = vpack.c.b16 %v889, %v881
        %v1122 = vpack.c.b16 %v890, %v882
        %v1123 = vpack.c.b16 %v891, %v883
        %v1124 = vpack.c.b16 %v892, %v884
        %v1125 = vpack.c.b16 %v893, %v885
        %v1126 = vpack.c.b16 %v894, %v886
        %v1127 = vpack.c.b16 %v903, %v895
        %v1128 = vpack.c.b16 %v904, %v896
        %v1129 = vpack.c.b16 %v905, %v897
        %v1130 = vpack.c.b16 %v906, %v898
        %v1131 = vpack.c.b16 %v907, %v899
        %v1132 = vpack.c.b16 %v908, %v900
        %v1133 = vpack.c.b16 %v909, %v901
        %v1134 = vpack.c.b16 %v910, %v902
        %v1135 = vpack.c.b16 %v919, %v911
        %v1136 = vpack.c.b16 %v920, %v912
        %v1137 = vpack.c.b16 %v921, %v913
        %v1138 = vpack.c.b16 %v922, %v914
        %v1139 = vpack.c.b16 %v923, %v915
        %v1140 = vpack.c.b16 %v924, %v916
        %v1141 = vpack.c.b16 %v925, %v917
        %v1142 = vpack.c.b16 %v926, %v918
        %v1143 = vpack.c.b16 %v935, %v927
        %v1144 = vpack.c.b16 %v936, %v928
        %v1145 = vpack.c.b16 %v937, %v929
        %v1146 = vpack.c.b16 %v938, %v930
        %v1147 = vpack.c.b16 %v939, %v931
        %v1148 = vpack.c.b16 %v940, %v932
        %v1149 = vpack.c.b16 %v941, %v933
        %v1150 = vpack.c.b16 %v942, %v934
        %v1151 = vpack.c.b16 %v951, %v943
        %v1152 = vpack.c.b16 %v952, %v944
        %v1153 = vpack.c.b16 %v953, %v945
        %v1154 = vpack.c.b16 %v954, %v946
        %v1155 = vpack.c.b16 %v955, %v947
        %v1156 = vpack.c.b16 %v956, %v948
        %v1157 = vpack.c.b16 %v957, %v949
        %v1158 = vpack.c.b16 %v958, %v950
        %v1159 = vpack.c.b16 %v967, %v959
        %v1160 = vpack.c.b16 %v968, %v960
        %v1161 = vpack.c.b16 %v969, %v961
        %v1162 = vpack.c.b16 %v970, %v962
        %v1163 = vpack.c.b16 %v971, %v963
        %v1164 = vpack.c.b16 %v972, %v964
        %v1165 = vpack.c.b16 %v973, %v965
        %v1166 = vpack.c.b16 %v974, %v966
        %v1167 = vpack.c.b16 %v983, %v975
        %v1168 = vpack.c.b16 %v984, %v976
        %v1169 = vpack.c.b16 %v985, %v977
        %v1170 = vpack.c.b16 %v986, %v978
        %v1171 = vpack.c.b16 %v987, %v979
        %v1172 = vpack.c.b16 %v988, %v980
        %v1173 = vpack.c.b16 %v989, %v981
        %v1174 = vpack.c.b16 %v990, %v982
        %v1175 = vpack.c.b16 %v999, %v991
        %v1176 = vpack.c.b16 %v1000, %v992
        %v1177 = vpack.c.b16 %v1001, %v993
        %v1178 = vpack.c.b16 %v1002, %v994
        %v1179 = vpack.c.b16 %v1003, %v995
        %v1180 = vpack.c.b16 %v1004, %v996
        %v1181 = vpack.c.b16 %v1005, %v997
        %v1182 = vpack.c.b16 %v1006, %v998
        %v1183 = vpack.c.b16 %v1015, %v1007
        %v1184 = vpack.c.b16 %v1016, %v1008
        %v1185 = vpack.c.b16 %v1017, %v1009
        %v1186 = vpack.c.b16 %v1018, %v1010
        %v1187 = vpack.c.b16 %v1019, %v1011
        %v1188 = vpack.c.b16 %v1020, %v1012
        %v1189 = vpack.c.b16 %v1021, %v1013
        %v1190 = vpack.c.b16 %v1022, %v1014
        %v1191 = vpack.c.b16 %v1031, %v1023
        %v1192 = vpack.c.b16 %v1032, %v1024
        %v1193 = vpack.c.b16 %v1033, %v1025
        %v1194 = vpack.c.b16 %v1034, %v1026
        %v1195 = vpack.c.b16 %v1035, %v1027
        %v1196 = vpack.c.b16 %v1036, %v1028
        %v1197 = vpack.c.b16 %v1037, %v1029
        %v1198 = vpack.c.b16 %v1038, %v1030
        %v1199 = vpack.c.b16 %v1047, %v1039
        %v1200 = vpack.c.b16 %v1048, %v1040
        %v1201 = vpack.c.b16 %v1049, %v1041
        %v1202 = vpack.c.b16 %v1050, %v1042
        %v1203 = vpack.c.b16 %v1051, %v1043
        %v1204 = vpack.c.b16 %v1052, %v1044
        %v1205 = vpack.c.b16 %v1053, %v1045
        %v1206 = vpack.c.b16 %v1054, %v1046
        %v1207 = vpack.c.b16 %v1063, %v1055
        %v1208 = vpack.c.b16 %v1064, %v1056
        %v1209 = vpack.c.b16 %v1065, %v1057
        %v1210 = vpack.c.b16 %v1066, %v1058
        %v1211 = vpack.c.b16 %v1067, %v1059
        %v1212 = vpack.c.b16 %v1068, %v1060
        %v1213 = vpack.c.b16 %v1069, %v1061
        %v1214 = vpack.c.b16 %v1070, %v1062
        %vm1359 = vcmask 261120
        %v1360 = vsel %vm1359, %v636, 0
        %1362 = vmatpush.bf16.msra.mxu0 %v1127
        %1363 = vmatpush.bf16.msra.mxu0 %v1119
        %1364 = vmatpush.bf16.msra.mxu0 %v1111
        %1365 = vmatpush.bf16.msra.mxu0 %v1103
        %1366 = vmatpush.bf16.msra.mxu0 %v1095
        %1367 = vmatpush.bf16.msra.mxu0 %v1087
        %1368 = vmatpush.bf16.msra.mxu0 %v1079
        %1369 = vmatpush.bf16.msra.mxu0 %v1071
        %1370 = vmatmul.bf16.gmra.mxu0 %v634
        %v1371 = vpop.f32.mrf.mxu0
        %v1372 = vadd.f32 %v631, %v1371
        %v1373 = vpop.f32.mrf.mxu0
        %1374 = vdwg.mxu0
        %1375 = vmatpush.bf16.msra.mxu0 %v1191
        %1376 = vmatpush.bf16.msra.mxu0 %v1183
        %1377 = vmatpush.bf16.msra.mxu0 %v1175
        %1378 = vmatpush.bf16.msra.mxu0 %v1167
        %1379 = vmatpush.bf16.msra.mxu0 %v1159
        %1380 = vmatpush.bf16.msra.mxu0 %v1151
        %1381 = vmatpush.bf16.msra.mxu0 %v1143
        %1382 = vmatpush.bf16.msra.mxu0 %v1135
        %1383 = vmatmul.bf16.gmra.mxu0 %v635
        %v1384 = vpop.f32.mrf.mxu0
        %v1385 = vadd.f32 %v1372, %v1384
        %v1386 = vpop.f32.mrf.mxu0
        %1387 = vdwg.mxu0
        %1388 = vmatpush.bf16.msra.mxu0 0
        %1389 = vmatpush.bf16.msra.mxu0 0
        %1390 = vmatpush.bf16.msra.mxu0 0
        %1391 = vmatpush.bf16.msra.mxu0 0
        %1392 = vmatpush.bf16.msra.mxu0 0
        %1393 = vmatpush.bf16.msra.mxu0 0
        %1394 = vmatpush.bf16.msra.mxu0 %v1207
        %1395 = vmatpush.bf16.msra.mxu0 %v1199
        %1396 = vmatmul.bf16.gmra.mxu0 %v1360
        %v1397 = vpop.f32.mrf.mxu0
        %v1398 = vadd.f32 %v1385, %v1397
        %v1399 = vpop.f32.mrf.mxu0
        %1400 = vdwg.mxu0
        %1401 = vmatpush.bf16.msra.mxu0 %v1128
        %1402 = vmatpush.bf16.msra.mxu0 %v1120
        %1403 = vmatpush.bf16.msra.mxu0 %v1112
        %1404 = vmatpush.bf16.msra.mxu0 %v1104
        %1405 = vmatpush.bf16.msra.mxu0 %v1096
        %1406 = vmatpush.bf16.msra.mxu0 %v1088
        %1407 = vmatpush.bf16.msra.mxu0 %v1080
        %1408 = vmatpush.bf16.msra.mxu0 %v1072
        %1409 = vmatmul.bf16.gmra.mxu0 %v634
        %v1410 = vpop.f32.mrf.mxu0
        %v1411 = vadd.f32 %v631, %v1410
        %v1412 = vpop.f32.mrf.mxu0
        %1413 = vdwg.mxu0
        %1414 = vmatpush.bf16.msra.mxu0 %v1192
        %1415 = vmatpush.bf16.msra.mxu0 %v1184
        %1416 = vmatpush.bf16.msra.mxu0 %v1176
        %1417 = vmatpush.bf16.msra.mxu0 %v1168
        %1418 = vmatpush.bf16.msra.mxu0 %v1160
        %1419 = vmatpush.bf16.msra.mxu0 %v1152
        %1420 = vmatpush.bf16.msra.mxu0 %v1144
        %1421 = vmatpush.bf16.msra.mxu0 %v1136
        %1422 = vmatmul.bf16.gmra.mxu0 %v635
        %v1423 = vpop.f32.mrf.mxu0
        %v1424 = vadd.f32 %v1411, %v1423
        %v1425 = vpop.f32.mrf.mxu0
        %1426 = vdwg.mxu0
        %1427 = vmatpush.bf16.msra.mxu0 0
        %1428 = vmatpush.bf16.msra.mxu0 0
        %1429 = vmatpush.bf16.msra.mxu0 0
        %1430 = vmatpush.bf16.msra.mxu0 0
        %1431 = vmatpush.bf16.msra.mxu0 0
        %1432 = vmatpush.bf16.msra.mxu0 0
        %1433 = vmatpush.bf16.msra.mxu0 %v1208
        %1434 = vmatpush.bf16.msra.mxu0 %v1200
        %1435 = vmatmul.bf16.gmra.mxu0 %v1360
        %v1436 = vpop.f32.mrf.mxu0
        %v1437 = vadd.f32 %v1424, %v1436
        %v1438 = vpop.f32.mrf.mxu0
        %1439 = vdwg.mxu0
        %1440 = vmatpush.bf16.msra.mxu0 %v1129
        %1441 = vmatpush.bf16.msra.mxu0 %v1121
        %1442 = vmatpush.bf16.msra.mxu0 %v1113
        %1443 = vmatpush.bf16.msra.mxu0 %v1105
        %1444 = vmatpush.bf16.msra.mxu0 %v1097
        %1445 = vmatpush.bf16.msra.mxu0 %v1089
        %1446 = vmatpush.bf16.msra.mxu0 %v1081
        %1447 = vmatpush.bf16.msra.mxu0 %v1073
        %1448 = vmatmul.bf16.gmra.mxu0 %v634
        %v1449 = vpop.f32.mrf.mxu0
        %v1450 = vadd.f32 %v631, %v1449
        %v1451 = vpop.f32.mrf.mxu0
        %1452 = vdwg.mxu0
        %1453 = vmatpush.bf16.msra.mxu0 %v1193
        %1454 = vmatpush.bf16.msra.mxu0 %v1185
        %1455 = vmatpush.bf16.msra.mxu0 %v1177
        %1456 = vmatpush.bf16.msra.mxu0 %v1169
        %1457 = vmatpush.bf16.msra.mxu0 %v1161
        %1458 = vmatpush.bf16.msra.mxu0 %v1153
        %1459 = vmatpush.bf16.msra.mxu0 %v1145
        %1460 = vmatpush.bf16.msra.mxu0 %v1137
        %1461 = vmatmul.bf16.gmra.mxu0 %v635
        %v1462 = vpop.f32.mrf.mxu0
        %v1463 = vadd.f32 %v1450, %v1462
        %v1464 = vpop.f32.mrf.mxu0
        %1465 = vdwg.mxu0
        %1466 = vmatpush.bf16.msra.mxu0 0
        %1467 = vmatpush.bf16.msra.mxu0 0
        %1468 = vmatpush.bf16.msra.mxu0 0
        %1469 = vmatpush.bf16.msra.mxu0 0
        %1470 = vmatpush.bf16.msra.mxu0 0
        %1471 = vmatpush.bf16.msra.mxu0 0
        %1472 = vmatpush.bf16.msra.mxu0 %v1209
        %1473 = vmatpush.bf16.msra.mxu0 %v1201
        %1474 = vmatmul.bf16.gmra.mxu0 %v1360
        %v1475 = vpop.f32.mrf.mxu0
        %v1476 = vadd.f32 %v1463, %v1475
        %v1477 = vpop.f32.mrf.mxu0
        %1478 = vdwg.mxu0
        %1479 = vmatpush.bf16.msra.mxu0 %v1130
        %1480 = vmatpush.bf16.msra.mxu0 %v1122
        %1481 = vmatpush.bf16.msra.mxu0 %v1114
        %1482 = vmatpush.bf16.msra.mxu0 %v1106
        %1483 = vmatpush.bf16.msra.mxu0 %v1098
        %1484 = vmatpush.bf16.msra.mxu0 %v1090
        %1485 = vmatpush.bf16.msra.mxu0 %v1082
        %1486 = vmatpush.bf16.msra.mxu0 %v1074
        %1487 = vmatmul.bf16.gmra.mxu0 %v634
        %v1488 = vpop.f32.mrf.mxu0
        %v1489 = vadd.f32 %v631, %v1488
        %v1490 = vpop.f32.mrf.mxu0
        %1491 = vdwg.mxu0
        %1492 = vmatpush.bf16.msra.mxu0 %v1194
        %1493 = vmatpush.bf16.msra.mxu0 %v1186
        %1494 = vmatpush.bf16.msra.mxu0 %v1178
        %1495 = vmatpush.bf16.msra.mxu0 %v1170
        %1496 = vmatpush.bf16.msra.mxu0 %v1162
        %1497 = vmatpush.bf16.msra.mxu0 %v1154
        %1498 = vmatpush.bf16.msra.mxu0 %v1146
        %1499 = vmatpush.bf16.msra.mxu0 %v1138
        %1500 = vmatmul.bf16.gmra.mxu0 %v635
        %v1501 = vpop.f32.mrf.mxu0
        %v1502 = vadd.f32 %v1489, %v1501
        %v1503 = vpop.f32.mrf.mxu0
        %1504 = vdwg.mxu0
        %1505 = vmatpush.bf16.msra.mxu0 0
        %1506 = vmatpush.bf16.msra.mxu0 0
        %1507 = vmatpush.bf16.msra.mxu0 0
        %1508 = vmatpush.bf16.msra.mxu0 0
        %1509 = vmatpush.bf16.msra.mxu0 0
        %1510 = vmatpush.bf16.msra.mxu0 0
        %1511 = vmatpush.bf16.msra.mxu0 %v1210
        %1512 = vmatpush.bf16.msra.mxu0 %v1202
        %1513 = vmatmul.bf16.gmra.mxu0 %v1360
        %v1514 = vpop.f32.mrf.mxu0
        %v1515 = vadd.f32 %v1502, %v1514
        %v1516 = vpop.f32.mrf.mxu0
        %1517 = vdwg.mxu0
        %1518 = vmatpush.bf16.msra.mxu0 %v1131
        %1519 = vmatpush.bf16.msra.mxu0 %v1123
        %1520 = vmatpush.bf16.msra.mxu0 %v1115
        %1521 = vmatpush.bf16.msra.mxu0 %v1107
        %1522 = vmatpush.bf16.msra.mxu0 %v1099
        %1523 = vmatpush.bf16.msra.mxu0 %v1091
        %1524 = vmatpush.bf16.msra.mxu0 %v1083
        %1525 = vmatpush.bf16.msra.mxu0 %v1075
        %1526 = vmatmul.bf16.gmra.mxu0 %v634
        %v1527 = vpop.f32.mrf.mxu0
        %v1528 = vadd.f32 %v631, %v1527
        %v1529 = vpop.f32.mrf.mxu0
        %1530 = vdwg.mxu0
        %1531 = vmatpush.bf16.msra.mxu0 %v1195
        %1532 = vmatpush.bf16.msra.mxu0 %v1187
        %1533 = vmatpush.bf16.msra.mxu0 %v1179
        %1534 = vmatpush.bf16.msra.mxu0 %v1171
        %1535 = vmatpush.bf16.msra.mxu0 %v1163
        %1536 = vmatpush.bf16.msra.mxu0 %v1155
        %1537 = vmatpush.bf16.msra.mxu0 %v1147
        %1538 = vmatpush.bf16.msra.mxu0 %v1139
        %1539 = vmatmul.bf16.gmra.mxu0 %v635
        %v1540 = vpop.f32.mrf.mxu0
        %v1541 = vadd.f32 %v1528, %v1540
        %v1542 = vpop.f32.mrf.mxu0
        %1543 = vdwg.mxu0
        %1544 = vmatpush.bf16.msra.mxu0 0
        %1545 = vmatpush.bf16.msra.mxu0 0
        %1546 = vmatpush.bf16.msra.mxu0 0
        %1547 = vmatpush.bf16.msra.mxu0 0
        %1548 = vmatpush.bf16.msra.mxu0 0
        %1549 = vmatpush.bf16.msra.mxu0 0
        %1550 = vmatpush.bf16.msra.mxu0 %v1211
        %1551 = vmatpush.bf16.msra.mxu0 %v1203
        %1552 = vmatmul.bf16.gmra.mxu0 %v1360
        %v1553 = vpop.f32.mrf.mxu0
        %v1554 = vadd.f32 %v1541, %v1553
        %v1555 = vpop.f32.mrf.mxu0
        %1556 = vdwg.mxu0
        %1557 = vmatpush.bf16.msra.mxu0 %v1132
        %1558 = vmatpush.bf16.msra.mxu0 %v1124
        %1559 = vmatpush.bf16.msra.mxu0 %v1116
        %1560 = vmatpush.bf16.msra.mxu0 %v1108
        %1561 = vmatpush.bf16.msra.mxu0 %v1100
        %1562 = vmatpush.bf16.msra.mxu0 %v1092
        %1563 = vmatpush.bf16.msra.mxu0 %v1084
        %1564 = vmatpush.bf16.msra.mxu0 %v1076
        %1565 = vmatmul.bf16.gmra.mxu0 %v634
        %v1566 = vpop.f32.mrf.mxu0
        %v1567 = vadd.f32 %v631, %v1566
        %v1568 = vpop.f32.mrf.mxu0
        %1569 = vdwg.mxu0
        %1570 = vmatpush.bf16.msra.mxu0 %v1196
        %1571 = vmatpush.bf16.msra.mxu0 %v1188
        %1572 = vmatpush.bf16.msra.mxu0 %v1180
        %1573 = vmatpush.bf16.msra.mxu0 %v1172
        %1574 = vmatpush.bf16.msra.mxu0 %v1164
        %1575 = vmatpush.bf16.msra.mxu0 %v1156
        %1576 = vmatpush.bf16.msra.mxu0 %v1148
        %1577 = vmatpush.bf16.msra.mxu0 %v1140
        %1578 = vmatmul.bf16.gmra.mxu0 %v635
        %v1579 = vpop.f32.mrf.mxu0
        %v1580 = vadd.f32 %v1567, %v1579
        %v1581 = vpop.f32.mrf.mxu0
        %1582 = vdwg.mxu0
        %1583 = vmatpush.bf16.msra.mxu0 0
        %1584 = vmatpush.bf16.msra.mxu0 0
        %1585 = vmatpush.bf16.msra.mxu0 0
        %1586 = vmatpush.bf16.msra.mxu0 0
        %1587 = vmatpush.bf16.msra.mxu0 0
        %1588 = vmatpush.bf16.msra.mxu0 0
        %1589 = vmatpush.bf16.msra.mxu0 %v1212
        %1590 = vmatpush.bf16.msra.mxu0 %v1204
        %1591 = vmatmul.bf16.gmra.mxu0 %v1360
        %v1592 = vpop.f32.mrf.mxu0
        %v1593 = vadd.f32 %v1580, %v1592
        %v1594 = vpop.f32.mrf.mxu0
        %1595 = vdwg.mxu0
        %1596 = vmatpush.bf16.msra.mxu0 %v1133
        %1597 = vmatpush.bf16.msra.mxu0 %v1125
        %1598 = vmatpush.bf16.msra.mxu0 %v1117
        %1599 = vmatpush.bf16.msra.mxu0 %v1109
        %1600 = vmatpush.bf16.msra.mxu0 %v1101
        %1601 = vmatpush.bf16.msra.mxu0 %v1093
        %1602 = vmatpush.bf16.msra.mxu0 %v1085
        %1603 = vmatpush.bf16.msra.mxu0 %v1077
        %1604 = vmatmul.bf16.gmra.mxu0 %v634
        %v1605 = vpop.f32.mrf.mxu0
        %v1606 = vadd.f32 %v631, %v1605
        %v1607 = vpop.f32.mrf.mxu0
        %1608 = vdwg.mxu0
        %1609 = vmatpush.bf16.msra.mxu0 %v1197
        %1610 = vmatpush.bf16.msra.mxu0 %v1189
        %1611 = vmatpush.bf16.msra.mxu0 %v1181
        %1612 = vmatpush.bf16.msra.mxu0 %v1173
        %1613 = vmatpush.bf16.msra.mxu0 %v1165
        %1614 = vmatpush.bf16.msra.mxu0 %v1157
        %1615 = vmatpush.bf16.msra.mxu0 %v1149
        %1616 = vmatpush.bf16.msra.mxu0 %v1141
        %1617 = vmatmul.bf16.gmra.mxu0 %v635
        %v1618 = vpop.f32.mrf.mxu0
        %v1619 = vadd.f32 %v1606, %v1618
        %v1620 = vpop.f32.mrf.mxu0
        %1621 = vdwg.mxu0
        %1622 = vmatpush.bf16.msra.mxu0 0
        %1623 = vmatpush.bf16.msra.mxu0 0
        %1624 = vmatpush.bf16.msra.mxu0 0
        %1625 = vmatpush.bf16.msra.mxu0 0
        %1626 = vmatpush.bf16.msra.mxu0 0
        %1627 = vmatpush.bf16.msra.mxu0 0
        %1628 = vmatpush.bf16.msra.mxu0 %v1213
        %1629 = vmatpush.bf16.msra.mxu0 %v1205
        %1630 = vmatmul.bf16.gmra.mxu0 %v1360
        %v1631 = vpop.f32.mrf.mxu0
        %v1632 = vadd.f32 %v1619, %v1631
        %v1633 = vpop.f32.mrf.mxu0
        %1634 = vdwg.mxu0
        %1635 = vmatpush.bf16.msra.mxu0 %v1134
        %1636 = vmatpush.bf16.msra.mxu0 %v1126
        %1637 = vmatpush.bf16.msra.mxu0 %v1118
        %1638 = vmatpush.bf16.msra.mxu0 %v1110
        %1639 = vmatpush.bf16.msra.mxu0 %v1102
        %1640 = vmatpush.bf16.msra.mxu0 %v1094
        %1641 = vmatpush.bf16.msra.mxu0 %v1086
        %1642 = vmatpush.bf16.msra.mxu0 %v1078
        %1643 = vmatmul.bf16.gmra.mxu0 %v634
        %v1644 = vpop.f32.mrf.mxu0
        %v1645 = vadd.f32 %v631, %v1644
        %v1646 = vpop.f32.mrf.mxu0
        %1647 = vdwg.mxu0
        %1648 = vmatpush.bf16.msra.mxu0 %v1198
        %1649 = vmatpush.bf16.msra.mxu0 %v1190
        %1650 = vmatpush.bf16.msra.mxu0 %v1182
        %1651 = vmatpush.bf16.msra.mxu0 %v1174
        %1652 = vmatpush.bf16.msra.mxu0 %v1166
        %1653 = vmatpush.bf16.msra.mxu0 %v1158
        %1654 = vmatpush.bf16.msra.mxu0 %v1150
        %1655 = vmatpush.bf16.msra.mxu0 %v1142
        %1656 = vmatmul.bf16.gmra.mxu0 %v635
        %v1657 = vpop.f32.mrf.mxu0
        %v1658 = vadd.f32 %v1645, %v1657
        %v1659 = vpop.f32.mrf.mxu0
        %1660 = vdwg.mxu0
        %1661 = vmatpush.bf16.msra.mxu0 0
        %1662 = vmatpush.bf16.msra.mxu0 0
        %1663 = vmatpush.bf16.msra.mxu0 0
        %1664 = vmatpush.bf16.msra.mxu0 0
        %1665 = vmatpush.bf16.msra.mxu0 0
        %1666 = vmatpush.bf16.msra.mxu0 0
        %1667 = vmatpush.bf16.msra.mxu0 %v1214
        %1668 = vmatpush.bf16.msra.mxu0 %v1206
        %1669 = vmatmul.bf16.gmra.mxu0 %v1360
        %v1670 = vpop.f32.mrf.mxu0
        %v1671 = vadd.f32 %v1658, %v1670
        %v1672 = vpop.f32.mrf.mxu0
        %1673 = vdwg.mxu0
        %v1682 = vrot.slane %v1437, 7
        %v1683 = vrot.slane %v1476, 6
        %v1684 = vrot.slane %v1515, 5
        %v1685 = vrot.slane %v1554, 4
        %v1686 = vrot.slane %v1593, 3
        %v1687 = vrot.slane %v1632, 2
        %v1688 = vrot.slane %v1671, 1
        %vm1689 = vcmask 1040384
        %v1690 = vsel %vm1689, %v1398, %v1682
        %vm1691 = vcmask 1042434
        %v1692 = vsel %vm1691, %v1683, %v1684
        %vm1693 = vcmask 1041408
        %v1694 = vsel %vm1693, %v1690, %v1692
        %vm1695 = vcmask 1044484
        %v1696 = vsel %vm1695, %v1685, %v1686
        %vm1697 = vcmask 1046534
        %v1698 = vsel %vm1697, %v1687, %v1688
        %vm1699 = vcmask 1045508
        %v1700 = vsel %vm1699, %v1696, %v1698
        %vm1701 = vcmask 1043456
        %v1702 = vsel %vm1701, %v1694, %v1700
        %1704 = vst [vmem:[%s477] sm:$0xff] %v1702
        %s1705 = smul.u32 8, %s16
        %p1706 = scmp.lt.s32.totalorder %s1705, 15
        %s1707 = scalar_select %p1706, %s1705, 15
        %s1708 = scalar_lea.vmem %s3, %s1707
        // Predicated region
        $region56: #{chained_forward.21} parent=50 // pred_check
          %p1709 = pneg %p102
        $region57: #{chained_forward.21} parent=50 // pred_check_branch
          %1711 = sbr.rel (%p1709) target = $region59
        $region58: #{chained_forward.21} parent=50 // pred_region
          %s1712 = smul.u32 8, %s16
        $region59: #{chained_forward.21} parent=50 // pred_fallthru
          _
      $region51: #{chained_forward.21} parent=5 // pred_fallthru
        _
      %p1713 = scmp.le.s32.totalorder 2, %s11
      // Predicated region
      $region60: #{chained_forward.21} parent=5 // pred_check
        %p1714 = pneg %p1713
      $region61: #{chained_forward.21} parent=5 // pred_check_branch
        %1716 = sbr.rel (%p1714) target = $region63
      $region62: #{chained_forward.21} parent=5 // pred_region
        %s1717 = ssub.s32 %s11, 2
        // Predicated region
        $region64: #{chained_forward.21} parent=62 // pred_check
          %p1718 = pneg %p108
        $region65: #{chained_forward.21} parent=62 // pred_check_branch
          %1720 = sbr.rel (%p1718) target = $region67
        $region66: #{chained_forward.21} parent=62 // pred_region
          %s1721 = smul.u32 8, %s17
          %p1722 = scmp.lt.s32.totalorder %s1721, 15
          %s1723 = scalar_select %p1722, %s1721, 15
          %s1724 = scalar_lea.vmem %s3, %s1723
        $region67: #{chained_forward.21} parent=62 // pred_fallthru
          _
      $region63: #{chained_forward.21} parent=5 // pred_fallthru
        _
    $region6: #{chained_forward.21} parent=1 // loop_footer
      %s15 = sadd.s32 1, %s11
    $region7: #{chained_forward.21} parent=1 // loop_footer_branch
      %10 = sbr.rel target = $region3
    $region8: #{chained_forward.21} parent=1 // loop_exit
      _

// kernel: chained_forward.29
$region0: #{chained_forward.29}
  #allocation0 [shape = 'u32[]', space=smem, size = 0x4, offset = 0x4, fixed_abs, tag = 'smem constant byte address 0x4 - core index']
  #allocation1 [shape = 'u32[72,128]{1,0:T(1,128)}', space=vmem, size = 0x9000, scoped, tag = 'internal scratch']
  %s0 = inlined_call_operand.vmem [shape: bf16[64,9], index: 0, kind: input, shape index: {}]
  %s1 = inlined_call_operand.vmem [shape: bf16[9,512], index: 1, kind: input, shape index: {}]
  %s2 = inlined_call_operand.vmem [shape: f32[64,1], index: 2, kind: input, shape index: {}]
  %s3 = inlined_call_operand.vmem [shape: f32[64,512], index: 3, kind: input, shape index: {}]
  %s4 = inlined_call_operand.vmem [shape: bf16[64,512], index: 4, kind: output, shape index: {}]
  %s5 = sld [smem:[#allocation0]]
  $region26: #{chained_forward.29} parent=0
    _
  %s7 = ssub.s32 1, %s5
  %s8 = scalar_select 0, %s7, %s5
  // Predicated region
  $region2: #{chained_forward.29} parent=0 // pred_check
    _
  $region3: #{chained_forward.29} parent=0 // pred_check_branch
    %10 = sbr.rel (0) target = $region5
  $region4: #{chained_forward.29} parent=0 // pred_region
    _
  $region5: #{chained_forward.29} parent=0 // pred_fallthru
    _
  // Predicated region
  $region6: #{chained_forward.29} parent=0 // pred_check
    _
  $region7: #{chained_forward.29} parent=0 // pred_check_branch
    %12 = sbr.rel (0) target = $region9
  $region8: #{chained_forward.29} parent=0 // pred_region
    _
  $region9: #{chained_forward.29} parent=0 // pred_fallthru
    _
  // Predicated region
  $region10: #{chained_forward.29} parent=0 // pred_check
    _
  $region11: #{chained_forward.29} parent=0 // pred_check_branch
    %14 = sbr.rel (0) target = $region13
  $region12: #{chained_forward.29} parent=0 // pred_region
    _
  $region13: #{chained_forward.29} parent=0 // pred_fallthru
    _
  // Predicated region
  $region14: #{chained_forward.29} parent=0 // pred_check
    _
  $region15: #{chained_forward.29} parent=0 // pred_check_branch
    %16 = sbr.rel (0) target = $region17
  $region16: #{chained_forward.29} parent=0 // pred_region
    _
  $region17: #{chained_forward.29} parent=0 // pred_fallthru
    _
  %v17 = vld [vmem:[%s0] sm:$0xf]
  %v18 = vld [vmem:[%s0 + $0x4] sm:$0xf]
  %v19 = vld [vmem:[%s0 + $0x8] sm:$0xf]
  %v20 = vld [vmem:[%s0 + $0xc] sm:$0xf]
  %v21 = vld [vmem:[%s0 + $0x10] sm:$0xf]
  %v22 = vld [vmem:[%s0 + $0x14] sm:$0xf]
  %v23 = vld [vmem:[%s0 + $0x18] sm:$0xf]
  %v24 = vld [vmem:[%s0 + $0x1c] sm:$0xf]
  %v25 = vunpack.c.l.bf16 %v17
  %v26 = vunpack.c.l.bf16 %v18
  %v27 = vunpack.c.l.bf16 %v19
  %v28 = vunpack.c.l.bf16 %v20
  %v29 = vunpack.c.l.bf16 %v21
  %v30 = vunpack.c.l.bf16 %v22
  %v31 = vunpack.c.l.bf16 %v23
  %v32 = vunpack.c.l.bf16 %v24
  %v33 = vld [vmem:[%s1] sm:$0xff]
  %v34 = vld [vmem:[%s1 + $0x8] sm:$0xff]
  %v35 = vld [vmem:[%s1 + $0x10] sm:$0x11]
  %v36 = vld [vmem:[%s1 + $0x18] sm:$0x11]
  %v37 = vunpack.c.l.bf16 %v33
  %v38 = vunpack.c.h.bf16 %v33
  %v39 = vunpack.c.l.bf16 %v34
  %v40 = vunpack.c.h.bf16 %v34
  %v41 = vunpack.c.l.bf16 %v35
  %v42 = vunpack.c.h.bf16 %v35
  %v43 = vunpack.c.l.bf16 %v36
  %v44 = vunpack.c.h.bf16 %v36
  %46 = vset.pattern.permute.xlu0 0
  %47 = vperm.xlu0 %46, %v25
  %v48 = vpop.permute.xlu0 %47
  %51 = vset.pattern.permute.xlu0 0
  %52 = vperm.xlu0 %51, %v26
  %v53 = vpop.permute.xlu0 %52
  %56 = vset.pattern.permute.xlu0 0
  %57 = vperm.xlu0 %56, %v27
  %v58 = vpop.permute.xlu0 %57
  %61 = vset.pattern.permute.xlu0 0
  %62 = vperm.xlu0 %61, %v28
  %v63 = vpop.permute.xlu0 %62
  %66 = vset.pattern.permute.xlu0 0
  %67 = vperm.xlu0 %66, %v29
  %v68 = vpop.permute.xlu0 %67
  %71 = vset.pattern.permute.xlu0 0
  %72 = vperm.xlu0 %71, %v30
  %v73 = vpop.permute.xlu0 %72
  %76 = vset.pattern.permute.xlu0 0
  %77 = vperm.xlu0 %76, %v31
  %v78 = vpop.permute.xlu0 %77
  %81 = vset.pattern.permute.xlu0 0
  %82 = vperm.xlu0 %81, %v32
  %v83 = vpop.permute.xlu0 %82
  %v85 = vperm.slane %v37, 0
  %v86 = vperm.slane %v38, 0
  %v87 = vperm.slane %v39, 0
  %v88 = vperm.slane %v40, 0
  %v89 = vmul.f32 %v48, %v85
  %v90 = vmul.f32 %v48, %v86
  %v91 = vmul.f32 %v48, %v87
  %v92 = vmul.f32 %v48, %v88
  %v93 = vmul.f32 %v53, %v85
  %v94 = vmul.f32 %v53, %v86
  %v95 = vmul.f32 %v53, %v87
  %v96 = vmul.f32 %v53, %v88
  %v97 = vmul.f32 %v58, %v85
  %v98 = vmul.f32 %v58, %v86
  %v99 = vmul.f32 %v58, %v87
  %v100 = vmul.f32 %v58, %v88
  %v101 = vmul.f32 %v63, %v85
  %v102 = vmul.f32 %v63, %v86
  %v103 = vmul.f32 %v63, %v87
  %v104 = vmul.f32 %v63, %v88
  %v105 = vmul.f32 %v68, %v85
  %v106 = vmul.f32 %v68, %v86
  %v107 = vmul.f32 %v68, %v87
  %v108 = vmul.f32 %v68, %v88
  %v109 = vmul.f32 %v73, %v85
  %v110 = vmul.f32 %v73, %v86
  %v111 = vmul.f32 %v73, %v87
  %v112 = vmul.f32 %v73, %v88
  %v113 = vmul.f32 %v78, %v85
  %v114 = vmul.f32 %v78, %v86
  %v115 = vmul.f32 %v78, %v87
  %v116 = vmul.f32 %v78, %v88
  %v117 = vmul.f32 %v83, %v85
  %v118 = vmul.f32 %v83, %v86
  %v119 = vmul.f32 %v83, %v87
  %v120 = vmul.f32 %v83, %v88
  %121 = vset.pattern.permute.xlu0 1
  %122 = vperm.xlu0 %121, %v25
  %v123 = vpop.permute.xlu0 %122
  %125 = vset.pattern.permute.xlu0 1
  %126 = vperm.xlu0 %125, %v26
  %v127 = vpop.permute.xlu0 %126
  %129 = vset.pattern.permute.xlu0 1
  %130 = vperm.xlu0 %129, %v27
  %v131 = vpop.permute.xlu0 %130
  %133 = vset.pattern.permute.xlu0 1
  %134 = vperm.xlu0 %133, %v28
  %v135 = vpop.permute.xlu0 %134
  %137 = vset.pattern.permute.xlu0 1
  %138 = vperm.xlu0 %137, %v29
  %v139 = vpop.permute.xlu0 %138
  %141 = vset.pattern.permute.xlu0 1
  %142 = vperm.xlu0 %141, %v30
  %v143 = vpop.permute.xlu0 %142
  %145 = vset.pattern.permute.xlu0 1
  %146 = vperm.xlu0 %145, %v31
  %v147 = vpop.permute.xlu0 %146
  %149 = vset.pattern.permute.xlu0 1
  %150 = vperm.xlu0 %149, %v32
  %v151 = vpop.permute.xlu0 %150
  %v153 = vperm.slane %v37, 1
  %v154 = vperm.slane %v38, 1
  %v155 = vperm.slane %v39, 1
  %v156 = vperm.slane %v40, 1
  %v157 = vmul.f32 %v123, %v153
  %v158 = vmul.f32 %v123, %v154
  %v159 = vmul.f32 %v123, %v155
  %v160 = vmul.f32 %v123, %v156
  %v161 = vmul.f32 %v127, %v153
  %v162 = vmul.f32 %v127, %v154
  %v163 = vmul.f32 %v127, %v155
  %v164 = vmul.f32 %v127, %v156
  %v165 = vmul.f32 %v131, %v153
  %v166 = vmul.f32 %v131, %v154
  %v167 = vmul.f32 %v131, %v155
  %v168 = vmul.f32 %v131, %v156
  %v169 = vmul.f32 %v135, %v153
  %v170 = vmul.f32 %v135, %v154
  %v171 = vmul.f32 %v135, %v155
  %v172 = vmul.f32 %v135, %v156
  %v173 = vmul.f32 %v139, %v153
  %v174 = vmul.f32 %v139, %v154
  %v175 = vmul.f32 %v139, %v155
  %v176 = vmul.f32 %v139, %v156
  %v177 = vmul.f32 %v143, %v153
  %v178 = vmul.f32 %v143, %v154
  %v179 = vmul.f32 %v143, %v155
  %v180 = vmul.f32 %v143, %v156
  %v181 = vmul.f32 %v147, %v153
  %v182 = vmul.f32 %v147, %v154
  %v183 = vmul.f32 %v147, %v155
  %v184 = vmul.f32 %v147, %v156
  %v185 = vmul.f32 %v151, %v153
  %v186 = vmul.f32 %v151, %v154
  %v187 = vmul.f32 %v151, %v155
  %v188 = vmul.f32 %v151, %v156
  %v189 = vadd.f32 %v89, %v157
  %v190 = vadd.f32 %v90, %v158
  %v191 = vadd.f32 %v91, %v159
  %v192 = vadd.f32 %v92, %v160
  %v193 = vadd.f32 %v93, %v161
  %v194 = vadd.f32 %v94, %v162
  %v195 = vadd.f32 %v95, %v163
  %v196 = vadd.f32 %v96, %v164
  %v197 = vadd.f32 %v97, %v165
  %v198 = vadd.f32 %v98, %v166
  %v199 = vadd.f32 %v99, %v167
  %v200 = vadd.f32 %v100, %v168
  %v201 = vadd.f32 %v101, %v169
  %v202 = vadd.f32 %v102, %v170
  %v203 = vadd.f32 %v103, %v171
  %v204 = vadd.f32 %v104, %v172
  %v205 = vadd.f32 %v105, %v173
  %v206 = vadd.f32 %v106, %v174
  %v207 = vadd.f32 %v107, %v175
  %v208 = vadd.f32 %v108, %v176
  %v209 = vadd.f32 %v109, %v177
  %v210 = vadd.f32 %v110, %v178
  %v211 = vadd.f32 %v111, %v179
  %v212 = vadd.f32 %v112, %v180
  %v213 = vadd.f32 %v113, %v181
  %v214 = vadd.f32 %v114, %v182
  %v215 = vadd.f32 %v115, %v183
  %v216 = vadd.f32 %v116, %v184
  %v217 = vadd.f32 %v117, %v185
  %v218 = vadd.f32 %v118, %v186
  %v219 = vadd.f32 %v119, %v187
  %v220 = vadd.f32 %v120, %v188
  %221 = vset.pattern.permute.xlu0 2
  %222 = vperm.xlu0 %221, %v25
  %v223 = vpop.permute.xlu0 %222
  %225 = vset.pattern.permute.xlu0 2
  %226 = vperm.xlu0 %225, %v26
  %v227 = vpop.permute.xlu0 %226
  %229 = vset.pattern.permute.xlu0 2
  %230 = vperm.xlu0 %229, %v27
  %v231 = vpop.permute.xlu0 %230
  %233 = vset.pattern.permute.xlu0 2
  %234 = vperm.xlu0 %233, %v28
  %v235 = vpop.permute.xlu0 %234
  %237 = vset.pattern.permute.xlu0 2
  %238 = vperm.xlu0 %237, %v29
  %v239 = vpop.permute.xlu0 %238
  %241 = vset.pattern.permute.xlu0 2
  %242 = vperm.xlu0 %241, %v30
  %v243 = vpop.permute.xlu0 %242
  %245 = vset.pattern.permute.xlu0 2
  %246 = vperm.xlu0 %245, %v31
  %v247 = vpop.permute.xlu0 %246
  %249 = vset.pattern.permute.xlu0 2
  %250 = vperm.xlu0 %249, %v32
  %v251 = vpop.permute.xlu0 %250
  %v253 = vperm.slane %v37, 2
  %v254 = vperm.slane %v38, 2
  %v255 = vperm.slane %v39, 2
  %v256 = vperm.slane %v40, 2
  %v257 = vmul.f32 %v223, %v253
  %v258 = vmul.f32 %v223, %v254
  %v259 = vmul.f32 %v223, %v255
  %v260 = vmul.f32 %v223, %v256
  %v261 = vmul.f32 %v227, %v253
  %v262 = vmul.f32 %v227, %v254
  %v263 = vmul.f32 %v227, %v255
  %v264 = vmul.f32 %v227, %v256
  %v265 = vmul.f32 %v231, %v253
  %v266 = vmul.f32 %v231, %v254
  %v267 = vmul.f32 %v231, %v255
  %v268 = vmul.f32 %v231, %v256
  %v269 = vmul.f32 %v235, %v253
  %v270 = vmul.f32 %v235, %v254
  %v271 = vmul.f32 %v235, %v255
  %v272 = vmul.f32 %v235, %v256
  %v273 = vmul.f32 %v239, %v253
  %v274 = vmul.f32 %v239, %v254
  %v275 = vmul.f32 %v239, %v255
  %v276 = vmul.f32 %v239, %v256
  %v277 = vmul.f32 %v243, %v253
  %v278 = vmul.f32 %v243, %v254
  %v279 = vmul.f32 %v243, %v255
  %v280 = vmul.f32 %v243, %v256
  %v281 = vmul.f32 %v247, %v253
  %v282 = vmul.f32 %v247, %v254
  %v283 = vmul.f32 %v247, %v255
  %v284 = vmul.f32 %v247, %v256
  %v285 = vmul.f32 %v251, %v253
  %v286 = vmul.f32 %v251, %v254
  %v287 = vmul.f32 %v251, %v255
  %v288 = vmul.f32 %v251, %v256
  %v289 = vadd.f32 %v189, %v257
  %v290 = vadd.f32 %v190, %v258
  %v291 = vadd.f32 %v191, %v259
  %v292 = vadd.f32 %v192, %v260
  %v293 = vadd.f32 %v193, %v261
  %v294 = vadd.f32 %v194, %v262
  %v295 = vadd.f32 %v195, %v263
  %v296 = vadd.f32 %v196, %v264
  %v297 = vadd.f32 %v197, %v265
  %v298 = vadd.f32 %v198, %v266
  %v299 = vadd.f32 %v199, %v267
  %v300 = vadd.f32 %v200, %v268
  %v301 = vadd.f32 %v201, %v269
  %v302 = vadd.f32 %v202, %v270
  %v303 = vadd.f32 %v203, %v271
  %v304 = vadd.f32 %v204, %v272
  %v305 = vadd.f32 %v205, %v273
  %v306 = vadd.f32 %v206, %v274
  %v307 = vadd.f32 %v207, %v275
  %v308 = vadd.f32 %v208, %v276
  %v309 = vadd.f32 %v209, %v277
  %v310 = vadd.f32 %v210, %v278
  %v311 = vadd.f32 %v211, %v279
  %v312 = vadd.f32 %v212, %v280
  %v313 = vadd.f32 %v213, %v281
  %v314 = vadd.f32 %v214, %v282
  %v315 = vadd.f32 %v215, %v283
  %v316 = vadd.f32 %v216, %v284
  %v317 = vadd.f32 %v217, %v285
  %v318 = vadd.f32 %v218, %v286
  %v319 = vadd.f32 %v219, %v287
  %v320 = vadd.f32 %v220, %v288
  %321 = vset.pattern.permute.xlu0 3
  %322 = vperm.xlu0 %321, %v25
  %v323 = vpop.permute.xlu0 %322
  %325 = vset.pattern.permute.xlu0 3
  %326 = vperm.xlu0 %325, %v26
  %v327 = vpop.permute.xlu0 %326
  %329 = vset.pattern.permute.xlu0 3
  %330 = vperm.xlu0 %329, %v27
  %v331 = vpop.permute.xlu0 %330
  %333 = vset.pattern.permute.xlu0 3
  %334 = vperm.xlu0 %333, %v28
  %v335 = vpop.permute.xlu0 %334
  %337 = vset.pattern.permute.xlu0 3
  %338 = vperm.xlu0 %337, %v29
  %v339 = vpop.permute.xlu0 %338
  %341 = vset.pattern.permute.xlu0 3
  %342 = vperm.xlu0 %341, %v30
  %v343 = vpop.permute.xlu0 %342
  %345 = vset.pattern.permute.xlu0 3
  %346 = vperm.xlu0 %345, %v31
  %v347 = vpop.permute.xlu0 %346
  %349 = vset.pattern.permute.xlu0 3
  %350 = vperm.xlu0 %349, %v32
  %v351 = vpop.permute.xlu0 %350
  %v353 = vperm.slane %v37, 3
  %v354 = vperm.slane %v38, 3
  %v355 = vperm.slane %v39, 3
  %v356 = vperm.slane %v40, 3
  %v357 = vmul.f32 %v323, %v353
  %v358 = vmul.f32 %v323, %v354
  %v359 = vmul.f32 %v323, %v355
  %v360 = vmul.f32 %v323, %v356
  %v361 = vmul.f32 %v327, %v353
  %v362 = vmul.f32 %v327, %v354
  %v363 = vmul.f32 %v327, %v355
  %v364 = vmul.f32 %v327, %v356
  %v365 = vmul.f32 %v331, %v353
  %v366 = vmul.f32 %v331, %v354
  %v367 = vmul.f32 %v331, %v355
  %v368 = vmul.f32 %v331, %v356
  %v369 = vmul.f32 %v335, %v353
  %v370 = vmul.f32 %v335, %v354
  %v371 = vmul.f32 %v335, %v355
  %v372 = vmul.f32 %v335, %v356
  %v373 = vmul.f32 %v339, %v353
  %v374 = vmul.f32 %v339, %v354
  %v375 = vmul.f32 %v339, %v355
  %v376 = vmul.f32 %v339, %v356
  %v377 = vmul.f32 %v343, %v353
  %v378 = vmul.f32 %v343, %v354
  %v379 = vmul.f32 %v343, %v355
  %v380 = vmul.f32 %v343, %v356
  %v381 = vmul.f32 %v347, %v353
  %v382 = vmul.f32 %v347, %v354
  %v383 = vmul.f32 %v347, %v355
  %v384 = vmul.f32 %v347, %v356
  %v385 = vmul.f32 %v351, %v353
  %v386 = vmul.f32 %v351, %v354
  %v387 = vmul.f32 %v351, %v355
  %v388 = vmul.f32 %v351, %v356
  %v389 = vadd.f32 %v289, %v357
  %v390 = vadd.f32 %v290, %v358
  %v391 = vadd.f32 %v291, %v359
  %v392 = vadd.f32 %v292, %v360
  %v393 = vadd.f32 %v293, %v361
  %v394 = vadd.f32 %v294, %v362
  %v395 = vadd.f32 %v295, %v363
  %v396 = vadd.f32 %v296, %v364
  %v397 = vadd.f32 %v297, %v365
  %v398 = vadd.f32 %v298, %v366
  %v399 = vadd.f32 %v299, %v367
  %v400 = vadd.f32 %v300, %v368
  %v401 = vadd.f32 %v301, %v369
  %v402 = vadd.f32 %v302, %v370
  %v403 = vadd.f32 %v303, %v371
  %v404 = vadd.f32 %v304, %v372
  %v405 = vadd.f32 %v305, %v373
  %v406 = vadd.f32 %v306, %v374
  %v407 = vadd.f32 %v307, %v375
  %v408 = vadd.f32 %v308, %v376
  %v409 = vadd.f32 %v309, %v377
  %v410 = vadd.f32 %v310, %v378
  %v411 = vadd.f32 %v311, %v379
  %v412 = vadd.f32 %v312, %v380
  %v413 = vadd.f32 %v313, %v381
  %v414 = vadd.f32 %v314, %v382
  %v415 = vadd.f32 %v315, %v383
  %v416 = vadd.f32 %v316, %v384
  %v417 = vadd.f32 %v317, %v385
  %v418 = vadd.f32 %v318, %v386
  %v419 = vadd.f32 %v319, %v387
  %v420 = vadd.f32 %v320, %v388
  %421 = vset.pattern.permute.xlu0 4
  %422 = vperm.xlu0 %421, %v25
  %v423 = vpop.permute.xlu0 %422
  %425 = vset.pattern.permute.xlu0 4
  %426 = vperm.xlu0 %425, %v26
  %v427 = vpop.permute.xlu0 %426
  %429 = vset.pattern.permute.xlu0 4
  %430 = vperm.xlu0 %429, %v27
  %v431 = vpop.permute.xlu0 %430
  %433 = vset.pattern.permute.xlu0 4
  %434 = vperm.xlu0 %433, %v28
  %v435 = vpop.permute.xlu0 %434
  %437 = vset.pattern.permute.xlu0 4
  %438 = vperm.xlu0 %437, %v29
  %v439 = vpop.permute.xlu0 %438
  %441 = vset.pattern.permute.xlu0 4
  %442 = vperm.xlu0 %441, %v30
  %v443 = vpop.permute.xlu0 %442
  %445 = vset.pattern.permute.xlu0 4
  %446 = vperm.xlu0 %445, %v31
  %v447 = vpop.permute.xlu0 %446
  %449 = vset.pattern.permute.xlu0 4
  %450 = vperm.xlu0 %449, %v32
  %v451 = vpop.permute.xlu0 %450
  %v453 = vperm.slane %v37, 4
  %v454 = vperm.slane %v38, 4
  %v455 = vperm.slane %v39, 4
  %v456 = vperm.slane %v40, 4
  %v457 = vmul.f32 %v423, %v453
  %v458 = vmul.f32 %v423, %v454
  %v459 = vmul.f32 %v423, %v455
  %v460 = vmul.f32 %v423, %v456
  %v461 = vmul.f32 %v427, %v453
  %v462 = vmul.f32 %v427, %v454
  %v463 = vmul.f32 %v427, %v455
  %v464 = vmul.f32 %v427, %v456
  %v465 = vmul.f32 %v431, %v453
  %v466 = vmul.f32 %v431, %v454
  %v467 = vmul.f32 %v431, %v455
  %v468 = vmul.f32 %v431, %v456
  %v469 = vmul.f32 %v435, %v453
  %v470 = vmul.f32 %v435, %v454
  %v471 = vmul.f32 %v435, %v455
  %v472 = vmul.f32 %v435, %v456
  %v473 = vmul.f32 %v439, %v453
  %v474 = vmul.f32 %v439, %v454
  %v475 = vmul.f32 %v439, %v455
  %v476 = vmul.f32 %v439, %v456
  %v477 = vmul.f32 %v443, %v453
  %v478 = vmul.f32 %v443, %v454
  %v479 = vmul.f32 %v443, %v455
  %v480 = vmul.f32 %v443, %v456
  %v481 = vmul.f32 %v447, %v453
  %v482 = vmul.f32 %v447, %v454
  %v483 = vmul.f32 %v447, %v455
  %v484 = vmul.f32 %v447, %v456
  %v485 = vmul.f32 %v451, %v453
  %v486 = vmul.f32 %v451, %v454
  %v487 = vmul.f32 %v451, %v455
  %v488 = vmul.f32 %v451, %v456
  %v489 = vadd.f32 %v389, %v457
  %v490 = vadd.f32 %v390, %v458
  %v491 = vadd.f32 %v391, %v459
  %v492 = vadd.f32 %v392, %v460
  %v493 = vadd.f32 %v393, %v461
  %v494 = vadd.f32 %v394, %v462
  %v495 = vadd.f32 %v395, %v463
  %v496 = vadd.f32 %v396, %v464
  %v497 = vadd.f32 %v397, %v465
  %v498 = vadd.f32 %v398, %v466
  %v499 = vadd.f32 %v399, %v467
  %v500 = vadd.f32 %v400, %v468
  %v501 = vadd.f32 %v401, %v469
  %v502 = vadd.f32 %v402, %v470
  %v503 = vadd.f32 %v403, %v471
  %v504 = vadd.f32 %v404, %v472
  %v505 = vadd.f32 %v405, %v473
  %v506 = vadd.f32 %v406, %v474
  %v507 = vadd.f32 %v407, %v475
  %v508 = vadd.f32 %v408, %v476
  %v509 = vadd.f32 %v409, %v477
  %v510 = vadd.f32 %v410, %v478
  %v511 = vadd.f32 %v411, %v479
  %v512 = vadd.f32 %v412, %v480
  %v513 = vadd.f32 %v413, %v481
  %v514 = vadd.f32 %v414, %v482
  %v515 = vadd.f32 %v415, %v483
  %v516 = vadd.f32 %v416, %v484
  %v517 = vadd.f32 %v417, %v485
  %v518 = vadd.f32 %v418, %v486
  %v519 = vadd.f32 %v419, %v487
  %v520 = vadd.f32 %v420, %v488
  %521 = vset.pattern.permute.xlu0 5
  %522 = vperm.xlu0 %521, %v25
  %v523 = vpop.permute.xlu0 %522
  %525 = vset.pattern.permute.xlu0 5
  %526 = vperm.xlu0 %525, %v26
  %v527 = vpop.permute.xlu0 %526
  %529 = vset.pattern.permute.xlu0 5
  %530 = vperm.xlu0 %529, %v27
  %v531 = vpop.permute.xlu0 %530
  %533 = vset.pattern.permute.xlu0 5
  %534 = vperm.xlu0 %533, %v28
  %v535 = vpop.permute.xlu0 %534
  %537 = vset.pattern.permute.xlu0 5
  %538 = vperm.xlu0 %537, %v29
  %v539 = vpop.permute.xlu0 %538
  %541 = vset.pattern.permute.xlu0 5
  %542 = vperm.xlu0 %541, %v30
  %v543 = vpop.permute.xlu0 %542
  %545 = vset.pattern.permute.xlu0 5
  %546 = vperm.xlu0 %545, %v31
  %v547 = vpop.permute.xlu0 %546
  %549 = vset.pattern.permute.xlu0 5
  %550 = vperm.xlu0 %549, %v32
  %v551 = vpop.permute.xlu0 %550
  %v553 = vperm.slane %v37, 5
  %v554 = vperm.slane %v38, 5
  %v555 = vperm.slane %v39, 5
  %v556 = vperm.slane %v40, 5
  %v557 = vmul.f32 %v523, %v553
  %v558 = vmul.f32 %v523, %v554
  %v559 = vmul.f32 %v523, %v555
  %v560 = vmul.f32 %v523, %v556
  %v561 = vmul.f32 %v527, %v553
  %v562 = vmul.f32 %v527, %v554
  %v563 = vmul.f32 %v527, %v555
  %v564 = vmul.f32 %v527, %v556
  %v565 = vmul.f32 %v531, %v553
  %v566 = vmul.f32 %v531, %v554
  %v567 = vmul.f32 %v531, %v555
  %v568 = vmul.f32 %v531, %v556
  %v569 = vmul.f32 %v535, %v553
  %v570 = vmul.f32 %v535, %v554
  %v571 = vmul.f32 %v535, %v555
  %v572 = vmul.f32 %v535, %v556
  %v573 = vmul.f32 %v539, %v553
  %v574 = vmul.f32 %v539, %v554
  %v575 = vmul.f32 %v539, %v555
  %v576 = vmul.f32 %v539, %v556
  %v577 = vmul.f32 %v543, %v553
  %v578 = vmul.f32 %v543, %v554
  %v579 = vmul.f32 %v543, %v555
  %v580 = vmul.f32 %v543, %v556
  %v581 = vmul.f32 %v547, %v553
  %v582 = vmul.f32 %v547, %v554
  %v583 = vmul.f32 %v547, %v555
  %v584 = vmul.f32 %v547, %v556
  %v585 = vmul.f32 %v551, %v553
  %v586 = vmul.f32 %v551, %v554
  %v587 = vmul.f32 %v551, %v555
  %v588 = vmul.f32 %v551, %v556
  %v589 = vadd.f32 %v489, %v557
  %v590 = vadd.f32 %v490, %v558
  %v591 = vadd.f32 %v491, %v559
  %v592 = vadd.f32 %v492, %v560
  %v593 = vadd.f32 %v493, %v561
  %v594 = vadd.f32 %v494, %v562
  %v595 = vadd.f32 %v495, %v563
  %v596 = vadd.f32 %v496, %v564
  %v597 = vadd.f32 %v497, %v565
  %v598 = vadd.f32 %v498, %v566
  %v599 = vadd.f32 %v499, %v567
  %v600 = vadd.f32 %v500, %v568
  %v601 = vadd.f32 %v501, %v569
  %v602 = vadd.f32 %v502, %v570
  %v603 = vadd.f32 %v503, %v571
  %v604 = vadd.f32 %v504, %v572
  %v605 = vadd.f32 %v505, %v573
  %v606 = vadd.f32 %v506, %v574
  %v607 = vadd.f32 %v507, %v575
  %v608 = vadd.f32 %v508, %v576
  %v609 = vadd.f32 %v509, %v577
  %v610 = vadd.f32 %v510, %v578
  %v611 = vadd.f32 %v511, %v579
  %v612 = vadd.f32 %v512, %v580
  %v613 = vadd.f32 %v513, %v581
  %v614 = vadd.f32 %v514, %v582
  %v615 = vadd.f32 %v515, %v583
  %v616 = vadd.f32 %v516, %v584
  %v617 = vadd.f32 %v517, %v585
  %v618 = vadd.f32 %v518, %v586
  %v619 = vadd.f32 %v519, %v587
  %v620 = vadd.f32 %v520, %v588
  %621 = vset.pattern.permute.xlu0 6
  %622 = vperm.xlu0 %621, %v25
  %v623 = vpop.permute.xlu0 %622
  %625 = vset.pattern.permute.xlu0 6
  %626 = vperm.xlu0 %625, %v26
  %v627 = vpop.permute.xlu0 %626
  %629 = vset.pattern.permute.xlu0 6
  %630 = vperm.xlu0 %629, %v27
  %v631 = vpop.permute.xlu0 %630
  %633 = vset.pattern.permute.xlu0 6
  %634 = vperm.xlu0 %633, %v28
  %v635 = vpop.permute.xlu0 %634
  %637 = vset.pattern.permute.xlu0 6
  %638 = vperm.xlu0 %637, %v29
  %v639 = vpop.permute.xlu0 %638
  %641 = vset.pattern.permute.xlu0 6
  %642 = vperm.xlu0 %641, %v30
  %v643 = vpop.permute.xlu0 %642
  %645 = vset.pattern.permute.xlu0 6
  %646 = vperm.xlu0 %645, %v31
  %v647 = vpop.permute.xlu0 %646
  %649 = vset.pattern.permute.xlu0 6
  %650 = vperm.xlu0 %649, %v32
  %v651 = vpop.permute.xlu0 %650
  %v653 = vperm.slane %v37, 6
  %v654 = vperm.slane %v38, 6
  %v655 = vperm.slane %v39, 6
  %v656 = vperm.slane %v40, 6
  %v657 = vmul.f32 %v623, %v653
  %v658 = vmul.f32 %v623, %v654
  %v659 = vmul.f32 %v623, %v655
  %v660 = vmul.f32 %v623, %v656
  %v661 = vmul.f32 %v627, %v653
  %v662 = vmul.f32 %v627, %v654
  %v663 = vmul.f32 %v627, %v655
  %v664 = vmul.f32 %v627, %v656
  %v665 = vmul.f32 %v631, %v653
  %v666 = vmul.f32 %v631, %v654
  %v667 = vmul.f32 %v631, %v655
  %v668 = vmul.f32 %v631, %v656
  %v669 = vmul.f32 %v635, %v653
  %v670 = vmul.f32 %v635, %v654
  %v671 = vmul.f32 %v635, %v655
  %v672 = vmul.f32 %v635, %v656
  %v673 = vmul.f32 %v639, %v653
  %v674 = vmul.f32 %v639, %v654
  %v675 = vmul.f32 %v639, %v655
  %v676 = vmul.f32 %v639, %v656
  %v677 = vmul.f32 %v643, %v653
  %v678 = vmul.f32 %v643, %v654
  %v679 = vmul.f32 %v643, %v655
  %v680 = vmul.f32 %v643, %v656
  %v681 = vmul.f32 %v647, %v653
  %v682 = vmul.f32 %v647, %v654
  %v683 = vmul.f32 %v647, %v655
  %v684 = vmul.f32 %v647, %v656
  %v685 = vmul.f32 %v651, %v653
  %v686 = vmul.f32 %v651, %v654
  %v687 = vmul.f32 %v651, %v655
  %v688 = vmul.f32 %v651, %v656
  %v689 = vadd.f32 %v589, %v657
  %v690 = vadd.f32 %v590, %v658
  %v691 = vadd.f32 %v591, %v659
  %v692 = vadd.f32 %v592, %v660
  %v693 = vadd.f32 %v593, %v661
  %v694 = vadd.f32 %v594, %v662
  %v695 = vadd.f32 %v595, %v663
  %v696 = vadd.f32 %v596, %v664
  %v697 = vadd.f32 %v597, %v665
  %v698 = vadd.f32 %v598, %v666
  %v699 = vadd.f32 %v599, %v667
  %v700 = vadd.f32 %v600, %v668
  %v701 = vadd.f32 %v601, %v669
  %v702 = vadd.f32 %v602, %v670
  %v703 = vadd.f32 %v603, %v671
  %v704 = vadd.f32 %v604, %v672
  %v705 = vadd.f32 %v605, %v673
  %v706 = vadd.f32 %v606, %v674
  %v707 = vadd.f32 %v607, %v675
  %v708 = vadd.f32 %v608, %v676
  %v709 = vadd.f32 %v609, %v677
  %v710 = vadd.f32 %v610, %v678
  %v711 = vadd.f32 %v611, %v679
  %v712 = vadd.f32 %v612, %v680
  %v713 = vadd.f32 %v613, %v681
  %v714 = vadd.f32 %v614, %v682
  %v715 = vadd.f32 %v615, %v683
  %v716 = vadd.f32 %v616, %v684
  %v717 = vadd.f32 %v617, %v685
  %v718 = vadd.f32 %v618, %v686
  %v719 = vadd.f32 %v619, %v687
  %v720 = vadd.f32 %v620, %v688
  %721 = vset.pattern.permute.xlu0 7
  %722 = vperm.xlu0 %721, %v25
  %v723 = vpop.permute.xlu0 %722
  %725 = vset.pattern.permute.xlu0 7
  %726 = vperm.xlu0 %725, %v26
  %v727 = vpop.permute.xlu0 %726
  %729 = vset.pattern.permute.xlu0 7
  %730 = vperm.xlu0 %729, %v27
  %v731 = vpop.permute.xlu0 %730
  %733 = vset.pattern.permute.xlu0 7
  %734 = vperm.xlu0 %733, %v28
  %v735 = vpop.permute.xlu0 %734
  %737 = vset.pattern.permute.xlu0 7
  %738 = vperm.xlu0 %737, %v29
  %v739 = vpop.permute.xlu0 %738
  %741 = vset.pattern.permute.xlu0 7
  %742 = vperm.xlu0 %741, %v30
  %v743 = vpop.permute.xlu0 %742
  %745 = vset.pattern.permute.xlu0 7
  %746 = vperm.xlu0 %745, %v31
  %v747 = vpop.permute.xlu0 %746
  %749 = vset.pattern.permute.xlu0 7
  %750 = vperm.xlu0 %749, %v32
  %v751 = vpop.permute.xlu0 %750
  %v753 = vperm.slane %v37, 7
  %v754 = vperm.slane %v38, 7
  %v755 = vperm.slane %v39, 7
  %v756 = vperm.slane %v40, 7
  %v757 = vmul.f32 %v723, %v753
  %v758 = vmul.f32 %v723, %v754
  %v759 = vmul.f32 %v723, %v755
  %v760 = vmul.f32 %v723, %v756
  %v761 = vmul.f32 %v727, %v753
  %v762 = vmul.f32 %v727, %v754
  %v763 = vmul.f32 %v727, %v755
  %v764 = vmul.f32 %v727, %v756
  %v765 = vmul.f32 %v731, %v753
  %v766 = vmul.f32 %v731, %v754
  %v767 = vmul.f32 %v731, %v755
  %v768 = vmul.f32 %v731, %v756
  %v769 = vmul.f32 %v735, %v753
  %v770 = vmul.f32 %v735, %v754
  %v771 = vmul.f32 %v735, %v755
  %v772 = vmul.f32 %v735, %v756
  %v773 = vmul.f32 %v739, %v753
  %v774 = vmul.f32 %v739, %v754
  %v775 = vmul.f32 %v739, %v755
  %v776 = vmul.f32 %v739, %v756
  %v777 = vmul.f32 %v743, %v753
  %v778 = vmul.f32 %v743, %v754
  %v779 = vmul.f32 %v743, %v755
  %v780 = vmul.f32 %v743, %v756
  %v781 = vmul.f32 %v747, %v753
  %v782 = vmul.f32 %v747, %v754
  %v783 = vmul.f32 %v747, %v755
  %v784 = vmul.f32 %v747, %v756
  %v785 = vmul.f32 %v751, %v753
  %v786 = vmul.f32 %v751, %v754
  %v787 = vmul.f32 %v751, %v755
  %v788 = vmul.f32 %v751, %v756
  %v789 = vadd.f32 %v689, %v757
  %v790 = vadd.f32 %v690, %v758
  %v791 = vadd.f32 %v691, %v759
  %v792 = vadd.f32 %v692, %v760
  %v793 = vadd.f32 %v693, %v761
  %v794 = vadd.f32 %v694, %v762
  %v795 = vadd.f32 %v695, %v763
  %v796 = vadd.f32 %v696, %v764
  %v797 = vadd.f32 %v697, %v765
  %v798 = vadd.f32 %v698, %v766
  %v799 = vadd.f32 %v699, %v767
  %v800 = vadd.f32 %v700, %v768
  %v801 = vadd.f32 %v701, %v769
  %v802 = vadd.f32 %v702, %v770
  %v803 = vadd.f32 %v703, %v771
  %v804 = vadd.f32 %v704, %v772
  %v805 = vadd.f32 %v705, %v773
  %v806 = vadd.f32 %v706, %v774
  %v807 = vadd.f32 %v707, %v775
  %v808 = vadd.f32 %v708, %v776
  %v809 = vadd.f32 %v709, %v777
  %v810 = vadd.f32 %v710, %v778
  %v811 = vadd.f32 %v711, %v779
  %v812 = vadd.f32 %v712, %v780
  %v813 = vadd.f32 %v713, %v781
  %v814 = vadd.f32 %v714, %v782
  %v815 = vadd.f32 %v715, %v783
  %v816 = vadd.f32 %v716, %v784
  %v817 = vadd.f32 %v717, %v785
  %v818 = vadd.f32 %v718, %v786
  %v819 = vadd.f32 %v719, %v787
  %v820 = vadd.f32 %v720, %v788
  %821 = vset.pattern.permute.xlu0 8
  %822 = vperm.xlu0 %821, %v25
  %v823 = vpop.permute.xlu0 %822
  %825 = vset.pattern.permute.xlu0 8
  %826 = vperm.xlu0 %825, %v26
  %v827 = vpop.permute.xlu0 %826
  %829 = vset.pattern.permute.xlu0 8
  %830 = vperm.xlu0 %829, %v27
  %v831 = vpop.permute.xlu0 %830
  %833 = vset.pattern.permute.xlu0 8
  %834 = vperm.xlu0 %833, %v28
  %v835 = vpop.permute.xlu0 %834
  %837 = vset.pattern.permute.xlu0 8
  %838 = vperm.xlu0 %837, %v29
  %v839 = vpop.permute.xlu0 %838
  %841 = vset.pattern.permute.xlu0 8
  %842 = vperm.xlu0 %841, %v30
  %v843 = vpop.permute.xlu0 %842
  %845 = vset.pattern.permute.xlu0 8
  %846 = vperm.xlu0 %845, %v31
  %v847 = vpop.permute.xlu0 %846
  %849 = vset.pattern.permute.xlu0 8
  %850 = vperm.xlu0 %849, %v32
  %v851 = vpop.permute.xlu0 %850
  %v853 = vperm.slane %v41, 0
  %v854 = vperm.slane %v42, 0
  %v855 = vperm.slane %v43, 0
  %v856 = vperm.slane %v44, 0
  %v857 = vmul.f32 %v823, %v853
  %v858 = vmul.f32 %v823, %v854
  %v859 = vmul.f32 %v823, %v855
  %v860 = vmul.f32 %v823, %v856
  %v861 = vmul.f32 %v827, %v853
  %v862 = vmul.f32 %v827, %v854
  %v863 = vmul.f32 %v827, %v855
  %v864 = vmul.f32 %v827, %v856
  %v865 = vmul.f32 %v831, %v853
  %v866 = vmul.f32 %v831, %v854
  %v867 = vmul.f32 %v831, %v855
  %v868 = vmul.f32 %v831, %v856
  %v869 = vmul.f32 %v835, %v853
  %v870 = vmul.f32 %v835, %v854
  %v871 = vmul.f32 %v835, %v855
  %v872 = vmul.f32 %v835, %v856
  %v873 = vmul.f32 %v839, %v853
  %v874 = vmul.f32 %v839, %v854
  %v875 = vmul.f32 %v839, %v855
  %v876 = vmul.f32 %v839, %v856
  %v877 = vmul.f32 %v843, %v853
  %v878 = vmul.f32 %v843, %v854
  %v879 = vmul.f32 %v843, %v855
  %v880 = vmul.f32 %v843, %v856
  %v881 = vmul.f32 %v847, %v853
  %v882 = vmul.f32 %v847, %v854
  %v883 = vmul.f32 %v847, %v855
  %v884 = vmul.f32 %v847, %v856
  %v885 = vmul.f32 %v851, %v853
  %v886 = vmul.f32 %v851, %v854
  %v887 = vmul.f32 %v851, %v855
  %v888 = vmul.f32 %v851, %v856
  %v889 = vadd.f32 %v789, %v857
  %v890 = vadd.f32 %v790, %v858
  %v891 = vadd.f32 %v791, %v859
  %v892 = vadd.f32 %v792, %v860
  %v893 = vadd.f32 %v793, %v861
  %v894 = vadd.f32 %v794, %v862
  %v895 = vadd.f32 %v795, %v863
  %v896 = vadd.f32 %v796, %v864
  %v897 = vadd.f32 %v797, %v865
  %v898 = vadd.f32 %v798, %v866
  %v899 = vadd.f32 %v799, %v867
  %v900 = vadd.f32 %v800, %v868
  %v901 = vadd.f32 %v801, %v869
  %v902 = vadd.f32 %v802, %v870
  %v903 = vadd.f32 %v803, %v871
  %v904 = vadd.f32 %v804, %v872
  %v905 = vadd.f32 %v805, %v873
  %v906 = vadd.f32 %v806, %v874
  %v907 = vadd.f32 %v807, %v875
  %v908 = vadd.f32 %v808, %v876
  %v909 = vadd.f32 %v809, %v877
  %v910 = vadd.f32 %v810, %v878
  %v911 = vadd.f32 %v811, %v879
  %v912 = vadd.f32 %v812, %v880
  %v913 = vadd.f32 %v813, %v881
  %v914 = vadd.f32 %v814, %v882
  %v915 = vadd.f32 %v815, %v883
  %v916 = vadd.f32 %v816, %v884
  %v917 = vadd.f32 %v817, %v885
  %v918 = vadd.f32 %v818, %v886
  %v919 = vadd.f32 %v819, %v887
  %v920 = vadd.f32 %v820, %v888
  %v921 = vld [vmem:[%s2] sm:$0xff]
  %v922 = vld [vmem:[%s2 + $0x8] sm:$0xff]
  %v923 = vld [vmem:[%s2 + $0x10] sm:$0xff]
  %v924 = vld [vmem:[%s2 + $0x18] sm:$0xff]
  %v925 = vld [vmem:[%s2 + $0x20] sm:$0xff]
  %v926 = vld [vmem:[%s2 + $0x28] sm:$0xff]
  %v927 = vld [vmem:[%s2 + $0x30] sm:$0xff]
  %v928 = vld [vmem:[%s2 + $0x38] sm:$0xff]
  %930 = vset.pattern.permute.xlu0 0
  %931 = vperm.xlu0 %930, %v921
  %v932 = vpop.permute.xlu0 %931
  %935 = vset.pattern.permute.xlu0 0
  %936 = vperm.xlu0 %935, %v922
  %v937 = vpop.permute.xlu0 %936
  %940 = vset.pattern.permute.xlu0 0
  %941 = vperm.xlu0 %940, %v923
  %v942 = vpop.permute.xlu0 %941
  %945 = vset.pattern.permute.xlu0 0
  %946 = vperm.xlu0 %945, %v924
  %v947 = vpop.permute.xlu0 %946
  %950 = vset.pattern.permute.xlu0 0
  %951 = vperm.xlu0 %950, %v925
  %v952 = vpop.permute.xlu0 %951
  %955 = vset.pattern.permute.xlu0 0
  %956 = vperm.xlu0 %955, %v926
  %v957 = vpop.permute.xlu0 %956
  %960 = vset.pattern.permute.xlu0 0
  %961 = vperm.xlu0 %960, %v927
  %v962 = vpop.permute.xlu0 %961
  %965 = vset.pattern.permute.xlu0 0
  %966 = vperm.xlu0 %965, %v928
  %v967 = vpop.permute.xlu0 %966
  %v969 = vadd.f32 %v889, %v932
  %v970 = vadd.f32 %v890, %v932
  %v971 = vadd.f32 %v891, %v932
  %v972 = vadd.f32 %v892, %v932
  %v973 = vadd.f32 %v893, %v937
  %v974 = vadd.f32 %v894, %v937
  %v975 = vadd.f32 %v895, %v937
  %v976 = vadd.f32 %v896, %v937
  %v977 = vadd.f32 %v897, %v942
  %v978 = vadd.f32 %v898, %v942
  %v979 = vadd.f32 %v899, %v942
  %v980 = vadd.f32 %v900, %v942
  %v981 = vadd.f32 %v901, %v947
  %v982 = vadd.f32 %v902, %v947
  %v983 = vadd.f32 %v903, %v947
  %v984 = vadd.f32 %v904, %v947
  %v985 = vadd.f32 %v905, %v952
  %v986 = vadd.f32 %v906, %v952
  %v987 = vadd.f32 %v907, %v952
  %v988 = vadd.f32 %v908, %v952
  %v989 = vadd.f32 %v909, %v957
  %v990 = vadd.f32 %v910, %v957
  %v991 = vadd.f32 %v911, %v957
  %v992 = vadd.f32 %v912, %v957
  %v993 = vadd.f32 %v913, %v962
  %v994 = vadd.f32 %v914, %v962
  %v995 = vadd.f32 %v915, %v962
  %v996 = vadd.f32 %v916, %v962
  %v997 = vadd.f32 %v917, %v967
  %v998 = vadd.f32 %v918, %v967
  %v999 = vadd.f32 %v919, %v967
  %v1000 = vadd.f32 %v920, %v967
  %v1001 = vld [vmem:[%s3] sm:$0xff]
  %v1002 = vld [vmem:[%s3 + $0x8] sm:$0xff]
  %v1003 = vld [vmem:[%s3 + $0x10] sm:$0xff]
  %v1004 = vld [vmem:[%s3 + $0x18] sm:$0xff]
  %v1005 = vld [vmem:[%s3 + $0x20] sm:$0xff]
  %v1006 = vld [vmem:[%s3 + $0x28] sm:$0xff]
  %v1007 = vld [vmem:[%s3 + $0x30] sm:$0xff]
  %v1008 = vld [vmem:[%s3 + $0x38] sm:$0xff]
  %v1009 = vld [vmem:[%s3 + $0x40] sm:$0xff]
  %v1010 = vld [vmem:[%s3 + $0x48] sm:$0xff]
  %v1011 = vld [vmem:[%s3 + $0x50] sm:$0xff]
  %v1012 = vld [vmem:[%s3 + $0x58] sm:$0xff]
  %v1013 = vld [vmem:[%s3 + $0x60] sm:$0xff]
  %v1014 = vld [vmem:[%s3 + $0x68] sm:$0xff]
  %v1015 = vld [vmem:[%s3 + $0x70] sm:$0xff]
  %v1016 = vld [vmem:[%s3 + $0x78] sm:$0xff]
  %v1017 = vld [vmem:[%s3 + $0x80] sm:$0xff]
  %v1018 = vld [vmem:[%s3 + $0x88] sm:$0xff]
  %v1019 = vld [vmem:[%s3 + $0x90] sm:$0xff]
  %v1020 = vld [vmem:[%s3 + $0x98] sm:$0xff]
  %v1021 = vld [vmem:[%s3 + $0xa0] sm:$0xff]
  %v1022 = vld [vmem:[%s3 + $0xa8] sm:$0xff]
  %v1023 = vld [vmem:[%s3 + $0xb0] sm:$0xff]
  %v1024 = vld [vmem:[%s3 + $0xb8] sm:$0xff]
  %v1025 = vld [vmem:[%s3 + $0xc0] sm:$0xff]
  %v1026 = vld [vmem:[%s3 + $0xc8] sm:$0xff]
  %v1027 = vld [vmem:[%s3 + $0xd0] sm:$0xff]
  %v1028 = vld [vmem:[%s3 + $0xd8] sm:$0xff]
  %v1029 = vld [vmem:[%s3 + $0xe0] sm:$0xff]
  %v1030 = vld [vmem:[%s3 + $0xe8] sm:$0xff]
  %v1031 = vld [vmem:[%s3 + $0xf0] sm:$0xff]
  %v1032 = vld [vmem:[%s3 + $0xf8] sm:$0xff]
  %v1033 = vadd.f32 %v969, %v1001
  %v1034 = vadd.f32 %v970, %v1002
  %v1035 = vadd.f32 %v971, %v1003
  %v1036 = vadd.f32 %v972, %v1004
  %v1037 = vadd.f32 %v973, %v1005
  %v1038 = vadd.f32 %v974, %v1006
  %v1039 = vadd.f32 %v975, %v1007
  %v1040 = vadd.f32 %v976, %v1008
  %v1041 = vadd.f32 %v977, %v1009
  %v1042 = vadd.f32 %v978, %v1010
  %v1043 = vadd.f32 %v979, %v1011
  %v1044 = vadd.f32 %v980, %v1012
  %v1045 = vadd.f32 %v981, %v1013
  %v1046 = vadd.f32 %v982, %v1014
  %v1047 = vadd.f32 %v983, %v1015
  %v1048 = vadd.f32 %v984, %v1016
  %v1049 = vadd.f32 %v985, %v1017
  %v1050 = vadd.f32 %v986, %v1018
  %v1051 = vadd.f32 %v987, %v1019
  %v1052 = vadd.f32 %v988, %v1020
  %v1053 = vadd.f32 %v989, %v1021
  %v1054 = vadd.f32 %v990, %v1022
  %v1055 = vadd.f32 %v991, %v1023
  %v1056 = vadd.f32 %v992, %v1024
  %v1057 = vadd.f32 %v993, %v1025
  %v1058 = vadd.f32 %v994, %v1026
  %v1059 = vadd.f32 %v995, %v1027
  %v1060 = vadd.f32 %v996, %v1028
  %v1061 = vadd.f32 %v997, %v1029
  %v1062 = vadd.f32 %v998, %v1030
  %v1063 = vadd.f32 %v999, %v1031
  %v1064 = vadd.f32 %v1000, %v1032
  %v1065 = vpack.c.bf16 %v1034, %v1033
  %v1066 = vpack.c.bf16 %v1036, %v1035
  %v1067 = vpack.c.bf16 %v1038, %v1037
  %v1068 = vpack.c.bf16 %v1040, %v1039
  %v1069 = vpack.c.bf16 %v1042, %v1041
  %v1070 = vpack.c.bf16 %v1044, %v1043
  %v1071 = vpack.c.bf16 %v1046, %v1045
  %v1072 = vpack.c.bf16 %v1048, %v1047
  %v1073 = vpack.c.bf16 %v1050, %v1049
  %v1074 = vpack.c.bf16 %v1052, %v1051
  %v1075 = vpack.c.bf16 %v1054, %v1053
  %v1076 = vpack.c.bf16 %v1056, %v1055
  %v1077 = vpack.c.bf16 %v1058, %v1057
  %v1078 = vpack.c.bf16 %v1060, %v1059
  %v1079 = vpack.c.bf16 %v1062, %v1061
  %v1080 = vpack.c.bf16 %v1064, %v1063
  %1081 = vst [vmem:[%s4] sm:$0xff] %v1065
  %1082 = vst [vmem:[%s4 + $0x8] sm:$0xff] %v1066
  %1083 = vst [vmem:[%s4 + $0x10] sm:$0xff] %v1067
  %1084 = vst [vmem:[%s4 + $0x18] sm:$0xff] %v1068
  %1085 = vst [vmem:[%s4 + $0x20] sm:$0xff] %v1069
  %1086 = vst [vmem:[%s4 + $0x28] sm:$0xff] %v1070
  %1087 = vst [vmem:[%s4 + $0x30] sm:$0xff] %v1071
  %1088 = vst [vmem:[%s4 + $0x38] sm:$0xff] %v1072
  %1089 = vst [vmem:[%s4 + $0x40] sm:$0xff] %v1073
  %1090 = vst [vmem:[%s4 + $0x48] sm:$0xff] %v1074
  %1091 = vst [vmem:[%s4 + $0x50] sm:$0xff] %v1075
  %1092 = vst [vmem:[%s4 + $0x58] sm:$0xff] %v1076
  %1093 = vst [vmem:[%s4 + $0x60] sm:$0xff] %v1077
  %1094 = vst [vmem:[%s4 + $0x68] sm:$0xff] %v1078
  %1095 = vst [vmem:[%s4 + $0x70] sm:$0xff] %v1079
  %1096 = vst [vmem:[%s4 + $0x78] sm:$0xff] %v1080
  // Predicated region
  $region18: #{chained_forward.29} parent=0 // pred_check
    _
  $region19: #{chained_forward.29} parent=0 // pred_check_branch
    %1098 = sbr.rel (0) target = $region21
  $region20: #{chained_forward.29} parent=0 // pred_region
    _
  $region21: #{chained_forward.29} parent=0 // pred_fallthru
    _
  // Predicated region
  $region22: #{chained_forward.29} parent=0 // pred_check
    _
  $region23: #{chained_forward.29} parent=0 // pred_check_branch
    %1100 = sbr.rel (0) target = $region25
  $region24: #{chained_forward.29} parent=0 // pred_region
    _
  $region25: #{chained_forward.29} parent=0 // pred_fallthru
    _

// kernel: chained_forward.22
$region0: #{chained_forward.22}
  #allocation0 [shape = 'u32[]', space=smem, size = 0x4, offset = 0x4, fixed_abs, tag = 'smem constant byte address 0x4 - core index']
  #allocation1 [shape = 'u32[72,128]{1,0:T(1,128)}', space=vmem, size = 0x9000, scoped, tag = 'internal scratch']
  %s0 = inlined_call_operand.vmem [shape: bf16[64,576], index: 0, kind: input, shape index: {}]
  %s1 = inlined_call_operand.vmem [shape: bf16[576,128], index: 1, kind: input, shape index: {}]
  %s2 = inlined_call_operand.vmem [shape: f32[64,1], index: 2, kind: input, shape index: {}]
  %s3 = inlined_call_operand.vmem [shape: f32[64,128], index: 3, kind: output, shape index: {}]
  %s4 = sld [smem:[#allocation0]]
  $region22: #{chained_forward.22} parent=0
    _
  %s6 = ssub.s32 1, %s4
  %s7 = scalar_select 0, %s6, %s4
  // Predicated region
  $region2: #{chained_forward.22} parent=0 // pred_check
    _
  $region3: #{chained_forward.22} parent=0 // pred_check_branch
    %9 = sbr.rel (0) target = $region5
  $region4: #{chained_forward.22} parent=0 // pred_region
    _
  $region5: #{chained_forward.22} parent=0 // pred_fallthru
    _
  // Predicated region
  $region6: #{chained_forward.22} parent=0 // pred_check
    _
  $region7: #{chained_forward.22} parent=0 // pred_check_branch
    %11 = sbr.rel (0) target = $region9
  $region8: #{chained_forward.22} parent=0 // pred_region
    _
  $region9: #{chained_forward.22} parent=0 // pred_fallthru
    _
  // Predicated region
  $region10: #{chained_forward.22} parent=0 // pred_check
    _
  $region11: #{chained_forward.22} parent=0 // pred_check_branch
    %13 = sbr.rel (0) target = $region13
  $region12: #{chained_forward.22} parent=0 // pred_region
    _
  $region13: #{chained_forward.22} parent=0 // pred_fallthru
    _
  %v15 = vld [vmem:[%s0] sm:$0xff]
  %v16 = vld [vmem:[%s0 + $0x8] sm:$0xff]
  %v17 = vld [vmem:[%s0 + $0x10] sm:$0xf]
  %v18 = vld [vmem:[%s0 + $0x14] sm:$0xff]
  %v19 = vld [vmem:[%s0 + $0x1c] sm:$0xff]
  %v20 = vld [vmem:[%s0 + $0x24] sm:$0xf]
  %v21 = vld [vmem:[%s0 + $0x28] sm:$0xff]
  %v22 = vld [vmem:[%s0 + $0x30] sm:$0xff]
  %v23 = vld [vmem:[%s0 + $0x38] sm:$0xf]
  %v24 = vld [vmem:[%s0 + $0x3c] sm:$0xff]
  %v25 = vld [vmem:[%s0 + $0x44] sm:$0xff]
  %v26 = vld [vmem:[%s0 + $0x4c] sm:$0xf]
  %v27 = vld [vmem:[%s0 + $0x50] sm:$0xff]
  %v28 = vld [vmem:[%s0 + $0x58] sm:$0xff]
  %v29 = vld [vmem:[%s0 + $0x60] sm:$0xf]
  %v30 = vld [vmem:[%s0 + $0x64] sm:$0xff]
  %v31 = vld [vmem:[%s0 + $0x6c] sm:$0xff]
  %v32 = vld [vmem:[%s0 + $0x74] sm:$0xf]
  %v33 = vld [vmem:[%s0 + $0x78] sm:$0xff]
  %v34 = vld [vmem:[%s0 + $0x80] sm:$0xff]
  %v35 = vld [vmem:[%s0 + $0x88] sm:$0xf]
  %v36 = vld [vmem:[%s0 + $0x8c] sm:$0xff]
  %v37 = vld [vmem:[%s0 + $0x94] sm:$0xff]
  %v38 = vld [vmem:[%s0 + $0x9c] sm:$0xf]
  %v39 = vld [vmem:[%s1] sm:$0xf]
  %v40 = vld [vmem:[%s1 + $0x4] sm:$0xf]
  %v41 = vld [vmem:[%s1 + $0x8] sm:$0xf]
  %v42 = vld [vmem:[%s1 + $0xc] sm:$0xf]
  %v43 = vld [vmem:[%s1 + $0x10] sm:$0xf]
  %v44 = vld [vmem:[%s1 + $0x14] sm:$0xf]
  %v45 = vld [vmem:[%s1 + $0x18] sm:$0xf]
  %v46 = vld [vmem:[%s1 + $0x1c] sm:$0xf]
  %v47 = vld [vmem:[%s1 + $0x20] sm:$0xf]
  %v48 = vld [vmem:[%s1 + $0x24] sm:$0xf]
  %v49 = vld [vmem:[%s1 + $0x28] sm:$0xf]
  %v50 = vld [vmem:[%s1 + $0x2c] sm:$0xf]
  %v51 = vld [vmem:[%s1 + $0x30] sm:$0xf]
  %v52 = vld [vmem:[%s1 + $0x34] sm:$0xf]
  %v53 = vld [vmem:[%s1 + $0x38] sm:$0xf]
  %v54 = vld [vmem:[%s1 + $0x3c] sm:$0xf]
  %v55 = vld [vmem:[%s1 + $0x40] sm:$0xf]
  %v56 = vld [vmem:[%s1 + $0x44] sm:$0xf]
  %v57 = vld [vmem:[%s1 + $0x48] sm:$0xf]
  %v58 = vld [vmem:[%s1 + $0x4c] sm:$0xf]
  %v59 = vld [vmem:[%s1 + $0x50] sm:$0xf]
  %v60 = vld [vmem:[%s1 + $0x54] sm:$0xf]
  %v61 = vld [vmem:[%s1 + $0x58] sm:$0xf]
  %v62 = vld [vmem:[%s1 + $0x5c] sm:$0xf]
  %v63 = vld [vmem:[%s1 + $0x60] sm:$0xf]
  %v64 = vld [vmem:[%s1 + $0x64] sm:$0xf]
  %v65 = vld [vmem:[%s1 + $0x68] sm:$0xf]
  %v66 = vld [vmem:[%s1 + $0x6c] sm:$0xf]
  %v67 = vld [vmem:[%s1 + $0x70] sm:$0xf]
  %v68 = vld [vmem:[%s1 + $0x74] sm:$0xf]
  %v69 = vld [vmem:[%s1 + $0x78] sm:$0xf]
  %v70 = vld [vmem:[%s1 + $0x7c] sm:$0xf]
  %v71 = vld [vmem:[%s1 + $0x80] sm:$0xf]
  %v72 = vld [vmem:[%s1 + $0x84] sm:$0xf]
  %v73 = vld [vmem:[%s1 + $0x88] sm:$0xf]
  %v74 = vld [vmem:[%s1 + $0x8c] sm:$0xf]
  %v75 = vld [vmem:[%s1 + $0x90] sm:$0xf]
  %v76 = vld [vmem:[%s1 + $0x94] sm:$0xf]
  %v77 = vld [vmem:[%s1 + $0x98] sm:$0xf]
  %v78 = vld [vmem:[%s1 + $0x9c] sm:$0xf]
  %v79 = vld [vmem:[%s1 + $0xa0] sm:$0xf]
  %v80 = vld [vmem:[%s1 + $0xa4] sm:$0xf]
  %v81 = vld [vmem:[%s1 + $0xa8] sm:$0xf]
  %v82 = vld [vmem:[%s1 + $0xac] sm:$0xf]
  %v83 = vld [vmem:[%s1 + $0xb0] sm:$0xf]
  %v84 = vld [vmem:[%s1 + $0xb4] sm:$0xf]
  %v85 = vld [vmem:[%s1 + $0xb8] sm:$0xf]
  %v86 = vld [vmem:[%s1 + $0xbc] sm:$0xf]
  %v87 = vld [vmem:[%s1 + $0xc0] sm:$0xf]
  %v88 = vld [vmem:[%s1 + $0xc4] sm:$0xf]
  %v89 = vld [vmem:[%s1 + $0xc8] sm:$0xf]
  %v90 = vld [vmem:[%s1 + $0xcc] sm:$0xf]
  %v91 = vld [vmem:[%s1 + $0xd0] sm:$0xf]
  %v92 = vld [vmem:[%s1 + $0xd4] sm:$0xf]
  %v93 = vld [vmem:[%s1 + $0xd8] sm:$0xf]
  %v94 = vld [vmem:[%s1 + $0xdc] sm:$0xf]
  %v95 = vld [vmem:[%s1 + $0xe0] sm:$0xf]
  %v96 = vld [vmem:[%s1 + $0xe4] sm:$0xf]
  %v97 = vld [vmem:[%s1 + $0xe8] sm:$0xf]
  %v98 = vld [vmem:[%s1 + $0xec] sm:$0xf]
  %v99 = vld [vmem:[%s1 + $0xf0] sm:$0xf]
  %v100 = vld [vmem:[%s1 + $0xf4] sm:$0xf]
  %v101 = vld [vmem:[%s1 + $0xf8] sm:$0xf]
  %v102 = vld [vmem:[%s1 + $0xfc] sm:$0xf]
  %v103 = vld [vmem:[%s1 + $0x100] sm:$0xf]
  %v104 = vld [vmem:[%s1 + $0x104] sm:$0xf]
  %v105 = vld [vmem:[%s1 + $0x108] sm:$0xf]
  %v106 = vld [vmem:[%s1 + $0x10c] sm:$0xf]
  %v107 = vld [vmem:[%s1 + $0x110] sm:$0xf]
  %v108 = vld [vmem:[%s1 + $0x114] sm:$0xf]
  %v109 = vld [vmem:[%s1 + $0x118] sm:$0xf]
  %v110 = vld [vmem:[%s1 + $0x11c] sm:$0xf]
  %v111 = vld [vmem:[%s2] sm:$0xff]
  %v112 = vld [vmem:[%s2 + $0x8] sm:$0xff]
  %v113 = vld [vmem:[%s2 + $0x10] sm:$0xff]
  %v114 = vld [vmem:[%s2 + $0x18] sm:$0xff]
  %v115 = vld [vmem:[%s2 + $0x20] sm:$0xff]
  %v116 = vld [vmem:[%s2 + $0x28] sm:$0xff]
  %v117 = vld [vmem:[%s2 + $0x30] sm:$0xff]
  %v118 = vld [vmem:[%s2 + $0x38] sm:$0xff]
  %120 = vset.pattern.permute.xlu0 0
  %121 = vperm.xlu0 %120, %v111
  %v122 = vpop.permute.xlu0 %121
  %125 = vset.pattern.permute.xlu0 0
  %126 = vperm.xlu0 %125, %v112
  %v127 = vpop.permute.xlu0 %126
  %130 = vset.pattern.permute.xlu0 0
  %131 = vperm.xlu0 %130, %v113
  %v132 = vpop.permute.xlu0 %131
  %135 = vset.pattern.permute.xlu0 0
  %136 = vperm.xlu0 %135, %v114
  %v137 = vpop.permute.xlu0 %136
  %140 = vset.pattern.permute.xlu0 0
  %141 = vperm.xlu0 %140, %v115
  %v142 = vpop.permute.xlu0 %141
  %145 = vset.pattern.permute.xlu0 0
  %146 = vperm.xlu0 %145, %v116
  %v147 = vpop.permute.xlu0 %146
  %150 = vset.pattern.permute.xlu0 0
  %151 = vperm.xlu0 %150, %v117
  %v152 = vpop.permute.xlu0 %151
  %155 = vset.pattern.permute.xlu0 0
  %156 = vperm.xlu0 %155, %v118
  %v157 = vpop.permute.xlu0 %156
  %v183 = vunpack.c.l.b16 %v15
  %v184 = vunpack.c.h.b16 %v15
  %v185 = vunpack.c.l.b16 %v16
  %v186 = vunpack.c.h.b16 %v16
  %v187 = vunpack.c.l.b16 %v17
  %v188 = vunpack.c.l.b16 %v18
  %v189 = vunpack.c.h.b16 %v18
  %v190 = vunpack.c.l.b16 %v19
  %v191 = vunpack.c.h.b16 %v19
  %v192 = vunpack.c.l.b16 %v20
  %v193 = vunpack.c.l.b16 %v21
  %v194 = vunpack.c.h.b16 %v21
  %v195 = vunpack.c.l.b16 %v22
  %v196 = vunpack.c.h.b16 %v22
  %v197 = vunpack.c.l.b16 %v23
  %v198 = vunpack.c.l.b16 %v24
  %v199 = vunpack.c.h.b16 %v24
  %v200 = vunpack.c.l.b16 %v25
  %v201 = vunpack.c.h.b16 %v25
  %v202 = vunpack.c.l.b16 %v26
  %v203 = vunpack.c.l.b16 %v27
  %v204 = vunpack.c.h.b16 %v27
  %v205 = vunpack.c.l.b16 %v28
  %v206 = vunpack.c.h.b16 %v28
  %v207 = vunpack.c.l.b16 %v29
  %v208 = vunpack.c.l.b16 %v30
  %v209 = vunpack.c.h.b16 %v30
  %v210 = vunpack.c.l.b16 %v31
  %v211 = vunpack.c.h.b16 %v31
  %v212 = vunpack.c.l.b16 %v32
  %v213 = vunpack.c.l.b16 %v33
  %v214 = vunpack.c.h.b16 %v33
  %v215 = vunpack.c.l.b16 %v34
  %v216 = vunpack.c.h.b16 %v34
  %v217 = vunpack.c.l.b16 %v35
  %v218 = vunpack.c.l.b16 %v36
  %v219 = vunpack.c.h.b16 %v36
  %v220 = vunpack.c.l.b16 %v37
  %v221 = vunpack.c.h.b16 %v37
  %v222 = vunpack.c.l.b16 %v38
  %v223 = vpack.c.b16 %v188, %v183
  %v224 = vpack.c.b16 %v189, %v184
  %v225 = vpack.c.b16 %v190, %v185
  %v226 = vpack.c.b16 %v191, %v186
  %v227 = vpack.c.b16 %v192, %v187
  %v228 = vpack.c.b16 %v198, %v193
  %v229 = vpack.c.b16 %v199, %v194
  %v230 = vpack.c.b16 %v200, %v195
  %v231 = vpack.c.b16 %v201, %v196
  %v232 = vpack.c.b16 %v202, %v197
  %v233 = vpack.c.b16 %v208, %v203
  %v234 = vpack.c.b16 %v209, %v204
  %v235 = vpack.c.b16 %v210, %v205
  %v236 = vpack.c.b16 %v211, %v206
  %v237 = vpack.c.b16 %v212, %v207
  %v238 = vpack.c.b16 %v218, %v213
  %v239 = vpack.c.b16 %v219, %v214
  %v240 = vpack.c.b16 %v220, %v215
  %v241 = vpack.c.b16 %v221, %v216
  %v242 = vpack.c.b16 %v222, %v217
  %v331 = vunpack.c.l.b16 %v39
  %v332 = vunpack.c.l.b16 %v40
  %v333 = vunpack.c.l.b16 %v41
  %v334 = vunpack.c.l.b16 %v42
  %v335 = vunpack.c.l.b16 %v43
  %v336 = vunpack.c.l.b16 %v44
  %v337 = vunpack.c.l.b16 %v45
  %v338 = vunpack.c.l.b16 %v46
  %v339 = vunpack.c.l.b16 %v47
  %v340 = vunpack.c.l.b16 %v48
  %v341 = vunpack.c.l.b16 %v49
  %v342 = vunpack.c.l.b16 %v50
  %v343 = vunpack.c.l.b16 %v51
  %v344 = vunpack.c.l.b16 %v52
  %v345 = vunpack.c.l.b16 %v53
  %v346 = vunpack.c.l.b16 %v54
  %v347 = vunpack.c.l.b16 %v55
  %v348 = vunpack.c.l.b16 %v56
  %v349 = vunpack.c.l.b16 %v57
  %v350 = vunpack.c.l.b16 %v58
  %v351 = vunpack.c.l.b16 %v59
  %v352 = vunpack.c.l.b16 %v60
  %v353 = vunpack.c.l.b16 %v61
  %v354 = vunpack.c.l.b16 %v62
  %v355 = vunpack.c.l.b16 %v63
  %v356 = vunpack.c.l.b16 %v64
  %v357 = vunpack.c.l.b16 %v65
  %v358 = vunpack.c.l.b16 %v66
  %v359 = vunpack.c.l.b16 %v67
  %v360 = vunpack.c.l.b16 %v68
  %v361 = vunpack.c.l.b16 %v69
  %v362 = vunpack.c.l.b16 %v70
  %v363 = vunpack.c.l.b16 %v71
  %v364 = vunpack.c.l.b16 %v72
  %v365 = vunpack.c.l.b16 %v73
  %v366 = vunpack.c.l.b16 %v74
  %v367 = vunpack.c.l.b16 %v75
  %v368 = vunpack.c.l.b16 %v76
  %v369 = vunpack.c.l.b16 %v77
  %v370 = vunpack.c.l.b16 %v78
  %v371 = vunpack.c.l.b16 %v79
  %v372 = vunpack.c.l.b16 %v80
  %v373 = vunpack.c.l.b16 %v81
  %v374 = vunpack.c.l.b16 %v82
  %v375 = vunpack.c.l.b16 %v83
  %v376 = vunpack.c.l.b16 %v84
  %v377 = vunpack.c.l.b16 %v85
  %v378 = vunpack.c.l.b16 %v86
  %v379 = vunpack.c.l.b16 %v87
  %v380 = vunpack.c.l.b16 %v88
  %v381 = vunpack.c.l.b16 %v89
  %v382 = vunpack.c.l.b16 %v90
  %v383 = vunpack.c.l.b16 %v91
  %v384 = vunpack.c.l.b16 %v92
  %v385 = vunpack.c.l.b16 %v93
  %v386 = vunpack.c.l.b16 %v94
  %v387 = vunpack.c.l.b16 %v95
  %v388 = vunpack.c.l.b16 %v96
  %v389 = vunpack.c.l.b16 %v97
  %v390 = vunpack.c.l.b16 %v98
  %v391 = vunpack.c.l.b16 %v99
  %v392 = vunpack.c.l.b16 %v100
  %v393 = vunpack.c.l.b16 %v101
  %v394 = vunpack.c.l.b16 %v102
  %v395 = vunpack.c.l.b16 %v103
  %v396 = vunpack.c.l.b16 %v104
  %v397 = vunpack.c.l.b16 %v105
  %v398 = vunpack.c.l.b16 %v106
  %v399 = vunpack.c.l.b16 %v107
  %v400 = vunpack.c.l.b16 %v108
  %v401 = vunpack.c.l.b16 %v109
  %v402 = vunpack.c.l.b16 %v110
  %v403 = vpack.c.b16 %v332, %v331
  %v404 = vpack.c.b16 %v334, %v333
  %v405 = vpack.c.b16 %v336, %v335
  %v406 = vpack.c.b16 %v338, %v337
  %v407 = vpack.c.b16 %v340, %v339
  %v408 = vpack.c.b16 %v342, %v341
  %v409 = vpack.c.b16 %v344, %v343
  %v410 = vpack.c.b16 %v346, %v345
  %v411 = vpack.c.b16 %v348, %v347
  %v412 = vpack.c.b16 %v350, %v349
  %v413 = vpack.c.b16 %v352, %v351
  %v414 = vpack.c.b16 %v354, %v353
  %v415 = vpack.c.b16 %v356, %v355
  %v416 = vpack.c.b16 %v358, %v357
  %v417 = vpack.c.b16 %v360, %v359
  %v418 = vpack.c.b16 %v362, %v361
  %v419 = vpack.c.b16 %v364, %v363
  %v420 = vpack.c.b16 %v366, %v365
  %v421 = vpack.c.b16 %v368, %v367
  %v422 = vpack.c.b16 %v370, %v369
  %v423 = vpack.c.b16 %v372, %v371
  %v424 = vpack.c.b16 %v374, %v373
  %v425 = vpack.c.b16 %v376, %v375
  %v426 = vpack.c.b16 %v378, %v377
  %v427 = vpack.c.b16 %v380, %v379
  %v428 = vpack.c.b16 %v382, %v381
  %v429 = vpack.c.b16 %v384, %v383
  %v430 = vpack.c.b16 %v386, %v385
  %v431 = vpack.c.b16 %v388, %v387
  %v432 = vpack.c.b16 %v390, %v389
  %v433 = vpack.c.b16 %v392, %v391
  %v434 = vpack.c.b16 %v394, %v393
  %v435 = vpack.c.b16 %v396, %v395
  %v436 = vpack.c.b16 %v398, %v397
  %v437 = vpack.c.b16 %v400, %v399
  %v438 = vpack.c.b16 %v402, %v401
  %vm475 = vcmask 523264
  %v477 = vsel %vm475, %v227, 0
  %v480 = vsel %vm475, %v232, 0
  %v483 = vsel %vm475, %v237, 0
  %v486 = vsel %vm475, %v242, 0
  %488 = vmatpush.bf16.msra.mxu0 %v410
  %489 = vmatpush.bf16.msra.mxu0 %v409
  %490 = vmatpush.bf16.msra.mxu0 %v408
  %491 = vmatpush.bf16.msra.mxu0 %v407
  %492 = vmatpush.bf16.msra.mxu0 %v406
  %493 = vmatpush.bf16.msra.mxu0 %v405
  %494 = vmatpush.bf16.msra.mxu0 %v404
  %495 = vmatpush.bf16.msra.mxu0 %v403
  %496 = vmatmul.bf16.gmra.mxu0 %v223
  %v497 = vpop.f32.mrf.mxu0
  %v498 = vadd.f32 %v122, %v497
  %v499 = vpop.f32.mrf.mxu0
  %v500 = vadd.f32 %v127, %v499
  %501 = vmatmul.bf16.gmra.mxu0 %v228
  %v502 = vpop.f32.mrf.mxu0
  %v503 = vadd.f32 %v132, %v502
  %v504 = vpop.f32.mrf.mxu0
  %v505 = vadd.f32 %v137, %v504
  %506 = vmatmul.bf16.gmra.mxu0 %v233
  %v507 = vpop.f32.mrf.mxu0
  %v508 = vadd.f32 %v142, %v507
  %v509 = vpop.f32.mrf.mxu0
  %v510 = vadd.f32 %v147, %v509
  %511 = vmatmul.bf16.gmra.mxu0 %v238
  %v512 = vpop.f32.mrf.mxu0
  %v513 = vadd.f32 %v152, %v512
  %v514 = vpop.f32.mrf.mxu0
  %v515 = vadd.f32 %v157, %v514
  %516 = vdwg.mxu0
  %517 = vmatpush.bf16.msra.mxu0 %v418
  %518 = vmatpush.bf16.msra.mxu0 %v417
  %519 = vmatpush.bf16.msra.mxu0 %v416
  %520 = vmatpush.bf16.msra.mxu0 %v415
  %521 = vmatpush.bf16.msra.mxu0 %v414
  %522 = vmatpush.bf16.msra.mxu0 %v413
  %523 = vmatpush.bf16.msra.mxu0 %v412
  %524 = vmatpush.bf16.msra.mxu0 %v411
  %525 = vmatmul.bf16.gmra.mxu0 %v224
  %v526 = vpop.f32.mrf.mxu0
  %v527 = vadd.f32 %v498, %v526
  %v528 = vpop.f32.mrf.mxu0
  %v529 = vadd.f32 %v500, %v528
  %530 = vmatmul.bf16.gmra.mxu0 %v229
  %v531 = vpop.f32.mrf.mxu0
  %v532 = vadd.f32 %v503, %v531
  %v533 = vpop.f32.mrf.mxu0
  %v534 = vadd.f32 %v505, %v533
  %535 = vmatmul.bf16.gmra.mxu0 %v234
  %v536 = vpop.f32.mrf.mxu0
  %v537 = vadd.f32 %v508, %v536
  %v538 = vpop.f32.mrf.mxu0
  %v539 = vadd.f32 %v510, %v538
  %540 = vmatmul.bf16.gmra.mxu0 %v239
  %v541 = vpop.f32.mrf.mxu0
  %v542 = vadd.f32 %v513, %v541
  %v543 = vpop.f32.mrf.mxu0
  %v544 = vadd.f32 %v515, %v543
  %545 = vdwg.mxu0
  %546 = vmatpush.bf16.msra.mxu0 %v426
  %547 = vmatpush.bf16.msra.mxu0 %v425
  %548 = vmatpush.bf16.msra.mxu0 %v424
  %549 = vmatpush.bf16.msra.mxu0 %v423
  %550 = vmatpush.bf16.msra.mxu0 %v422
  %551 = vmatpush.bf16.msra.mxu0 %v421
  %552 = vmatpush.bf16.msra.mxu0 %v420
  %553 = vmatpush.bf16.msra.mxu0 %v419
  %554 = vmatmul.bf16.gmra.mxu0 %v225
  %v555 = vpop.f32.mrf.mxu0
  %v556 = vadd.f32 %v527, %v555
  %v557 = vpop.f32.mrf.mxu0
  %v558 = vadd.f32 %v529, %v557
  %559 = vmatmul.bf16.gmra.mxu0 %v230
  %v560 = vpop.f32.mrf.mxu0
  %v561 = vadd.f32 %v532, %v560
  %v562 = vpop.f32.mrf.mxu0
  %v563 = vadd.f32 %v534, %v562
  %564 = vmatmul.bf16.gmra.mxu0 %v235
  %v565 = vpop.f32.mrf.mxu0
  %v566 = vadd.f32 %v537, %v565
  %v567 = vpop.f32.mrf.mxu0
  %v568 = vadd.f32 %v539, %v567
  %569 = vmatmul.bf16.gmra.mxu0 %v240
  %v570 = vpop.f32.mrf.mxu0
  %v571 = vadd.f32 %v542, %v570
  %v572 = vpop.f32.mrf.mxu0
  %v573 = vadd.f32 %v544, %v572
  %574 = vdwg.mxu0
  %575 = vmatpush.bf16.msra.mxu0 %v434
  %576 = vmatpush.bf16.msra.mxu0 %v433
  %577 = vmatpush.bf16.msra.mxu0 %v432
  %578 = vmatpush.bf16.msra.mxu0 %v431
  %579 = vmatpush.bf16.msra.mxu0 %v430
  %580 = vmatpush.bf16.msra.mxu0 %v429
  %581 = vmatpush.bf16.msra.mxu0 %v428
  %582 = vmatpush.bf16.msra.mxu0 %v427
  %583 = vmatmul.bf16.gmra.mxu0 %v226
  %v584 = vpop.f32.mrf.mxu0
  %v585 = vadd.f32 %v556, %v584
  %v586 = vpop.f32.mrf.mxu0
  %v587 = vadd.f32 %v558, %v586
  %588 = vmatmul.bf16.gmra.mxu0 %v231
  %v589 = vpop.f32.mrf.mxu0
  %v590 = vadd.f32 %v561, %v589
  %v591 = vpop.f32.mrf.mxu0
  %v592 = vadd.f32 %v563, %v591
  %593 = vmatmul.bf16.gmra.mxu0 %v236
  %v594 = vpop.f32.mrf.mxu0
  %v595 = vadd.f32 %v566, %v594
  %v596 = vpop.f32.mrf.mxu0
  %v597 = vadd.f32 %v568, %v596
  %598 = vmatmul.bf16.gmra.mxu0 %v241
  %v599 = vpop.f32.mrf.mxu0
  %v600 = vadd.f32 %v571, %v599
  %v601 = vpop.f32.mrf.mxu0
  %v602 = vadd.f32 %v573, %v601
  %603 = vdwg.mxu0
  %604 = vmatpush.bf16.msra.mxu0 0
  %605 = vmatpush.bf16.msra.mxu0 0
  %606 = vmatpush.bf16.msra.mxu0 0
  %607 = vmatpush.bf16.msra.mxu0 0
  %608 = vmatpush.bf16.msra.mxu0 %v438
  %609 = vmatpush.bf16.msra.mxu0 %v437
  %610 = vmatpush.bf16.msra.mxu0 %v436
  %611 = vmatpush.bf16.msra.mxu0 %v435
  %612 = vmatmul.bf16.gmra.mxu0 %v477
  %v613 = vpop.f32.mrf.mxu0
  %v614 = vadd.f32 %v585, %v613
  %v615 = vpop.f32.mrf.mxu0
  %v616 = vadd.f32 %v587, %v615
  %617 = vmatmul.bf16.gmra.mxu0 %v480
  %v618 = vpop.f32.mrf.mxu0
  %v619 = vadd.f32 %v590, %v618
  %v620 = vpop.f32.mrf.mxu0
  %v621 = vadd.f32 %v592, %v620
  %622 = vmatmul.bf16.gmra.mxu0 %v483
  %v623 = vpop.f32.mrf.mxu0
  %v624 = vadd.f32 %v595, %v623
  %v625 = vpop.f32.mrf.mxu0
  %v626 = vadd.f32 %v597, %v625
  %627 = vmatmul.bf16.gmra.mxu0 %v486
  %v628 = vpop.f32.mrf.mxu0
  %v629 = vadd.f32 %v600, %v628
  %v630 = vpop.f32.mrf.mxu0
  %v631 = vadd.f32 %v602, %v630
  %632 = vdwg.mxu0
  %633 = vst [vmem:[%s3] sm:$0xff] %v614
  %634 = vst [vmem:[%s3 + $0x8] sm:$0xff] %v616
  %635 = vst [vmem:[%s3 + $0x10] sm:$0xff] %v619
  %636 = vst [vmem:[%s3 + $0x18] sm:$0xff] %v621
  %637 = vst [vmem:[%s3 + $0x20] sm:$0xff] %v624
  %638 = vst [vmem:[%s3 + $0x28] sm:$0xff] %v626
  %639 = vst [vmem:[%s3 + $0x30] sm:$0xff] %v629
  %640 = vst [vmem:[%s3 + $0x38] sm:$0xff] %v631
  // Predicated region
  $region14: #{chained_forward.22} parent=0 // pred_check
    _
  $region15: #{chained_forward.22} parent=0 // pred_check_branch
    %642 = sbr.rel (0) target = $region17
  $region16: #{chained_forward.22} parent=0 // pred_region
    _
  $region17: #{chained_forward.22} parent=0 // pred_fallthru
    _
  // Predicated region
  $region18: #{chained_forward.22} parent=0 // pred_check
    _
  $region19: #{chained_forward.22} parent=0 // pred_check_branch
    %644 = sbr.rel (0) target = $region21
  $region20: #{chained_forward.22} parent=0 // pred_region
    _
  $region21: #{chained_forward.22} parent=0 // pred_fallthru
    _

// kernel: chained_forward.24
$region0: #{chained_forward.24}
  #allocation0 [shape = 'u32[]', space=smem, size = 0x4, offset = 0x4, fixed_abs, tag = 'smem constant byte address 0x4 - core index']
  #allocation1 [shape = 'u32[72,128]{1,0:T(1,128)}', space=vmem, size = 0x9000, scoped, tag = 'internal scratch']
  %s0 = inlined_call_operand.vmem [shape: bf16[64,576], index: 0, kind: input, shape index: {}]
  %s1 = inlined_call_operand.vmem [shape: bf16[576,128], index: 1, kind: input, shape index: {}]
  %s2 = inlined_call_operand.vmem [shape: f32[64,1], index: 2, kind: input, shape index: {}]
  %s3 = inlined_call_operand.vmem [shape: f32[64,128], index: 3, kind: input, shape index: {}]
  %s4 = inlined_call_operand.vmem [shape: f32[64,128], index: 4, kind: output, shape index: {}]
  %s5 = sld [smem:[#allocation0]]
  $region26: #{chained_forward.24} parent=0
    _
  %s7 = ssub.s32 1, %s5
  %s8 = scalar_select 0, %s7, %s5
  // Predicated region
  $region2: #{chained_forward.24} parent=0 // pred_check
    _
  $region3: #{chained_forward.24} parent=0 // pred_check_branch
    %10 = sbr.rel (0) target = $region5
  $region4: #{chained_forward.24} parent=0 // pred_region
    _
  $region5: #{chained_forward.24} parent=0 // pred_fallthru
    _
  // Predicated region
  $region6: #{chained_forward.24} parent=0 // pred_check
    _
  $region7: #{chained_forward.24} parent=0 // pred_check_branch
    %12 = sbr.rel (0) target = $region9
  $region8: #{chained_forward.24} parent=0 // pred_region
    _
  $region9: #{chained_forward.24} parent=0 // pred_fallthru
    _
  // Predicated region
  $region10: #{chained_forward.24} parent=0 // pred_check
    _
  $region11: #{chained_forward.24} parent=0 // pred_check_branch
    %14 = sbr.rel (0) target = $region13
  $region12: #{chained_forward.24} parent=0 // pred_region
    _
  $region13: #{chained_forward.24} parent=0 // pred_fallthru
    _
  // Predicated region
  $region14: #{chained_forward.24} parent=0 // pred_check
    _
  $region15: #{chained_forward.24} parent=0 // pred_check_branch
    %16 = sbr.rel (0) target = $region17
  $region16: #{chained_forward.24} parent=0 // pred_region
    _
  $region17: #{chained_forward.24} parent=0 // pred_fallthru
    _
  %v18 = vld [vmem:[%s0] sm:$0xff]
  %v19 = vld [vmem:[%s0 + $0x8] sm:$0xff]
  %v20 = vld [vmem:[%s0 + $0x10] sm:$0xf]
  %v21 = vld [vmem:[%s0 + $0x14] sm:$0xff]
  %v22 = vld [vmem:[%s0 + $0x1c] sm:$0xff]
  %v23 = vld [vmem:[%s0 + $0x24] sm:$0xf]
  %v24 = vld [vmem:[%s0 + $0x28] sm:$0xff]
  %v25 = vld [vmem:[%s0 + $0x30] sm:$0xff]
  %v26 = vld [vmem:[%s0 + $0x38] sm:$0xf]
  %v27 = vld [vmem:[%s0 + $0x3c] sm:$0xff]
  %v28 = vld [vmem:[%s0 + $0x44] sm:$0xff]
  %v29 = vld [vmem:[%s0 + $0x4c] sm:$0xf]
  %v30 = vld [vmem:[%s0 + $0x50] sm:$0xff]
  %v31 = vld [vmem:[%s0 + $0x58] sm:$0xff]
  %v32 = vld [vmem:[%s0 + $0x60] sm:$0xf]
  %v33 = vld [vmem:[%s0 + $0x64] sm:$0xff]
  %v34 = vld [vmem:[%s0 + $0x6c] sm:$0xff]
  %v35 = vld [vmem:[%s0 + $0x74] sm:$0xf]
  %v36 = vld [vmem:[%s0 + $0x78] sm:$0xff]
  %v37 = vld [vmem:[%s0 + $0x80] sm:$0xff]
  %v38 = vld [vmem:[%s0 + $0x88] sm:$0xf]
  %v39 = vld [vmem:[%s0 + $0x8c] sm:$0xff]
  %v40 = vld [vmem:[%s0 + $0x94] sm:$0xff]
  %v41 = vld [vmem:[%s0 + $0x9c] sm:$0xf]
  %v42 = vld [vmem:[%s1] sm:$0xf]
  %v43 = vld [vmem:[%s1 + $0x4] sm:$0xf]
  %v44 = vld [vmem:[%s1 + $0x8] sm:$0xf]
  %v45 = vld [vmem:[%s1 + $0xc] sm:$0xf]
  %v46 = vld [vmem:[%s1 + $0x10] sm:$0xf]
  %v47 = vld [vmem:[%s1 + $0x14] sm:$0xf]
  %v48 = vld [vmem:[%s1 + $0x18] sm:$0xf]
  %v49 = vld [vmem:[%s1 + $0x1c] sm:$0xf]
  %v50 = vld [vmem:[%s1 + $0x20] sm:$0xf]
  %v51 = vld [vmem:[%s1 + $0x24] sm:$0xf]
  %v52 = vld [vmem:[%s1 + $0x28] sm:$0xf]
  %v53 = vld [vmem:[%s1 + $0x2c] sm:$0xf]
  %v54 = vld [vmem:[%s1 + $0x30] sm:$0xf]
  %v55 = vld [vmem:[%s1 + $0x34] sm:$0xf]
  %v56 = vld [vmem:[%s1 + $0x38] sm:$0xf]
  %v57 = vld [vmem:[%s1 + $0x3c] sm:$0xf]
  %v58 = vld [vmem:[%s1 + $0x40] sm:$0xf]
  %v59 = vld [vmem:[%s1 + $0x44] sm:$0xf]
  %v60 = vld [vmem:[%s1 + $0x48] sm:$0xf]
  %v61 = vld [vmem:[%s1 + $0x4c] sm:$0xf]
  %v62 = vld [vmem:[%s1 + $0x50] sm:$0xf]
  %v63 = vld [vmem:[%s1 + $0x54] sm:$0xf]
  %v64 = vld [vmem:[%s1 + $0x58] sm:$0xf]
  %v65 = vld [vmem:[%s1 + $0x5c] sm:$0xf]
  %v66 = vld [vmem:[%s1 + $0x60] sm:$0xf]
  %v67 = vld [vmem:[%s1 + $0x64] sm:$0xf]
  %v68 = vld [vmem:[%s1 + $0x68] sm:$0xf]
  %v69 = vld [vmem:[%s1 + $0x6c] sm:$0xf]
  %v70 = vld [vmem:[%s1 + $0x70] sm:$0xf]
  %v71 = vld [vmem:[%s1 + $0x74] sm:$0xf]
  %v72 = vld [vmem:[%s1 + $0x78] sm:$0xf]
  %v73 = vld [vmem:[%s1 + $0x7c] sm:$0xf]
  %v74 = vld [vmem:[%s1 + $0x80] sm:$0xf]
  %v75 = vld [vmem:[%s1 + $0x84] sm:$0xf]
  %v76 = vld [vmem:[%s1 + $0x88] sm:$0xf]
  %v77 = vld [vmem:[%s1 + $0x8c] sm:$0xf]
  %v78 = vld [vmem:[%s1 + $0x90] sm:$0xf]
  %v79 = vld [vmem:[%s1 + $0x94] sm:$0xf]
  %v80 = vld [vmem:[%s1 + $0x98] sm:$0xf]
  %v81 = vld [vmem:[%s1 + $0x9c] sm:$0xf]
  %v82 = vld [vmem:[%s1 + $0xa0] sm:$0xf]
  %v83 = vld [vmem:[%s1 + $0xa4] sm:$0xf]
  %v84 = vld [vmem:[%s1 + $0xa8] sm:$0xf]
  %v85 = vld [vmem:[%s1 + $0xac] sm:$0xf]
  %v86 = vld [vmem:[%s1 + $0xb0] sm:$0xf]
  %v87 = vld [vmem:[%s1 + $0xb4] sm:$0xf]
  %v88 = vld [vmem:[%s1 + $0xb8] sm:$0xf]
  %v89 = vld [vmem:[%s1 + $0xbc] sm:$0xf]
  %v90 = vld [vmem:[%s1 + $0xc0] sm:$0xf]
  %v91 = vld [vmem:[%s1 + $0xc4] sm:$0xf]
  %v92 = vld [vmem:[%s1 + $0xc8] sm:$0xf]
  %v93 = vld [vmem:[%s1 + $0xcc] sm:$0xf]
  %v94 = vld [vmem:[%s1 + $0xd0] sm:$0xf]
  %v95 = vld [vmem:[%s1 + $0xd4] sm:$0xf]
  %v96 = vld [vmem:[%s1 + $0xd8] sm:$0xf]
  %v97 = vld [vmem:[%s1 + $0xdc] sm:$0xf]
  %v98 = vld [vmem:[%s1 + $0xe0] sm:$0xf]
  %v99 = vld [vmem:[%s1 + $0xe4] sm:$0xf]
  %v100 = vld [vmem:[%s1 + $0xe8] sm:$0xf]
  %v101 = vld [vmem:[%s1 + $0xec] sm:$0xf]
  %v102 = vld [vmem:[%s1 + $0xf0] sm:$0xf]
  %v103 = vld [vmem:[%s1 + $0xf4] sm:$0xf]
  %v104 = vld [vmem:[%s1 + $0xf8] sm:$0xf]
  %v105 = vld [vmem:[%s1 + $0xfc] sm:$0xf]
  %v106 = vld [vmem:[%s1 + $0x100] sm:$0xf]
  %v107 = vld [vmem:[%s1 + $0x104] sm:$0xf]
  %v108 = vld [vmem:[%s1 + $0x108] sm:$0xf]
  %v109 = vld [vmem:[%s1 + $0x10c] sm:$0xf]
  %v110 = vld [vmem:[%s1 + $0x110] sm:$0xf]
  %v111 = vld [vmem:[%s1 + $0x114] sm:$0xf]
  %v112 = vld [vmem:[%s1 + $0x118] sm:$0xf]
  %v113 = vld [vmem:[%s1 + $0x11c] sm:$0xf]
  %v114 = vld [vmem:[%s2] sm:$0xff]
  %v115 = vld [vmem:[%s2 + $0x8] sm:$0xff]
  %v116 = vld [vmem:[%s2 + $0x10] sm:$0xff]
  %v117 = vld [vmem:[%s2 + $0x18] sm:$0xff]
  %v118 = vld [vmem:[%s2 + $0x20] sm:$0xff]
  %v119 = vld [vmem:[%s2 + $0x28] sm:$0xff]
  %v120 = vld [vmem:[%s2 + $0x30] sm:$0xff]
  %v121 = vld [vmem:[%s2 + $0x38] sm:$0xff]
  %123 = vset.pattern.permute.xlu0 0
  %124 = vperm.xlu0 %123, %v114
  %v125 = vpop.permute.xlu0 %124
  %128 = vset.pattern.permute.xlu0 0
  %129 = vperm.xlu0 %128, %v115
  %v130 = vpop.permute.xlu0 %129
  %133 = vset.pattern.permute.xlu0 0
  %134 = vperm.xlu0 %133, %v116
  %v135 = vpop.permute.xlu0 %134
  %138 = vset.pattern.permute.xlu0 0
  %139 = vperm.xlu0 %138, %v117
  %v140 = vpop.permute.xlu0 %139
  %143 = vset.pattern.permute.xlu0 0
  %144 = vperm.xlu0 %143, %v118
  %v145 = vpop.permute.xlu0 %144
  %148 = vset.pattern.permute.xlu0 0
  %149 = vperm.xlu0 %148, %v119
  %v150 = vpop.permute.xlu0 %149
  %153 = vset.pattern.permute.xlu0 0
  %154 = vperm.xlu0 %153, %v120
  %v155 = vpop.permute.xlu0 %154
  %158 = vset.pattern.permute.xlu0 0
  %159 = vperm.xlu0 %158, %v121
  %v160 = vpop.permute.xlu0 %159
  %v186 = vunpack.c.l.b16 %v18
  %v187 = vunpack.c.h.b16 %v18
  %v188 = vunpack.c.l.b16 %v19
  %v189 = vunpack.c.h.b16 %v19
  %v190 = vunpack.c.l.b16 %v20
  %v191 = vunpack.c.l.b16 %v21
  %v192 = vunpack.c.h.b16 %v21
  %v193 = vunpack.c.l.b16 %v22
  %v194 = vunpack.c.h.b16 %v22
  %v195 = vunpack.c.l.b16 %v23
  %v196 = vunpack.c.l.b16 %v24
  %v197 = vunpack.c.h.b16 %v24
  %v198 = vunpack.c.l.b16 %v25
  %v199 = vunpack.c.h.b16 %v25
  %v200 = vunpack.c.l.b16 %v26
  %v201 = vunpack.c.l.b16 %v27
  %v202 = vunpack.c.h.b16 %v27
  %v203 = vunpack.c.l.b16 %v28
  %v204 = vunpack.c.h.b16 %v28
  %v205 = vunpack.c.l.b16 %v29
  %v206 = vunpack.c.l.b16 %v30
  %v207 = vunpack.c.h.b16 %v30
  %v208 = vunpack.c.l.b16 %v31
  %v209 = vunpack.c.h.b16 %v31
  %v210 = vunpack.c.l.b16 %v32
  %v211 = vunpack.c.l.b16 %v33
  %v212 = vunpack.c.h.b16 %v33
  %v213 = vunpack.c.l.b16 %v34
  %v214 = vunpack.c.h.b16 %v34
  %v215 = vunpack.c.l.b16 %v35
  %v216 = vunpack.c.l.b16 %v36
  %v217 = vunpack.c.h.b16 %v36
  %v218 = vunpack.c.l.b16 %v37
  %v219 = vunpack.c.h.b16 %v37
  %v220 = vunpack.c.l.b16 %v38
  %v221 = vunpack.c.l.b16 %v39
  %v222 = vunpack.c.h.b16 %v39
  %v223 = vunpack.c.l.b16 %v40
  %v224 = vunpack.c.h.b16 %v40
  %v225 = vunpack.c.l.b16 %v41
  %v226 = vpack.c.b16 %v191, %v186
  %v227 = vpack.c.b16 %v192, %v187
  %v228 = vpack.c.b16 %v193, %v188
  %v229 = vpack.c.b16 %v194, %v189
  %v230 = vpack.c.b16 %v195, %v190
  %v231 = vpack.c.b16 %v201, %v196
  %v232 = vpack.c.b16 %v202, %v197
  %v233 = vpack.c.b16 %v203, %v198
  %v234 = vpack.c.b16 %v204, %v199
  %v235 = vpack.c.b16 %v205, %v200
  %v236 = vpack.c.b16 %v211, %v206
  %v237 = vpack.c.b16 %v212, %v207
  %v238 = vpack.c.b16 %v213, %v208
  %v239 = vpack.c.b16 %v214, %v209
  %v240 = vpack.c.b16 %v215, %v210
  %v241 = vpack.c.b16 %v221, %v216
  %v242 = vpack.c.b16 %v222, %v217
  %v243 = vpack.c.b16 %v223, %v218
  %v244 = vpack.c.b16 %v224, %v219
  %v245 = vpack.c.b16 %v225, %v220
  %v334 = vunpack.c.l.b16 %v42
  %v335 = vunpack.c.l.b16 %v43
  %v336 = vunpack.c.l.b16 %v44
  %v337 = vunpack.c.l.b16 %v45
  %v338 = vunpack.c.l.b16 %v46
  %v339 = vunpack.c.l.b16 %v47
  %v340 = vunpack.c.l.b16 %v48
  %v341 = vunpack.c.l.b16 %v49
  %v342 = vunpack.c.l.b16 %v50
  %v343 = vunpack.c.l.b16 %v51
  %v344 = vunpack.c.l.b16 %v52
  %v345 = vunpack.c.l.b16 %v53
  %v346 = vunpack.c.l.b16 %v54
  %v347 = vunpack.c.l.b16 %v55
  %v348 = vunpack.c.l.b16 %v56
  %v349 = vunpack.c.l.b16 %v57
  %v350 = vunpack.c.l.b16 %v58
  %v351 = vunpack.c.l.b16 %v59
  %v352 = vunpack.c.l.b16 %v60
  %v353 = vunpack.c.l.b16 %v61
  %v354 = vunpack.c.l.b16 %v62
  %v355 = vunpack.c.l.b16 %v63
  %v356 = vunpack.c.l.b16 %v64
  %v357 = vunpack.c.l.b16 %v65
  %v358 = vunpack.c.l.b16 %v66
  %v359 = vunpack.c.l.b16 %v67
  %v360 = vunpack.c.l.b16 %v68
  %v361 = vunpack.c.l.b16 %v69
  %v362 = vunpack.c.l.b16 %v70
  %v363 = vunpack.c.l.b16 %v71
  %v364 = vunpack.c.l.b16 %v72
  %v365 = vunpack.c.l.b16 %v73
  %v366 = vunpack.c.l.b16 %v74
  %v367 = vunpack.c.l.b16 %v75
  %v368 = vunpack.c.l.b16 %v76
  %v369 = vunpack.c.l.b16 %v77
  %v370 = vunpack.c.l.b16 %v78
  %v371 = vunpack.c.l.b16 %v79
  %v372 = vunpack.c.l.b16 %v80
  %v373 = vunpack.c.l.b16 %v81
  %v374 = vunpack.c.l.b16 %v82
  %v375 = vunpack.c.l.b16 %v83
  %v376 = vunpack.c.l.b16 %v84
  %v377 = vunpack.c.l.b16 %v85
  %v378 = vunpack.c.l.b16 %v86
  %v379 = vunpack.c.l.b16 %v87
  %v380 = vunpack.c.l.b16 %v88
  %v381 = vunpack.c.l.b16 %v89
  %v382 = vunpack.c.l.b16 %v90
  %v383 = vunpack.c.l.b16 %v91
  %v384 = vunpack.c.l.b16 %v92
  %v385 = vunpack.c.l.b16 %v93
  %v386 = vunpack.c.l.b16 %v94
  %v387 = vunpack.c.l.b16 %v95
  %v388 = vunpack.c.l.b16 %v96
  %v389 = vunpack.c.l.b16 %v97
  %v390 = vunpack.c.l.b16 %v98
  %v391 = vunpack.c.l.b16 %v99
  %v392 = vunpack.c.l.b16 %v100
  %v393 = vunpack.c.l.b16 %v101
  %v394 = vunpack.c.l.b16 %v102
  %v395 = vunpack.c.l.b16 %v103
  %v396 = vunpack.c.l.b16 %v104
  %v397 = vunpack.c.l.b16 %v105
  %v398 = vunpack.c.l.b16 %v106
  %v399 = vunpack.c.l.b16 %v107
  %v400 = vunpack.c.l.b16 %v108
  %v401 = vunpack.c.l.b16 %v109
  %v402 = vunpack.c.l.b16 %v110
  %v403 = vunpack.c.l.b16 %v111
  %v404 = vunpack.c.l.b16 %v112
  %v405 = vunpack.c.l.b16 %v113
  %v406 = vpack.c.b16 %v335, %v334
  %v407 = vpack.c.b16 %v337, %v336
  %v408 = vpack.c.b16 %v339, %v338
  %v409 = vpack.c.b16 %v341, %v340
  %v410 = vpack.c.b16 %v343, %v342
  %v411 = vpack.c.b16 %v345, %v344
  %v412 = vpack.c.b16 %v347, %v346
  %v413 = vpack.c.b16 %v349, %v348
  %v414 = vpack.c.b16 %v351, %v350
  %v415 = vpack.c.b16 %v353, %v352
  %v416 = vpack.c.b16 %v355, %v354
  %v417 = vpack.c.b16 %v357, %v356
  %v418 = vpack.c.b16 %v359, %v358
  %v419 = vpack.c.b16 %v361, %v360
  %v420 = vpack.c.b16 %v363, %v362
  %v421 = vpack.c.b16 %v365, %v364
  %v422 = vpack.c.b16 %v367, %v366
  %v423 = vpack.c.b16 %v369, %v368
  %v424 = vpack.c.b16 %v371, %v370
  %v425 = vpack.c.b16 %v373, %v372
  %v426 = vpack.c.b16 %v375, %v374
  %v427 = vpack.c.b16 %v377, %v376
  %v428 = vpack.c.b16 %v379, %v378
  %v429 = vpack.c.b16 %v381, %v380
  %v430 = vpack.c.b16 %v383, %v382
  %v431 = vpack.c.b16 %v385, %v384
  %v432 = vpack.c.b16 %v387, %v386
  %v433 = vpack.c.b16 %v389, %v388
  %v434 = vpack.c.b16 %v391, %v390
  %v435 = vpack.c.b16 %v393, %v392
  %v436 = vpack.c.b16 %v395, %v394
  %v437 = vpack.c.b16 %v397, %v396
  %v438 = vpack.c.b16 %v399, %v398
  %v439 = vpack.c.b16 %v401, %v400
  %v440 = vpack.c.b16 %v403, %v402
  %v441 = vpack.c.b16 %v405, %v404
  %vm478 = vcmask 523264
  %v480 = vsel %vm478, %v230, 0
  %v483 = vsel %vm478, %v235, 0
  %v486 = vsel %vm478, %v240, 0
  %v489 = vsel %vm478, %v245, 0
  %491 = vmatpush.bf16.msra.mxu0 %v413
  %492 = vmatpush.bf16.msra.mxu0 %v412
  %493 = vmatpush.bf16.msra.mxu0 %v411
  %494 = vmatpush.bf16.msra.mxu0 %v410
  %495 = vmatpush.bf16.msra.mxu0 %v409
  %496 = vmatpush.bf16.msra.mxu0 %v408
  %497 = vmatpush.bf16.msra.mxu0 %v407
  %498 = vmatpush.bf16.msra.mxu0 %v406
  %499 = vmatmul.bf16.gmra.mxu0 %v226
  %v500 = vpop.f32.mrf.mxu0
  %v501 = vadd.f32 %v125, %v500
  %v502 = vpop.f32.mrf.mxu0
  %v503 = vadd.f32 %v130, %v502
  %504 = vmatmul.bf16.gmra.mxu0 %v231
  %v505 = vpop.f32.mrf.mxu0
  %v506 = vadd.f32 %v135, %v505
  %v507 = vpop.f32.mrf.mxu0
  %v508 = vadd.f32 %v140, %v507
  %509 = vmatmul.bf16.gmra.mxu0 %v236
  %v510 = vpop.f32.mrf.mxu0
  %v511 = vadd.f32 %v145, %v510
  %v512 = vpop.f32.mrf.mxu0
  %v513 = vadd.f32 %v150, %v512
  %514 = vmatmul.bf16.gmra.mxu0 %v241
  %v515 = vpop.f32.mrf.mxu0
  %v516 = vadd.f32 %v155, %v515
  %v517 = vpop.f32.mrf.mxu0
  %v518 = vadd.f32 %v160, %v517
  %519 = vdwg.mxu0
  %520 = vmatpush.bf16.msra.mxu0 %v421
  %521 = vmatpush.bf16.msra.mxu0 %v420
  %522 = vmatpush.bf16.msra.mxu0 %v419
  %523 = vmatpush.bf16.msra.mxu0 %v418
  %524 = vmatpush.bf16.msra.mxu0 %v417
  %525 = vmatpush.bf16.msra.mxu0 %v416
  %526 = vmatpush.bf16.msra.mxu0 %v415
  %527 = vmatpush.bf16.msra.mxu0 %v414
  %528 = vmatmul.bf16.gmra.mxu0 %v227
  %v529 = vpop.f32.mrf.mxu0
  %v530 = vadd.f32 %v501, %v529
  %v531 = vpop.f32.mrf.mxu0
  %v532 = vadd.f32 %v503, %v531
  %533 = vmatmul.bf16.gmra.mxu0 %v232
  %v534 = vpop.f32.mrf.mxu0
  %v535 = vadd.f32 %v506, %v534
  %v536 = vpop.f32.mrf.mxu0
  %v537 = vadd.f32 %v508, %v536
  %538 = vmatmul.bf16.gmra.mxu0 %v237
  %v539 = vpop.f32.mrf.mxu0
  %v540 = vadd.f32 %v511, %v539
  %v541 = vpop.f32.mrf.mxu0
  %v542 = vadd.f32 %v513, %v541
  %543 = vmatmul.bf16.gmra.mxu0 %v242
  %v544 = vpop.f32.mrf.mxu0
  %v545 = vadd.f32 %v516, %v544
  %v546 = vpop.f32.mrf.mxu0
  %v547 = vadd.f32 %v518, %v546
  %548 = vdwg.mxu0
  %549 = vmatpush.bf16.msra.mxu0 %v429
  %550 = vmatpush.bf16.msra.mxu0 %v428
  %551 = vmatpush.bf16.msra.mxu0 %v427
  %552 = vmatpush.bf16.msra.mxu0 %v426
  %553 = vmatpush.bf16.msra.mxu0 %v425
  %554 = vmatpush.bf16.msra.mxu0 %v424
  %555 = vmatpush.bf16.msra.mxu0 %v423
  %556 = vmatpush.bf16.msra.mxu0 %v422
  %557 = vmatmul.bf16.gmra.mxu0 %v228
  %v558 = vpop.f32.mrf.mxu0
  %v559 = vadd.f32 %v530, %v558
  %v560 = vpop.f32.mrf.mxu0
  %v561 = vadd.f32 %v532, %v560
  %562 = vmatmul.bf16.gmra.mxu0 %v233
  %v563 = vpop.f32.mrf.mxu0
  %v564 = vadd.f32 %v535, %v563
  %v565 = vpop.f32.mrf.mxu0
  %v566 = vadd.f32 %v537, %v565
  %567 = vmatmul.bf16.gmra.mxu0 %v238
  %v568 = vpop.f32.mrf.mxu0
  %v569 = vadd.f32 %v540, %v568
  %v570 = vpop.f32.mrf.mxu0
  %v571 = vadd.f32 %v542, %v570
  %572 = vmatmul.bf16.gmra.mxu0 %v243
  %v573 = vpop.f32.mrf.mxu0
  %v574 = vadd.f32 %v545, %v573
  %v575 = vpop.f32.mrf.mxu0
  %v576 = vadd.f32 %v547, %v575
  %577 = vdwg.mxu0
  %578 = vmatpush.bf16.msra.mxu0 %v437
  %579 = vmatpush.bf16.msra.mxu0 %v436
  %580 = vmatpush.bf16.msra.mxu0 %v435
  %581 = vmatpush.bf16.msra.mxu0 %v434
  %582 = vmatpush.bf16.msra.mxu0 %v433
  %583 = vmatpush.bf16.msra.mxu0 %v432
  %584 = vmatpush.bf16.msra.mxu0 %v431
  %585 = vmatpush.bf16.msra.mxu0 %v430
  %586 = vmatmul.bf16.gmra.mxu0 %v229
  %v587 = vpop.f32.mrf.mxu0
  %v588 = vadd.f32 %v559, %v587
  %v589 = vpop.f32.mrf.mxu0
  %v590 = vadd.f32 %v561, %v589
  %591 = vmatmul.bf16.gmra.mxu0 %v234
  %v592 = vpop.f32.mrf.mxu0
  %v593 = vadd.f32 %v564, %v592
  %v594 = vpop.f32.mrf.mxu0
  %v595 = vadd.f32 %v566, %v594
  %596 = vmatmul.bf16.gmra.mxu0 %v239
  %v597 = vpop.f32.mrf.mxu0
  %v598 = vadd.f32 %v569, %v597
  %v599 = vpop.f32.mrf.mxu0
  %v600 = vadd.f32 %v571, %v599
  %601 = vmatmul.bf16.gmra.mxu0 %v244
  %v602 = vpop.f32.mrf.mxu0
  %v603 = vadd.f32 %v574, %v602
  %v604 = vpop.f32.mrf.mxu0
  %v605 = vadd.f32 %v576, %v604
  %606 = vdwg.mxu0
  %607 = vmatpush.bf16.msra.mxu0 0
  %608 = vmatpush.bf16.msra.mxu0 0
  %609 = vmatpush.bf16.msra.mxu0 0
  %610 = vmatpush.bf16.msra.mxu0 0
  %611 = vmatpush.bf16.msra.mxu0 %v441
  %612 = vmatpush.bf16.msra.mxu0 %v440
  %613 = vmatpush.bf16.msra.mxu0 %v439
  %614 = vmatpush.bf16.msra.mxu0 %v438
  %615 = vmatmul.bf16.gmra.mxu0 %v480
  %v616 = vpop.f32.mrf.mxu0
  %v617 = vadd.f32 %v588, %v616
  %v618 = vpop.f32.mrf.mxu0
  %v619 = vadd.f32 %v590, %v618
  %620 = vmatmul.bf16.gmra.mxu0 %v483
  %v621 = vpop.f32.mrf.mxu0
  %v622 = vadd.f32 %v593, %v621
  %v623 = vpop.f32.mrf.mxu0
  %v624 = vadd.f32 %v595, %v623
  %625 = vmatmul.bf16.gmra.mxu0 %v486
  %v626 = vpop.f32.mrf.mxu0
  %v627 = vadd.f32 %v598, %v626
  %v628 = vpop.f32.mrf.mxu0
  %v629 = vadd.f32 %v600, %v628
  %630 = vmatmul.bf16.gmra.mxu0 %v489
  %v631 = vpop.f32.mrf.mxu0
  %v632 = vadd.f32 %v603, %v631
  %v633 = vpop.f32.mrf.mxu0
  %v634 = vadd.f32 %v605, %v633
  %635 = vdwg.mxu0
  %v636 = vld [vmem:[%s3] sm:$0xff]
  %v637 = vld [vmem:[%s3 + $0x8] sm:$0xff]
  %v638 = vld [vmem:[%s3 + $0x10] sm:$0xff]
  %v639 = vld [vmem:[%s3 + $0x18] sm:$0xff]
  %v640 = vld [vmem:[%s3 + $0x20] sm:$0xff]
  %v641 = vld [vmem:[%s3 + $0x28] sm:$0xff]
  %v642 = vld [vmem:[%s3 + $0x30] sm:$0xff]
  %v643 = vld [vmem:[%s3 + $0x38] sm:$0xff]
  %v644 = vadd.f32 %v617, %v636
  %v645 = vadd.f32 %v619, %v637
  %v646 = vadd.f32 %v622, %v638
  %v647 = vadd.f32 %v624, %v639
  %v648 = vadd.f32 %v627, %v640
  %v649 = vadd.f32 %v629, %v641
  %v650 = vadd.f32 %v632, %v642
  %v651 = vadd.f32 %v634, %v643
  %v652 = vmax.f32 %v644, 0.0
  %v653 = vmax.f32 %v645, 0.0
  %v654 = vmax.f32 %v646, 0.0
  %v655 = vmax.f32 %v647, 0.0
  %v656 = vmax.f32 %v648, 0.0
  %v657 = vmax.f32 %v649, 0.0
  %v658 = vmax.f32 %v650, 0.0
  %v659 = vmax.f32 %v651, 0.0
  %660 = vst [vmem:[%s4] sm:$0xff] %v652
  %661 = vst [vmem:[%s4 + $0x8] sm:$0xff] %v653
  %662 = vst [vmem:[%s4 + $0x10] sm:$0xff] %v654
  %663 = vst [vmem:[%s4 + $0x18] sm:$0xff] %v655
  %664 = vst [vmem:[%s4 + $0x20] sm:$0xff] %v656
  %665 = vst [vmem:[%s4 + $0x28] sm:$0xff] %v657
  %666 = vst [vmem:[%s4 + $0x30] sm:$0xff] %v658
  %667 = vst [vmem:[%s4 + $0x38] sm:$0xff] %v659
  // Predicated region
  $region18: #{chained_forward.24} parent=0 // pred_check
    _
  $region19: #{chained_forward.24} parent=0 // pred_check_branch
    %669 = sbr.rel (0) target = $region21
  $region20: #{chained_forward.24} parent=0 // pred_region
    _
  $region21: #{chained_forward.24} parent=0 // pred_fallthru
    _
  // Predicated region
  $region22: #{chained_forward.24} parent=0 // pred_check
    _
  $region23: #{chained_forward.24} parent=0 // pred_check_branch
    %671 = sbr.rel (0) target = $region25
  $region24: #{chained_forward.24} parent=0 // pred_region
    _
  $region25: #{chained_forward.24} parent=0 // pred_fallthru
    _

// kernel: chained_forward.30
$region0: #{chained_forward.30}
  #allocation0 [shape = 'u32[]', space=smem, size = 0x4, offset = 0x4, fixed_abs, tag = 'smem constant byte address 0x4 - core index']
  #allocation1 [shape = 'u32[72,128]{1,0:T(1,128)}', space=vmem, size = 0x9000, scoped, tag = 'internal scratch']
  %s0 = inlined_call_operand.vmem [shape: bf16[64,576], index: 0, kind: input, shape index: {}]
  %s1 = inlined_call_operand.vmem [shape: bf16[576,128], index: 1, kind: input, shape index: {}]
  %s2 = inlined_call_operand.vmem [shape: f32[64,1], index: 2, kind: input, shape index: {}]
  %s3 = inlined_call_operand.vmem [shape: f32[64,128], index: 3, kind: input, shape index: {}]
  %s4 = inlined_call_operand.vmem [shape: f32[64,128], index: 4, kind: output, shape index: {}]
  %s5 = sld [smem:[#allocation0]]
  $region26: #{chained_forward.30} parent=0
    _
  %s7 = ssub.s32 1, %s5
  %s8 = scalar_select 0, %s7, %s5
  // Predicated region
  $region2: #{chained_forward.30} parent=0 // pred_check
    _
  $region3: #{chained_forward.30} parent=0 // pred_check_branch
    %10 = sbr.rel (0) target = $region5
  $region4: #{chained_forward.30} parent=0 // pred_region
    _
  $region5: #{chained_forward.30} parent=0 // pred_fallthru
    _
  // Predicated region
  $region6: #{chained_forward.30} parent=0 // pred_check
    _
  $region7: #{chained_forward.30} parent=0 // pred_check_branch
    %12 = sbr.rel (0) target = $region9
  $region8: #{chained_forward.30} parent=0 // pred_region
    _
  $region9: #{chained_forward.30} parent=0 // pred_fallthru
    _
  // Predicated region
  $region10: #{chained_forward.30} parent=0 // pred_check
    _
  $region11: #{chained_forward.30} parent=0 // pred_check_branch
    %14 = sbr.rel (0) target = $region13
  $region12: #{chained_forward.30} parent=0 // pred_region
    _
  $region13: #{chained_forward.30} parent=0 // pred_fallthru
    _
  // Predicated region
  $region14: #{chained_forward.30} parent=0 // pred_check
    _
  $region15: #{chained_forward.30} parent=0 // pred_check_branch
    %16 = sbr.rel (0) target = $region17
  $region16: #{chained_forward.30} parent=0 // pred_region
    _
  $region17: #{chained_forward.30} parent=0 // pred_fallthru
    _
  %v18 = vld [vmem:[%s0] sm:$0xff]
  %v19 = vld [vmem:[%s0 + $0x8] sm:$0xff]
  %v20 = vld [vmem:[%s0 + $0x10] sm:$0xf]
  %v21 = vld [vmem:[%s0 + $0x14] sm:$0xff]
  %v22 = vld [vmem:[%s0 + $0x1c] sm:$0xff]
  %v23 = vld [vmem:[%s0 + $0x24] sm:$0xf]
  %v24 = vld [vmem:[%s0 + $0x28] sm:$0xff]
  %v25 = vld [vmem:[%s0 + $0x30] sm:$0xff]
  %v26 = vld [vmem:[%s0 + $0x38] sm:$0xf]
  %v27 = vld [vmem:[%s0 + $0x3c] sm:$0xff]
  %v28 = vld [vmem:[%s0 + $0x44] sm:$0xff]
  %v29 = vld [vmem:[%s0 + $0x4c] sm:$0xf]
  %v30 = vld [vmem:[%s0 + $0x50] sm:$0xff]
  %v31 = vld [vmem:[%s0 + $0x58] sm:$0xff]
  %v32 = vld [vmem:[%s0 + $0x60] sm:$0xf]
  %v33 = vld [vmem:[%s0 + $0x64] sm:$0xff]
  %v34 = vld [vmem:[%s0 + $0x6c] sm:$0xff]
  %v35 = vld [vmem:[%s0 + $0x74] sm:$0xf]
  %v36 = vld [vmem:[%s0 + $0x78] sm:$0xff]
  %v37 = vld [vmem:[%s0 + $0x80] sm:$0xff]
  %v38 = vld [vmem:[%s0 + $0x88] sm:$0xf]
  %v39 = vld [vmem:[%s0 + $0x8c] sm:$0xff]
  %v40 = vld [vmem:[%s0 + $0x94] sm:$0xff]
  %v41 = vld [vmem:[%s0 + $0x9c] sm:$0xf]
  %v42 = vld [vmem:[%s1] sm:$0xf]
  %v43 = vld [vmem:[%s1 + $0x4] sm:$0xf]
  %v44 = vld [vmem:[%s1 + $0x8] sm:$0xf]
  %v45 = vld [vmem:[%s1 + $0xc] sm:$0xf]
  %v46 = vld [vmem:[%s1 + $0x10] sm:$0xf]
  %v47 = vld [vmem:[%s1 + $0x14] sm:$0xf]
  %v48 = vld [vmem:[%s1 + $0x18] sm:$0xf]
  %v49 = vld [vmem:[%s1 + $0x1c] sm:$0xf]
  %v50 = vld [vmem:[%s1 + $0x20] sm:$0xf]
  %v51 = vld [vmem:[%s1 + $0x24] sm:$0xf]
  %v52 = vld [vmem:[%s1 + $0x28] sm:$0xf]
  %v53 = vld [vmem:[%s1 + $0x2c] sm:$0xf]
  %v54 = vld [vmem:[%s1 + $0x30] sm:$0xf]
  %v55 = vld [vmem:[%s1 + $0x34] sm:$0xf]
  %v56 = vld [vmem:[%s1 + $0x38] sm:$0xf]
  %v57 = vld [vmem:[%s1 + $0x3c] sm:$0xf]
  %v58 = vld [vmem:[%s1 + $0x40] sm:$0xf]
  %v59 = vld [vmem:[%s1 + $0x44] sm:$0xf]
  %v60 = vld [vmem:[%s1 + $0x48] sm:$0xf]
  %v61 = vld [vmem:[%s1 + $0x4c] sm:$0xf]
  %v62 = vld [vmem:[%s1 + $0x50] sm:$0xf]
  %v63 = vld [vmem:[%s1 + $0x54] sm:$0xf]
  %v64 = vld [vmem:[%s1 + $0x58] sm:$0xf]
  %v65 = vld [vmem:[%s1 + $0x5c] sm:$0xf]
  %v66 = vld [vmem:[%s1 + $0x60] sm:$0xf]
  %v67 = vld [vmem:[%s1 + $0x64] sm:$0xf]
  %v68 = vld [vmem:[%s1 + $0x68] sm:$0xf]
  %v69 = vld [vmem:[%s1 + $0x6c] sm:$0xf]
  %v70 = vld [vmem:[%s1 + $0x70] sm:$0xf]
  %v71 = vld [vmem:[%s1 + $0x74] sm:$0xf]
  %v72 = vld [vmem:[%s1 + $0x78] sm:$0xf]
  %v73 = vld [vmem:[%s1 + $0x7c] sm:$0xf]
  %v74 = vld [vmem:[%s1 + $0x80] sm:$0xf]
  %v75 = vld [vmem:[%s1 + $0x84] sm:$0xf]
  %v76 = vld [vmem:[%s1 + $0x88] sm:$0xf]
  %v77 = vld [vmem:[%s1 + $0x8c] sm:$0xf]
  %v78 = vld [vmem:[%s1 + $0x90] sm:$0xf]
  %v79 = vld [vmem:[%s1 + $0x94] sm:$0xf]
  %v80 = vld [vmem:[%s1 + $0x98] sm:$0xf]
  %v81 = vld [vmem:[%s1 + $0x9c] sm:$0xf]
  %v82 = vld [vmem:[%s1 + $0xa0] sm:$0xf]
  %v83 = vld [vmem:[%s1 + $0xa4] sm:$0xf]
  %v84 = vld [vmem:[%s1 + $0xa8] sm:$0xf]
  %v85 = vld [vmem:[%s1 + $0xac] sm:$0xf]
  %v86 = vld [vmem:[%s1 + $0xb0] sm:$0xf]
  %v87 = vld [vmem:[%s1 + $0xb4] sm:$0xf]
  %v88 = vld [vmem:[%s1 + $0xb8] sm:$0xf]
  %v89 = vld [vmem:[%s1 + $0xbc] sm:$0xf]
  %v90 = vld [vmem:[%s1 + $0xc0] sm:$0xf]
  %v91 = vld [vmem:[%s1 + $0xc4] sm:$0xf]
  %v92 = vld [vmem:[%s1 + $0xc8] sm:$0xf]
  %v93 = vld [vmem:[%s1 + $0xcc] sm:$0xf]
  %v94 = vld [vmem:[%s1 + $0xd0] sm:$0xf]
  %v95 = vld [vmem:[%s1 + $0xd4] sm:$0xf]
  %v96 = vld [vmem:[%s1 + $0xd8] sm:$0xf]
  %v97 = vld [vmem:[%s1 + $0xdc] sm:$0xf]
  %v98 = vld [vmem:[%s1 + $0xe0] sm:$0xf]
  %v99 = vld [vmem:[%s1 + $0xe4] sm:$0xf]
  %v100 = vld [vmem:[%s1 + $0xe8] sm:$0xf]
  %v101 = vld [vmem:[%s1 + $0xec] sm:$0xf]
  %v102 = vld [vmem:[%s1 + $0xf0] sm:$0xf]
  %v103 = vld [vmem:[%s1 + $0xf4] sm:$0xf]
  %v104 = vld [vmem:[%s1 + $0xf8] sm:$0xf]
  %v105 = vld [vmem:[%s1 + $0xfc] sm:$0xf]
  %v106 = vld [vmem:[%s1 + $0x100] sm:$0xf]
  %v107 = vld [vmem:[%s1 + $0x104] sm:$0xf]
  %v108 = vld [vmem:[%s1 + $0x108] sm:$0xf]
  %v109 = vld [vmem:[%s1 + $0x10c] sm:$0xf]
  %v110 = vld [vmem:[%s1 + $0x110] sm:$0xf]
  %v111 = vld [vmem:[%s1 + $0x114] sm:$0xf]
  %v112 = vld [vmem:[%s1 + $0x118] sm:$0xf]
  %v113 = vld [vmem:[%s1 + $0x11c] sm:$0xf]
  %v114 = vld [vmem:[%s2] sm:$0xff]
  %v115 = vld [vmem:[%s2 + $0x8] sm:$0xff]
  %v116 = vld [vmem:[%s2 + $0x10] sm:$0xff]
  %v117 = vld [vmem:[%s2 + $0x18] sm:$0xff]
  %v118 = vld [vmem:[%s2 + $0x20] sm:$0xff]
  %v119 = vld [vmem:[%s2 + $0x28] sm:$0xff]
  %v120 = vld [vmem:[%s2 + $0x30] sm:$0xff]
  %v121 = vld [vmem:[%s2 + $0x38] sm:$0xff]
  %123 = vset.pattern.permute.xlu0 0
  %124 = vperm.xlu0 %123, %v114
  %v125 = vpop.permute.xlu0 %124
  %128 = vset.pattern.permute.xlu0 0
  %129 = vperm.xlu0 %128, %v115
  %v130 = vpop.permute.xlu0 %129
  %133 = vset.pattern.permute.xlu0 0
  %134 = vperm.xlu0 %133, %v116
  %v135 = vpop.permute.xlu0 %134
  %138 = vset.pattern.permute.xlu0 0
  %139 = vperm.xlu0 %138, %v117
  %v140 = vpop.permute.xlu0 %139
  %143 = vset.pattern.permute.xlu0 0
  %144 = vperm.xlu0 %143, %v118
  %v145 = vpop.permute.xlu0 %144
  %148 = vset.pattern.permute.xlu0 0
  %149 = vperm.xlu0 %148, %v119
  %v150 = vpop.permute.xlu0 %149
  %153 = vset.pattern.permute.xlu0 0
  %154 = vperm.xlu0 %153, %v120
  %v155 = vpop.permute.xlu0 %154
  %158 = vset.pattern.permute.xlu0 0
  %159 = vperm.xlu0 %158, %v121
  %v160 = vpop.permute.xlu0 %159
  %v186 = vunpack.c.l.b16 %v18
  %v187 = vunpack.c.h.b16 %v18
  %v188 = vunpack.c.l.b16 %v19
  %v189 = vunpack.c.h.b16 %v19
  %v190 = vunpack.c.l.b16 %v20
  %v191 = vunpack.c.l.b16 %v21
  %v192 = vunpack.c.h.b16 %v21
  %v193 = vunpack.c.l.b16 %v22
  %v194 = vunpack.c.h.b16 %v22
  %v195 = vunpack.c.l.b16 %v23
  %v196 = vunpack.c.l.b16 %v24
  %v197 = vunpack.c.h.b16 %v24
  %v198 = vunpack.c.l.b16 %v25
  %v199 = vunpack.c.h.b16 %v25
  %v200 = vunpack.c.l.b16 %v26
  %v201 = vunpack.c.l.b16 %v27
  %v202 = vunpack.c.h.b16 %v27
  %v203 = vunpack.c.l.b16 %v28
  %v204 = vunpack.c.h.b16 %v28
  %v205 = vunpack.c.l.b16 %v29
  %v206 = vunpack.c.l.b16 %v30
  %v207 = vunpack.c.h.b16 %v30
  %v208 = vunpack.c.l.b16 %v31
  %v209 = vunpack.c.h.b16 %v31
  %v210 = vunpack.c.l.b16 %v32
  %v211 = vunpack.c.l.b16 %v33
  %v212 = vunpack.c.h.b16 %v33
  %v213 = vunpack.c.l.b16 %v34
  %v214 = vunpack.c.h.b16 %v34
  %v215 = vunpack.c.l.b16 %v35
  %v216 = vunpack.c.l.b16 %v36
  %v217 = vunpack.c.h.b16 %v36
  %v218 = vunpack.c.l.b16 %v37
  %v219 = vunpack.c.h.b16 %v37
  %v220 = vunpack.c.l.b16 %v38
  %v221 = vunpack.c.l.b16 %v39
  %v222 = vunpack.c.h.b16 %v39
  %v223 = vunpack.c.l.b16 %v40
  %v224 = vunpack.c.h.b16 %v40
  %v225 = vunpack.c.l.b16 %v41
  %v226 = vpack.c.b16 %v191, %v186
  %v227 = vpack.c.b16 %v192, %v187
  %v228 = vpack.c.b16 %v193, %v188
  %v229 = vpack.c.b16 %v194, %v189
  %v230 = vpack.c.b16 %v195, %v190
  %v231 = vpack.c.b16 %v201, %v196
  %v232 = vpack.c.b16 %v202, %v197
  %v233 = vpack.c.b16 %v203, %v198
  %v234 = vpack.c.b16 %v204, %v199
  %v235 = vpack.c.b16 %v205, %v200
  %v236 = vpack.c.b16 %v211, %v206
  %v237 = vpack.c.b16 %v212, %v207
  %v238 = vpack.c.b16 %v213, %v208
  %v239 = vpack.c.b16 %v214, %v209
  %v240 = vpack.c.b16 %v215, %v210
  %v241 = vpack.c.b16 %v221, %v216
  %v242 = vpack.c.b16 %v222, %v217
  %v243 = vpack.c.b16 %v223, %v218
  %v244 = vpack.c.b16 %v224, %v219
  %v245 = vpack.c.b16 %v225, %v220
  %v334 = vunpack.c.l.b16 %v42
  %v335 = vunpack.c.l.b16 %v43
  %v336 = vunpack.c.l.b16 %v44
  %v337 = vunpack.c.l.b16 %v45
  %v338 = vunpack.c.l.b16 %v46
  %v339 = vunpack.c.l.b16 %v47
  %v340 = vunpack.c.l.b16 %v48
  %v341 = vunpack.c.l.b16 %v49
  %v342 = vunpack.c.l.b16 %v50
  %v343 = vunpack.c.l.b16 %v51
  %v344 = vunpack.c.l.b16 %v52
  %v345 = vunpack.c.l.b16 %v53
  %v346 = vunpack.c.l.b16 %v54
  %v347 = vunpack.c.l.b16 %v55
  %v348 = vunpack.c.l.b16 %v56
  %v349 = vunpack.c.l.b16 %v57
  %v350 = vunpack.c.l.b16 %v58
  %v351 = vunpack.c.l.b16 %v59
  %v352 = vunpack.c.l.b16 %v60
  %v353 = vunpack.c.l.b16 %v61
  %v354 = vunpack.c.l.b16 %v62
  %v355 = vunpack.c.l.b16 %v63
  %v356 = vunpack.c.l.b16 %v64
  %v357 = vunpack.c.l.b16 %v65
  %v358 = vunpack.c.l.b16 %v66
  %v359 = vunpack.c.l.b16 %v67
  %v360 = vunpack.c.l.b16 %v68
  %v361 = vunpack.c.l.b16 %v69
  %v362 = vunpack.c.l.b16 %v70
  %v363 = vunpack.c.l.b16 %v71
  %v364 = vunpack.c.l.b16 %v72
  %v365 = vunpack.c.l.b16 %v73
  %v366 = vunpack.c.l.b16 %v74
  %v367 = vunpack.c.l.b16 %v75
  %v368 = vunpack.c.l.b16 %v76
  %v369 = vunpack.c.l.b16 %v77
  %v370 = vunpack.c.l.b16 %v78
  %v371 = vunpack.c.l.b16 %v79
  %v372 = vunpack.c.l.b16 %v80
  %v373 = vunpack.c.l.b16 %v81
  %v374 = vunpack.c.l.b16 %v82
  %v375 = vunpack.c.l.b16 %v83
  %v376 = vunpack.c.l.b16 %v84
  %v377 = vunpack.c.l.b16 %v85
  %v378 = vunpack.c.l.b16 %v86
  %v379 = vunpack.c.l.b16 %v87
  %v380 = vunpack.c.l.b16 %v88
  %v381 = vunpack.c.l.b16 %v89
  %v382 = vunpack.c.l.b16 %v90
  %v383 = vunpack.c.l.b16 %v91
  %v384 = vunpack.c.l.b16 %v92
  %v385 = vunpack.c.l.b16 %v93
  %v386 = vunpack.c.l.b16 %v94
  %v387 = vunpack.c.l.b16 %v95
  %v388 = vunpack.c.l.b16 %v96
  %v389 = vunpack.c.l.b16 %v97
  %v390 = vunpack.c.l.b16 %v98
  %v391 = vunpack.c.l.b16 %v99
  %v392 = vunpack.c.l.b16 %v100
  %v393 = vunpack.c.l.b16 %v101
  %v394 = vunpack.c.l.b16 %v102
  %v395 = vunpack.c.l.b16 %v103
  %v396 = vunpack.c.l.b16 %v104
  %v397 = vunpack.c.l.b16 %v105
  %v398 = vunpack.c.l.b16 %v106
  %v399 = vunpack.c.l.b16 %v107
  %v400 = vunpack.c.l.b16 %v108
  %v401 = vunpack.c.l.b16 %v109
  %v402 = vunpack.c.l.b16 %v110
  %v403 = vunpack.c.l.b16 %v111
  %v404 = vunpack.c.l.b16 %v112
  %v405 = vunpack.c.l.b16 %v113
  %v406 = vpack.c.b16 %v335, %v334
  %v407 = vpack.c.b16 %v337, %v336
  %v408 = vpack.c.b16 %v339, %v338
  %v409 = vpack.c.b16 %v341, %v340
  %v410 = vpack.c.b16 %v343, %v342
  %v411 = vpack.c.b16 %v345, %v344
  %v412 = vpack.c.b16 %v347, %v346
  %v413 = vpack.c.b16 %v349, %v348
  %v414 = vpack.c.b16 %v351, %v350
  %v415 = vpack.c.b16 %v353, %v352
  %v416 = vpack.c.b16 %v355, %v354
  %v417 = vpack.c.b16 %v357, %v356
  %v418 = vpack.c.b16 %v359, %v358
  %v419 = vpack.c.b16 %v361, %v360
  %v420 = vpack.c.b16 %v363, %v362
  %v421 = vpack.c.b16 %v365, %v364
  %v422 = vpack.c.b16 %v367, %v366
  %v423 = vpack.c.b16 %v369, %v368
  %v424 = vpack.c.b16 %v371, %v370
  %v425 = vpack.c.b16 %v373, %v372
  %v426 = vpack.c.b16 %v375, %v374
  %v427 = vpack.c.b16 %v377, %v376
  %v428 = vpack.c.b16 %v379, %v378
  %v429 = vpack.c.b16 %v381, %v380
  %v430 = vpack.c.b16 %v383, %v382
  %v431 = vpack.c.b16 %v385, %v384
  %v432 = vpack.c.b16 %v387, %v386
  %v433 = vpack.c.b16 %v389, %v388
  %v434 = vpack.c.b16 %v391, %v390
  %v435 = vpack.c.b16 %v393, %v392
  %v436 = vpack.c.b16 %v395, %v394
  %v437 = vpack.c.b16 %v397, %v396
  %v438 = vpack.c.b16 %v399, %v398
  %v439 = vpack.c.b16 %v401, %v400
  %v440 = vpack.c.b16 %v403, %v402
  %v441 = vpack.c.b16 %v405, %v404
  %vm478 = vcmask 523264
  %v480 = vsel %vm478, %v230, 0
  %v483 = vsel %vm478, %v235, 0
  %v486 = vsel %vm478, %v240, 0
  %v489 = vsel %vm478, %v245, 0
  %491 = vmatpush.bf16.msra.mxu0 %v413
  %492 = vmatpush.bf16.msra.mxu0 %v412
  %493 = vmatpush.bf16.msra.mxu0 %v411
  %494 = vmatpush.bf16.msra.mxu0 %v410
  %495 = vmatpush.bf16.msra.mxu0 %v409
  %496 = vmatpush.bf16.msra.mxu0 %v408
  %497 = vmatpush.bf16.msra.mxu0 %v407
  %498 = vmatpush.bf16.msra.mxu0 %v406
  %499 = vmatmul.bf16.gmra.mxu0 %v226
  %v500 = vpop.f32.mrf.mxu0
  %v501 = vadd.f32 %v125, %v500
  %v502 = vpop.f32.mrf.mxu0
  %v503 = vadd.f32 %v130, %v502
  %504 = vmatmul.bf16.gmra.mxu0 %v231
  %v505 = vpop.f32.mrf.mxu0
  %v506 = vadd.f32 %v135, %v505
  %v507 = vpop.f32.mrf.mxu0
  %v508 = vadd.f32 %v140, %v507
  %509 = vmatmul.bf16.gmra.mxu0 %v236
  %v510 = vpop.f32.mrf.mxu0
  %v511 = vadd.f32 %v145, %v510
  %v512 = vpop.f32.mrf.mxu0
  %v513 = vadd.f32 %v150, %v512
  %514 = vmatmul.bf16.gmra.mxu0 %v241
  %v515 = vpop.f32.mrf.mxu0
  %v516 = vadd.f32 %v155, %v515
  %v517 = vpop.f32.mrf.mxu0
  %v518 = vadd.f32 %v160, %v517
  %519 = vdwg.mxu0
  %520 = vmatpush.bf16.msra.mxu0 %v421
  %521 = vmatpush.bf16.msra.mxu0 %v420
  %522 = vmatpush.bf16.msra.mxu0 %v419
  %523 = vmatpush.bf16.msra.mxu0 %v418
  %524 = vmatpush.bf16.msra.mxu0 %v417
  %525 = vmatpush.bf16.msra.mxu0 %v416
  %526 = vmatpush.bf16.msra.mxu0 %v415
  %527 = vmatpush.bf16.msra.mxu0 %v414
  %528 = vmatmul.bf16.gmra.mxu0 %v227
  %v529 = vpop.f32.mrf.mxu0
  %v530 = vadd.f32 %v501, %v529
  %v531 = vpop.f32.mrf.mxu0
  %v532 = vadd.f32 %v503, %v531
  %533 = vmatmul.bf16.gmra.mxu0 %v232
  %v534 = vpop.f32.mrf.mxu0
  %v535 = vadd.f32 %v506, %v534
  %v536 = vpop.f32.mrf.mxu0
  %v537 = vadd.f32 %v508, %v536
  %538 = vmatmul.bf16.gmra.mxu0 %v237
  %v539 = vpop.f32.mrf.mxu0
  %v540 = vadd.f32 %v511, %v539
  %v541 = vpop.f32.mrf.mxu0
  %v542 = vadd.f32 %v513, %v541
  %543 = vmatmul.bf16.gmra.mxu0 %v242
  %v544 = vpop.f32.mrf.mxu0
  %v545 = vadd.f32 %v516, %v544
  %v546 = vpop.f32.mrf.mxu0
  %v547 = vadd.f32 %v518, %v546
  %548 = vdwg.mxu0
  %549 = vmatpush.bf16.msra.mxu0 %v429
  %550 = vmatpush.bf16.msra.mxu0 %v428
  %551 = vmatpush.bf16.msra.mxu0 %v427
  %552 = vmatpush.bf16.msra.mxu0 %v426
  %553 = vmatpush.bf16.msra.mxu0 %v425
  %554 = vmatpush.bf16.msra.mxu0 %v424
  %555 = vmatpush.bf16.msra.mxu0 %v423
  %556 = vmatpush.bf16.msra.mxu0 %v422
  %557 = vmatmul.bf16.gmra.mxu0 %v228
  %v558 = vpop.f32.mrf.mxu0
  %v559 = vadd.f32 %v530, %v558
  %v560 = vpop.f32.mrf.mxu0
  %v561 = vadd.f32 %v532, %v560
  %562 = vmatmul.bf16.gmra.mxu0 %v233
  %v563 = vpop.f32.mrf.mxu0
  %v564 = vadd.f32 %v535, %v563
  %v565 = vpop.f32.mrf.mxu0
  %v566 = vadd.f32 %v537, %v565
  %567 = vmatmul.bf16.gmra.mxu0 %v238
  %v568 = vpop.f32.mrf.mxu0
  %v569 = vadd.f32 %v540, %v568
  %v570 = vpop.f32.mrf.mxu0
  %v571 = vadd.f32 %v542, %v570
  %572 = vmatmul.bf16.gmra.mxu0 %v243
  %v573 = vpop.f32.mrf.mxu0
  %v574 = vadd.f32 %v545, %v573
  %v575 = vpop.f32.mrf.mxu0
  %v576 = vadd.f32 %v547, %v575
  %577 = vdwg.mxu0
  %578 = vmatpush.bf16.msra.mxu0 %v437
  %579 = vmatpush.bf16.msra.mxu0 %v436
  %580 = vmatpush.bf16.msra.mxu0 %v435
  %581 = vmatpush.bf16.msra.mxu0 %v434
  %582 = vmatpush.bf16.msra.mxu0 %v433
  %583 = vmatpush.bf16.msra.mxu0 %v432
  %584 = vmatpush.bf16.msra.mxu0 %v431
  %585 = vmatpush.bf16.msra.mxu0 %v430
  %586 = vmatmul.bf16.gmra.mxu0 %v229
  %v587 = vpop.f32.mrf.mxu0
  %v588 = vadd.f32 %v559, %v587
  %v589 = vpop.f32.mrf.mxu0
  %v590 = vadd.f32 %v561, %v589
  %591 = vmatmul.bf16.gmra.mxu0 %v234
  %v592 = vpop.f32.mrf.mxu0
  %v593 = vadd.f32 %v564, %v592
  %v594 = vpop.f32.mrf.mxu0
  %v595 = vadd.f32 %v566, %v594
  %596 = vmatmul.bf16.gmra.mxu0 %v239
  %v597 = vpop.f32.mrf.mxu0
  %v598 = vadd.f32 %v569, %v597
  %v599 = vpop.f32.mrf.mxu0
  %v600 = vadd.f32 %v571, %v599
  %601 = vmatmul.bf16.gmra.mxu0 %v244
  %v602 = vpop.f32.mrf.mxu0
  %v603 = vadd.f32 %v574, %v602
  %v604 = vpop.f32.mrf.mxu0
  %v605 = vadd.f32 %v576, %v604
  %606 = vdwg.mxu0
  %607 = vmatpush.bf16.msra.mxu0 0
  %608 = vmatpush.bf16.msra.mxu0 0
  %609 = vmatpush.bf16.msra.mxu0 0
  %610 = vmatpush.bf16.msra.mxu0 0
  %611 = vmatpush.bf16.msra.mxu0 %v441
  %612 = vmatpush.bf16.msra.mxu0 %v440
  %613 = vmatpush.bf16.msra.mxu0 %v439
  %614 = vmatpush.bf16.msra.mxu0 %v438
  %615 = vmatmul.bf16.gmra.mxu0 %v480
  %v616 = vpop.f32.mrf.mxu0
  %v617 = vadd.f32 %v588, %v616
  %v618 = vpop.f32.mrf.mxu0
  %v619 = vadd.f32 %v590, %v618
  %620 = vmatmul.bf16.gmra.mxu0 %v483
  %v621 = vpop.f32.mrf.mxu0
  %v622 = vadd.f32 %v593, %v621
  %v623 = vpop.f32.mrf.mxu0
  %v624 = vadd.f32 %v595, %v623
  %625 = vmatmul.bf16.gmra.mxu0 %v486
  %v626 = vpop.f32.mrf.mxu0
  %v627 = vadd.f32 %v598, %v626
  %v628 = vpop.f32.mrf.mxu0
  %v629 = vadd.f32 %v600, %v628
  %630 = vmatmul.bf16.gmra.mxu0 %v489
  %v631 = vpop.f32.mrf.mxu0
  %v632 = vadd.f32 %v603, %v631
  %v633 = vpop.f32.mrf.mxu0
  %v634 = vadd.f32 %v605, %v633
  %635 = vdwg.mxu0
  %v636 = vld [vmem:[%s3] sm:$0xff]
  %v637 = vld [vmem:[%s3 + $0x8] sm:$0xff]
  %v638 = vld [vmem:[%s3 + $0x10] sm:$0xff]
  %v639 = vld [vmem:[%s3 + $0x18] sm:$0xff]
  %v640 = vld [vmem:[%s3 + $0x20] sm:$0xff]
  %v641 = vld [vmem:[%s3 + $0x28] sm:$0xff]
  %v642 = vld [vmem:[%s3 + $0x30] sm:$0xff]
  %v643 = vld [vmem:[%s3 + $0x38] sm:$0xff]
  %v644 = vadd.f32 %v617, %v636
  %v645 = vadd.f32 %v619, %v637
  %v646 = vadd.f32 %v622, %v638
  %v647 = vadd.f32 %v624, %v639
  %v648 = vadd.f32 %v627, %v640
  %v649 = vadd.f32 %v629, %v641
  %v650 = vadd.f32 %v632, %v642
  %v651 = vadd.f32 %v634, %v643
  %652 = vst [vmem:[%s4] sm:$0xff] %v644
  %653 = vst [vmem:[%s4 + $0x8] sm:$0xff] %v645
  %654 = vst [vmem:[%s4 + $0x10] sm:$0xff] %v646
  %655 = vst [vmem:[%s4 + $0x18] sm:$0xff] %v647
  %656 = vst [vmem:[%s4 + $0x20] sm:$0xff] %v648
  %657 = vst [vmem:[%s4 + $0x28] sm:$0xff] %v649
  %658 = vst [vmem:[%s4 + $0x30] sm:$0xff] %v650
  %659 = vst [vmem:[%s4 + $0x38] sm:$0xff] %v651
  // Predicated region
  $region18: #{chained_forward.30} parent=0 // pred_check
    _
  $region19: #{chained_forward.30} parent=0 // pred_check_branch
    %661 = sbr.rel (0) target = $region21
  $region20: #{chained_forward.30} parent=0 // pred_region
    _
  $region21: #{chained_forward.30} parent=0 // pred_fallthru
    _
  // Predicated region
  $region22: #{chained_forward.30} parent=0 // pred_check
    _
  $region23: #{chained_forward.30} parent=0 // pred_check_branch
    %663 = sbr.rel (0) target = $region25
  $region24: #{chained_forward.30} parent=0 // pred_region
    _
  $region25: #{chained_forward.30} parent=0 // pred_fallthru
    _

</llo_original>
